<compile_context>
chip_gen: v7x
topology: tpu7x:2x2x1
jax: 0.10.0
libtpu: 0.0.40
codegen_flags: <defaults>
</compile_context>

<pallas_src>
import functools

import jax
import jax.numpy as jnp
from jax.experimental import pallas as pl
from jax.experimental.pallas import tpu as pltpu


def _round_up(x, m):
    return (x + m - 1) // m * m


# -----------------------------------------------------------------------------
# Kernel 1: fused bidirectional input projection (single pass over x)
#   preact = x @ [W_ih_fw | W_ih_bw] + b   (bias zeroed on padded timesteps so
#   the recurrence state stays exactly 0 through the time padding).
# -----------------------------------------------------------------------------
def _preact_kernel(x_ref, w_ref, b_ref, pf_ref, pb_ref, *, bp, gp, t_real):
    nb = x_ref.shape[0]
    acc = jnp.dot(x_ref[...], w_ref[...], preferred_element_type=jnp.float32)
    # global flat row -> valid iff its timestep < t_real (rows are time-major)
    row = pl.program_id(0) * nb + jax.lax.broadcasted_iota(jnp.int32, (nb, 1), 0)
    valid = row < (t_real * bp)
    acc = acc + jnp.where(valid, b_ref[...], 0.0)
    pf_ref[...] = acc[:, :gp].astype(pf_ref.dtype)
    pb_ref[...] = acc[:, gp:].astype(pb_ref.dtype)


def run_preact(x_flat, w_ih_fused, b_fused, *, bp, t_real, nb):
    """x_flat: (N, Dp) bf16; w: (Dp, 2*GP) bf16; b: (1, 2*GP) f32 -> 2x (N, GP) bf16."""
    n, dp = x_flat.shape
    gp2 = w_ih_fused.shape[-1]
    gp = gp2 // 2
    kern = functools.partial(_preact_kernel, bp=bp, gp=gp, t_real=t_real)
    return pl.pallas_call(
        kern,
        out_shape=(jax.ShapeDtypeStruct((n, gp), jnp.bfloat16),
                   jax.ShapeDtypeStruct((n, gp), jnp.bfloat16)),
        grid=(n // nb,),
        in_specs=[
            pl.BlockSpec((nb, dp), lambda i: (i, 0)),
            pl.BlockSpec((dp, gp2), lambda i: (0, 0)),
            pl.BlockSpec((1, gp2), lambda i: (0, 0)),
        ],
        out_specs=(pl.BlockSpec((nb, gp), lambda i: (i, 0)),
                   pl.BlockSpec((nb, gp), lambda i: (i, 0))),
        compiler_params=pltpu.CompilerParams(
            dimension_semantics=("parallel",)),
    )(x_flat, w_ih_fused, b_fused)


# -----------------------------------------------------------------------------
# Kernel 2: time-chunked, direction-fused coupled-gate LSTM recurrence.
#   grid=(num_chunks,) "arbitrary"; forward chunks ascend in time, backward
#   chunks descend; h/c live in VMEM scratch across chunks.  Per step, one
#   block-diagonal (2*Bp, 2*Hp) x (2*Hp, GP) bf16 matmul computes both
#   directions' gates (K = 256 fills the v6e/v7x MXU depth).
# -----------------------------------------------------------------------------
def _rec_kernel(pf_ref, pb_ref, whh_ref, hf_ref, hb_ref, h_scr, c_scr,
                *, bp, hp, tb):
    @pl.when(pl.program_id(0) == 0)
    def _():
        h_scr[...] = jnp.zeros_like(h_scr)   # off-diagonal blocks stay 0 forever
        c_scr[...] = jnp.zeros_like(c_scr)

    def step(s, carry):
        rev = tb - 1 - s
        pre = jnp.concatenate(
            [pf_ref[s].astype(jnp.float32), pb_ref[rev].astype(jnp.float32)],
            axis=0)                                                # (2*Bp, GP)
        gates = pre + jnp.dot(h_scr[...].astype(jnp.bfloat16), whh_ref[...],
                              preferred_element_type=jnp.float32)
        # gate order (i, o, g); lattice cell with empty gaz: f = 1 - i
        i = jax.nn.sigmoid(gates[:, :hp])
        o = jax.nn.sigmoid(gates[:, hp:2 * hp])
        g = jnp.tanh(gates[:, 2 * hp:])
        c_new = (1.0 - i) * c_scr[...] + i * g
        h_new = o * jnp.tanh(c_new)
        c_scr[...] = c_new
        # maintain the block-diagonal LHS [[h_f, 0], [0, h_b]]
        h_scr[0:bp, 0:hp] = h_new[0:bp]
        h_scr[bp:, hp:] = h_new[bp:]
        h16 = h_new.astype(jnp.bfloat16)
        hf_ref[s] = h16[0:bp]
        hb_ref[rev] = h16[bp:]
        return carry

    unroll = tb if tb <= 16 else 8           # tb is a multiple of 8 when > 16
    jax.lax.fori_loop(0, tb, step, 0, unroll=unroll)


def run_bilstm_recurrence(pre_f, pre_b, w_hh_stacked, *, tb):
    """pre_f/pre_b: (Tp, Bp, GP) bf16; w_hh: (2*Hp, GP) bf16 -> 2x (Tp, Bp, Hp) bf16."""
    tp, bp, gp = pre_f.shape
    hp = gp // 3
    nc = tp // tb
    kern = functools.partial(_rec_kernel, bp=bp, hp=hp, tb=tb)
    return pl.pallas_call(
        kern,
        out_shape=(jax.ShapeDtypeStruct((tp, bp, hp), jnp.bfloat16),
                   jax.ShapeDtypeStruct((tp, bp, hp), jnp.bfloat16)),
        grid=(nc,),
        in_specs=[
            pl.BlockSpec((tb, bp, gp), lambda c: (c, 0, 0)),            # fwd chunk
            pl.BlockSpec((tb, bp, gp), lambda c: (nc - 1 - c, 0, 0)),   # bwd chunk
            pl.BlockSpec((2 * hp, gp), lambda c: (0, 0)),
        ],
        out_specs=(pl.BlockSpec((tb, bp, hp), lambda c: (c, 0, 0)),
                   pl.BlockSpec((tb, bp, hp), lambda c: (nc - 1 - c, 0, 0))),
        scratch_shapes=[
            pltpu.VMEM((2 * bp, 2 * hp), jnp.float32),   # block-diag h carry
            pltpu.VMEM((2 * bp, hp), jnp.float32),       # c carry
        ],
        compiler_params=pltpu.CompilerParams(
            dimension_semantics=("arbitrary",)),
    )(pre_f, pre_b, w_hh_stacked)


# -----------------------------------------------------------------------------
# Kernel 3: hidden2tag Linear + argmax + mask (row-tiled, single K=2*Hp matmul)
# -----------------------------------------------------------------------------
def _decode_kernel(hf_ref, hb_ref, w_ref, b_ref, mask_ref, out_ref):
    h = jnp.concatenate([hf_ref[...], hb_ref[...]], axis=-1)   # (NB, 2*Hp) bf16
    scores = (jnp.dot(h, w_ref[...], preferred_element_type=jnp.float32)
              + b_ref[...])                                    # (NB, Lp) f32
    lp = scores.shape[-1]
    m = jnp.max(scores, axis=-1, keepdims=True)
    idx = jax.lax.broadcasted_iota(jnp.int32, scores.shape, 1)
    cand = jnp.where(scores >= m, idx, jnp.int32(lp))
    tag = jnp.min(cand, axis=-1, keepdims=True)                # first-max index
    out_ref[...] = mask_ref[...] * tag
    # TODO(synk): emit a lane-dense tag layout instead of (NB, 1) to avoid
    #             masked vst.msk stores (tiny absolute win for this output).


def run_decode(h_f, h_b, w_dec, b_dec, mask_flat, *, nb):
    """h_f/h_b: (N, Hp) bf16; w: (2*Hp, Lp) bf16; b: (1, Lp) f32; mask: (N,1) i32."""
    n, hp = h_f.shape
    lp = w_dec.shape[-1]
    return pl.pallas_call(
        _decode_kernel,
        out_shape=jax.ShapeDtypeStruct((n, 1), jnp.int32),
        grid=(n // nb,),
        in_specs=[
            pl.BlockSpec((nb, hp), lambda i: (i, 0)),
            pl.BlockSpec((nb, hp), lambda i: (i, 0)),
            pl.BlockSpec((2 * hp, lp), lambda i: (0, 0)),
            pl.BlockSpec((1, lp), lambda i: (0, 0)),
            pl.BlockSpec((nb, 1), lambda i: (i, 0)),
        ],
        out_specs=pl.BlockSpec((nb, 1), lambda i: (i, 0)),
        compiler_params=pltpu.CompilerParams(
            dimension_semantics=("parallel",)),
    )(h_f, h_b, w_dec, b_dec, mask_flat)


# -----------------------------------------------------------------------------
# Full BiLSTM.forward (inference decode)
# -----------------------------------------------------------------------------
def bilstm_forward(params, word_inputs, biword_inputs, mask):
    B, T = word_inputs.shape
    D = params["fw_w_ih"].shape[1]
    H = params["fw_w_hh"].shape[-1]
    L = params["h2t_w"].shape[-1]

    Bp = _round_up(max(B, 16), 16)          # 16-row pad: dense bf16 sublane tiles
    Dp = _round_up(max(D, 128), 128)
    Hp = _round_up(max(H, 128), 128)
    Lp = _round_up(max(L, 128), 128)
    GP = 3 * Hp

    # Time block: ~512-row MXU tiles for kernels 1/3 and the chunk size that
    # bounds kernel-2 VMEM at O(Tb*Bp*(GP+Hp)) independent of T.
    Tb = max(1, min(T, 512 // Bp))
    if Tb > 16:
        Tb = (Tb // 8) * 8                  # keep the unroll factor exact
    Tp = _round_up(T, Tb)
    Np = Tp * Bp
    NB = Tb * Bp

    # Embedding lookups gathered straight into time-major layout (only tiny
    # int32 index arrays are transposed; no (B,T,D)<->(T,B,D) activation copy).
    word_embs = jnp.take(params["word_emb"], word_inputs.T, axis=0)      # (T,B,We)
    biword_embs = jnp.take(params["biword_emb"], biword_inputs.T, axis=0)
    x = jnp.concatenate([word_embs, biword_embs], axis=-1).astype(jnp.float32)
    # self.drop / self.droplstm: dropout is identity at inference.
    x = jnp.pad(x, ((0, Tp - T), (0, Bp - B), (0, Dp - D)))              # (Tp,Bp,Dp)
    x_flat = x.reshape(Np, Dp).astype(jnp.bfloat16)

    # Fused / padded LSTM weights, gate order (i, o, g), each gate padded to Hp
    # lanes; both directions concatenated on lanes for the input projection and
    # stacked on the contraction dim for the recurrence.
    w_ih = jnp.zeros((Dp, 2 * GP), jnp.float32)
    b_ih = jnp.zeros((1, 2 * GP), jnp.float32)
    w_hh = jnp.zeros((2 * Hp, GP), jnp.float32)
    for d, (wi, wh, bb) in enumerate([
            (params["fw_w_ih"], params["fw_w_hh"], params["fw_b"]),
            (params["bw_w_ih"], params["bw_w_hh"], params["bw_b"])]):
        for g in range(3):
            col = d * GP + g * Hp
            w_ih = w_ih.at[:D, col:col + H].set(wi[g])
            b_ih = b_ih.at[:, col:col + H].set(bb[g])
            w_hh = w_hh.at[d * Hp:d * Hp + H, g * Hp:g * Hp + H].set(wh[g])
    w_ih = w_ih.astype(jnp.bfloat16)
    w_hh = w_hh.astype(jnp.bfloat16)

    # 1) single-pass bidirectional x-projection (bias folded in, bf16 preact).
    #    Note: padded batch rows (B..Bp) still receive bias-only preacts; this
    #    is harmless because the recurrence/decode are row-independent and
    #    those rows are masked / sliced off.
    pre_f, pre_b = run_preact(x_flat, w_ih, b_ih, bp=Bp, t_real=T, nb=NB)
    pre_f = pre_f.reshape(Tp, Bp, GP)
    pre_b = pre_b.reshape(Tp, Bp, GP)

    # 2) time-chunked, direction-fused recurrence (serial over T inside kernel).
    h_f, h_b = run_bilstm_recurrence(pre_f, pre_b, w_hh, tb=Tb)  # (Tp,Bp,Hp) x2

    # 3) hidden2tag + argmax + mask; single (2*Hp, Lp) weight, padded labels
    #    get a -1e30 bias so they never win the argmax.
    w_dec = jnp.zeros((2 * Hp, Lp), jnp.float32)
    w_dec = w_dec.at[:H, :L].set(params["h2t_w"][:H])
    w_dec = w_dec.at[Hp:Hp + H, :L].set(params["h2t_w"][H:])
    w_dec = w_dec.astype(jnp.bfloat16)
    b_dec = jnp.full((1, Lp), -1e30, jnp.float32).at[:, :L].set(params["h2t_b"])

    mask_tm = jnp.pad(mask.T.astype(jnp.int32), ((0, Tp - T), (0, Bp - B)))
    mask_flat = mask_tm.reshape(Np, 1)

    tags = run_decode(h_f.reshape(Np, Hp), h_b.reshape(Np, Hp),
                      w_dec, b_dec, mask_flat, nb=NB)            # (Np, 1)
    return tags.reshape(Tp, Bp)[:T, :B].T                        # (B, T) int32


# -----------------------------------------------------------------------------
# Deterministic synthetic parameters
# -----------------------------------------------------------------------------
def make_params(key, *, word_vocab, biword_vocab, word_dim, biword_dim,
                hidden_dim, label_size):
    lstm_input = word_dim + biword_dim
    lstm_hidden = hidden_dim // 2
    ks = jax.random.split(key, 10)

    def u(k, shape, scale):
        return jax.random.uniform(k, shape, jnp.float32, -scale, scale)

    emb_scale_w = jnp.sqrt(3.0 / word_dim)
    emb_scale_b = jnp.sqrt(3.0 / biword_dim)
    lstm_scale = 1.0 / jnp.sqrt(lstm_hidden)
    lin_scale = 1.0 / jnp.sqrt(hidden_dim)

    return {
        "word_emb": u(ks[0], (word_vocab, word_dim), emb_scale_w),
        "biword_emb": u(ks[1], (biword_vocab, biword_dim), emb_scale_b),
        # forward LatticeLSTM (gate order i, o, g)
        "fw_w_ih": u(ks[2], (3, lstm_input, lstm_hidden), lstm_scale),
        "fw_w_hh": u(ks[3], (3, lstm_hidden, lstm_hidden), lstm_scale),
        "fw_b":    u(ks[4], (3, 1, lstm_hidden), lstm_scale),
        # backward LatticeLSTM
        "bw_w_ih": u(ks[5], (3, lstm_input, lstm_hidden), lstm_scale),
        "bw_w_hh": u(ks[6], (3, lstm_hidden, lstm_hidden), lstm_scale),
        "bw_b":    u(ks[7], (3, 1, lstm_hidden), lstm_scale),
        # hidden2tag Linear
        "h2t_w": u(ks[8], (hidden_dim, label_size), lin_scale),
        "h2t_b": u(ks[9], (1, label_size), lin_scale),
    }


if __name__ == "__main__":
    B, T = 2, 8
    WORD_DIM, BIWORD_DIM = 32, 32
    HIDDEN_DIM = 64          # bilstm => per-direction hidden = 32
    LABEL_SIZE = 16
    WORD_VOCAB, BIWORD_VOCAB = 100, 200

    key = jax.random.PRNGKey(0)
    kp, kw, kb = jax.random.split(key, 3)

    params = make_params(kp, word_vocab=WORD_VOCAB, biword_vocab=BIWORD_VOCAB,
                         word_dim=WORD_DIM, biword_dim=BIWORD_DIM,
                         hidden_dim=HIDDEN_DIM, label_size=LABEL_SIZE)

    word_inputs = jax.random.randint(kw, (B, T), 1, WORD_VOCAB, dtype=jnp.int32)
    biword_inputs = jax.random.randint(kb, (B, T), 1, BIWORD_VOCAB, dtype=jnp.int32)
    # mask: first row fully valid, second row has trailing padding
    mask = jnp.array([[1] * T, [1] * (T - 3) + [0] * 3], dtype=jnp.int32)

    decode_seq = jax.jit(bilstm_forward)(params, word_inputs, biword_inputs, mask)
    decode_seq = jax.block_until_ready(decode_seq)

    assert decode_seq.shape == (B, T) and decode_seq.dtype == jnp.int32
    assert bool(jnp.all((decode_seq >= 0) & (decode_seq < LABEL_SIZE)))
    print("KERNEL_OK")
</pallas_src>

<mosaic_0001>
module attributes {stable_mosaic.version = 11 : i64} {
  func.func @_preact_kernel(%arg0: i32, %arg1: memref<128x128xbf16, #tpu.memory_space<vmem>>, %arg2: memref<128x768xbf16, #tpu.memory_space<vmem>>, %arg3: memref<1x768xf32, #tpu.memory_space<vmem>>, %arg4: memref<128x384xbf16, #tpu.memory_space<vmem>>, %arg5: memref<128x384xbf16, #tpu.memory_space<vmem>>) attributes {dimension_semantics = [#tpu.dimension_semantics<parallel>], iteration_bounds = array<i64: 1>, scalar_prefetch = 0 : i64, scratch_operands = 0 : i64, tpu.core_type = #tpu.core_type<tc>, window_params = [{transform_indices = @transform_0, window_bounds = array<i64: 128, 128>}, {pipeline_mode = #tpu.pipeline_mode<synchronous>, transform_indices = @transform_1, window_bounds = array<i64: 128, 768>}, {pipeline_mode = #tpu.pipeline_mode<synchronous>, transform_indices = @transform_2, window_bounds = array<i64: 1, 768>}, {transform_indices = @transform_3, window_bounds = array<i64: 128, 384>}, {transform_indices = @transform_4, window_bounds = array<i64: 128, 384>}]} {
    %c0 = arith.constant 0 : index
    %c0_0 = arith.constant 0 : index
    %0 = vector.load %arg1[%c0, %c0_0] : memref<128x128xbf16, #tpu.memory_space<vmem>>, vector<128x128xbf16>
    %c0_1 = arith.constant 0 : index
    %c0_2 = arith.constant 0 : index
    %1 = vector.load %arg2[%c0_1, %c0_2] : memref<128x768xbf16, #tpu.memory_space<vmem>>, vector<128x768xbf16>
    %cst = arith.constant dense<0.000000e+00> : vector<128x768xf32>
    %2 = tpu.matmul %0, %1, %cst {dimension_numbers = #tpu.dot_dimension_numbers<[1], [0], [0], [1], [0, 0, 1, 1], [], []>} : vector<128x128xbf16>, vector<128x768xbf16>, vector<128x768xf32> -> vector<128x768xf32>
    %c128_i32 = arith.constant 128 : i32
    %3 = arith.muli %arg0, %c128_i32 : i32
    %4 = tpu.iota {dimensions = array<i32: 0>} : vector<128x1xi32>
    %5 = vector.broadcast %3 : i32 to vector<128x1xi32>
    %6 = arith.addi %5, %4 : vector<128x1xi32>
    %c128_i32_3 = arith.constant 128 : i32
    %7 = vector.broadcast %c128_i32_3 : i32 to vector<128x1xi32>
    %8 = arith.cmpi slt, %6, %7 : vector<128x1xi32>
    %c0_4 = arith.constant 0 : index
    %c0_5 = arith.constant 0 : index
    %9 = vector.load %arg3[%c0_4, %c0_5] : memref<1x768xf32, #tpu.memory_space<vmem>>, vector<1x768xf32>
    %cst_6 = arith.constant 0.000000e+00 : f32
    %10 = vector.shape_cast %8 : vector<128x1xi1> to vector<128x1xi1>
    %11 = vector.broadcast %10 : vector<128x1xi1> to vector<128x768xi1>
    %12 = vector.shape_cast %9 : vector<1x768xf32> to vector<1x768xf32>
    %13 = vector.broadcast %12 : vector<1x768xf32> to vector<128x768xf32>
    %14 = vector.broadcast %cst_6 : f32 to vector<128x768xf32>
    %15 = arith.select %11, %13, %14 : vector<128x768xi1>, vector<128x768xf32>
    %16 = arith.addf %2, %15 : vector<128x768xf32>
    %17 = vector.extract_strided_slice %16 {offsets = [0, 0], sizes = [128, 384], strides = [1, 1]} : vector<128x768xf32> to vector<128x384xf32>
    %18 = arith.truncf %17 : vector<128x384xf32> to vector<128x384xbf16>
    %c0_7 = arith.constant 0 : index
    %c0_8 = arith.constant 0 : index
    %19 = vector.load %arg4[%c0_7, %c0_8] : memref<128x384xbf16, #tpu.memory_space<vmem>>, vector<128x384xbf16>
    tpu.vector_store %arg4[%c0_7, %c0_8], %18 {strides = array<i32>} : memref<128x384xbf16, #tpu.memory_space<vmem>>, vector<128x384xbf16>,
    %20 = vector.extract_strided_slice %16 {offsets = [0, 384], sizes = [128, 384], strides = [1, 1]} : vector<128x768xf32> to vector<128x384xf32>
    %21 = arith.truncf %20 : vector<128x384xf32> to vector<128x384xbf16>
    %c0_9 = arith.constant 0 : index
    %c0_10 = arith.constant 0 : index
    %22 = vector.load %arg5[%c0_9, %c0_10] : memref<128x384xbf16, #tpu.memory_space<vmem>>, vector<128x384xbf16>
    tpu.vector_store %arg5[%c0_9, %c0_10], %21 {strides = array<i32>} : memref<128x384xbf16, #tpu.memory_space<vmem>>, vector<128x384xbf16>,
    return
  }
  func.func @transform_0(%arg0: i32) -> (i32, i32) {
    %c0_i32 = arith.constant 0 : i32
    %c0_i32_0 = arith.constant 0 : i32
    return %arg0, %c0_i32 : i32, i32
  }
  func.func @transform_1(%arg0: i32) -> (i32, i32) {
    %c0_i32 = arith.constant 0 : i32
    %c0_i32_0 = arith.constant 0 : i32
    %c0_i32_1 = arith.constant 0 : i32
    return %c0_i32, %c0_i32_0 : i32, i32
  }
  func.func @transform_2(%arg0: i32) -> (i32, i32) {
    %c0_i32 = arith.constant 0 : i32
    %c0_i32_0 = arith.constant 0 : i32
    %c0_i32_1 = arith.constant 0 : i32
    return %c0_i32, %c0_i32_0 : i32, i32
  }
  func.func @transform_3(%arg0: i32) -> (i32, i32) {
    %c0_i32 = arith.constant 0 : i32
    %c0_i32_0 = arith.constant 0 : i32
    return %arg0, %c0_i32 : i32, i32
  }
  func.func @transform_4(%arg0: i32) -> (i32, i32) {
    %c0_i32 = arith.constant 0 : i32
    %c0_i32_0 = arith.constant 0 : i32
    return %arg0, %c0_i32 : i32, i32
  }
}

module attributes {stable_mosaic.version = 11 : i64} {
  func.func @_rec_kernel(%arg0: i32, %arg1: memref<8x16x384xbf16, #tpu.memory_space<vmem>>, %arg2: memref<8x16x384xbf16, #tpu.memory_space<vmem>>, %arg3: memref<256x384xbf16, #tpu.memory_space<vmem>>, %arg4: memref<8x16x128xbf16, #tpu.memory_space<vmem>>, %arg5: memref<8x16x128xbf16, #tpu.memory_space<vmem>>, %arg6: memref<32x256xf32, #tpu.memory_space<vmem>>, %arg7: memref<32x128xf32, #tpu.memory_space<vmem>>) attributes {dimension_semantics = [#tpu.dimension_semantics<arbitrary>], iteration_bounds = array<i64: 1>, scalar_prefetch = 0 : i64, scratch_operands = 2 : i64, tpu.core_type = #tpu.core_type<tc>, window_params = [{transform_indices = @transform_0, window_bounds = array<i64: 8, 16, 384>}, {transform_indices = @transform_1, window_bounds = array<i64: 8, 16, 384>}, {pipeline_mode = #tpu.pipeline_mode<synchronous>, transform_indices = @transform_2, window_bounds = array<i64: 256, 384>}, {transform_indices = @transform_3, window_bounds = array<i64: 8, 16, 128>}, {transform_indices = @transform_4, window_bounds = array<i64: 8, 16, 128>}]} {
    %c0_i32 = arith.constant 0 : i32
    %0 = arith.cmpi eq, %arg0, %c0_i32 : i32
    %1 = arith.extui %0 : i1 to i32
    %c0_i32_0 = arith.constant 0 : i32
    %2 = arith.cmpi ne, %1, %c0_i32_0 : i32
    scf.if %2 {
      %cst_198 = arith.constant 0.000000e+00 : f32
      %427 = vector.broadcast %cst_198 : f32 to vector<32x256xf32>
      %c0_199 = arith.constant 0 : index
      %c0_200 = arith.constant 0 : index
      %428 = vector.load %arg6[%c0_199, %c0_200] : memref<32x256xf32, #tpu.memory_space<vmem>>, vector<32x256xf32>
      tpu.vector_store %arg6[%c0_199, %c0_200], %427 {strides = array<i32>} : memref<32x256xf32, #tpu.memory_space<vmem>>, vector<32x256xf32>,
      %cst_201 = arith.constant 0.000000e+00 : f32
      %429 = vector.broadcast %cst_201 : f32 to vector<32x128xf32>
      %c0_202 = arith.constant 0 : index
      %c0_203 = arith.constant 0 : index
      %430 = vector.load %arg7[%c0_202, %c0_203] : memref<32x128xf32, #tpu.memory_space<vmem>>, vector<32x128xf32>
      tpu.vector_store %arg7[%c0_202, %c0_203], %429 {strides = array<i32>} : memref<32x128xf32, #tpu.memory_space<vmem>>, vector<32x128xf32>,
    } else {
    }
    %c0_i32_1 = arith.constant 0 : i32
    %c7_i32 = arith.constant 7 : i32
    %3 = arith.subi %c7_i32, %c0_i32_1 : i32
    %4 = arith.index_cast %c0_i32_1 : i32 to index
    %c0 = arith.constant 0 : index
    %c0_2 = arith.constant 0 : index
    %5 = vector.load %arg1[%4, %c0, %c0_2] : memref<8x16x384xbf16, #tpu.memory_space<vmem>>, vector<1x16x384xbf16>
    %6 = vector.shape_cast %5 : vector<1x16x384xbf16> to vector<16x384xbf16>
    %7 = arith.extf %6 : vector<16x384xbf16> to vector<16x384xf32>
    %8 = arith.index_cast %3 : i32 to index
    %c0_3 = arith.constant 0 : index
    %c0_4 = arith.constant 0 : index
    %9 = vector.load %arg2[%8, %c0_3, %c0_4] : memref<8x16x384xbf16, #tpu.memory_space<vmem>>, vector<1x16x384xbf16>
    %10 = vector.shape_cast %9 : vector<1x16x384xbf16> to vector<16x384xbf16>
    %11 = arith.extf %10 : vector<16x384xbf16> to vector<16x384xf32>
    %12 = tpu.concatenate %7, %11 in 0 : vector<16x384xf32>, vector<16x384xf32> -> vector<32x384xf32>
    %c0_5 = arith.constant 0 : index
    %c0_6 = arith.constant 0 : index
    %13 = vector.load %arg6[%c0_5, %c0_6] : memref<32x256xf32, #tpu.memory_space<vmem>>, vector<32x256xf32>
    %14 = arith.truncf %13 : vector<32x256xf32> to vector<32x256xbf16>
    %c0_7 = arith.constant 0 : index
    %c0_8 = arith.constant 0 : index
    %15 = vector.load %arg3[%c0_7, %c0_8] : memref<256x384xbf16, #tpu.memory_space<vmem>>, vector<256x384xbf16>
    %cst = arith.constant dense<0.000000e+00> : vector<32x384xf32>
    %16 = tpu.matmul %14, %15, %cst {dimension_numbers = #tpu.dot_dimension_numbers<[1], [0], [0], [1], [0, 0, 1, 1], [], []>} : vector<32x256xbf16>, vector<256x384xbf16>, vector<32x384xf32> -> vector<32x384xf32>
    %17 = arith.addf %12, %16 : vector<32x384xf32>
    %18 = vector.extract_strided_slice %17 {offsets = [0, 0], sizes = [32, 128], strides = [1, 1]} : vector<32x384xf32> to vector<32x128xf32>
    %19 = arith.negf %18 : vector<32x128xf32>
    %20 = math.exp %19 : vector<32x128xf32>
    %cst_9 = arith.constant 1.000000e+00 : f32
    %21 = vector.broadcast %cst_9 : f32 to vector<32x128xf32>
    %22 = arith.addf %21, %20 : vector<32x128xf32>
    %23 = arith.divf %21, %22 : vector<32x128xf32>
    %24 = vector.extract_strided_slice %17 {offsets = [0, 128], sizes = [32, 128], strides = [1, 1]} : vector<32x384xf32> to vector<32x128xf32>
    %25 = arith.negf %24 : vector<32x128xf32>
    %26 = math.exp %25 : vector<32x128xf32>
    %cst_10 = arith.constant 1.000000e+00 : f32
    %27 = vector.broadcast %cst_10 : f32 to vector<32x128xf32>
    %28 = arith.addf %27, %26 : vector<32x128xf32>
    %29 = arith.divf %27, %28 : vector<32x128xf32>
    %30 = vector.extract_strided_slice %17 {offsets = [0, 256], sizes = [32, 128], strides = [1, 1]} : vector<32x384xf32> to vector<32x128xf32>
    %31 = math.tanh %30 : vector<32x128xf32>
    %cst_11 = arith.constant 1.000000e+00 : f32
    %32 = vector.broadcast %cst_11 : f32 to vector<32x128xf32>
    %33 = arith.subf %32, %23 : vector<32x128xf32>
    %c0_12 = arith.constant 0 : index
    %c0_13 = arith.constant 0 : index
    %34 = vector.load %arg7[%c0_12, %c0_13] : memref<32x128xf32, #tpu.memory_space<vmem>>, vector<32x128xf32>
    %35 = arith.mulf %33, %34 : vector<32x128xf32>
    %36 = arith.mulf %23, %31 : vector<32x128xf32>
    %37 = arith.addf %35, %36 : vector<32x128xf32>
    %38 = math.tanh %37 : vector<32x128xf32>
    %39 = arith.mulf %29, %38 : vector<32x128xf32>
    %c0_14 = arith.constant 0 : index
    %c0_15 = arith.constant 0 : index
    %40 = vector.load %arg7[%c0_14, %c0_15] : memref<32x128xf32, #tpu.memory_space<vmem>>, vector<32x128xf32>
    tpu.vector_store %arg7[%c0_14, %c0_15], %37 {strides = array<i32>} : memref<32x128xf32, #tpu.memory_space<vmem>>, vector<32x128xf32>,
    %41 = vector.extract_strided_slice %39 {offsets = [0, 0], sizes = [16, 128], strides = [1, 1]} : vector<32x128xf32> to vector<16x128xf32>
    %c0_16 = arith.constant 0 : index
    %c0_17 = arith.constant 0 : index
    %42 = vector.load %arg6[%c0_16, %c0_17] : memref<32x256xf32, #tpu.memory_space<vmem>>, vector<16x128xf32>
    tpu.vector_store %arg6[%c0_16, %c0_17], %41 {strides = array<i32>} : memref<32x256xf32, #tpu.memory_space<vmem>>, vector<16x128xf32>,
    %43 = vector.extract_strided_slice %39 {offsets = [16, 0], sizes = [16, 128], strides = [1, 1]} : vector<32x128xf32> to vector<16x128xf32>
    %c16 = arith.constant 16 : index
    %c128 = arith.constant 128 : index
    %44 = vector.load %arg6[%c16, %c128] : memref<32x256xf32, #tpu.memory_space<vmem>>, vector<16x128xf32>
    tpu.vector_store %arg6[%c16, %c128], %43 {strides = array<i32>} : memref<32x256xf32, #tpu.memory_space<vmem>>, vector<16x128xf32>,
    %45 = arith.truncf %39 : vector<32x128xf32> to vector<32x128xbf16>
    %46 = vector.extract_strided_slice %45 {offsets = [0, 0], sizes = [16, 128], strides = [1, 1]} : vector<32x128xbf16> to vector<16x128xbf16>
    %47 = arith.index_cast %c0_i32_1 : i32 to index
    %c0_18 = arith.constant 0 : index
    %c0_19 = arith.constant 0 : index
    %48 = vector.load %arg4[%47, %c0_18, %c0_19] : memref<8x16x128xbf16, #tpu.memory_space<vmem>>, vector<1x16x128xbf16>
    %49 = vector.shape_cast %48 : vector<1x16x128xbf16> to vector<16x128xbf16>
    %50 = vector.shape_cast %46 : vector<16x128xbf16> to vector<1x16x128xbf16>
    tpu.vector_store %arg4[%47, %c0_18, %c0_19], %50 {strides = array<i32>} : memref<8x16x128xbf16, #tpu.memory_space<vmem>>, vector<1x16x128xbf16>,
    %51 = vector.extract_strided_slice %45 {offsets = [16, 0], sizes = [16, 128], strides = [1, 1]} : vector<32x128xbf16> to vector<16x128xbf16>
    %52 = arith.index_cast %3 : i32 to index
    %c0_20 = arith.constant 0 : index
    %c0_21 = arith.constant 0 : index
    %53 = vector.load %arg5[%52, %c0_20, %c0_21] : memref<8x16x128xbf16, #tpu.memory_space<vmem>>, vector<1x16x128xbf16>
    %54 = vector.shape_cast %53 : vector<1x16x128xbf16> to vector<16x128xbf16>
    %55 = vector.shape_cast %51 : vector<16x128xbf16> to vector<1x16x128xbf16>
    tpu.vector_store %arg5[%52, %c0_20, %c0_21], %55 {strides = array<i32>} : memref<8x16x128xbf16, #tpu.memory_space<vmem>>, vector<1x16x128xbf16>,
    %c1_i32 = arith.constant 1 : i32
    %c7_i32_22 = arith.constant 7 : i32
    %56 = arith.subi %c7_i32_22, %c1_i32 : i32
    %57 = arith.index_cast %c1_i32 : i32 to index
    %c0_23 = arith.constant 0 : index
    %c0_24 = arith.constant 0 : index
    %58 = vector.load %arg1[%57, %c0_23, %c0_24] : memref<8x16x384xbf16, #tpu.memory_space<vmem>>, vector<1x16x384xbf16>
    %59 = vector.shape_cast %58 : vector<1x16x384xbf16> to vector<16x384xbf16>
    %60 = arith.extf %59 : vector<16x384xbf16> to vector<16x384xf32>
    %61 = arith.index_cast %56 : i32 to index
    %c0_25 = arith.constant 0 : index
    %c0_26 = arith.constant 0 : index
    %62 = vector.load %arg2[%61, %c0_25, %c0_26] : memref<8x16x384xbf16, #tpu.memory_space<vmem>>, vector<1x16x384xbf16>
    %63 = vector.shape_cast %62 : vector<1x16x384xbf16> to vector<16x384xbf16>
    %64 = arith.extf %63 : vector<16x384xbf16> to vector<16x384xf32>
    %65 = tpu.concatenate %60, %64 in 0 : vector<16x384xf32>, vector<16x384xf32> -> vector<32x384xf32>
    %c0_27 = arith.constant 0 : index
    %c0_28 = arith.constant 0 : index
    %66 = vector.load %arg6[%c0_27, %c0_28] : memref<32x256xf32, #tpu.memory_space<vmem>>, vector<32x256xf32>
    %67 = arith.truncf %66 : vector<32x256xf32> to vector<32x256xbf16>
    %c0_29 = arith.constant 0 : index
    %c0_30 = arith.constant 0 : index
    %68 = vector.load %arg3[%c0_29, %c0_30] : memref<256x384xbf16, #tpu.memory_space<vmem>>, vector<256x384xbf16>
    %cst_31 = arith.constant dense<0.000000e+00> : vector<32x384xf32>
    %69 = tpu.matmul %67, %68, %cst_31 {dimension_numbers = #tpu.dot_dimension_numbers<[1], [0], [0], [1], [0, 0, 1, 1], [], []>} : vector<32x256xbf16>, vector<256x384xbf16>, vector<32x384xf32> -> vector<32x384xf32>
    %70 = arith.addf %65, %69 : vector<32x384xf32>
    %71 = vector.extract_strided_slice %70 {offsets = [0, 0], sizes = [32, 128], strides = [1, 1]} : vector<32x384xf32> to vector<32x128xf32>
    %72 = arith.negf %71 : vector<32x128xf32>
    %73 = math.exp %72 : vector<32x128xf32>
    %cst_32 = arith.constant 1.000000e+00 : f32
    %74 = vector.broadcast %cst_32 : f32 to vector<32x128xf32>
    %75 = arith.addf %74, %73 : vector<32x128xf32>
    %76 = arith.divf %74, %75 : vector<32x128xf32>
    %77 = vector.extract_strided_slice %70 {offsets = [0, 128], sizes = [32, 128], strides = [1, 1]} : vector<32x384xf32> to vector<32x128xf32>
    %78 = arith.negf %77 : vector<32x128xf32>
    %79 = math.exp %78 : vector<32x128xf32>
    %cst_33 = arith.constant 1.000000e+00 : f32
    %80 = vector.broadcast %cst_33 : f32 to vector<32x128xf32>
    %81 = arith.addf %80, %79 : vector<32x128xf32>
    %82 = arith.divf %80, %81 : vector<32x128xf32>
    %83 = vector.extract_strided_slice %70 {offsets = [0, 256], sizes = [32, 128], strides = [1, 1]} : vector<32x384xf32> to vector<32x128xf32>
    %84 = math.tanh %83 : vector<32x128xf32>
    %cst_34 = arith.constant 1.000000e+00 : f32
    %85 = vector.broadcast %cst_34 : f32 to vector<32x128xf32>
    %86 = arith.subf %85, %76 : vector<32x128xf32>
    %c0_35 = arith.constant 0 : index
    %c0_36 = arith.constant 0 : index
    %87 = vector.load %arg7[%c0_35, %c0_36] : memref<32x128xf32, #tpu.memory_space<vmem>>, vector<32x128xf32>
    %88 = arith.mulf %86, %87 : vector<32x128xf32>
    %89 = arith.mulf %76, %84 : vector<32x128xf32>
    %90 = arith.addf %88, %89 : vector<32x128xf32>
    %91 = math.tanh %90 : vector<32x128xf32>
    %92 = arith.mulf %82, %91 : vector<32x128xf32>
    %c0_37 = arith.constant 0 : index
    %c0_38 = arith.constant 0 : index
    %93 = vector.load %arg7[%c0_37, %c0_38] : memref<32x128xf32, #tpu.memory_space<vmem>>, vector<32x128xf32>
    tpu.vector_store %arg7[%c0_37, %c0_38], %90 {strides = array<i32>} : memref<32x128xf32, #tpu.memory_space<vmem>>, vector<32x128xf32>,
    %94 = vector.extract_strided_slice %92 {offsets = [0, 0], sizes = [16, 128], strides = [1, 1]} : vector<32x128xf32> to vector<16x128xf32>
    %c0_39 = arith.constant 0 : index
    %c0_40 = arith.constant 0 : index
    %95 = vector.load %arg6[%c0_39, %c0_40] : memref<32x256xf32, #tpu.memory_space<vmem>>, vector<16x128xf32>
    tpu.vector_store %arg6[%c0_39, %c0_40], %94 {strides = array<i32>} : memref<32x256xf32, #tpu.memory_space<vmem>>, vector<16x128xf32>,
    %96 = vector.extract_strided_slice %92 {offsets = [16, 0], sizes = [16, 128], strides = [1, 1]} : vector<32x128xf32> to vector<16x128xf32>
    %c16_41 = arith.constant 16 : index
    %c128_42 = arith.constant 128 : index
    %97 = vector.load %arg6[%c16_41, %c128_42] : memref<32x256xf32, #tpu.memory_space<vmem>>, vector<16x128xf32>
    tpu.vector_store %arg6[%c16_41, %c128_42], %96 {strides = array<i32>} : memref<32x256xf32, #tpu.memory_space<vmem>>, vector<16x128xf32>,
    %98 = arith.truncf %92 : vector<32x128xf32> to vector<32x128xbf16>
    %99 = vector.extract_strided_slice %98 {offsets = [0, 0], sizes = [16, 128], strides = [1, 1]} : vector<32x128xbf16> to vector<16x128xbf16>
    %100 = arith.index_cast %c1_i32 : i32 to index
    %c0_43 = arith.constant 0 : index
    %c0_44 = arith.constant 0 : index
    %101 = vector.load %arg4[%100, %c0_43, %c0_44] : memref<8x16x128xbf16, #tpu.memory_space<vmem>>, vector<1x16x128xbf16>
    %102 = vector.shape_cast %101 : vector<1x16x128xbf16> to vector<16x128xbf16>
    %103 = vector.shape_cast %99 : vector<16x128xbf16> to vector<1x16x128xbf16>
    tpu.vector_store %arg4[%100, %c0_43, %c0_44], %103 {strides = array<i32>} : memref<8x16x128xbf16, #tpu.memory_space<vmem>>, vector<1x16x128xbf16>,
    %104 = vector.extract_strided_slice %98 {offsets = [16, 0], sizes = [16, 128], strides = [1, 1]} : vector<32x128xbf16> to vector<16x128xbf16>
    %105 = arith.index_cast %56 : i32 to index
    %c0_45 = arith.constant 0 : index
    %c0_46 = arith.constant 0 : index
    %106 = vector.load %arg5[%105, %c0_45, %c0_46] : memref<8x16x128xbf16, #tpu.memory_space<vmem>>, vector<1x16x128xbf16>
    %107 = vector.shape_cast %106 : vector<1x16x128xbf16> to vector<16x128xbf16>
    %108 = vector.shape_cast %104 : vector<16x128xbf16> to vector<1x16x128xbf16>
    tpu.vector_store %arg5[%105, %c0_45, %c0_46], %108 {strides = array<i32>} : memref<8x16x128xbf16, #tpu.memory_space<vmem>>, vector<1x16x128xbf16>,
    %c2_i32 = arith.constant 2 : i32
    %c7_i32_47 = arith.constant 7 : i32
    %109 = arith.subi %c7_i32_47, %c2_i32 : i32
    %110 = arith.index_cast %c2_i32 : i32 to index
    %c0_48 = arith.constant 0 : index
    %c0_49 = arith.constant 0 : index
    %111 = vector.load %arg1[%110, %c0_48, %c0_49] : memref<8x16x384xbf16, #tpu.memory_space<vmem>>, vector<1x16x384xbf16>
    %112 = vector.shape_cast %111 : vector<1x16x384xbf16> to vector<16x384xbf16>
    %113 = arith.extf %112 : vector<16x384xbf16> to vector<16x384xf32>
    %114 = arith.index_cast %109 : i32 to index
    %c0_50 = arith.constant 0 : index
    %c0_51 = arith.constant 0 : index
    %115 = vector.load %arg2[%114, %c0_50, %c0_51] : memref<8x16x384xbf16, #tpu.memory_space<vmem>>, vector<1x16x384xbf16>
    %116 = vector.shape_cast %115 : vector<1x16x384xbf16> to vector<16x384xbf16>
    %117 = arith.extf %116 : vector<16x384xbf16> to vector<16x384xf32>
    %118 = tpu.concatenate %113, %117 in 0 : vector<16x384xf32>, vector<16x384xf32> -> vector<32x384xf32>
    %c0_52 = arith.constant 0 : index
    %c0_53 = arith.constant 0 : index
    %119 = vector.load %arg6[%c0_52, %c0_53] : memref<32x256xf32, #tpu.memory_space<vmem>>, vector<32x256xf32>
    %120 = arith.truncf %119 : vector<32x256xf32> to vector<32x256xbf16>
    %c0_54 = arith.constant 0 : index
    %c0_55 = arith.constant 0 : index
    %121 = vector.load %arg3[%c0_54, %c0_55] : memref<256x384xbf16, #tpu.memory_space<vmem>>, vector<256x384xbf16>
    %cst_56 = arith.constant dense<0.000000e+00> : vector<32x384xf32>
    %122 = tpu.matmul %120, %121, %cst_56 {dimension_numbers = #tpu.dot_dimension_numbers<[1], [0], [0], [1], [0, 0, 1, 1], [], []>} : vector<32x256xbf16>, vector<256x384xbf16>, vector<32x384xf32> -> vector<32x384xf32>
    %123 = arith.addf %118, %122 : vector<32x384xf32>
    %124 = vector.extract_strided_slice %123 {offsets = [0, 0], sizes = [32, 128], strides = [1, 1]} : vector<32x384xf32> to vector<32x128xf32>
    %125 = arith.negf %124 : vector<32x128xf32>
    %126 = math.exp %125 : vector<32x128xf32>
    %cst_57 = arith.constant 1.000000e+00 : f32
    %127 = vector.broadcast %cst_57 : f32 to vector<32x128xf32>
    %128 = arith.addf %127, %126 : vector<32x128xf32>
    %129 = arith.divf %127, %128 : vector<32x128xf32>
    %130 = vector.extract_strided_slice %123 {offsets = [0, 128], sizes = [32, 128], strides = [1, 1]} : vector<32x384xf32> to vector<32x128xf32>
    %131 = arith.negf %130 : vector<32x128xf32>
    %132 = math.exp %131 : vector<32x128xf32>
    %cst_58 = arith.constant 1.000000e+00 : f32
    %133 = vector.broadcast %cst_58 : f32 to vector<32x128xf32>
    %134 = arith.addf %133, %132 : vector<32x128xf32>
    %135 = arith.divf %133, %134 : vector<32x128xf32>
    %136 = vector.extract_strided_slice %123 {offsets = [0, 256], sizes = [32, 128], strides = [1, 1]} : vector<32x384xf32> to vector<32x128xf32>
    %137 = math.tanh %136 : vector<32x128xf32>
    %cst_59 = arith.constant 1.000000e+00 : f32
    %138 = vector.broadcast %cst_59 : f32 to vector<32x128xf32>
    %139 = arith.subf %138, %129 : vector<32x128xf32>
    %c0_60 = arith.constant 0 : index
    %c0_61 = arith.constant 0 : index
    %140 = vector.load %arg7[%c0_60, %c0_61] : memref<32x128xf32, #tpu.memory_space<vmem>>, vector<32x128xf32>
    %141 = arith.mulf %139, %140 : vector<32x128xf32>
    %142 = arith.mulf %129, %137 : vector<32x128xf32>
    %143 = arith.addf %141, %142 : vector<32x128xf32>
    %144 = math.tanh %143 : vector<32x128xf32>
    %145 = arith.mulf %135, %144 : vector<32x128xf32>
    %c0_62 = arith.constant 0 : index
    %c0_63 = arith.constant 0 : index
    %146 = vector.load %arg7[%c0_62, %c0_63] : memref<32x128xf32, #tpu.memory_space<vmem>>, vector<32x128xf32>
    tpu.vector_store %arg7[%c0_62, %c0_63], %143 {strides = array<i32>} : memref<32x128xf32, #tpu.memory_space<vmem>>, vector<32x128xf32>,
    %147 = vector.extract_strided_slice %145 {offsets = [0, 0], sizes = [16, 128], strides = [1, 1]} : vector<32x128xf32> to vector<16x128xf32>
    %c0_64 = arith.constant 0 : index
    %c0_65 = arith.constant 0 : index
    %148 = vector.load %arg6[%c0_64, %c0_65] : memref<32x256xf32, #tpu.memory_space<vmem>>, vector<16x128xf32>
    tpu.vector_store %arg6[%c0_64, %c0_65], %147 {strides = array<i32>} : memref<32x256xf32, #tpu.memory_space<vmem>>, vector<16x128xf32>,
    %149 = vector.extract_strided_slice %145 {offsets = [16, 0], sizes = [16, 128], strides = [1, 1]} : vector<32x128xf32> to vector<16x128xf32>
    %c16_66 = arith.constant 16 : index
    %c128_67 = arith.constant 128 : index
    %150 = vector.load %arg6[%c16_66, %c128_67] : memref<32x256xf32, #tpu.memory_space<vmem>>, vector<16x128xf32>
    tpu.vector_store %arg6[%c16_66, %c128_67], %149 {strides = array<i32>} : memref<32x256xf32, #tpu.memory_space<vmem>>, vector<16x128xf32>,
    %151 = arith.truncf %145 : vector<32x128xf32> to vector<32x128xbf16>
    %152 = vector.extract_strided_slice %151 {offsets = [0, 0], sizes = [16, 128], strides = [1, 1]} : vector<32x128xbf16> to vector<16x128xbf16>
    %153 = arith.index_cast %c2_i32 : i32 to index
    %c0_68 = arith.constant 0 : index
    %c0_69 = arith.constant 0 : index
    %154 = vector.load %arg4[%153, %c0_68, %c0_69] : memref<8x16x128xbf16, #tpu.memory_space<vmem>>, vector<1x16x128xbf16>
    %155 = vector.shape_cast %154 : vector<1x16x128xbf16> to vector<16x128xbf16>
    %156 = vector.shape_cast %152 : vector<16x128xbf16> to vector<1x16x128xbf16>
    tpu.vector_store %arg4[%153, %c0_68, %c0_69], %156 {strides = array<i32>} : memref<8x16x128xbf16, #tpu.memory_space<vmem>>, vector<1x16x128xbf16>,
    %157 = vector.extract_strided_slice %151 {offsets = [16, 0], sizes = [16, 128], strides = [1, 1]} : vector<32x128xbf16> to vector<16x128xbf16>
    %158 = arith.index_cast %109 : i32 to index
    %c0_70 = arith.constant 0 : index
    %c0_71 = arith.constant 0 : index
    %159 = vector.load %arg5[%158, %c0_70, %c0_71] : memref<8x16x128xbf16, #tpu.memory_space<vmem>>, vector<1x16x128xbf16>
    %160 = vector.shape_cast %159 : vector<1x16x128xbf16> to vector<16x128xbf16>
    %161 = vector.shape_cast %157 : vector<16x128xbf16> to vector<1x16x128xbf16>
    tpu.vector_store %arg5[%158, %c0_70, %c0_71], %161 {strides = array<i32>} : memref<8x16x128xbf16, #tpu.memory_space<vmem>>, vector<1x16x128xbf16>,
    %c3_i32 = arith.constant 3 : i32
    %c7_i32_72 = arith.constant 7 : i32
    %162 = arith.subi %c7_i32_72, %c3_i32 : i32
    %163 = arith.index_cast %c3_i32 : i32 to index
    %c0_73 = arith.constant 0 : index
    %c0_74 = arith.constant 0 : index
    %164 = vector.load %arg1[%163, %c0_73, %c0_74] : memref<8x16x384xbf16, #tpu.memory_space<vmem>>, vector<1x16x384xbf16>
    %165 = vector.shape_cast %164 : vector<1x16x384xbf16> to vector<16x384xbf16>
    %166 = arith.extf %165 : vector<16x384xbf16> to vector<16x384xf32>
    %167 = arith.index_cast %162 : i32 to index
    %c0_75 = arith.constant 0 : index
    %c0_76 = arith.constant 0 : index
    %168 = vector.load %arg2[%167, %c0_75, %c0_76] : memref<8x16x384xbf16, #tpu.memory_space<vmem>>, vector<1x16x384xbf16>
    %169 = vector.shape_cast %168 : vector<1x16x384xbf16> to vector<16x384xbf16>
    %170 = arith.extf %169 : vector<16x384xbf16> to vector<16x384xf32>
    %171 = tpu.concatenate %166, %170 in 0 : vector<16x384xf32>, vector<16x384xf32> -> vector<32x384xf32>
    %c0_77 = arith.constant 0 : index
    %c0_78 = arith.constant 0 : index
    %172 = vector.load %arg6[%c0_77, %c0_78] : memref<32x256xf32, #tpu.memory_space<vmem>>, vector<32x256xf32>
    %173 = arith.truncf %172 : vector<32x256xf32> to vector<32x256xbf16>
    %c0_79 = arith.constant 0 : index
    %c0_80 = arith.constant 0 : index
    %174 = vector.load %arg3[%c0_79, %c0_80] : memref<256x384xbf16, #tpu.memory_space<vmem>>, vector<256x384xbf16>
    %cst_81 = arith.constant dense<0.000000e+00> : vector<32x384xf32>
    %175 = tpu.matmul %173, %174, %cst_81 {dimension_numbers = #tpu.dot_dimension_numbers<[1], [0], [0], [1], [0, 0, 1, 1], [], []>} : vector<32x256xbf16>, vector<256x384xbf16>, vector<32x384xf32> -> vector<32x384xf32>
    %176 = arith.addf %171, %175 : vector<32x384xf32>
    %177 = vector.extract_strided_slice %176 {offsets = [0, 0], sizes = [32, 128], strides = [1, 1]} : vector<32x384xf32> to vector<32x128xf32>
    %178 = arith.negf %177 : vector<32x128xf32>
    %179 = math.exp %178 : vector<32x128xf32>
    %cst_82 = arith.constant 1.000000e+00 : f32
    %180 = vector.broadcast %cst_82 : f32 to vector<32x128xf32>
    %181 = arith.addf %180, %179 : vector<32x128xf32>
    %182 = arith.divf %180, %181 : vector<32x128xf32>
    %183 = vector.extract_strided_slice %176 {offsets = [0, 128], sizes = [32, 128], strides = [1, 1]} : vector<32x384xf32> to vector<32x128xf32>
    %184 = arith.negf %183 : vector<32x128xf32>
    %185 = math.exp %184 : vector<32x128xf32>
    %cst_83 = arith.constant 1.000000e+00 : f32
    %186 = vector.broadcast %cst_83 : f32 to vector<32x128xf32>
    %187 = arith.addf %186, %185 : vector<32x128xf32>
    %188 = arith.divf %186, %187 : vector<32x128xf32>
    %189 = vector.extract_strided_slice %176 {offsets = [0, 256], sizes = [32, 128], strides = [1, 1]} : vector<32x384xf32> to vector<32x128xf32>
    %190 = math.tanh %189 : vector<32x128xf32>
    %cst_84 = arith.constant 1.000000e+00 : f32
    %191 = vector.broadcast %cst_84 : f32 to vector<32x128xf32>
    %192 = arith.subf %191, %182 : vector<32x128xf32>
    %c0_85 = arith.constant 0 : index
    %c0_86 = arith.constant 0 : index
    %193 = vector.load %arg7[%c0_85, %c0_86] : memref<32x128xf32, #tpu.memory_space<vmem>>, vector<32x128xf32>
    %194 = arith.mulf %192, %193 : vector<32x128xf32>
    %195 = arith.mulf %182, %190 : vector<32x128xf32>
    %196 = arith.addf %194, %195 : vector<32x128xf32>
    %197 = math.tanh %196 : vector<32x128xf32>
    %198 = arith.mulf %188, %197 : vector<32x128xf32>
    %c0_87 = arith.constant 0 : index
    %c0_88 = arith.constant 0 : index
    %199 = vector.load %arg7[%c0_87, %c0_88] : memref<32x128xf32, #tpu.memory_space<vmem>>, vector<32x128xf32>
    tpu.vector_store %arg7[%c0_87, %c0_88], %196 {strides = array<i32>} : memref<32x128xf32, #tpu.memory_space<vmem>>, vector<32x128xf32>,
    %200 = vector.extract_strided_slice %198 {offsets = [0, 0], sizes = [16, 128], strides = [1, 1]} : vector<32x128xf32> to vector<16x128xf32>
    %c0_89 = arith.constant 0 : index
    %c0_90 = arith.constant 0 : index
    %201 = vector.load %arg6[%c0_89, %c0_90] : memref<32x256xf32, #tpu.memory_space<vmem>>, vector<16x128xf32>
    tpu.vector_store %arg6[%c0_89, %c0_90], %200 {strides = array<i32>} : memref<32x256xf32, #tpu.memory_space<vmem>>, vector<16x128xf32>,
    %202 = vector.extract_strided_slice %198 {offsets = [16, 0], sizes = [16, 128], strides = [1, 1]} : vector<32x128xf32> to vector<16x128xf32>
    %c16_91 = arith.constant 16 : index
    %c128_92 = arith.constant 128 : index
    %203 = vector.load %arg6[%c16_91, %c128_92] : memref<32x256xf32, #tpu.memory_space<vmem>>, vector<16x128xf32>
    tpu.vector_store %arg6[%c16_91, %c128_92], %202 {strides = array<i32>} : memref<32x256xf32, #tpu.memory_space<vmem>>, vector<16x128xf32>,
    %204 = arith.truncf %198 : vector<32x128xf32> to vector<32x128xbf16>
    %205 = vector.extract_strided_slice %204 {offsets = [0, 0], sizes = [16, 128], strides = [1, 1]} : vector<32x128xbf16> to vector<16x128xbf16>
    %206 = arith.index_cast %c3_i32 : i32 to index
    %c0_93 = arith.constant 0 : index
    %c0_94 = arith.constant 0 : index
    %207 = vector.load %arg4[%206, %c0_93, %c0_94] : memref<8x16x128xbf16, #tpu.memory_space<vmem>>, vector<1x16x128xbf16>
    %208 = vector.shape_cast %207 : vector<1x16x128xbf16> to vector<16x128xbf16>
    %209 = vector.shape_cast %205 : vector<16x128xbf16> to vector<1x16x128xbf16>
    tpu.vector_store %arg4[%206, %c0_93, %c0_94], %209 {strides = array<i32>} : memref<8x16x128xbf16, #tpu.memory_space<vmem>>, vector<1x16x128xbf16>,
    %210 = vector.extract_strided_slice %204 {offsets = [16, 0], sizes = [16, 128], strides = [1, 1]} : vector<32x128xbf16> to vector<16x128xbf16>
    %211 = arith.index_cast %162 : i32 to index
    %c0_95 = arith.constant 0 : index
    %c0_96 = arith.constant 0 : index
    %212 = vector.load %arg5[%211, %c0_95, %c0_96] : memref<8x16x128xbf16, #tpu.memory_space<vmem>>, vector<1x16x128xbf16>
    %213 = vector.shape_cast %212 : vector<1x16x128xbf16> to vector<16x128xbf16>
    %214 = vector.shape_cast %210 : vector<16x128xbf16> to vector<1x16x128xbf16>
    tpu.vector_store %arg5[%211, %c0_95, %c0_96], %214 {strides = array<i32>} : memref<8x16x128xbf16, #tpu.memory_space<vmem>>, vector<1x16x128xbf16>,
    %c4_i32 = arith.constant 4 : i32
    %c7_i32_97 = arith.constant 7 : i32
    %215 = arith.subi %c7_i32_97, %c4_i32 : i32
    %216 = arith.index_cast %c4_i32 : i32 to index
    %c0_98 = arith.constant 0 : index
    %c0_99 = arith.constant 0 : index
    %217 = vector.load %arg1[%216, %c0_98, %c0_99] : memref<8x16x384xbf16, #tpu.memory_space<vmem>>, vector<1x16x384xbf16>
    %218 = vector.shape_cast %217 : vector<1x16x384xbf16> to vector<16x384xbf16>
    %219 = arith.extf %218 : vector<16x384xbf16> to vector<16x384xf32>
    %220 = arith.index_cast %215 : i32 to index
    %c0_100 = arith.constant 0 : index
    %c0_101 = arith.constant 0 : index
    %221 = vector.load %arg2[%220, %c0_100, %c0_101] : memref<8x16x384xbf16, #tpu.memory_space<vmem>>, vector<1x16x384xbf16>
    %222 = vector.shape_cast %221 : vector<1x16x384xbf16> to vector<16x384xbf16>
    %223 = arith.extf %222 : vector<16x384xbf16> to vector<16x384xf32>
    %224 = tpu.concatenate %219, %223 in 0 : vector<16x384xf32>, vector<16x384xf32> -> vector<32x384xf32>
    %c0_102 = arith.constant 0 : index
    %c0_103 = arith.constant 0 : index
    %225 = vector.load %arg6[%c0_102, %c0_103] : memref<32x256xf32, #tpu.memory_space<vmem>>, vector<32x256xf32>
    %226 = arith.truncf %225 : vector<32x256xf32> to vector<32x256xbf16>
    %c0_104 = arith.constant 0 : index
    %c0_105 = arith.constant 0 : index
    %227 = vector.load %arg3[%c0_104, %c0_105] : memref<256x384xbf16, #tpu.memory_space<vmem>>, vector<256x384xbf16>
    %cst_106 = arith.constant dense<0.000000e+00> : vector<32x384xf32>
    %228 = tpu.matmul %226, %227, %cst_106 {dimension_numbers = #tpu.dot_dimension_numbers<[1], [0], [0], [1], [0, 0, 1, 1], [], []>} : vector<32x256xbf16>, vector<256x384xbf16>, vector<32x384xf32> -> vector<32x384xf32>
    %229 = arith.addf %224, %228 : vector<32x384xf32>
    %230 = vector.extract_strided_slice %229 {offsets = [0, 0], sizes = [32, 128], strides = [1, 1]} : vector<32x384xf32> to vector<32x128xf32>
    %231 = arith.negf %230 : vector<32x128xf32>
    %232 = math.exp %231 : vector<32x128xf32>
    %cst_107 = arith.constant 1.000000e+00 : f32
    %233 = vector.broadcast %cst_107 : f32 to vector<32x128xf32>
    %234 = arith.addf %233, %232 : vector<32x128xf32>
    %235 = arith.divf %233, %234 : vector<32x128xf32>
    %236 = vector.extract_strided_slice %229 {offsets = [0, 128], sizes = [32, 128], strides = [1, 1]} : vector<32x384xf32> to vector<32x128xf32>
    %237 = arith.negf %236 : vector<32x128xf32>
    %238 = math.exp %237 : vector<32x128xf32>
    %cst_108 = arith.constant 1.000000e+00 : f32
    %239 = vector.broadcast %cst_108 : f32 to vector<32x128xf32>
    %240 = arith.addf %239, %238 : vector<32x128xf32>
    %241 = arith.divf %239, %240 : vector<32x128xf32>
    %242 = vector.extract_strided_slice %229 {offsets = [0, 256], sizes = [32, 128], strides = [1, 1]} : vector<32x384xf32> to vector<32x128xf32>
    %243 = math.tanh %242 : vector<32x128xf32>
    %cst_109 = arith.constant 1.000000e+00 : f32
    %244 = vector.broadcast %cst_109 : f32 to vector<32x128xf32>
    %245 = arith.subf %244, %235 : vector<32x128xf32>
    %c0_110 = arith.constant 0 : index
    %c0_111 = arith.constant 0 : index
    %246 = vector.load %arg7[%c0_110, %c0_111] : memref<32x128xf32, #tpu.memory_space<vmem>>, vector<32x128xf32>
    %247 = arith.mulf %245, %246 : vector<32x128xf32>
    %248 = arith.mulf %235, %243 : vector<32x128xf32>
    %249 = arith.addf %247, %248 : vector<32x128xf32>
    %250 = math.tanh %249 : vector<32x128xf32>
    %251 = arith.mulf %241, %250 : vector<32x128xf32>
    %c0_112 = arith.constant 0 : index
    %c0_113 = arith.constant 0 : index
    %252 = vector.load %arg7[%c0_112, %c0_113] : memref<32x128xf32, #tpu.memory_space<vmem>>, vector<32x128xf32>
    tpu.vector_store %arg7[%c0_112, %c0_113], %249 {strides = array<i32>} : memref<32x128xf32, #tpu.memory_space<vmem>>, vector<32x128xf32>,
    %253 = vector.extract_strided_slice %251 {offsets = [0, 0], sizes = [16, 128], strides = [1, 1]} : vector<32x128xf32> to vector<16x128xf32>
    %c0_114 = arith.constant 0 : index
    %c0_115 = arith.constant 0 : index
    %254 = vector.load %arg6[%c0_114, %c0_115] : memref<32x256xf32, #tpu.memory_space<vmem>>, vector<16x128xf32>
    tpu.vector_store %arg6[%c0_114, %c0_115], %253 {strides = array<i32>} : memref<32x256xf32, #tpu.memory_space<vmem>>, vector<16x128xf32>,
    %255 = vector.extract_strided_slice %251 {offsets = [16, 0], sizes = [16, 128], strides = [1, 1]} : vector<32x128xf32> to vector<16x128xf32>
    %c16_116 = arith.constant 16 : index
    %c128_117 = arith.constant 128 : index
    %256 = vector.load %arg6[%c16_116, %c128_117] : memref<32x256xf32, #tpu.memory_space<vmem>>, vector<16x128xf32>
    tpu.vector_store %arg6[%c16_116, %c128_117], %255 {strides = array<i32>} : memref<32x256xf32, #tpu.memory_space<vmem>>, vector<16x128xf32>,
    %257 = arith.truncf %251 : vector<32x128xf32> to vector<32x128xbf16>
    %258 = vector.extract_strided_slice %257 {offsets = [0, 0], sizes = [16, 128], strides = [1, 1]} : vector<32x128xbf16> to vector<16x128xbf16>
    %259 = arith.index_cast %c4_i32 : i32 to index
    %c0_118 = arith.constant 0 : index
    %c0_119 = arith.constant 0 : index
    %260 = vector.load %arg4[%259, %c0_118, %c0_119] : memref<8x16x128xbf16, #tpu.memory_space<vmem>>, vector<1x16x128xbf16>
    %261 = vector.shape_cast %260 : vector<1x16x128xbf16> to vector<16x128xbf16>
    %262 = vector.shape_cast %258 : vector<16x128xbf16> to vector<1x16x128xbf16>
    tpu.vector_store %arg4[%259, %c0_118, %c0_119], %262 {strides = array<i32>} : memref<8x16x128xbf16, #tpu.memory_space<vmem>>, vector<1x16x128xbf16>,
    %263 = vector.extract_strided_slice %257 {offsets = [16, 0], sizes = [16, 128], strides = [1, 1]} : vector<32x128xbf16> to vector<16x128xbf16>
    %264 = arith.index_cast %215 : i32 to index
    %c0_120 = arith.constant 0 : index
    %c0_121 = arith.constant 0 : index
    %265 = vector.load %arg5[%264, %c0_120, %c0_121] : memref<8x16x128xbf16, #tpu.memory_space<vmem>>, vector<1x16x128xbf16>
    %266 = vector.shape_cast %265 : vector<1x16x128xbf16> to vector<16x128xbf16>
    %267 = vector.shape_cast %263 : vector<16x128xbf16> to vector<1x16x128xbf16>
    tpu.vector_store %arg5[%264, %c0_120, %c0_121], %267 {strides = array<i32>} : memref<8x16x128xbf16, #tpu.memory_space<vmem>>, vector<1x16x128xbf16>,
    %c5_i32 = arith.constant 5 : i32
    %c7_i32_122 = arith.constant 7 : i32
    %268 = arith.subi %c7_i32_122, %c5_i32 : i32
    %269 = arith.index_cast %c5_i32 : i32 to index
    %c0_123 = arith.constant 0 : index
    %c0_124 = arith.constant 0 : index
    %270 = vector.load %arg1[%269, %c0_123, %c0_124] : memref<8x16x384xbf16, #tpu.memory_space<vmem>>, vector<1x16x384xbf16>
    %271 = vector.shape_cast %270 : vector<1x16x384xbf16> to vector<16x384xbf16>
    %272 = arith.extf %271 : vector<16x384xbf16> to vector<16x384xf32>
    %273 = arith.index_cast %268 : i32 to index
    %c0_125 = arith.constant 0 : index
    %c0_126 = arith.constant 0 : index
    %274 = vector.load %arg2[%273, %c0_125, %c0_126] : memref<8x16x384xbf16, #tpu.memory_space<vmem>>, vector<1x16x384xbf16>
    %275 = vector.shape_cast %274 : vector<1x16x384xbf16> to vector<16x384xbf16>
    %276 = arith.extf %275 : vector<16x384xbf16> to vector<16x384xf32>
    %277 = tpu.concatenate %272, %276 in 0 : vector<16x384xf32>, vector<16x384xf32> -> vector<32x384xf32>
    %c0_127 = arith.constant 0 : index
    %c0_128 = arith.constant 0 : index
    %278 = vector.load %arg6[%c0_127, %c0_128] : memref<32x256xf32, #tpu.memory_space<vmem>>, vector<32x256xf32>
    %279 = arith.truncf %278 : vector<32x256xf32> to vector<32x256xbf16>
    %c0_129 = arith.constant 0 : index
    %c0_130 = arith.constant 0 : index
    %280 = vector.load %arg3[%c0_129, %c0_130] : memref<256x384xbf16, #tpu.memory_space<vmem>>, vector<256x384xbf16>
    %cst_131 = arith.constant dense<0.000000e+00> : vector<32x384xf32>
    %281 = tpu.matmul %279, %280, %cst_131 {dimension_numbers = #tpu.dot_dimension_numbers<[1], [0], [0], [1], [0, 0, 1, 1], [], []>} : vector<32x256xbf16>, vector<256x384xbf16>, vector<32x384xf32> -> vector<32x384xf32>
    %282 = arith.addf %277, %281 : vector<32x384xf32>
    %283 = vector.extract_strided_slice %282 {offsets = [0, 0], sizes = [32, 128], strides = [1, 1]} : vector<32x384xf32> to vector<32x128xf32>
    %284 = arith.negf %283 : vector<32x128xf32>
    %285 = math.exp %284 : vector<32x128xf32>
    %cst_132 = arith.constant 1.000000e+00 : f32
    %286 = vector.broadcast %cst_132 : f32 to vector<32x128xf32>
    %287 = arith.addf %286, %285 : vector<32x128xf32>
    %288 = arith.divf %286, %287 : vector<32x128xf32>
    %289 = vector.extract_strided_slice %282 {offsets = [0, 128], sizes = [32, 128], strides = [1, 1]} : vector<32x384xf32> to vector<32x128xf32>
    %290 = arith.negf %289 : vector<32x128xf32>
    %291 = math.exp %290 : vector<32x128xf32>
    %cst_133 = arith.constant 1.000000e+00 : f32
    %292 = vector.broadcast %cst_133 : f32 to vector<32x128xf32>
    %293 = arith.addf %292, %291 : vector<32x128xf32>
    %294 = arith.divf %292, %293 : vector<32x128xf32>
    %295 = vector.extract_strided_slice %282 {offsets = [0, 256], sizes = [32, 128], strides = [1, 1]} : vector<32x384xf32> to vector<32x128xf32>
    %296 = math.tanh %295 : vector<32x128xf32>
    %cst_134 = arith.constant 1.000000e+00 : f32
    %297 = vector.broadcast %cst_134 : f32 to vector<32x128xf32>
    %298 = arith.subf %297, %288 : vector<32x128xf32>
    %c0_135 = arith.constant 0 : index
    %c0_136 = arith.constant 0 : index
    %299 = vector.load %arg7[%c0_135, %c0_136] : memref<32x128xf32, #tpu.memory_space<vmem>>, vector<32x128xf32>
    %300 = arith.mulf %298, %299 : vector<32x128xf32>
    %301 = arith.mulf %288, %296 : vector<32x128xf32>
    %302 = arith.addf %300, %301 : vector<32x128xf32>
    %303 = math.tanh %302 : vector<32x128xf32>
    %304 = arith.mulf %294, %303 : vector<32x128xf32>
    %c0_137 = arith.constant 0 : index
    %c0_138 = arith.constant 0 : index
    %305 = vector.load %arg7[%c0_137, %c0_138] : memref<32x128xf32, #tpu.memory_space<vmem>>, vector<32x128xf32>
    tpu.vector_store %arg7[%c0_137, %c0_138], %302 {strides = array<i32>} : memref<32x128xf32, #tpu.memory_space<vmem>>, vector<32x128xf32>,
    %306 = vector.extract_strided_slice %304 {offsets = [0, 0], sizes = [16, 128], strides = [1, 1]} : vector<32x128xf32> to vector<16x128xf32>
    %c0_139 = arith.constant 0 : index
    %c0_140 = arith.constant 0 : index
    %307 = vector.load %arg6[%c0_139, %c0_140] : memref<32x256xf32, #tpu.memory_space<vmem>>, vector<16x128xf32>
    tpu.vector_store %arg6[%c0_139, %c0_140], %306 {strides = array<i32>} : memref<32x256xf32, #tpu.memory_space<vmem>>, vector<16x128xf32>,
    %308 = vector.extract_strided_slice %304 {offsets = [16, 0], sizes = [16, 128], strides = [1, 1]} : vector<32x128xf32> to vector<16x128xf32>
    %c16_141 = arith.constant 16 : index
    %c128_142 = arith.constant 128 : index
    %309 = vector.load %arg6[%c16_141, %c128_142] : memref<32x256xf32, #tpu.memory_space<vmem>>, vector<16x128xf32>
    tpu.vector_store %arg6[%c16_141, %c128_142], %308 {strides = array<i32>} : memref<32x256xf32, #tpu.memory_space<vmem>>, vector<16x128xf32>,
    %310 = arith.truncf %304 : vector<32x128xf32> to vector<32x128xbf16>
    %311 = vector.extract_strided_slice %310 {offsets = [0, 0], sizes = [16, 128], strides = [1, 1]} : vector<32x128xbf16> to vector<16x128xbf16>
    %312 = arith.index_cast %c5_i32 : i32 to index
    %c0_143 = arith.constant 0 : index
    %c0_144 = arith.constant 0 : index
    %313 = vector.load %arg4[%312, %c0_143, %c0_144] : memref<8x16x128xbf16, #tpu.memory_space<vmem>>, vector<1x16x128xbf16>
    %314 = vector.shape_cast %313 : vector<1x16x128xbf16> to vector<16x128xbf16>
    %315 = vector.shape_cast %311 : vector<16x128xbf16> to vector<1x16x128xbf16>
    tpu.vector_store %arg4[%312, %c0_143, %c0_144], %315 {strides = array<i32>} : memref<8x16x128xbf16, #tpu.memory_space<vmem>>, vector<1x16x128xbf16>,
    %316 = vector.extract_strided_slice %310 {offsets = [16, 0], sizes = [16, 128], strides = [1, 1]} : vector<32x128xbf16> to vector<16x128xbf16>
    %317 = arith.index_cast %268 : i32 to index
    %c0_145 = arith.constant 0 : index
    %c0_146 = arith.constant 0 : index
    %318 = vector.load %arg5[%317, %c0_145, %c0_146] : memref<8x16x128xbf16, #tpu.memory_space<vmem>>, vector<1x16x128xbf16>
    %319 = vector.shape_cast %318 : vector<1x16x128xbf16> to vector<16x128xbf16>
    %320 = vector.shape_cast %316 : vector<16x128xbf16> to vector<1x16x128xbf16>
    tpu.vector_store %arg5[%317, %c0_145, %c0_146], %320 {strides = array<i32>} : memref<8x16x128xbf16, #tpu.memory_space<vmem>>, vector<1x16x128xbf16>,
    %c6_i32 = arith.constant 6 : i32
    %c7_i32_147 = arith.constant 7 : i32
    %321 = arith.subi %c7_i32_147, %c6_i32 : i32
    %322 = arith.index_cast %c6_i32 : i32 to index
    %c0_148 = arith.constant 0 : index
    %c0_149 = arith.constant 0 : index
    %323 = vector.load %arg1[%322, %c0_148, %c0_149] : memref<8x16x384xbf16, #tpu.memory_space<vmem>>, vector<1x16x384xbf16>
    %324 = vector.shape_cast %323 : vector<1x16x384xbf16> to vector<16x384xbf16>
    %325 = arith.extf %324 : vector<16x384xbf16> to vector<16x384xf32>
    %326 = arith.index_cast %321 : i32 to index
    %c0_150 = arith.constant 0 : index
    %c0_151 = arith.constant 0 : index
    %327 = vector.load %arg2[%326, %c0_150, %c0_151] : memref<8x16x384xbf16, #tpu.memory_space<vmem>>, vector<1x16x384xbf16>
    %328 = vector.shape_cast %327 : vector<1x16x384xbf16> to vector<16x384xbf16>
    %329 = arith.extf %328 : vector<16x384xbf16> to vector<16x384xf32>
    %330 = tpu.concatenate %325, %329 in 0 : vector<16x384xf32>, vector<16x384xf32> -> vector<32x384xf32>
    %c0_152 = arith.constant 0 : index
    %c0_153 = arith.constant 0 : index
    %331 = vector.load %arg6[%c0_152, %c0_153] : memref<32x256xf32, #tpu.memory_space<vmem>>, vector<32x256xf32>
    %332 = arith.truncf %331 : vector<32x256xf32> to vector<32x256xbf16>
    %c0_154 = arith.constant 0 : index
    %c0_155 = arith.constant 0 : index
    %333 = vector.load %arg3[%c0_154, %c0_155] : memref<256x384xbf16, #tpu.memory_space<vmem>>, vector<256x384xbf16>
    %cst_156 = arith.constant dense<0.000000e+00> : vector<32x384xf32>
    %334 = tpu.matmul %332, %333, %cst_156 {dimension_numbers = #tpu.dot_dimension_numbers<[1], [0], [0], [1], [0, 0, 1, 1], [], []>} : vector<32x256xbf16>, vector<256x384xbf16>, vector<32x384xf32> -> vector<32x384xf32>
    %335 = arith.addf %330, %334 : vector<32x384xf32>
    %336 = vector.extract_strided_slice %335 {offsets = [0, 0], sizes = [32, 128], strides = [1, 1]} : vector<32x384xf32> to vector<32x128xf32>
    %337 = arith.negf %336 : vector<32x128xf32>
    %338 = math.exp %337 : vector<32x128xf32>
    %cst_157 = arith.constant 1.000000e+00 : f32
    %339 = vector.broadcast %cst_157 : f32 to vector<32x128xf32>
    %340 = arith.addf %339, %338 : vector<32x128xf32>
    %341 = arith.divf %339, %340 : vector<32x128xf32>
    %342 = vector.extract_strided_slice %335 {offsets = [0, 128], sizes = [32, 128], strides = [1, 1]} : vector<32x384xf32> to vector<32x128xf32>
    %343 = arith.negf %342 : vector<32x128xf32>
    %344 = math.exp %343 : vector<32x128xf32>
    %cst_158 = arith.constant 1.000000e+00 : f32
    %345 = vector.broadcast %cst_158 : f32 to vector<32x128xf32>
    %346 = arith.addf %345, %344 : vector<32x128xf32>
    %347 = arith.divf %345, %346 : vector<32x128xf32>
    %348 = vector.extract_strided_slice %335 {offsets = [0, 256], sizes = [32, 128], strides = [1, 1]} : vector<32x384xf32> to vector<32x128xf32>
    %349 = math.tanh %348 : vector<32x128xf32>
    %cst_159 = arith.constant 1.000000e+00 : f32
    %350 = vector.broadcast %cst_159 : f32 to vector<32x128xf32>
    %351 = arith.subf %350, %341 : vector<32x128xf32>
    %c0_160 = arith.constant 0 : index
    %c0_161 = arith.constant 0 : index
    %352 = vector.load %arg7[%c0_160, %c0_161] : memref<32x128xf32, #tpu.memory_space<vmem>>, vector<32x128xf32>
    %353 = arith.mulf %351, %352 : vector<32x128xf32>
    %354 = arith.mulf %341, %349 : vector<32x128xf32>
    %355 = arith.addf %353, %354 : vector<32x128xf32>
    %356 = math.tanh %355 : vector<32x128xf32>
    %357 = arith.mulf %347, %356 : vector<32x128xf32>
    %c0_162 = arith.constant 0 : index
    %c0_163 = arith.constant 0 : index
    %358 = vector.load %arg7[%c0_162, %c0_163] : memref<32x128xf32, #tpu.memory_space<vmem>>, vector<32x128xf32>
    tpu.vector_store %arg7[%c0_162, %c0_163], %355 {strides = array<i32>} : memref<32x128xf32, #tpu.memory_space<vmem>>, vector<32x128xf32>,
    %359 = vector.extract_strided_slice %357 {offsets = [0, 0], sizes = [16, 128], strides = [1, 1]} : vector<32x128xf32> to vector<16x128xf32>
    %c0_164 = arith.constant 0 : index
    %c0_165 = arith.constant 0 : index
    %360 = vector.load %arg6[%c0_164, %c0_165] : memref<32x256xf32, #tpu.memory_space<vmem>>, vector<16x128xf32>
    tpu.vector_store %arg6[%c0_164, %c0_165], %359 {strides = array<i32>} : memref<32x256xf32, #tpu.memory_space<vmem>>, vector<16x128xf32>,
    %361 = vector.extract_strided_slice %357 {offsets = [16, 0], sizes = [16, 128], strides = [1, 1]} : vector<32x128xf32> to vector<16x128xf32>
    %c16_166 = arith.constant 16 : index
    %c128_167 = arith.constant 128 : index
    %362 = vector.load %arg6[%c16_166, %c128_167] : memref<32x256xf32, #tpu.memory_space<vmem>>, vector<16x128xf32>
    tpu.vector_store %arg6[%c16_166, %c128_167], %361 {strides = array<i32>} : memref<32x256xf32, #tpu.memory_space<vmem>>, vector<16x128xf32>,
    %363 = arith.truncf %357 : vector<32x128xf32> to vector<32x128xbf16>
    %364 = vector.extract_strided_slice %363 {offsets = [0, 0], sizes = [16, 128], strides = [1, 1]} : vector<32x128xbf16> to vector<16x128xbf16>
    %365 = arith.index_cast %c6_i32 : i32 to index
    %c0_168 = arith.constant 0 : index
    %c0_169 = arith.constant 0 : index
    %366 = vector.load %arg4[%365, %c0_168, %c0_169] : memref<8x16x128xbf16, #tpu.memory_space<vmem>>, vector<1x16x128xbf16>
    %367 = vector.shape_cast %366 : vector<1x16x128xbf16> to vector<16x128xbf16>
    %368 = vector.shape_cast %364 : vector<16x128xbf16> to vector<1x16x128xbf16>
    tpu.vector_store %arg4[%365, %c0_168, %c0_169], %368 {strides = array<i32>} : memref<8x16x128xbf16, #tpu.memory_space<vmem>>, vector<1x16x128xbf16>,
    %369 = vector.extract_strided_slice %363 {offsets = [16, 0], sizes = [16, 128], strides = [1, 1]} : vector<32x128xbf16> to vector<16x128xbf16>
    %370 = arith.index_cast %321 : i32 to index
    %c0_170 = arith.constant 0 : index
    %c0_171 = arith.constant 0 : index
    %371 = vector.load %arg5[%370, %c0_170, %c0_171] : memref<8x16x128xbf16, #tpu.memory_space<vmem>>, vector<1x16x128xbf16>
    %372 = vector.shape_cast %371 : vector<1x16x128xbf16> to vector<16x128xbf16>
    %373 = vector.shape_cast %369 : vector<16x128xbf16> to vector<1x16x128xbf16>
    tpu.vector_store %arg5[%370, %c0_170, %c0_171], %373 {strides = array<i32>} : memref<8x16x128xbf16, #tpu.memory_space<vmem>>, vector<1x16x128xbf16>,
    %c7_i32_172 = arith.constant 7 : i32
    %c7_i32_173 = arith.constant 7 : i32
    %374 = arith.subi %c7_i32_173, %c7_i32_172 : i32
    %375 = arith.index_cast %c7_i32_172 : i32 to index
    %c0_174 = arith.constant 0 : index
    %c0_175 = arith.constant 0 : index
    %376 = vector.load %arg1[%375, %c0_174, %c0_175] : memref<8x16x384xbf16, #tpu.memory_space<vmem>>, vector<1x16x384xbf16>
    %377 = vector.shape_cast %376 : vector<1x16x384xbf16> to vector<16x384xbf16>
    %378 = arith.extf %377 : vector<16x384xbf16> to vector<16x384xf32>
    %379 = arith.index_cast %374 : i32 to index
    %c0_176 = arith.constant 0 : index
    %c0_177 = arith.constant 0 : index
    %380 = vector.load %arg2[%379, %c0_176, %c0_177] : memref<8x16x384xbf16, #tpu.memory_space<vmem>>, vector<1x16x384xbf16>
    %381 = vector.shape_cast %380 : vector<1x16x384xbf16> to vector<16x384xbf16>
    %382 = arith.extf %381 : vector<16x384xbf16> to vector<16x384xf32>
    %383 = tpu.concatenate %378, %382 in 0 : vector<16x384xf32>, vector<16x384xf32> -> vector<32x384xf32>
    %c0_178 = arith.constant 0 : index
    %c0_179 = arith.constant 0 : index
    %384 = vector.load %arg6[%c0_178, %c0_179] : memref<32x256xf32, #tpu.memory_space<vmem>>, vector<32x256xf32>
    %385 = arith.truncf %384 : vector<32x256xf32> to vector<32x256xbf16>
    %c0_180 = arith.constant 0 : index
    %c0_181 = arith.constant 0 : index
    %386 = vector.load %arg3[%c0_180, %c0_181] : memref<256x384xbf16, #tpu.memory_space<vmem>>, vector<256x384xbf16>
    %cst_182 = arith.constant dense<0.000000e+00> : vector<32x384xf32>
    %387 = tpu.matmul %385, %386, %cst_182 {dimension_numbers = #tpu.dot_dimension_numbers<[1], [0], [0], [1], [0, 0, 1, 1], [], []>} : vector<32x256xbf16>, vector<256x384xbf16>, vector<32x384xf32> -> vector<32x384xf32>
    %388 = arith.addf %383, %387 : vector<32x384xf32>
    %389 = vector.extract_strided_slice %388 {offsets = [0, 0], sizes = [32, 128], strides = [1, 1]} : vector<32x384xf32> to vector<32x128xf32>
    %390 = arith.negf %389 : vector<32x128xf32>
    %391 = math.exp %390 : vector<32x128xf32>
    %cst_183 = arith.constant 1.000000e+00 : f32
    %392 = vector.broadcast %cst_183 : f32 to vector<32x128xf32>
    %393 = arith.addf %392, %391 : vector<32x128xf32>
    %394 = arith.divf %392, %393 : vector<32x128xf32>
    %395 = vector.extract_strided_slice %388 {offsets = [0, 128], sizes = [32, 128], strides = [1, 1]} : vector<32x384xf32> to vector<32x128xf32>
    %396 = arith.negf %395 : vector<32x128xf32>
    %397 = math.exp %396 : vector<32x128xf32>
    %cst_184 = arith.constant 1.000000e+00 : f32
    %398 = vector.broadcast %cst_184 : f32 to vector<32x128xf32>
    %399 = arith.addf %398, %397 : vector<32x128xf32>
    %400 = arith.divf %398, %399 : vector<32x128xf32>
    %401 = vector.extract_strided_slice %388 {offsets = [0, 256], sizes = [32, 128], strides = [1, 1]} : vector<32x384xf32> to vector<32x128xf32>
    %402 = math.tanh %401 : vector<32x128xf32>
    %cst_185 = arith.constant 1.000000e+00 : f32
    %403 = vector.broadcast %cst_185 : f32 to vector<32x128xf32>
    %404 = arith.subf %403, %394 : vector<32x128xf32>
    %c0_186 = arith.constant 0 : index
    %c0_187 = arith.constant 0 : index
    %405 = vector.load %arg7[%c0_186, %c0_187] : memref<32x128xf32, #tpu.memory_space<vmem>>, vector<32x128xf32>
    %406 = arith.mulf %404, %405 : vector<32x128xf32>
    %407 = arith.mulf %394, %402 : vector<32x128xf32>
    %408 = arith.addf %406, %407 : vector<32x128xf32>
    %409 = math.tanh %408 : vector<32x128xf32>
    %410 = arith.mulf %400, %409 : vector<32x128xf32>
    %c0_188 = arith.constant 0 : index
    %c0_189 = arith.constant 0 : index
    %411 = vector.load %arg7[%c0_188, %c0_189] : memref<32x128xf32, #tpu.memory_space<vmem>>, vector<32x128xf32>
    tpu.vector_store %arg7[%c0_188, %c0_189], %408 {strides = array<i32>} : memref<32x128xf32, #tpu.memory_space<vmem>>, vector<32x128xf32>,
    %412 = vector.extract_strided_slice %410 {offsets = [0, 0], sizes = [16, 128], strides = [1, 1]} : vector<32x128xf32> to vector<16x128xf32>
    %c0_190 = arith.constant 0 : index
    %c0_191 = arith.constant 0 : index
    %413 = vector.load %arg6[%c0_190, %c0_191] : memref<32x256xf32, #tpu.memory_space<vmem>>, vector<16x128xf32>
    tpu.vector_store %arg6[%c0_190, %c0_191], %412 {strides = array<i32>} : memref<32x256xf32, #tpu.memory_space<vmem>>, vector<16x128xf32>,
    %414 = vector.extract_strided_slice %410 {offsets = [16, 0], sizes = [16, 128], strides = [1, 1]} : vector<32x128xf32> to vector<16x128xf32>
    %c16_192 = arith.constant 16 : index
    %c128_193 = arith.constant 128 : index
    %415 = vector.load %arg6[%c16_192, %c128_193] : memref<32x256xf32, #tpu.memory_space<vmem>>, vector<16x128xf32>
    tpu.vector_store %arg6[%c16_192, %c128_193], %414 {strides = array<i32>} : memref<32x256xf32, #tpu.memory_space<vmem>>, vector<16x128xf32>,
    %416 = arith.truncf %410 : vector<32x128xf32> to vector<32x128xbf16>
    %417 = vector.extract_strided_slice %416 {offsets = [0, 0], sizes = [16, 128], strides = [1, 1]} : vector<32x128xbf16> to vector<16x128xbf16>
    %418 = arith.index_cast %c7_i32_172 : i32 to index
    %c0_194 = arith.constant 0 : index
    %c0_195 = arith.constant 0 : index
    %419 = vector.load %arg4[%418, %c0_194, %c0_195] : memref<8x16x128xbf16, #tpu.memory_space<vmem>>, vector<1x16x128xbf16>
    %420 = vector.shape_cast %419 : vector<1x16x128xbf16> to vector<16x128xbf16>
    %421 = vector.shape_cast %417 : vector<16x128xbf16> to vector<1x16x128xbf16>
    tpu.vector_store %arg4[%418, %c0_194, %c0_195], %421 {strides = array<i32>} : memref<8x16x128xbf16, #tpu.memory_space<vmem>>, vector<1x16x128xbf16>,
    %422 = vector.extract_strided_slice %416 {offsets = [16, 0], sizes = [16, 128], strides = [1, 1]} : vector<32x128xbf16> to vector<16x128xbf16>
    %423 = arith.index_cast %374 : i32 to index
    %c0_196 = arith.constant 0 : index
    %c0_197 = arith.constant 0 : index
    %424 = vector.load %arg5[%423, %c0_196, %c0_197] : memref<8x16x128xbf16, #tpu.memory_space<vmem>>, vector<1x16x128xbf16>
    %425 = vector.shape_cast %424 : vector<1x16x128xbf16> to vector<16x128xbf16>
    %426 = vector.shape_cast %422 : vector<16x128xbf16> to vector<1x16x128xbf16>
    tpu.vector_store %arg5[%423, %c0_196, %c0_197], %426 {strides = array<i32>} : memref<8x16x128xbf16, #tpu.memory_space<vmem>>, vector<1x16x128xbf16>,
    %c8_i32 = arith.constant 8 : i32
    return
  }
  func.func @transform_0(%arg0: i32) -> (i32, i32, i32) {
    %c0_i32 = arith.constant 0 : i32
    %c0_i32_0 = arith.constant 0 : i32
    %c0_i32_1 = arith.constant 0 : i32
    return %arg0, %c0_i32, %c0_i32_0 : i32, i32, i32
  }
  func.func @transform_1(%arg0: i32) -> (i32, i32, i32) {
    %c0_i32 = arith.constant 0 : i32
    %0 = arith.subi %c0_i32, %arg0 : i32
    %c0_i32_0 = arith.constant 0 : i32
    %c0_i32_1 = arith.constant 0 : i32
    %c0_i32_2 = arith.constant 0 : i32
    return %0, %c0_i32_0, %c0_i32_1 : i32, i32, i32
  }
  func.func @transform_2(%arg0: i32) -> (i32, i32) {
    %c0_i32 = arith.constant 0 : i32
    %c0_i32_0 = arith.constant 0 : i32
    %c0_i32_1 = arith.constant 0 : i32
    return %c0_i32, %c0_i32_0 : i32, i32
  }
  func.func @transform_3(%arg0: i32) -> (i32, i32, i32) {
    %c0_i32 = arith.constant 0 : i32
    %c0_i32_0 = arith.constant 0 : i32
    %c0_i32_1 = arith.constant 0 : i32
    return %arg0, %c0_i32, %c0_i32_0 : i32, i32, i32
  }
  func.func @transform_4(%arg0: i32) -> (i32, i32, i32) {
    %c0_i32 = arith.constant 0 : i32
    %0 = arith.subi %c0_i32, %arg0 : i32
    %c0_i32_0 = arith.constant 0 : i32
    %c0_i32_1 = arith.constant 0 : i32
    %c0_i32_2 = arith.constant 0 : i32
    return %0, %c0_i32_0, %c0_i32_1 : i32, i32, i32
  }
}

module attributes {stable_mosaic.version = 11 : i64} {
  func.func @_decode_kernel(%arg0: i32, %arg1: memref<128x128xbf16, #tpu.memory_space<vmem>>, %arg2: memref<128x128xbf16, #tpu.memory_space<vmem>>, %arg3: memref<256x128xbf16, #tpu.memory_space<vmem>>, %arg4: memref<1x128xf32, #tpu.memory_space<vmem>>, %arg5: memref<128x1xi32, #tpu.memory_space<vmem>>, %arg6: memref<128x1xi32, #tpu.memory_space<vmem>>) attributes {dimension_semantics = [#tpu.dimension_semantics<parallel>], iteration_bounds = array<i64: 1>, scalar_prefetch = 0 : i64, scratch_operands = 0 : i64, tpu.core_type = #tpu.core_type<tc>, window_params = [{transform_indices = @transform_0, window_bounds = array<i64: 128, 128>}, {transform_indices = @transform_1, window_bounds = array<i64: 128, 128>}, {pipeline_mode = #tpu.pipeline_mode<synchronous>, transform_indices = @transform_2, window_bounds = array<i64: 256, 128>}, {pipeline_mode = #tpu.pipeline_mode<synchronous>, transform_indices = @transform_3, window_bounds = array<i64: 1, 128>}, {transform_indices = @transform_4, window_bounds = array<i64: 128, 1>}, {transform_indices = @transform_5, window_bounds = array<i64: 128, 1>}]} {
    %c0 = arith.constant 0 : index
    %c0_0 = arith.constant 0 : index
    %0 = vector.load %arg1[%c0, %c0_0] : memref<128x128xbf16, #tpu.memory_space<vmem>>, vector<128x128xbf16>
    %c0_1 = arith.constant 0 : index
    %c0_2 = arith.constant 0 : index
    %1 = vector.load %arg2[%c0_1, %c0_2] : memref<128x128xbf16, #tpu.memory_space<vmem>>, vector<128x128xbf16>
    %2 = tpu.concatenate %0, %1 in 1 : vector<128x128xbf16>, vector<128x128xbf16> -> vector<128x256xbf16>
    %c0_3 = arith.constant 0 : index
    %c0_4 = arith.constant 0 : index
    %3 = vector.load %arg3[%c0_3, %c0_4] : memref<256x128xbf16, #tpu.memory_space<vmem>>, vector<256x128xbf16>
    %cst = arith.constant dense<0.000000e+00> : vector<128x128xf32>
    %4 = tpu.matmul %2, %3, %cst {dimension_numbers = #tpu.dot_dimension_numbers<[1], [0], [0], [1], [0, 0, 1, 1], [], []>} : vector<128x256xbf16>, vector<256x128xbf16>, vector<128x128xf32> -> vector<128x128xf32>
    %c0_5 = arith.constant 0 : index
    %c0_6 = arith.constant 0 : index
    %5 = vector.load %arg4[%c0_5, %c0_6] : memref<1x128xf32, #tpu.memory_space<vmem>>, vector<1x128xf32>
    %6 = vector.broadcast %5 : vector<1x128xf32> to vector<128x128xf32>
    %7 = arith.addf %4, %6 : vector<128x128xf32>
    %cst_7 = arith.constant dense<0xFF800000> : vector<128xf32>
    %8 = vector.multi_reduction <maximumf>, %7, %cst_7 [1] : vector<128x128xf32> to vector<128xf32>
    %9 = vector.shape_cast %8 : vector<128xf32> to vector<128x1xf32>
    %10 = tpu.iota {dimensions = array<i32: 1>} : vector<128x128xi32>
    %11 = vector.broadcast %9 : vector<128x1xf32> to vector<128x128xf32>
    %12 = arith.cmpf oge, %7, %11 : vector<128x128xf32>
    %c128_i32 = arith.constant 128 : i32
    %13 = vector.broadcast %c128_i32 : i32 to vector<128x128xi32>
    %14 = arith.select %12, %10, %13 : vector<128x128xi1>, vector<128x128xi32>
    %cst_8 = arith.constant dense<2147483647> : vector<128xi32>
    %15 = vector.multi_reduction <minsi>, %14, %cst_8 [1] : vector<128x128xi32> to vector<128xi32>
    %16 = vector.shape_cast %15 : vector<128xi32> to vector<128x1xi32>
    %c0_9 = arith.constant 0 : index
    %c0_10 = arith.constant 0 : index
    %17 = vector.load %arg5[%c0_9, %c0_10] : memref<128x1xi32, #tpu.memory_space<vmem>>, vector<128x1xi32>
    %18 = arith.muli %17, %16 : vector<128x1xi32>
    %c0_11 = arith.constant 0 : index
    %c0_12 = arith.constant 0 : index
    %19 = vector.load %arg6[%c0_11, %c0_12] : memref<128x1xi32, #tpu.memory_space<vmem>>, vector<128x1xi32>
    tpu.vector_store %arg6[%c0_11, %c0_12], %18 {strides = array<i32>} : memref<128x1xi32, #tpu.memory_space<vmem>>, vector<128x1xi32>,
    return
  }
  func.func @transform_0(%arg0: i32) -> (i32, i32) {
    %c0_i32 = arith.constant 0 : i32
    %c0_i32_0 = arith.constant 0 : i32
    return %arg0, %c0_i32 : i32, i32
  }
  func.func @transform_1(%arg0: i32) -> (i32, i32) {
    %c0_i32 = arith.constant 0 : i32
    %c0_i32_0 = arith.constant 0 : i32
    return %arg0, %c0_i32 : i32, i32
  }
  func.func @transform_2(%arg0: i32) -> (i32, i32) {
    %c0_i32 = arith.constant 0 : i32
    %c0_i32_0 = arith.constant 0 : i32
    %c0_i32_1 = arith.constant 0 : i32
    return %c0_i32, %c0_i32_0 : i32, i32
  }
  func.func @transform_3(%arg0: i32) -> (i32, i32) {
    %c0_i32 = arith.constant 0 : i32
    %c0_i32_0 = arith.constant 0 : i32
    %c0_i32_1 = arith.constant 0 : i32
    return %c0_i32, %c0_i32_0 : i32, i32
  }
  func.func @transform_4(%arg0: i32) -> (i32, i32) {
    %c0_i32 = arith.constant 0 : i32
    %c0_i32_0 = arith.constant 0 : i32
    return %arg0, %c0_i32 : i32, i32
  }
  func.func @transform_5(%arg0: i32) -> (i32, i32) {
    %c0_i32 = arith.constant 0 : i32
    %c0_i32_0 = arith.constant 0 : i32
    return %arg0, %c0_i32 : i32, i32
  }
}

</mosaic_0001>

<llo_original>
// kernel: bilstm_forward.3
$region0: #{bilstm_forward.3}
  #allocation0 [shape = 'u32[]', space=smem, size = 0x4, offset = 0x4, fixed_abs, tag = 'smem constant byte address 0x4 - core index']
  #allocation1 [shape = 'u32[144,128]{1,0:T(1,128)}', space=vmem, size = 0x12000, scoped, tag = 'internal scratch']
  %s0 = inlined_call_operand.vmem [shape: bf16[128,128], index: 0, kind: input, shape index: {}]
  %s1 = inlined_call_operand.vmem [shape: bf16[128,768], index: 1, kind: input, shape index: {}]
  %s2 = inlined_call_operand.vmem [shape: f32[1,768], index: 2, kind: input, shape index: {}]
  %s3 = inlined_call_operand.vmem [shape: bf16[128,384], index: 3, kind: output, shape index: {0}]
  %s4 = inlined_call_operand.vmem [shape: bf16[128,384], index: 4, kind: output, shape index: {1}]
  %5 = xla_tuple %s3, %s4
  %s6 = sld [smem:[#allocation0]]
  $region30: #{bilstm_forward.3} parent=0
    _
  %s8 = ssub.s32 1, %s6
  %s9 = scalar_select 0, %s8, %s6
  // Predicated region
  $region2: #{bilstm_forward.3} parent=0 // pred_check
    _
  $region3: #{bilstm_forward.3} parent=0 // pred_check_branch
    %11 = sbr.rel (0) target = $region5
  $region4: #{bilstm_forward.3} parent=0 // pred_region
    _
  $region5: #{bilstm_forward.3} parent=0 // pred_fallthru
    _
  // Predicated region
  $region6: #{bilstm_forward.3} parent=0 // pred_check
    _
  $region7: #{bilstm_forward.3} parent=0 // pred_check_branch
    %13 = sbr.rel (0) target = $region9
  $region8: #{bilstm_forward.3} parent=0 // pred_region
    _
  $region9: #{bilstm_forward.3} parent=0 // pred_fallthru
    _
  // Predicated region
  $region10: #{bilstm_forward.3} parent=0 // pred_check
    _
  $region11: #{bilstm_forward.3} parent=0 // pred_check_branch
    %15 = sbr.rel (0) target = $region13
  $region12: #{bilstm_forward.3} parent=0 // pred_region
    _
  $region13: #{bilstm_forward.3} parent=0 // pred_fallthru
    _
  %v17 = vld [vmem:[%s0] sm:$0xf]
  %v18 = vld [vmem:[%s0 + $0x4] sm:$0xf]
  %v19 = vld [vmem:[%s0 + $0x8] sm:$0xf]
  %v20 = vld [vmem:[%s0 + $0xc] sm:$0xf]
  %v21 = vld [vmem:[%s0 + $0x10] sm:$0xf]
  %v22 = vld [vmem:[%s0 + $0x14] sm:$0xf]
  %v23 = vld [vmem:[%s0 + $0x18] sm:$0xf]
  %v24 = vld [vmem:[%s0 + $0x1c] sm:$0xf]
  %v25 = vld [vmem:[%s0 + $0x20] sm:$0xf]
  %v26 = vld [vmem:[%s0 + $0x24] sm:$0xf]
  %v27 = vld [vmem:[%s0 + $0x28] sm:$0xf]
  %v28 = vld [vmem:[%s0 + $0x2c] sm:$0xf]
  %v29 = vld [vmem:[%s0 + $0x30] sm:$0xf]
  %v30 = vld [vmem:[%s0 + $0x34] sm:$0xf]
  %v31 = vld [vmem:[%s0 + $0x38] sm:$0xf]
  %v32 = vld [vmem:[%s0 + $0x3c] sm:$0xf]
  %v33 = vld [vmem:[%s1] sm:$0xff]
  %v34 = vld [vmem:[%s1 + $0x8] sm:$0xff]
  %v35 = vld [vmem:[%s1 + $0x10] sm:$0xff]
  %v36 = vld [vmem:[%s1 + $0x18] sm:$0xff]
  %v37 = vld [vmem:[%s1 + $0x20] sm:$0xff]
  %v38 = vld [vmem:[%s1 + $0x28] sm:$0xff]
  %v39 = vld [vmem:[%s1 + $0x30] sm:$0xff]
  %v40 = vld [vmem:[%s1 + $0x38] sm:$0xff]
  %v41 = vld [vmem:[%s1 + $0x40] sm:$0xff]
  %v42 = vld [vmem:[%s1 + $0x48] sm:$0xff]
  %v43 = vld [vmem:[%s1 + $0x50] sm:$0xff]
  %v44 = vld [vmem:[%s1 + $0x58] sm:$0xff]
  %v45 = vld [vmem:[%s1 + $0x60] sm:$0xff]
  %v46 = vld [vmem:[%s1 + $0x68] sm:$0xff]
  %v47 = vld [vmem:[%s1 + $0x70] sm:$0xff]
  %v48 = vld [vmem:[%s1 + $0x78] sm:$0xff]
  %v49 = vld [vmem:[%s1 + $0x80] sm:$0xff]
  %v50 = vld [vmem:[%s1 + $0x88] sm:$0xff]
  %v51 = vld [vmem:[%s1 + $0x90] sm:$0xff]
  %v52 = vld [vmem:[%s1 + $0x98] sm:$0xff]
  %v53 = vld [vmem:[%s1 + $0xa0] sm:$0xff]
  %v54 = vld [vmem:[%s1 + $0xa8] sm:$0xff]
  %v55 = vld [vmem:[%s1 + $0xb0] sm:$0xff]
  %v56 = vld [vmem:[%s1 + $0xb8] sm:$0xff]
  %v57 = vld [vmem:[%s1 + $0xc0] sm:$0xff]
  %v58 = vld [vmem:[%s1 + $0xc8] sm:$0xff]
  %v59 = vld [vmem:[%s1 + $0xd0] sm:$0xff]
  %v60 = vld [vmem:[%s1 + $0xd8] sm:$0xff]
  %v61 = vld [vmem:[%s1 + $0xe0] sm:$0xff]
  %v62 = vld [vmem:[%s1 + $0xe8] sm:$0xff]
  %v63 = vld [vmem:[%s1 + $0xf0] sm:$0xff]
  %v64 = vld [vmem:[%s1 + $0xf8] sm:$0xff]
  %v65 = vld [vmem:[%s1 + $0x100] sm:$0xff]
  %v66 = vld [vmem:[%s1 + $0x108] sm:$0xff]
  %v67 = vld [vmem:[%s1 + $0x110] sm:$0xff]
  %v68 = vld [vmem:[%s1 + $0x118] sm:$0xff]
  %v69 = vld [vmem:[%s1 + $0x120] sm:$0xff]
  %v70 = vld [vmem:[%s1 + $0x128] sm:$0xff]
  %v71 = vld [vmem:[%s1 + $0x130] sm:$0xff]
  %v72 = vld [vmem:[%s1 + $0x138] sm:$0xff]
  %v73 = vld [vmem:[%s1 + $0x140] sm:$0xff]
  %v74 = vld [vmem:[%s1 + $0x148] sm:$0xff]
  %v75 = vld [vmem:[%s1 + $0x150] sm:$0xff]
  %v76 = vld [vmem:[%s1 + $0x158] sm:$0xff]
  %v77 = vld [vmem:[%s1 + $0x160] sm:$0xff]
  %v78 = vld [vmem:[%s1 + $0x168] sm:$0xff]
  %v79 = vld [vmem:[%s1 + $0x170] sm:$0xff]
  %v80 = vld [vmem:[%s1 + $0x178] sm:$0xff]
  %s81 = smul.u32 0, 128
  %v82 = vlaneseq
  %v83 = vshrl.u32 %v82, 7
  %v84 = vadd.s32 %v83, 8
  %v85 = vadd.s32 %v83, 16
  %v86 = vadd.s32 %v83, 24
  %v87 = vadd.s32 %v83, 32
  %v88 = vadd.s32 %v83, 40
  %v89 = vadd.s32 %v83, 48
  %v90 = vadd.s32 %v83, 56
  %v91 = vadd.s32 %v83, 64
  %v92 = vadd.s32 %v83, 72
  %v93 = vadd.s32 %v83, 80
  %v94 = vadd.s32 %v83, 88
  %v95 = vadd.s32 %v83, 96
  %v96 = vadd.s32 %v83, 104
  %v97 = vadd.s32 %v83, 112
  %v98 = vadd.s32 %v83, 120
  %v99 = vstv %s81
  %v100 = vadd.s32 %v99, %v83
  %v101 = vadd.s32 %v99, %v84
  %v102 = vadd.s32 %v99, %v85
  %v103 = vadd.s32 %v99, %v86
  %v104 = vadd.s32 %v99, %v87
  %v105 = vadd.s32 %v99, %v88
  %v106 = vadd.s32 %v99, %v89
  %v107 = vadd.s32 %v99, %v90
  %v108 = vadd.s32 %v99, %v91
  %v109 = vadd.s32 %v99, %v92
  %v110 = vadd.s32 %v99, %v93
  %v111 = vadd.s32 %v99, %v94
  %v112 = vadd.s32 %v99, %v95
  %v113 = vadd.s32 %v99, %v96
  %v114 = vadd.s32 %v99, %v97
  %v115 = vadd.s32 %v99, %v98
  %vm116 = vcmp.lt.s32.totalorder %v100, 128
  %vm117 = vcmp.lt.s32.totalorder %v101, 128
  %vm118 = vcmp.lt.s32.totalorder %v102, 128
  %vm119 = vcmp.lt.s32.totalorder %v103, 128
  %vm120 = vcmp.lt.s32.totalorder %v104, 128
  %vm121 = vcmp.lt.s32.totalorder %v105, 128
  %vm122 = vcmp.lt.s32.totalorder %v106, 128
  %vm123 = vcmp.lt.s32.totalorder %v107, 128
  %vm124 = vcmp.lt.s32.totalorder %v108, 128
  %vm125 = vcmp.lt.s32.totalorder %v109, 128
  %vm126 = vcmp.lt.s32.totalorder %v110, 128
  %vm127 = vcmp.lt.s32.totalorder %v111, 128
  %vm128 = vcmp.lt.s32.totalorder %v112, 128
  %vm129 = vcmp.lt.s32.totalorder %v113, 128
  %vm130 = vcmp.lt.s32.totalorder %v114, 128
  %vm131 = vcmp.lt.s32.totalorder %v115, 128
  %v132 = vld [vmem:[%s2] sm:$0x3f]
  %v133 = vsel %vm116, 1, 0
  %v134 = vsel %vm117, 1, 0
  %v135 = vsel %vm118, 1, 0
  %v136 = vsel %vm119, 1, 0
  %v137 = vsel %vm120, 1, 0
  %v138 = vsel %vm121, 1, 0
  %v139 = vsel %vm122, 1, 0
  %v140 = vsel %vm123, 1, 0
  %v141 = vsel %vm124, 1, 0
  %v142 = vsel %vm125, 1, 0
  %v143 = vsel %vm126, 1, 0
  %v144 = vsel %vm127, 1, 0
  %v145 = vsel %vm128, 1, 0
  %v146 = vsel %vm129, 1, 0
  %v147 = vsel %vm130, 1, 0
  %v148 = vsel %vm131, 1, 0
  %vm149 = vcmp.eq.s32.totalorder %v133, 1
  %vm150 = vcmp.eq.s32.totalorder %v134, 1
  %vm151 = vcmp.eq.s32.totalorder %v135, 1
  %vm152 = vcmp.eq.s32.totalorder %v136, 1
  %vm153 = vcmp.eq.s32.totalorder %v137, 1
  %vm154 = vcmp.eq.s32.totalorder %v138, 1
  %vm155 = vcmp.eq.s32.totalorder %v139, 1
  %vm156 = vcmp.eq.s32.totalorder %v140, 1
  %vm157 = vcmp.eq.s32.totalorder %v141, 1
  %vm158 = vcmp.eq.s32.totalorder %v142, 1
  %vm159 = vcmp.eq.s32.totalorder %v143, 1
  %vm160 = vcmp.eq.s32.totalorder %v144, 1
  %vm161 = vcmp.eq.s32.totalorder %v145, 1
  %vm162 = vcmp.eq.s32.totalorder %v146, 1
  %vm163 = vcmp.eq.s32.totalorder %v147, 1
  %vm164 = vcmp.eq.s32.totalorder %v148, 1
  %v166 = vlaneseq
  %v167 = vshrl.u32 %v166, 7
  %v168 = vsub.s32 0, %v167
  %v169 = vrot.slane %v132, %v168
  %v170 = vlaneseq
  %v171 = vshrl.u32 %v170, 7
  %v172 = vsub.s32 1, %v171
  %v173 = vrot.slane %v132, %v172
  %v174 = vlaneseq
  %v175 = vshrl.u32 %v174, 7
  %v176 = vsub.s32 2, %v175
  %v177 = vrot.slane %v132, %v176
  %v178 = vlaneseq
  %v179 = vshrl.u32 %v178, 7
  %v180 = vsub.s32 3, %v179
  %v181 = vrot.slane %v132, %v180
  %v182 = vlaneseq
  %v183 = vshrl.u32 %v182, 7
  %v184 = vsub.s32 4, %v183
  %v185 = vrot.slane %v132, %v184
  %v186 = vlaneseq
  %v187 = vshrl.u32 %v186, 7
  %v188 = vsub.s32 5, %v187
  %v189 = vrot.slane %v132, %v188
  %v196 = vsel %vm149, %v169, 0.0
  %v197 = vsel %vm149, %v173, 0.0
  %v198 = vsel %vm149, %v177, 0.0
  %v199 = vsel %vm149, %v181, 0.0
  %v200 = vsel %vm149, %v185, 0.0
  %v201 = vsel %vm149, %v189, 0.0
  %v202 = vsel %vm150, %v169, 0.0
  %v203 = vsel %vm150, %v173, 0.0
  %v204 = vsel %vm150, %v177, 0.0
  %v205 = vsel %vm150, %v181, 0.0
  %v206 = vsel %vm150, %v185, 0.0
  %v207 = vsel %vm150, %v189, 0.0
  %v208 = vsel %vm151, %v169, 0.0
  %v209 = vsel %vm151, %v173, 0.0
  %v210 = vsel %vm151, %v177, 0.0
  %v211 = vsel %vm151, %v181, 0.0
  %v212 = vsel %vm151, %v185, 0.0
  %v213 = vsel %vm151, %v189, 0.0
  %v214 = vsel %vm152, %v169, 0.0
  %v215 = vsel %vm152, %v173, 0.0
  %v216 = vsel %vm152, %v177, 0.0
  %v217 = vsel %vm152, %v181, 0.0
  %v218 = vsel %vm152, %v185, 0.0
  %v219 = vsel %vm152, %v189, 0.0
  %v220 = vsel %vm153, %v169, 0.0
  %v221 = vsel %vm153, %v173, 0.0
  %v222 = vsel %vm153, %v177, 0.0
  %v223 = vsel %vm153, %v181, 0.0
  %v224 = vsel %vm153, %v185, 0.0
  %v225 = vsel %vm153, %v189, 0.0
  %v226 = vsel %vm154, %v169, 0.0
  %v227 = vsel %vm154, %v173, 0.0
  %v228 = vsel %vm154, %v177, 0.0
  %v229 = vsel %vm154, %v181, 0.0
  %v230 = vsel %vm154, %v185, 0.0
  %v231 = vsel %vm154, %v189, 0.0
  %v232 = vsel %vm155, %v169, 0.0
  %v233 = vsel %vm155, %v173, 0.0
  %v234 = vsel %vm155, %v177, 0.0
  %v235 = vsel %vm155, %v181, 0.0
  %v236 = vsel %vm155, %v185, 0.0
  %v237 = vsel %vm155, %v189, 0.0
  %v238 = vsel %vm156, %v169, 0.0
  %v239 = vsel %vm156, %v173, 0.0
  %v240 = vsel %vm156, %v177, 0.0
  %v241 = vsel %vm156, %v181, 0.0
  %v242 = vsel %vm156, %v185, 0.0
  %v243 = vsel %vm156, %v189, 0.0
  %v244 = vsel %vm157, %v169, 0.0
  %v245 = vsel %vm157, %v173, 0.0
  %v246 = vsel %vm157, %v177, 0.0
  %v247 = vsel %vm157, %v181, 0.0
  %v248 = vsel %vm157, %v185, 0.0
  %v249 = vsel %vm157, %v189, 0.0
  %v250 = vsel %vm158, %v169, 0.0
  %v251 = vsel %vm158, %v173, 0.0
  %v252 = vsel %vm158, %v177, 0.0
  %v253 = vsel %vm158, %v181, 0.0
  %v254 = vsel %vm158, %v185, 0.0
  %v255 = vsel %vm158, %v189, 0.0
  %v256 = vsel %vm159, %v169, 0.0
  %v257 = vsel %vm159, %v173, 0.0
  %v258 = vsel %vm159, %v177, 0.0
  %v259 = vsel %vm159, %v181, 0.0
  %v260 = vsel %vm159, %v185, 0.0
  %v261 = vsel %vm159, %v189, 0.0
  %v262 = vsel %vm160, %v169, 0.0
  %v263 = vsel %vm160, %v173, 0.0
  %v264 = vsel %vm160, %v177, 0.0
  %v265 = vsel %vm160, %v181, 0.0
  %v266 = vsel %vm160, %v185, 0.0
  %v267 = vsel %vm160, %v189, 0.0
  %v268 = vsel %vm161, %v169, 0.0
  %v269 = vsel %vm161, %v173, 0.0
  %v270 = vsel %vm161, %v177, 0.0
  %v271 = vsel %vm161, %v181, 0.0
  %v272 = vsel %vm161, %v185, 0.0
  %v273 = vsel %vm161, %v189, 0.0
  %v274 = vsel %vm162, %v169, 0.0
  %v275 = vsel %vm162, %v173, 0.0
  %v276 = vsel %vm162, %v177, 0.0
  %v277 = vsel %vm162, %v181, 0.0
  %v278 = vsel %vm162, %v185, 0.0
  %v279 = vsel %vm162, %v189, 0.0
  %v280 = vsel %vm163, %v169, 0.0
  %v281 = vsel %vm163, %v173, 0.0
  %v282 = vsel %vm163, %v177, 0.0
  %v283 = vsel %vm163, %v181, 0.0
  %v284 = vsel %vm163, %v185, 0.0
  %v285 = vsel %vm163, %v189, 0.0
  %v286 = vsel %vm164, %v169, 0.0
  %v287 = vsel %vm164, %v173, 0.0
  %v288 = vsel %vm164, %v177, 0.0
  %v289 = vsel %vm164, %v181, 0.0
  %v290 = vsel %vm164, %v185, 0.0
  %v291 = vsel %vm164, %v189, 0.0
  %v308 = vunpack.c.l.b16 %v17
  %v309 = vunpack.c.l.b16 %v18
  %v310 = vunpack.c.l.b16 %v19
  %v311 = vunpack.c.l.b16 %v20
  %v312 = vunpack.c.l.b16 %v21
  %v313 = vunpack.c.l.b16 %v22
  %v314 = vunpack.c.l.b16 %v23
  %v315 = vunpack.c.l.b16 %v24
  %v316 = vunpack.c.l.b16 %v25
  %v317 = vunpack.c.l.b16 %v26
  %v318 = vunpack.c.l.b16 %v27
  %v319 = vunpack.c.l.b16 %v28
  %v320 = vunpack.c.l.b16 %v29
  %v321 = vunpack.c.l.b16 %v30
  %v322 = vunpack.c.l.b16 %v31
  %v323 = vunpack.c.l.b16 %v32
  %v324 = vpack.c.b16 %v309, %v308
  %v325 = vpack.c.b16 %v311, %v310
  %v326 = vpack.c.b16 %v313, %v312
  %v327 = vpack.c.b16 %v315, %v314
  %v328 = vpack.c.b16 %v317, %v316
  %v329 = vpack.c.b16 %v319, %v318
  %v330 = vpack.c.b16 %v321, %v320
  %v331 = vpack.c.b16 %v323, %v322
  %v388 = vunpack.c.l.b16 %v33
  %v389 = vunpack.c.h.b16 %v33
  %v390 = vunpack.c.l.b16 %v34
  %v391 = vunpack.c.h.b16 %v34
  %v392 = vunpack.c.l.b16 %v35
  %v393 = vunpack.c.h.b16 %v35
  %v394 = vunpack.c.l.b16 %v36
  %v395 = vunpack.c.h.b16 %v36
  %v396 = vunpack.c.l.b16 %v37
  %v397 = vunpack.c.h.b16 %v37
  %v398 = vunpack.c.l.b16 %v38
  %v399 = vunpack.c.h.b16 %v38
  %v400 = vunpack.c.l.b16 %v39
  %v401 = vunpack.c.h.b16 %v39
  %v402 = vunpack.c.l.b16 %v40
  %v403 = vunpack.c.h.b16 %v40
  %v404 = vunpack.c.l.b16 %v41
  %v405 = vunpack.c.h.b16 %v41
  %v406 = vunpack.c.l.b16 %v42
  %v407 = vunpack.c.h.b16 %v42
  %v408 = vunpack.c.l.b16 %v43
  %v409 = vunpack.c.h.b16 %v43
  %v410 = vunpack.c.l.b16 %v44
  %v411 = vunpack.c.h.b16 %v44
  %v412 = vunpack.c.l.b16 %v45
  %v413 = vunpack.c.h.b16 %v45
  %v414 = vunpack.c.l.b16 %v46
  %v415 = vunpack.c.h.b16 %v46
  %v416 = vunpack.c.l.b16 %v47
  %v417 = vunpack.c.h.b16 %v47
  %v418 = vunpack.c.l.b16 %v48
  %v419 = vunpack.c.h.b16 %v48
  %v420 = vunpack.c.l.b16 %v49
  %v421 = vunpack.c.h.b16 %v49
  %v422 = vunpack.c.l.b16 %v50
  %v423 = vunpack.c.h.b16 %v50
  %v424 = vunpack.c.l.b16 %v51
  %v425 = vunpack.c.h.b16 %v51
  %v426 = vunpack.c.l.b16 %v52
  %v427 = vunpack.c.h.b16 %v52
  %v428 = vunpack.c.l.b16 %v53
  %v429 = vunpack.c.h.b16 %v53
  %v430 = vunpack.c.l.b16 %v54
  %v431 = vunpack.c.h.b16 %v54
  %v432 = vunpack.c.l.b16 %v55
  %v433 = vunpack.c.h.b16 %v55
  %v434 = vunpack.c.l.b16 %v56
  %v435 = vunpack.c.h.b16 %v56
  %v436 = vunpack.c.l.b16 %v57
  %v437 = vunpack.c.h.b16 %v57
  %v438 = vunpack.c.l.b16 %v58
  %v439 = vunpack.c.h.b16 %v58
  %v440 = vunpack.c.l.b16 %v59
  %v441 = vunpack.c.h.b16 %v59
  %v442 = vunpack.c.l.b16 %v60
  %v443 = vunpack.c.h.b16 %v60
  %v444 = vunpack.c.l.b16 %v61
  %v445 = vunpack.c.h.b16 %v61
  %v446 = vunpack.c.l.b16 %v62
  %v447 = vunpack.c.h.b16 %v62
  %v448 = vunpack.c.l.b16 %v63
  %v449 = vunpack.c.h.b16 %v63
  %v450 = vunpack.c.l.b16 %v64
  %v451 = vunpack.c.h.b16 %v64
  %v452 = vunpack.c.l.b16 %v65
  %v453 = vunpack.c.h.b16 %v65
  %v454 = vunpack.c.l.b16 %v66
  %v455 = vunpack.c.h.b16 %v66
  %v456 = vunpack.c.l.b16 %v67
  %v457 = vunpack.c.h.b16 %v67
  %v458 = vunpack.c.l.b16 %v68
  %v459 = vunpack.c.h.b16 %v68
  %v460 = vunpack.c.l.b16 %v69
  %v461 = vunpack.c.h.b16 %v69
  %v462 = vunpack.c.l.b16 %v70
  %v463 = vunpack.c.h.b16 %v70
  %v464 = vunpack.c.l.b16 %v71
  %v465 = vunpack.c.h.b16 %v71
  %v466 = vunpack.c.l.b16 %v72
  %v467 = vunpack.c.h.b16 %v72
  %v468 = vunpack.c.l.b16 %v73
  %v469 = vunpack.c.h.b16 %v73
  %v470 = vunpack.c.l.b16 %v74
  %v471 = vunpack.c.h.b16 %v74
  %v472 = vunpack.c.l.b16 %v75
  %v473 = vunpack.c.h.b16 %v75
  %v474 = vunpack.c.l.b16 %v76
  %v475 = vunpack.c.h.b16 %v76
  %v476 = vunpack.c.l.b16 %v77
  %v477 = vunpack.c.h.b16 %v77
  %v478 = vunpack.c.l.b16 %v78
  %v479 = vunpack.c.h.b16 %v78
  %v480 = vunpack.c.l.b16 %v79
  %v481 = vunpack.c.h.b16 %v79
  %v482 = vunpack.c.l.b16 %v80
  %v483 = vunpack.c.h.b16 %v80
  %v484 = vpack.c.b16 %v394, %v388
  %v485 = vpack.c.b16 %v395, %v389
  %v486 = vpack.c.b16 %v396, %v390
  %v487 = vpack.c.b16 %v397, %v391
  %v488 = vpack.c.b16 %v398, %v392
  %v489 = vpack.c.b16 %v399, %v393
  %v490 = vpack.c.b16 %v406, %v400
  %v491 = vpack.c.b16 %v407, %v401
  %v492 = vpack.c.b16 %v408, %v402
  %v493 = vpack.c.b16 %v409, %v403
  %v494 = vpack.c.b16 %v410, %v404
  %v495 = vpack.c.b16 %v411, %v405
  %v496 = vpack.c.b16 %v418, %v412
  %v497 = vpack.c.b16 %v419, %v413
  %v498 = vpack.c.b16 %v420, %v414
  %v499 = vpack.c.b16 %v421, %v415
  %v500 = vpack.c.b16 %v422, %v416
  %v501 = vpack.c.b16 %v423, %v417
  %v502 = vpack.c.b16 %v430, %v424
  %v503 = vpack.c.b16 %v431, %v425
  %v504 = vpack.c.b16 %v432, %v426
  %v505 = vpack.c.b16 %v433, %v427
  %v506 = vpack.c.b16 %v434, %v428
  %v507 = vpack.c.b16 %v435, %v429
  %v508 = vpack.c.b16 %v442, %v436
  %v509 = vpack.c.b16 %v443, %v437
  %v510 = vpack.c.b16 %v444, %v438
  %v511 = vpack.c.b16 %v445, %v439
  %v512 = vpack.c.b16 %v446, %v440
  %v513 = vpack.c.b16 %v447, %v441
  %v514 = vpack.c.b16 %v454, %v448
  %v515 = vpack.c.b16 %v455, %v449
  %v516 = vpack.c.b16 %v456, %v450
  %v517 = vpack.c.b16 %v457, %v451
  %v518 = vpack.c.b16 %v458, %v452
  %v519 = vpack.c.b16 %v459, %v453
  %v520 = vpack.c.b16 %v466, %v460
  %v521 = vpack.c.b16 %v467, %v461
  %v522 = vpack.c.b16 %v468, %v462
  %v523 = vpack.c.b16 %v469, %v463
  %v524 = vpack.c.b16 %v470, %v464
  %v525 = vpack.c.b16 %v471, %v465
  %v526 = vpack.c.b16 %v478, %v472
  %v527 = vpack.c.b16 %v479, %v473
  %v528 = vpack.c.b16 %v480, %v474
  %v529 = vpack.c.b16 %v481, %v475
  %v530 = vpack.c.b16 %v482, %v476
  %v531 = vpack.c.b16 %v483, %v477
  %580 = vmatprep.subr.bf16.mxu0 %v485
  %581 = vmatpush1.bf16.msra.mxu0 %v484
  %582 = vmatprep.subr.bf16.mxu0 %v491
  %583 = vmatpush1.bf16.msra.mxu0 %v490
  %584 = vmatprep.subr.bf16.mxu0 %v497
  %585 = vmatpush1.bf16.msra.mxu0 %v496
  %586 = vmatprep.subr.bf16.mxu0 %v503
  %587 = vmatpush1.bf16.msra.mxu0 %v502
  %588 = vmatprep.subr.bf16.mxu0 %v509
  %589 = vmatpush1.bf16.msra.mxu0 %v508
  %590 = vmatprep.subr.bf16.mxu0 %v515
  %591 = vmatpush1.bf16.msra.mxu0 %v514
  %592 = vmatprep.subr.bf16.mxu0 %v521
  %593 = vmatpush1.bf16.msra.mxu0 %v520
  %594 = vmatprep.subr.bf16.mxu0 %v527
  %595 = vmatpush1.bf16.msra.mxu0 %v526
  %596 = vmatprep.subr.bf16.mxu0 0
  %597 = vmatpush1.bf16.msra.mxu0 0
  %598 = vmatprep.subr.bf16.mxu0 0
  %599 = vmatpush1.bf16.msra.mxu0 0
  %600 = vmatprep.subr.bf16.mxu0 0
  %601 = vmatpush1.bf16.msra.mxu0 0
  %602 = vmatprep.subr.bf16.mxu0 0
  %603 = vmatpush1.bf16.msra.mxu0 0
  %604 = vmatprep.subr.bf16.mxu0 0
  %605 = vmatpush1.bf16.msra.mxu0 0
  %606 = vmatprep.subr.bf16.mxu0 0
  %607 = vmatpush1.bf16.msra.mxu0 0
  %608 = vmatprep.subr.bf16.mxu0 0
  %609 = vmatpush1.bf16.msra.mxu0 0
  %610 = vmatprep.subr.bf16.mxu0 0
  %611 = vmatpush1.bf16.msra.mxu0 0
  %612 = vmatprep.mubr.bf16.mxu0 0
  %613 = vmatmul.mubr.bf16.gmra.mrb[0].mxu0 %v324
  %v614 = vpop.f32.mrb[0].mxu0
  %v615 = vadd.f32 %v196, %v614
  %v616 = vpop.f32.mrb[0].mxu0
  %v617 = vadd.f32 %v197, %v616
  %v618 = vpop.f32.mrb[0].mxu0
  %v619 = vadd.f32 %v202, %v618
  %v620 = vpop.f32.mrb[0].mxu0
  %v621 = vadd.f32 %v203, %v620
  %622 = vmatprep.mubr.bf16.mxu0 0
  %623 = vmatmul.mubr.bf16.gmra.mrb[0].mxu0 %v325
  %v624 = vpop.f32.mrb[0].mxu0
  %v625 = vadd.f32 %v208, %v624
  %v626 = vpop.f32.mrb[0].mxu0
  %v627 = vadd.f32 %v209, %v626
  %v628 = vpop.f32.mrb[0].mxu0
  %v629 = vadd.f32 %v214, %v628
  %v630 = vpop.f32.mrb[0].mxu0
  %v631 = vadd.f32 %v215, %v630
  %632 = vmatprep.mubr.bf16.mxu0 0
  %633 = vmatmul.mubr.bf16.gmra.mrb[0].mxu0 %v326
  %v634 = vpop.f32.mrb[0].mxu0
  %v635 = vadd.f32 %v220, %v634
  %v636 = vpop.f32.mrb[0].mxu0
  %v637 = vadd.f32 %v221, %v636
  %v638 = vpop.f32.mrb[0].mxu0
  %v639 = vadd.f32 %v226, %v638
  %v640 = vpop.f32.mrb[0].mxu0
  %v641 = vadd.f32 %v227, %v640
  %642 = vmatprep.mubr.bf16.mxu0 0
  %643 = vmatmul.mubr.bf16.gmra.mrb[0].mxu0 %v327
  %v644 = vpop.f32.mrb[0].mxu0
  %v645 = vadd.f32 %v232, %v644
  %v646 = vpop.f32.mrb[0].mxu0
  %v647 = vadd.f32 %v233, %v646
  %v648 = vpop.f32.mrb[0].mxu0
  %v649 = vadd.f32 %v238, %v648
  %v650 = vpop.f32.mrb[0].mxu0
  %v651 = vadd.f32 %v239, %v650
  %652 = vmatprep.mubr.bf16.mxu0 0
  %653 = vmatmul.mubr.bf16.gmra.mrb[0].mxu0 %v328
  %v654 = vpop.f32.mrb[0].mxu0
  %v655 = vadd.f32 %v244, %v654
  %v656 = vpop.f32.mrb[0].mxu0
  %v657 = vadd.f32 %v245, %v656
  %v658 = vpop.f32.mrb[0].mxu0
  %v659 = vadd.f32 %v250, %v658
  %v660 = vpop.f32.mrb[0].mxu0
  %v661 = vadd.f32 %v251, %v660
  %662 = vmatprep.mubr.bf16.mxu0 0
  %663 = vmatmul.mubr.bf16.gmra.mrb[0].mxu0 %v329
  %v664 = vpop.f32.mrb[0].mxu0
  %v665 = vadd.f32 %v256, %v664
  %v666 = vpop.f32.mrb[0].mxu0
  %v667 = vadd.f32 %v257, %v666
  %v668 = vpop.f32.mrb[0].mxu0
  %v669 = vadd.f32 %v262, %v668
  %v670 = vpop.f32.mrb[0].mxu0
  %v671 = vadd.f32 %v263, %v670
  %672 = vmatprep.mubr.bf16.mxu0 0
  %673 = vmatmul.mubr.bf16.gmra.mrb[0].mxu0 %v330
  %v674 = vpop.f32.mrb[0].mxu0
  %v675 = vadd.f32 %v268, %v674
  %v676 = vpop.f32.mrb[0].mxu0
  %v677 = vadd.f32 %v269, %v676
  %v678 = vpop.f32.mrb[0].mxu0
  %v679 = vadd.f32 %v274, %v678
  %v680 = vpop.f32.mrb[0].mxu0
  %v681 = vadd.f32 %v275, %v680
  %682 = vmatprep.mubr.bf16.mxu0 0
  %683 = vmatmul.mubr.bf16.gmra.mrb[0].mxu0 %v331
  %v684 = vpop.f32.mrb[0].mxu0
  %v685 = vadd.f32 %v280, %v684
  %v686 = vpop.f32.mrb[0].mxu0
  %v687 = vadd.f32 %v281, %v686
  %v688 = vpop.f32.mrb[0].mxu0
  %v689 = vadd.f32 %v286, %v688
  %v690 = vpop.f32.mrb[0].mxu0
  %v691 = vadd.f32 %v287, %v690
  %692 = vdwg.mxu0
  %693 = vmatprep.subr.bf16.mxu0 %v487
  %694 = vmatpush1.bf16.msra.mxu0 %v486
  %695 = vmatprep.subr.bf16.mxu0 %v493
  %696 = vmatpush1.bf16.msra.mxu0 %v492
  %697 = vmatprep.subr.bf16.mxu0 %v499
  %698 = vmatpush1.bf16.msra.mxu0 %v498
  %699 = vmatprep.subr.bf16.mxu0 %v505
  %700 = vmatpush1.bf16.msra.mxu0 %v504
  %701 = vmatprep.subr.bf16.mxu0 %v511
  %702 = vmatpush1.bf16.msra.mxu0 %v510
  %703 = vmatprep.subr.bf16.mxu0 %v517
  %704 = vmatpush1.bf16.msra.mxu0 %v516
  %705 = vmatprep.subr.bf16.mxu0 %v523
  %706 = vmatpush1.bf16.msra.mxu0 %v522
  %707 = vmatprep.subr.bf16.mxu0 %v529
  %708 = vmatpush1.bf16.msra.mxu0 %v528
  %709 = vmatprep.subr.bf16.mxu0 0
  %710 = vmatpush1.bf16.msra.mxu0 0
  %711 = vmatprep.subr.bf16.mxu0 0
  %712 = vmatpush1.bf16.msra.mxu0 0
  %713 = vmatprep.subr.bf16.mxu0 0
  %714 = vmatpush1.bf16.msra.mxu0 0
  %715 = vmatprep.subr.bf16.mxu0 0
  %716 = vmatpush1.bf16.msra.mxu0 0
  %717 = vmatprep.subr.bf16.mxu0 0
  %718 = vmatpush1.bf16.msra.mxu0 0
  %719 = vmatprep.subr.bf16.mxu0 0
  %720 = vmatpush1.bf16.msra.mxu0 0
  %721 = vmatprep.subr.bf16.mxu0 0
  %722 = vmatpush1.bf16.msra.mxu0 0
  %723 = vmatprep.subr.bf16.mxu0 0
  %724 = vmatpush1.bf16.msra.mxu0 0
  %725 = vmatprep.mubr.bf16.mxu0 0
  %726 = vmatmul.mubr.bf16.gmra.mrb[0].mxu0 %v324
  %v727 = vpop.f32.mrb[0].mxu0
  %v728 = vadd.f32 %v198, %v727
  %v729 = vpop.f32.mrb[0].mxu0
  %v730 = vadd.f32 %v199, %v729
  %v731 = vpop.f32.mrb[0].mxu0
  %v732 = vadd.f32 %v204, %v731
  %v733 = vpop.f32.mrb[0].mxu0
  %v734 = vadd.f32 %v205, %v733
  %735 = vmatprep.mubr.bf16.mxu0 0
  %736 = vmatmul.mubr.bf16.gmra.mrb[0].mxu0 %v325
  %v737 = vpop.f32.mrb[0].mxu0
  %v738 = vadd.f32 %v210, %v737
  %v739 = vpop.f32.mrb[0].mxu0
  %v740 = vadd.f32 %v211, %v739
  %v741 = vpop.f32.mrb[0].mxu0
  %v742 = vadd.f32 %v216, %v741
  %v743 = vpop.f32.mrb[0].mxu0
  %v744 = vadd.f32 %v217, %v743
  %745 = vmatprep.mubr.bf16.mxu0 0
  %746 = vmatmul.mubr.bf16.gmra.mrb[0].mxu0 %v326
  %v747 = vpop.f32.mrb[0].mxu0
  %v748 = vadd.f32 %v222, %v747
  %v749 = vpop.f32.mrb[0].mxu0
  %v750 = vadd.f32 %v223, %v749
  %v751 = vpop.f32.mrb[0].mxu0
  %v752 = vadd.f32 %v228, %v751
  %v753 = vpop.f32.mrb[0].mxu0
  %v754 = vadd.f32 %v229, %v753
  %755 = vmatprep.mubr.bf16.mxu0 0
  %756 = vmatmul.mubr.bf16.gmra.mrb[0].mxu0 %v327
  %v757 = vpop.f32.mrb[0].mxu0
  %v758 = vadd.f32 %v234, %v757
  %v759 = vpop.f32.mrb[0].mxu0
  %v760 = vadd.f32 %v235, %v759
  %v761 = vpop.f32.mrb[0].mxu0
  %v762 = vadd.f32 %v240, %v761
  %v763 = vpop.f32.mrb[0].mxu0
  %v764 = vadd.f32 %v241, %v763
  %765 = vmatprep.mubr.bf16.mxu0 0
  %766 = vmatmul.mubr.bf16.gmra.mrb[0].mxu0 %v328
  %v767 = vpop.f32.mrb[0].mxu0
  %v768 = vadd.f32 %v246, %v767
  %v769 = vpop.f32.mrb[0].mxu0
  %v770 = vadd.f32 %v247, %v769
  %v771 = vpop.f32.mrb[0].mxu0
  %v772 = vadd.f32 %v252, %v771
  %v773 = vpop.f32.mrb[0].mxu0
  %v774 = vadd.f32 %v253, %v773
  %775 = vmatprep.mubr.bf16.mxu0 0
  %776 = vmatmul.mubr.bf16.gmra.mrb[0].mxu0 %v329
  %v777 = vpop.f32.mrb[0].mxu0
  %v778 = vadd.f32 %v258, %v777
  %v779 = vpop.f32.mrb[0].mxu0
  %v780 = vadd.f32 %v259, %v779
  %v781 = vpop.f32.mrb[0].mxu0
  %v782 = vadd.f32 %v264, %v781
  %v783 = vpop.f32.mrb[0].mxu0
  %v784 = vadd.f32 %v265, %v783
  %785 = vmatprep.mubr.bf16.mxu0 0
  %786 = vmatmul.mubr.bf16.gmra.mrb[0].mxu0 %v330
  %v787 = vpop.f32.mrb[0].mxu0
  %v788 = vadd.f32 %v270, %v787
  %v789 = vpop.f32.mrb[0].mxu0
  %v790 = vadd.f32 %v271, %v789
  %v791 = vpop.f32.mrb[0].mxu0
  %v792 = vadd.f32 %v276, %v791
  %v793 = vpop.f32.mrb[0].mxu0
  %v794 = vadd.f32 %v277, %v793
  %795 = vmatprep.mubr.bf16.mxu0 0
  %796 = vmatmul.mubr.bf16.gmra.mrb[0].mxu0 %v331
  %v797 = vpop.f32.mrb[0].mxu0
  %v798 = vadd.f32 %v282, %v797
  %v799 = vpop.f32.mrb[0].mxu0
  %v800 = vadd.f32 %v283, %v799
  %v801 = vpop.f32.mrb[0].mxu0
  %v802 = vadd.f32 %v288, %v801
  %v803 = vpop.f32.mrb[0].mxu0
  %v804 = vadd.f32 %v289, %v803
  %805 = vdwg.mxu0
  %806 = vmatprep.subr.bf16.mxu0 %v489
  %807 = vmatpush1.bf16.msra.mxu0 %v488
  %808 = vmatprep.subr.bf16.mxu0 %v495
  %809 = vmatpush1.bf16.msra.mxu0 %v494
  %810 = vmatprep.subr.bf16.mxu0 %v501
  %811 = vmatpush1.bf16.msra.mxu0 %v500
  %812 = vmatprep.subr.bf16.mxu0 %v507
  %813 = vmatpush1.bf16.msra.mxu0 %v506
  %814 = vmatprep.subr.bf16.mxu0 %v513
  %815 = vmatpush1.bf16.msra.mxu0 %v512
  %816 = vmatprep.subr.bf16.mxu0 %v519
  %817 = vmatpush1.bf16.msra.mxu0 %v518
  %818 = vmatprep.subr.bf16.mxu0 %v525
  %819 = vmatpush1.bf16.msra.mxu0 %v524
  %820 = vmatprep.subr.bf16.mxu0 %v531
  %821 = vmatpush1.bf16.msra.mxu0 %v530
  %822 = vmatprep.subr.bf16.mxu0 0
  %823 = vmatpush1.bf16.msra.mxu0 0
  %824 = vmatprep.subr.bf16.mxu0 0
  %825 = vmatpush1.bf16.msra.mxu0 0
  %826 = vmatprep.subr.bf16.mxu0 0
  %827 = vmatpush1.bf16.msra.mxu0 0
  %828 = vmatprep.subr.bf16.mxu0 0
  %829 = vmatpush1.bf16.msra.mxu0 0
  %830 = vmatprep.subr.bf16.mxu0 0
  %831 = vmatpush1.bf16.msra.mxu0 0
  %832 = vmatprep.subr.bf16.mxu0 0
  %833 = vmatpush1.bf16.msra.mxu0 0
  %834 = vmatprep.subr.bf16.mxu0 0
  %835 = vmatpush1.bf16.msra.mxu0 0
  %836 = vmatprep.subr.bf16.mxu0 0
  %837 = vmatpush1.bf16.msra.mxu0 0
  %838 = vmatprep.mubr.bf16.mxu0 0
  %839 = vmatmul.mubr.bf16.gmra.mrb[0].mxu0 %v324
  %v840 = vpop.f32.mrb[0].mxu0
  %v841 = vadd.f32 %v200, %v840
  %v842 = vpop.f32.mrb[0].mxu0
  %v843 = vadd.f32 %v201, %v842
  %v844 = vpop.f32.mrb[0].mxu0
  %v845 = vadd.f32 %v206, %v844
  %v846 = vpop.f32.mrb[0].mxu0
  %v847 = vadd.f32 %v207, %v846
  %848 = vmatprep.mubr.bf16.mxu0 0
  %849 = vmatmul.mubr.bf16.gmra.mrb[0].mxu0 %v325
  %v850 = vpop.f32.mrb[0].mxu0
  %v851 = vadd.f32 %v212, %v850
  %v852 = vpop.f32.mrb[0].mxu0
  %v853 = vadd.f32 %v213, %v852
  %v854 = vpop.f32.mrb[0].mxu0
  %v855 = vadd.f32 %v218, %v854
  %v856 = vpop.f32.mrb[0].mxu0
  %v857 = vadd.f32 %v219, %v856
  %858 = vmatprep.mubr.bf16.mxu0 0
  %859 = vmatmul.mubr.bf16.gmra.mrb[0].mxu0 %v326
  %v860 = vpop.f32.mrb[0].mxu0
  %v861 = vadd.f32 %v224, %v860
  %v862 = vpop.f32.mrb[0].mxu0
  %v863 = vadd.f32 %v225, %v862
  %v864 = vpop.f32.mrb[0].mxu0
  %v865 = vadd.f32 %v230, %v864
  %v866 = vpop.f32.mrb[0].mxu0
  %v867 = vadd.f32 %v231, %v866
  %868 = vmatprep.mubr.bf16.mxu0 0
  %869 = vmatmul.mubr.bf16.gmra.mrb[0].mxu0 %v327
  %v870 = vpop.f32.mrb[0].mxu0
  %v871 = vadd.f32 %v236, %v870
  %v872 = vpop.f32.mrb[0].mxu0
  %v873 = vadd.f32 %v237, %v872
  %v874 = vpop.f32.mrb[0].mxu0
  %v875 = vadd.f32 %v242, %v874
  %v876 = vpop.f32.mrb[0].mxu0
  %v877 = vadd.f32 %v243, %v876
  %878 = vmatprep.mubr.bf16.mxu0 0
  %879 = vmatmul.mubr.bf16.gmra.mrb[0].mxu0 %v328
  %v880 = vpop.f32.mrb[0].mxu0
  %v881 = vadd.f32 %v248, %v880
  %v882 = vpop.f32.mrb[0].mxu0
  %v883 = vadd.f32 %v249, %v882
  %v884 = vpop.f32.mrb[0].mxu0
  %v885 = vadd.f32 %v254, %v884
  %v886 = vpop.f32.mrb[0].mxu0
  %v887 = vadd.f32 %v255, %v886
  %888 = vmatprep.mubr.bf16.mxu0 0
  %889 = vmatmul.mubr.bf16.gmra.mrb[0].mxu0 %v329
  %v890 = vpop.f32.mrb[0].mxu0
  %v891 = vadd.f32 %v260, %v890
  %v892 = vpop.f32.mrb[0].mxu0
  %v893 = vadd.f32 %v261, %v892
  %v894 = vpop.f32.mrb[0].mxu0
  %v895 = vadd.f32 %v266, %v894
  %v896 = vpop.f32.mrb[0].mxu0
  %v897 = vadd.f32 %v267, %v896
  %898 = vmatprep.mubr.bf16.mxu0 0
  %899 = vmatmul.mubr.bf16.gmra.mrb[0].mxu0 %v330
  %v900 = vpop.f32.mrb[0].mxu0
  %v901 = vadd.f32 %v272, %v900
  %v902 = vpop.f32.mrb[0].mxu0
  %v903 = vadd.f32 %v273, %v902
  %v904 = vpop.f32.mrb[0].mxu0
  %v905 = vadd.f32 %v278, %v904
  %v906 = vpop.f32.mrb[0].mxu0
  %v907 = vadd.f32 %v279, %v906
  %908 = vmatprep.mubr.bf16.mxu0 0
  %909 = vmatmul.mubr.bf16.gmra.mrb[0].mxu0 %v331
  %v910 = vpop.f32.mrb[0].mxu0
  %v911 = vadd.f32 %v284, %v910
  %v912 = vpop.f32.mrb[0].mxu0
  %v913 = vadd.f32 %v285, %v912
  %v914 = vpop.f32.mrb[0].mxu0
  %v915 = vadd.f32 %v290, %v914
  %v916 = vpop.f32.mrb[0].mxu0
  %v917 = vadd.f32 %v291, %v916
  %918 = vdwg.mxu0
  %v919 = vpack.c.bf16 %v619, %v615
  %v920 = vpack.c.bf16 %v621, %v617
  %v921 = vpack.c.bf16 %v732, %v728
  %v922 = vpack.c.bf16 %v629, %v625
  %v923 = vpack.c.bf16 %v631, %v627
  %v924 = vpack.c.bf16 %v742, %v738
  %v925 = vpack.c.bf16 %v639, %v635
  %v926 = vpack.c.bf16 %v641, %v637
  %v927 = vpack.c.bf16 %v752, %v748
  %v928 = vpack.c.bf16 %v649, %v645
  %v929 = vpack.c.bf16 %v651, %v647
  %v930 = vpack.c.bf16 %v762, %v758
  %v931 = vpack.c.bf16 %v659, %v655
  %v932 = vpack.c.bf16 %v661, %v657
  %v933 = vpack.c.bf16 %v772, %v768
  %v934 = vpack.c.bf16 %v669, %v665
  %v935 = vpack.c.bf16 %v671, %v667
  %v936 = vpack.c.bf16 %v782, %v778
  %v937 = vpack.c.bf16 %v679, %v675
  %v938 = vpack.c.bf16 %v681, %v677
  %v939 = vpack.c.bf16 %v792, %v788
  %v940 = vpack.c.bf16 %v689, %v685
  %v941 = vpack.c.bf16 %v691, %v687
  %v942 = vpack.c.bf16 %v802, %v798
  %v967 = vunpack.c.l.b16 %v919
  %v968 = vunpack.c.l.b16 %v920
  %v969 = vunpack.c.l.b16 %v921
  %v970 = vunpack.c.h.b16 %v919
  %v971 = vunpack.c.h.b16 %v920
  %v972 = vunpack.c.h.b16 %v921
  %v973 = vunpack.c.l.b16 %v922
  %v974 = vunpack.c.l.b16 %v923
  %v975 = vunpack.c.l.b16 %v924
  %v976 = vunpack.c.h.b16 %v922
  %v977 = vunpack.c.h.b16 %v923
  %v978 = vunpack.c.h.b16 %v924
  %v979 = vunpack.c.l.b16 %v925
  %v980 = vunpack.c.l.b16 %v926
  %v981 = vunpack.c.l.b16 %v927
  %v982 = vunpack.c.h.b16 %v925
  %v983 = vunpack.c.h.b16 %v926
  %v984 = vunpack.c.h.b16 %v927
  %v985 = vunpack.c.l.b16 %v928
  %v986 = vunpack.c.l.b16 %v929
  %v987 = vunpack.c.l.b16 %v930
  %v988 = vunpack.c.h.b16 %v928
  %v989 = vunpack.c.h.b16 %v929
  %v990 = vunpack.c.h.b16 %v930
  %v991 = vunpack.c.l.b16 %v931
  %v992 = vunpack.c.l.b16 %v932
  %v993 = vunpack.c.l.b16 %v933
  %v994 = vunpack.c.h.b16 %v931
  %v995 = vunpack.c.h.b16 %v932
  %v996 = vunpack.c.h.b16 %v933
  %v997 = vunpack.c.l.b16 %v934
  %v998 = vunpack.c.l.b16 %v935
  %v999 = vunpack.c.l.b16 %v936
  %v1000 = vunpack.c.h.b16 %v934
  %v1001 = vunpack.c.h.b16 %v935
  %v1002 = vunpack.c.h.b16 %v936
  %v1003 = vunpack.c.l.b16 %v937
  %v1004 = vunpack.c.l.b16 %v938
  %v1005 = vunpack.c.l.b16 %v939
  %v1006 = vunpack.c.h.b16 %v937
  %v1007 = vunpack.c.h.b16 %v938
  %v1008 = vunpack.c.h.b16 %v939
  %v1009 = vunpack.c.l.b16 %v940
  %v1010 = vunpack.c.l.b16 %v941
  %v1011 = vunpack.c.l.b16 %v942
  %v1012 = vunpack.c.h.b16 %v940
  %v1013 = vunpack.c.h.b16 %v941
  %v1014 = vunpack.c.h.b16 %v942
  %v1015 = vpack.c.b16 %v968, %v967
  %v1016 = vpack.c.b16 %v969, %v969
  %v1017 = vpack.c.b16 %v971, %v970
  %v1018 = vpack.c.b16 %v972, %v972
  %v1019 = vpack.c.b16 %v974, %v973
  %v1020 = vpack.c.b16 %v975, %v975
  %v1021 = vpack.c.b16 %v977, %v976
  %v1022 = vpack.c.b16 %v978, %v978
  %v1023 = vpack.c.b16 %v980, %v979
  %v1024 = vpack.c.b16 %v981, %v981
  %v1025 = vpack.c.b16 %v983, %v982
  %v1026 = vpack.c.b16 %v984, %v984
  %v1027 = vpack.c.b16 %v986, %v985
  %v1028 = vpack.c.b16 %v987, %v987
  %v1029 = vpack.c.b16 %v989, %v988
  %v1030 = vpack.c.b16 %v990, %v990
  %v1031 = vpack.c.b16 %v992, %v991
  %v1032 = vpack.c.b16 %v993, %v993
  %v1033 = vpack.c.b16 %v995, %v994
  %v1034 = vpack.c.b16 %v996, %v996
  %v1035 = vpack.c.b16 %v998, %v997
  %v1036 = vpack.c.b16 %v999, %v999
  %v1037 = vpack.c.b16 %v1001, %v1000
  %v1038 = vpack.c.b16 %v1002, %v1002
  %v1039 = vpack.c.b16 %v1004, %v1003
  %v1040 = vpack.c.b16 %v1005, %v1005
  %v1041 = vpack.c.b16 %v1007, %v1006
  %v1042 = vpack.c.b16 %v1008, %v1008
  %v1043 = vpack.c.b16 %v1010, %v1009
  %v1044 = vpack.c.b16 %v1011, %v1011
  %v1045 = vpack.c.b16 %v1013, %v1012
  %v1046 = vpack.c.b16 %v1014, %v1014
  %1079 = vst [vmem:[%s3] sm:$0xff] %v1015
  %1080 = vst [vmem:[%s3 + $0x8] sm:$0xf] %v1016
  %1081 = vst [vmem:[%s3 + $0xc] sm:$0xff] %v1017
  %1082 = vst [vmem:[%s3 + $0x14] sm:$0xf] %v1018
  %1083 = vst [vmem:[%s3 + $0x18] sm:$0xff] %v1019
  %1084 = vst [vmem:[%s3 + $0x20] sm:$0xf] %v1020
  %1085 = vst [vmem:[%s3 + $0x24] sm:$0xff] %v1021
  %1086 = vst [vmem:[%s3 + $0x2c] sm:$0xf] %v1022
  %1087 = vst [vmem:[%s3 + $0x30] sm:$0xff] %v1023
  %1088 = vst [vmem:[%s3 + $0x38] sm:$0xf] %v1024
  %1089 = vst [vmem:[%s3 + $0x3c] sm:$0xff] %v1025
  %1090 = vst [vmem:[%s3 + $0x44] sm:$0xf] %v1026
  %1091 = vst [vmem:[%s3 + $0x48] sm:$0xff] %v1027
  %1092 = vst [vmem:[%s3 + $0x50] sm:$0xf] %v1028
  %1093 = vst [vmem:[%s3 + $0x54] sm:$0xff] %v1029
  %1094 = vst [vmem:[%s3 + $0x5c] sm:$0xf] %v1030
  %1095 = vst [vmem:[%s3 + $0x60] sm:$0xff] %v1031
  %1096 = vst [vmem:[%s3 + $0x68] sm:$0xf] %v1032
  %1097 = vst [vmem:[%s3 + $0x6c] sm:$0xff] %v1033
  %1098 = vst [vmem:[%s3 + $0x74] sm:$0xf] %v1034
  %1099 = vst [vmem:[%s3 + $0x78] sm:$0xff] %v1035
  %1100 = vst [vmem:[%s3 + $0x80] sm:$0xf] %v1036
  %1101 = vst [vmem:[%s3 + $0x84] sm:$0xff] %v1037
  %1102 = vst [vmem:[%s3 + $0x8c] sm:$0xf] %v1038
  %1103 = vst [vmem:[%s3 + $0x90] sm:$0xff] %v1039
  %1104 = vst [vmem:[%s3 + $0x98] sm:$0xf] %v1040
  %1105 = vst [vmem:[%s3 + $0x9c] sm:$0xff] %v1041
  %1106 = vst [vmem:[%s3 + $0xa4] sm:$0xf] %v1042
  %1107 = vst [vmem:[%s3 + $0xa8] sm:$0xff] %v1043
  %1108 = vst [vmem:[%s3 + $0xb0] sm:$0xf] %v1044
  %1109 = vst [vmem:[%s3 + $0xb4] sm:$0xff] %v1045
  %1110 = vst [vmem:[%s3 + $0xbc] sm:$0xf] %v1046
  %v1111 = vpack.c.bf16 %v734, %v730
  %v1112 = vpack.c.bf16 %v845, %v841
  %v1113 = vpack.c.bf16 %v847, %v843
  %v1114 = vpack.c.bf16 %v744, %v740
  %v1115 = vpack.c.bf16 %v855, %v851
  %v1116 = vpack.c.bf16 %v857, %v853
  %v1117 = vpack.c.bf16 %v754, %v750
  %v1118 = vpack.c.bf16 %v865, %v861
  %v1119 = vpack.c.bf16 %v867, %v863
  %v1120 = vpack.c.bf16 %v764, %v760
  %v1121 = vpack.c.bf16 %v875, %v871
  %v1122 = vpack.c.bf16 %v877, %v873
  %v1123 = vpack.c.bf16 %v774, %v770
  %v1124 = vpack.c.bf16 %v885, %v881
  %v1125 = vpack.c.bf16 %v887, %v883
  %v1126 = vpack.c.bf16 %v784, %v780
  %v1127 = vpack.c.bf16 %v895, %v891
  %v1128 = vpack.c.bf16 %v897, %v893
  %v1129 = vpack.c.bf16 %v794, %v790
  %v1130 = vpack.c.bf16 %v905, %v901
  %v1131 = vpack.c.bf16 %v907, %v903
  %v1132 = vpack.c.bf16 %v804, %v800
  %v1133 = vpack.c.bf16 %v915, %v911
  %v1134 = vpack.c.bf16 %v917, %v913
  %v1159 = vunpack.c.l.b16 %v1111
  %v1160 = vunpack.c.l.b16 %v1112
  %v1161 = vunpack.c.l.b16 %v1113
  %v1162 = vunpack.c.h.b16 %v1111
  %v1163 = vunpack.c.h.b16 %v1112
  %v1164 = vunpack.c.h.b16 %v1113
  %v1165 = vunpack.c.l.b16 %v1114
  %v1166 = vunpack.c.l.b16 %v1115
  %v1167 = vunpack.c.l.b16 %v1116
  %v1168 = vunpack.c.h.b16 %v1114
  %v1169 = vunpack.c.h.b16 %v1115
  %v1170 = vunpack.c.h.b16 %v1116
  %v1171 = vunpack.c.l.b16 %v1117
  %v1172 = vunpack.c.l.b16 %v1118
  %v1173 = vunpack.c.l.b16 %v1119
  %v1174 = vunpack.c.h.b16 %v1117
  %v1175 = vunpack.c.h.b16 %v1118
  %v1176 = vunpack.c.h.b16 %v1119
  %v1177 = vunpack.c.l.b16 %v1120
  %v1178 = vunpack.c.l.b16 %v1121
  %v1179 = vunpack.c.l.b16 %v1122
  %v1180 = vunpack.c.h.b16 %v1120
  %v1181 = vunpack.c.h.b16 %v1121
  %v1182 = vunpack.c.h.b16 %v1122
  %v1183 = vunpack.c.l.b16 %v1123
  %v1184 = vunpack.c.l.b16 %v1124
  %v1185 = vunpack.c.l.b16 %v1125
  %v1186 = vunpack.c.h.b16 %v1123
  %v1187 = vunpack.c.h.b16 %v1124
  %v1188 = vunpack.c.h.b16 %v1125
  %v1189 = vunpack.c.l.b16 %v1126
  %v1190 = vunpack.c.l.b16 %v1127
  %v1191 = vunpack.c.l.b16 %v1128
  %v1192 = vunpack.c.h.b16 %v1126
  %v1193 = vunpack.c.h.b16 %v1127
  %v1194 = vunpack.c.h.b16 %v1128
  %v1195 = vunpack.c.l.b16 %v1129
  %v1196 = vunpack.c.l.b16 %v1130
  %v1197 = vunpack.c.l.b16 %v1131
  %v1198 = vunpack.c.h.b16 %v1129
  %v1199 = vunpack.c.h.b16 %v1130
  %v1200 = vunpack.c.h.b16 %v1131
  %v1201 = vunpack.c.l.b16 %v1132
  %v1202 = vunpack.c.l.b16 %v1133
  %v1203 = vunpack.c.l.b16 %v1134
  %v1204 = vunpack.c.h.b16 %v1132
  %v1205 = vunpack.c.h.b16 %v1133
  %v1206 = vunpack.c.h.b16 %v1134
  %v1207 = vpack.c.b16 %v1160, %v1159
  %v1208 = vpack.c.b16 %v1161, %v1161
  %v1209 = vpack.c.b16 %v1163, %v1162
  %v1210 = vpack.c.b16 %v1164, %v1164
  %v1211 = vpack.c.b16 %v1166, %v1165
  %v1212 = vpack.c.b16 %v1167, %v1167
  %v1213 = vpack.c.b16 %v1169, %v1168
  %v1214 = vpack.c.b16 %v1170, %v1170
  %v1215 = vpack.c.b16 %v1172, %v1171
  %v1216 = vpack.c.b16 %v1173, %v1173
  %v1217 = vpack.c.b16 %v1175, %v1174
  %v1218 = vpack.c.b16 %v1176, %v1176
  %v1219 = vpack.c.b16 %v1178, %v1177
  %v1220 = vpack.c.b16 %v1179, %v1179
  %v1221 = vpack.c.b16 %v1181, %v1180
  %v1222 = vpack.c.b16 %v1182, %v1182
  %v1223 = vpack.c.b16 %v1184, %v1183
  %v1224 = vpack.c.b16 %v1185, %v1185
  %v1225 = vpack.c.b16 %v1187, %v1186
  %v1226 = vpack.c.b16 %v1188, %v1188
  %v1227 = vpack.c.b16 %v1190, %v1189
  %v1228 = vpack.c.b16 %v1191, %v1191
  %v1229 = vpack.c.b16 %v1193, %v1192
  %v1230 = vpack.c.b16 %v1194, %v1194
  %v1231 = vpack.c.b16 %v1196, %v1195
  %v1232 = vpack.c.b16 %v1197, %v1197
  %v1233 = vpack.c.b16 %v1199, %v1198
  %v1234 = vpack.c.b16 %v1200, %v1200
  %v1235 = vpack.c.b16 %v1202, %v1201
  %v1236 = vpack.c.b16 %v1203, %v1203
  %v1237 = vpack.c.b16 %v1205, %v1204
  %v1238 = vpack.c.b16 %v1206, %v1206
  %1271 = vst [vmem:[%s4] sm:$0xff] %v1207
  %1272 = vst [vmem:[%s4 + $0x8] sm:$0xf] %v1208
  %1273 = vst [vmem:[%s4 + $0xc] sm:$0xff] %v1209
  %1274 = vst [vmem:[%s4 + $0x14] sm:$0xf] %v1210
  %1275 = vst [vmem:[%s4 + $0x18] sm:$0xff] %v1211
  %1276 = vst [vmem:[%s4 + $0x20] sm:$0xf] %v1212
  %1277 = vst [vmem:[%s4 + $0x24] sm:$0xff] %v1213
  %1278 = vst [vmem:[%s4 + $0x2c] sm:$0xf] %v1214
  %1279 = vst [vmem:[%s4 + $0x30] sm:$0xff] %v1215
  %1280 = vst [vmem:[%s4 + $0x38] sm:$0xf] %v1216
  %1281 = vst [vmem:[%s4 + $0x3c] sm:$0xff] %v1217
  %1282 = vst [vmem:[%s4 + $0x44] sm:$0xf] %v1218
  %1283 = vst [vmem:[%s4 + $0x48] sm:$0xff] %v1219
  %1284 = vst [vmem:[%s4 + $0x50] sm:$0xf] %v1220
  %1285 = vst [vmem:[%s4 + $0x54] sm:$0xff] %v1221
  %1286 = vst [vmem:[%s4 + $0x5c] sm:$0xf] %v1222
  %1287 = vst [vmem:[%s4 + $0x60] sm:$0xff] %v1223
  %1288 = vst [vmem:[%s4 + $0x68] sm:$0xf] %v1224
  %1289 = vst [vmem:[%s4 + $0x6c] sm:$0xff] %v1225
  %1290 = vst [vmem:[%s4 + $0x74] sm:$0xf] %v1226
  %1291 = vst [vmem:[%s4 + $0x78] sm:$0xff] %v1227
  %1292 = vst [vmem:[%s4 + $0x80] sm:$0xf] %v1228
  %1293 = vst [vmem:[%s4 + $0x84] sm:$0xff] %v1229
  %1294 = vst [vmem:[%s4 + $0x8c] sm:$0xf] %v1230
  %1295 = vst [vmem:[%s4 + $0x90] sm:$0xff] %v1231
  %1296 = vst [vmem:[%s4 + $0x98] sm:$0xf] %v1232
  %1297 = vst [vmem:[%s4 + $0x9c] sm:$0xff] %v1233
  %1298 = vst [vmem:[%s4 + $0xa4] sm:$0xf] %v1234
  %1299 = vst [vmem:[%s4 + $0xa8] sm:$0xff] %v1235
  %1300 = vst [vmem:[%s4 + $0xb0] sm:$0xf] %v1236
  %1301 = vst [vmem:[%s4 + $0xb4] sm:$0xff] %v1237
  %1302 = vst [vmem:[%s4 + $0xbc] sm:$0xf] %v1238
  // Predicated region
  $region14: #{bilstm_forward.3} parent=0 // pred_check
    _
  $region15: #{bilstm_forward.3} parent=0 // pred_check_branch
    %1304 = sbr.rel (0) target = $region17
  $region16: #{bilstm_forward.3} parent=0 // pred_region
    _
  $region17: #{bilstm_forward.3} parent=0 // pred_fallthru
    _
  // Predicated region
  $region18: #{bilstm_forward.3} parent=0 // pred_check
    _
  $region19: #{bilstm_forward.3} parent=0 // pred_check_branch
    %1306 = sbr.rel (0) target = $region21
  $region20: #{bilstm_forward.3} parent=0 // pred_region
    _
  $region21: #{bilstm_forward.3} parent=0 // pred_fallthru
    _
  // Predicated region
  $region22: #{bilstm_forward.3} parent=0 // pred_check
    _
  $region23: #{bilstm_forward.3} parent=0 // pred_check_branch
    %1308 = sbr.rel (0) target = $region25
  $region24: #{bilstm_forward.3} parent=0 // pred_region
    _
  $region25: #{bilstm_forward.3} parent=0 // pred_fallthru
    _
  // Predicated region
  $region26: #{bilstm_forward.3} parent=0 // pred_check
    _
  $region27: #{bilstm_forward.3} parent=0 // pred_check_branch
    %1310 = sbr.rel (0) target = $region29
  $region28: #{bilstm_forward.3} parent=0 // pred_region
    _
  $region29: #{bilstm_forward.3} parent=0 // pred_fallthru
    _

// kernel: bilstm_forward.5
$region0: #{bilstm_forward.5}
  #allocation0 [shape = 'u32[]', space=smem, size = 0x4, offset = 0x4, fixed_abs, tag = 'smem constant byte address 0x4 - core index']
  #allocation1 [shape = 'u32[144,128]{1,0:T(1,128)}', space=vmem, size = 0x12000, scoped, tag = 'internal scratch']
  %s0 = inlined_call_operand.vmem [shape: bf16[128,128], index: 0, kind: input, shape index: {}]
  %s1 = inlined_call_operand.vmem [shape: bf16[128,128], index: 1, kind: input, shape index: {}]
  %s2 = inlined_call_operand.vmem [shape: bf16[256,128], index: 2, kind: input, shape index: {}]
  %s3 = inlined_call_operand.vmem [shape: f32[1,128], index: 3, kind: input, shape index: {}]
  %s4 = inlined_call_operand.vmem [shape: s32[128,1], index: 4, kind: input, shape index: {}]
  %s5 = inlined_call_operand.vmem [shape: s32[128,1], index: 5, kind: output, shape index: {}]
  %s6 = sld [smem:[#allocation0]]
  $region30: #{bilstm_forward.5} parent=0
    _
  %s8 = ssub.s32 1, %s6
  %s9 = scalar_select 0, %s8, %s6
  // Predicated region
  $region2: #{bilstm_forward.5} parent=0 // pred_check
    _
  $region3: #{bilstm_forward.5} parent=0 // pred_check_branch
    %11 = sbr.rel (0) target = $region5
  $region4: #{bilstm_forward.5} parent=0 // pred_region
    _
  $region5: #{bilstm_forward.5} parent=0 // pred_fallthru
    _
  // Predicated region
  $region6: #{bilstm_forward.5} parent=0 // pred_check
    _
  $region7: #{bilstm_forward.5} parent=0 // pred_check_branch
    %13 = sbr.rel (0) target = $region9
  $region8: #{bilstm_forward.5} parent=0 // pred_region
    _
  $region9: #{bilstm_forward.5} parent=0 // pred_fallthru
    _
  // Predicated region
  $region10: #{bilstm_forward.5} parent=0 // pred_check
    _
  $region11: #{bilstm_forward.5} parent=0 // pred_check_branch
    %15 = sbr.rel (0) target = $region13
  $region12: #{bilstm_forward.5} parent=0 // pred_region
    _
  $region13: #{bilstm_forward.5} parent=0 // pred_fallthru
    _
  // Predicated region
  $region14: #{bilstm_forward.5} parent=0 // pred_check
    _
  $region15: #{bilstm_forward.5} parent=0 // pred_check_branch
    %17 = sbr.rel (0) target = $region17
  $region16: #{bilstm_forward.5} parent=0 // pred_region
    _
  $region17: #{bilstm_forward.5} parent=0 // pred_fallthru
    _
  // Predicated region
  $region18: #{bilstm_forward.5} parent=0 // pred_check
    _
  $region19: #{bilstm_forward.5} parent=0 // pred_check_branch
    %19 = sbr.rel (0) target = $region21
  $region20: #{bilstm_forward.5} parent=0 // pred_region
    _
  $region21: #{bilstm_forward.5} parent=0 // pred_fallthru
    _
  %v21 = vld [vmem:[%s0] sm:$0xf]
  %v22 = vld [vmem:[%s0 + $0x4] sm:$0xf]
  %v23 = vld [vmem:[%s0 + $0x8] sm:$0xf]
  %v24 = vld [vmem:[%s0 + $0xc] sm:$0xf]
  %v25 = vld [vmem:[%s0 + $0x10] sm:$0xf]
  %v26 = vld [vmem:[%s0 + $0x14] sm:$0xf]
  %v27 = vld [vmem:[%s0 + $0x18] sm:$0xf]
  %v28 = vld [vmem:[%s0 + $0x1c] sm:$0xf]
  %v29 = vld [vmem:[%s0 + $0x20] sm:$0xf]
  %v30 = vld [vmem:[%s0 + $0x24] sm:$0xf]
  %v31 = vld [vmem:[%s0 + $0x28] sm:$0xf]
  %v32 = vld [vmem:[%s0 + $0x2c] sm:$0xf]
  %v33 = vld [vmem:[%s0 + $0x30] sm:$0xf]
  %v34 = vld [vmem:[%s0 + $0x34] sm:$0xf]
  %v35 = vld [vmem:[%s0 + $0x38] sm:$0xf]
  %v36 = vld [vmem:[%s0 + $0x3c] sm:$0xf]
  %v37 = vld [vmem:[%s1] sm:$0xf]
  %v38 = vld [vmem:[%s1 + $0x4] sm:$0xf]
  %v39 = vld [vmem:[%s1 + $0x8] sm:$0xf]
  %v40 = vld [vmem:[%s1 + $0xc] sm:$0xf]
  %v41 = vld [vmem:[%s1 + $0x10] sm:$0xf]
  %v42 = vld [vmem:[%s1 + $0x14] sm:$0xf]
  %v43 = vld [vmem:[%s1 + $0x18] sm:$0xf]
  %v44 = vld [vmem:[%s1 + $0x1c] sm:$0xf]
  %v45 = vld [vmem:[%s1 + $0x20] sm:$0xf]
  %v46 = vld [vmem:[%s1 + $0x24] sm:$0xf]
  %v47 = vld [vmem:[%s1 + $0x28] sm:$0xf]
  %v48 = vld [vmem:[%s1 + $0x2c] sm:$0xf]
  %v49 = vld [vmem:[%s1 + $0x30] sm:$0xf]
  %v50 = vld [vmem:[%s1 + $0x34] sm:$0xf]
  %v51 = vld [vmem:[%s1 + $0x38] sm:$0xf]
  %v52 = vld [vmem:[%s1 + $0x3c] sm:$0xf]
  %v69 = vunpack.c.l.b16 %v21
  %v70 = vunpack.c.l.b16 %v22
  %v71 = vunpack.c.l.b16 %v23
  %v72 = vunpack.c.l.b16 %v24
  %v73 = vunpack.c.l.b16 %v25
  %v74 = vunpack.c.l.b16 %v26
  %v75 = vunpack.c.l.b16 %v27
  %v76 = vunpack.c.l.b16 %v28
  %v77 = vunpack.c.l.b16 %v29
  %v78 = vunpack.c.l.b16 %v30
  %v79 = vunpack.c.l.b16 %v31
  %v80 = vunpack.c.l.b16 %v32
  %v81 = vunpack.c.l.b16 %v33
  %v82 = vunpack.c.l.b16 %v34
  %v83 = vunpack.c.l.b16 %v35
  %v84 = vunpack.c.l.b16 %v36
  %v85 = vpack.c.b16 %v70, %v69
  %v86 = vpack.c.b16 %v72, %v71
  %v87 = vpack.c.b16 %v74, %v73
  %v88 = vpack.c.b16 %v76, %v75
  %v89 = vpack.c.b16 %v78, %v77
  %v90 = vpack.c.b16 %v80, %v79
  %v91 = vpack.c.b16 %v82, %v81
  %v92 = vpack.c.b16 %v84, %v83
  %v117 = vunpack.c.l.b16 %v37
  %v118 = vunpack.c.l.b16 %v38
  %v119 = vunpack.c.l.b16 %v39
  %v120 = vunpack.c.l.b16 %v40
  %v121 = vunpack.c.l.b16 %v41
  %v122 = vunpack.c.l.b16 %v42
  %v123 = vunpack.c.l.b16 %v43
  %v124 = vunpack.c.l.b16 %v44
  %v125 = vunpack.c.l.b16 %v45
  %v126 = vunpack.c.l.b16 %v46
  %v127 = vunpack.c.l.b16 %v47
  %v128 = vunpack.c.l.b16 %v48
  %v129 = vunpack.c.l.b16 %v49
  %v130 = vunpack.c.l.b16 %v50
  %v131 = vunpack.c.l.b16 %v51
  %v132 = vunpack.c.l.b16 %v52
  %v133 = vpack.c.b16 %v118, %v117
  %v134 = vpack.c.b16 %v120, %v119
  %v135 = vpack.c.b16 %v122, %v121
  %v136 = vpack.c.b16 %v124, %v123
  %v137 = vpack.c.b16 %v126, %v125
  %v138 = vpack.c.b16 %v128, %v127
  %v139 = vpack.c.b16 %v130, %v129
  %v140 = vpack.c.b16 %v132, %v131
  %v149 = vld [vmem:[%s2] sm:$0xf]
  %v150 = vld [vmem:[%s2 + $0x4] sm:$0xf]
  %v151 = vld [vmem:[%s2 + $0x8] sm:$0xf]
  %v152 = vld [vmem:[%s2 + $0xc] sm:$0xf]
  %v153 = vld [vmem:[%s2 + $0x10] sm:$0xf]
  %v154 = vld [vmem:[%s2 + $0x14] sm:$0xf]
  %v155 = vld [vmem:[%s2 + $0x18] sm:$0xf]
  %v156 = vld [vmem:[%s2 + $0x1c] sm:$0xf]
  %v157 = vld [vmem:[%s2 + $0x20] sm:$0xf]
  %v158 = vld [vmem:[%s2 + $0x24] sm:$0xf]
  %v159 = vld [vmem:[%s2 + $0x28] sm:$0xf]
  %v160 = vld [vmem:[%s2 + $0x2c] sm:$0xf]
  %v161 = vld [vmem:[%s2 + $0x30] sm:$0xf]
  %v162 = vld [vmem:[%s2 + $0x34] sm:$0xf]
  %v163 = vld [vmem:[%s2 + $0x38] sm:$0xf]
  %v164 = vld [vmem:[%s2 + $0x3c] sm:$0xf]
  %v165 = vld [vmem:[%s2 + $0x40] sm:$0xf]
  %v166 = vld [vmem:[%s2 + $0x44] sm:$0xf]
  %v167 = vld [vmem:[%s2 + $0x48] sm:$0xf]
  %v168 = vld [vmem:[%s2 + $0x4c] sm:$0xf]
  %v169 = vld [vmem:[%s2 + $0x50] sm:$0xf]
  %v170 = vld [vmem:[%s2 + $0x54] sm:$0xf]
  %v171 = vld [vmem:[%s2 + $0x58] sm:$0xf]
  %v172 = vld [vmem:[%s2 + $0x5c] sm:$0xf]
  %v173 = vld [vmem:[%s2 + $0x60] sm:$0xf]
  %v174 = vld [vmem:[%s2 + $0x64] sm:$0xf]
  %v175 = vld [vmem:[%s2 + $0x68] sm:$0xf]
  %v176 = vld [vmem:[%s2 + $0x6c] sm:$0xf]
  %v177 = vld [vmem:[%s2 + $0x70] sm:$0xf]
  %v178 = vld [vmem:[%s2 + $0x74] sm:$0xf]
  %v179 = vld [vmem:[%s2 + $0x78] sm:$0xf]
  %v180 = vld [vmem:[%s2 + $0x7c] sm:$0xf]
  %v181 = vld [vmem:[%s3] sm:$0x1]
  %v183 = vlaneseq
  %v184 = vshrl.u32 %v183, 7
  %v185 = vsub.s32 0, %v184
  %v186 = vrot.slane %v181, %v185
  %v220 = vunpack.c.l.b16 %v149
  %v221 = vunpack.c.l.b16 %v150
  %v222 = vunpack.c.l.b16 %v151
  %v223 = vunpack.c.l.b16 %v152
  %v224 = vunpack.c.l.b16 %v153
  %v225 = vunpack.c.l.b16 %v154
  %v226 = vunpack.c.l.b16 %v155
  %v227 = vunpack.c.l.b16 %v156
  %v228 = vunpack.c.l.b16 %v157
  %v229 = vunpack.c.l.b16 %v158
  %v230 = vunpack.c.l.b16 %v159
  %v231 = vunpack.c.l.b16 %v160
  %v232 = vunpack.c.l.b16 %v161
  %v233 = vunpack.c.l.b16 %v162
  %v234 = vunpack.c.l.b16 %v163
  %v235 = vunpack.c.l.b16 %v164
  %v236 = vunpack.c.l.b16 %v165
  %v237 = vunpack.c.l.b16 %v166
  %v238 = vunpack.c.l.b16 %v167
  %v239 = vunpack.c.l.b16 %v168
  %v240 = vunpack.c.l.b16 %v169
  %v241 = vunpack.c.l.b16 %v170
  %v242 = vunpack.c.l.b16 %v171
  %v243 = vunpack.c.l.b16 %v172
  %v244 = vunpack.c.l.b16 %v173
  %v245 = vunpack.c.l.b16 %v174
  %v246 = vunpack.c.l.b16 %v175
  %v247 = vunpack.c.l.b16 %v176
  %v248 = vunpack.c.l.b16 %v177
  %v249 = vunpack.c.l.b16 %v178
  %v250 = vunpack.c.l.b16 %v179
  %v251 = vunpack.c.l.b16 %v180
  %v252 = vpack.c.b16 %v221, %v220
  %v253 = vpack.c.b16 %v223, %v222
  %v254 = vpack.c.b16 %v225, %v224
  %v255 = vpack.c.b16 %v227, %v226
  %v256 = vpack.c.b16 %v229, %v228
  %v257 = vpack.c.b16 %v231, %v230
  %v258 = vpack.c.b16 %v233, %v232
  %v259 = vpack.c.b16 %v235, %v234
  %v260 = vpack.c.b16 %v237, %v236
  %v261 = vpack.c.b16 %v239, %v238
  %v262 = vpack.c.b16 %v241, %v240
  %v263 = vpack.c.b16 %v243, %v242
  %v264 = vpack.c.b16 %v245, %v244
  %v265 = vpack.c.b16 %v247, %v246
  %v266 = vpack.c.b16 %v249, %v248
  %v267 = vpack.c.b16 %v251, %v250
  %284 = vmatprep.subr.bf16.mxu0 0
  %285 = vmatpush1.bf16.msra.mxu0 %v252
  %286 = vmatprep.subr.bf16.mxu0 0
  %287 = vmatpush1.bf16.msra.mxu0 %v253
  %288 = vmatprep.subr.bf16.mxu0 0
  %289 = vmatpush1.bf16.msra.mxu0 %v254
  %290 = vmatprep.subr.bf16.mxu0 0
  %291 = vmatpush1.bf16.msra.mxu0 %v255
  %292 = vmatprep.subr.bf16.mxu0 0
  %293 = vmatpush1.bf16.msra.mxu0 %v256
  %294 = vmatprep.subr.bf16.mxu0 0
  %295 = vmatpush1.bf16.msra.mxu0 %v257
  %296 = vmatprep.subr.bf16.mxu0 0
  %297 = vmatpush1.bf16.msra.mxu0 %v258
  %298 = vmatprep.subr.bf16.mxu0 0
  %299 = vmatpush1.bf16.msra.mxu0 %v259
  %300 = vmatprep.subr.bf16.mxu0 0
  %301 = vmatpush1.bf16.msra.mxu0 %v260
  %302 = vmatprep.subr.bf16.mxu0 0
  %303 = vmatpush1.bf16.msra.mxu0 %v261
  %304 = vmatprep.subr.bf16.mxu0 0
  %305 = vmatpush1.bf16.msra.mxu0 %v262
  %306 = vmatprep.subr.bf16.mxu0 0
  %307 = vmatpush1.bf16.msra.mxu0 %v263
  %308 = vmatprep.subr.bf16.mxu0 0
  %309 = vmatpush1.bf16.msra.mxu0 %v264
  %310 = vmatprep.subr.bf16.mxu0 0
  %311 = vmatpush1.bf16.msra.mxu0 %v265
  %312 = vmatprep.subr.bf16.mxu0 0
  %313 = vmatpush1.bf16.msra.mxu0 %v266
  %314 = vmatprep.subr.bf16.mxu0 0
  %315 = vmatpush1.bf16.msra.mxu0 %v267
  %316 = vmatprep.mubr.bf16.mxu0 %v133
  %317 = vmatmul.mubr.bf16.gmra.mrb[0].mxu0 %v85
  %v318 = vpop.f32.mrb[0].mxu0
  %v319 = vadd.f32 %v186, %v318
  %v320 = vpop.f32.mrb[0].mxu0
  %v321 = vpop.f32.mrb[0].mxu0
  %v322 = vadd.f32 %v186, %v321
  %v323 = vpop.f32.mrb[0].mxu0
  %324 = vmatprep.mubr.bf16.mxu0 %v134
  %325 = vmatmul.mubr.bf16.gmra.mrb[0].mxu0 %v86
  %v326 = vpop.f32.mrb[0].mxu0
  %v327 = vadd.f32 %v186, %v326
  %v328 = vpop.f32.mrb[0].mxu0
  %v329 = vpop.f32.mrb[0].mxu0
  %v330 = vadd.f32 %v186, %v329
  %v331 = vpop.f32.mrb[0].mxu0
  %332 = vmatprep.mubr.bf16.mxu0 %v135
  %333 = vmatmul.mubr.bf16.gmra.mrb[0].mxu0 %v87
  %v334 = vpop.f32.mrb[0].mxu0
  %v335 = vadd.f32 %v186, %v334
  %v336 = vpop.f32.mrb[0].mxu0
  %v337 = vpop.f32.mrb[0].mxu0
  %v338 = vadd.f32 %v186, %v337
  %v339 = vpop.f32.mrb[0].mxu0
  %340 = vmatprep.mubr.bf16.mxu0 %v136
  %341 = vmatmul.mubr.bf16.gmra.mrb[0].mxu0 %v88
  %v342 = vpop.f32.mrb[0].mxu0
  %v343 = vadd.f32 %v186, %v342
  %v344 = vpop.f32.mrb[0].mxu0
  %v345 = vpop.f32.mrb[0].mxu0
  %v346 = vadd.f32 %v186, %v345
  %v347 = vpop.f32.mrb[0].mxu0
  %348 = vmatprep.mubr.bf16.mxu0 %v137
  %349 = vmatmul.mubr.bf16.gmra.mrb[0].mxu0 %v89
  %v350 = vpop.f32.mrb[0].mxu0
  %v351 = vadd.f32 %v186, %v350
  %v352 = vpop.f32.mrb[0].mxu0
  %v353 = vpop.f32.mrb[0].mxu0
  %v354 = vadd.f32 %v186, %v353
  %v355 = vpop.f32.mrb[0].mxu0
  %356 = vmatprep.mubr.bf16.mxu0 %v138
  %357 = vmatmul.mubr.bf16.gmra.mrb[0].mxu0 %v90
  %v358 = vpop.f32.mrb[0].mxu0
  %v359 = vadd.f32 %v186, %v358
  %v360 = vpop.f32.mrb[0].mxu0
  %v361 = vpop.f32.mrb[0].mxu0
  %v362 = vadd.f32 %v186, %v361
  %v363 = vpop.f32.mrb[0].mxu0
  %364 = vmatprep.mubr.bf16.mxu0 %v139
  %365 = vmatmul.mubr.bf16.gmra.mrb[0].mxu0 %v91
  %v366 = vpop.f32.mrb[0].mxu0
  %v367 = vadd.f32 %v186, %v366
  %v368 = vpop.f32.mrb[0].mxu0
  %v369 = vpop.f32.mrb[0].mxu0
  %v370 = vadd.f32 %v186, %v369
  %v371 = vpop.f32.mrb[0].mxu0
  %372 = vmatprep.mubr.bf16.mxu0 %v140
  %373 = vmatmul.mubr.bf16.gmra.mrb[0].mxu0 %v92
  %v374 = vpop.f32.mrb[0].mxu0
  %v375 = vadd.f32 %v186, %v374
  %v376 = vpop.f32.mrb[0].mxu0
  %v377 = vpop.f32.mrb[0].mxu0
  %v378 = vadd.f32 %v186, %v377
  %v379 = vpop.f32.mrb[0].mxu0
  %380 = vdwg.mxu0
  %381 = vmax.xlane.f32.xlu0 %v319
  %v382 = vpop.xlane.xlu0 %381
  %383 = vmax.xlane.f32.xlu0 %v322
  %v384 = vpop.xlane.xlu0 %383
  %385 = vmax.xlane.f32.xlu0 %v327
  %v386 = vpop.xlane.xlu0 %385
  %387 = vmax.xlane.f32.xlu0 %v330
  %v388 = vpop.xlane.xlu0 %387
  %389 = vmax.xlane.f32.xlu0 %v335
  %v390 = vpop.xlane.xlu0 %389
  %391 = vmax.xlane.f32.xlu0 %v338
  %v392 = vpop.xlane.xlu0 %391
  %393 = vmax.xlane.f32.xlu0 %v343
  %v394 = vpop.xlane.xlu0 %393
  %395 = vmax.xlane.f32.xlu0 %v346
  %v396 = vpop.xlane.xlu0 %395
  %397 = vmax.xlane.f32.xlu0 %v351
  %v398 = vpop.xlane.xlu0 %397
  %399 = vmax.xlane.f32.xlu0 %v354
  %v400 = vpop.xlane.xlu0 %399
  %401 = vmax.xlane.f32.xlu0 %v359
  %v402 = vpop.xlane.xlu0 %401
  %403 = vmax.xlane.f32.xlu0 %v362
  %v404 = vpop.xlane.xlu0 %403
  %405 = vmax.xlane.f32.xlu0 %v367
  %v406 = vpop.xlane.xlu0 %405
  %407 = vmax.xlane.f32.xlu0 %v370
  %v408 = vpop.xlane.xlu0 %407
  %409 = vmax.xlane.f32.xlu0 %v375
  %v410 = vpop.xlane.xlu0 %409
  %411 = vmax.xlane.f32.xlu0 %v378
  %v412 = vpop.xlane.xlu0 %411
  %v413 = vlaneseq
  %v414 = vand.u32 %v413, 127
  %vm415 = vcmp.ge.f32.partialorder %v319, %v382
  %vm416 = vcmp.ge.f32.partialorder %v322, %v384
  %vm417 = vcmp.ge.f32.partialorder %v327, %v386
  %vm418 = vcmp.ge.f32.partialorder %v330, %v388
  %vm419 = vcmp.ge.f32.partialorder %v335, %v390
  %vm420 = vcmp.ge.f32.partialorder %v338, %v392
  %vm421 = vcmp.ge.f32.partialorder %v343, %v394
  %vm422 = vcmp.ge.f32.partialorder %v346, %v396
  %vm423 = vcmp.ge.f32.partialorder %v351, %v398
  %vm424 = vcmp.ge.f32.partialorder %v354, %v400
  %vm425 = vcmp.ge.f32.partialorder %v359, %v402
  %vm426 = vcmp.ge.f32.partialorder %v362, %v404
  %vm427 = vcmp.ge.f32.partialorder %v367, %v406
  %vm428 = vcmp.ge.f32.partialorder %v370, %v408
  %vm429 = vcmp.ge.f32.partialorder %v375, %v410
  %vm430 = vcmp.ge.f32.partialorder %v378, %v412
  %v431 = vsel %vm415, %v414, 128
  %v432 = vsel %vm416, %v414, 128
  %v433 = vsel %vm417, %v414, 128
  %v434 = vsel %vm418, %v414, 128
  %v435 = vsel %vm419, %v414, 128
  %v436 = vsel %vm420, %v414, 128
  %v437 = vsel %vm421, %v414, 128
  %v438 = vsel %vm422, %v414, 128
  %v439 = vsel %vm423, %v414, 128
  %v440 = vsel %vm424, %v414, 128
  %v441 = vsel %vm425, %v414, 128
  %v442 = vsel %vm426, %v414, 128
  %v443 = vsel %vm427, %v414, 128
  %v444 = vsel %vm428, %v414, 128
  %v445 = vsel %vm429, %v414, 128
  %v446 = vsel %vm430, %v414, 128
  %v447 = vand.u32 %v431, 65535
  %v448 = vshra.s32 %v431, 16
  %v449 = vcvt.s32.f32 %v447
  %v450 = vcvt.s32.f32 %v448
  %451 = vmin.xlane.f32.xlu0 %v450
  %v452 = vpop.xlane.xlu0 %451
  %vm453 = vcmp.eq.f32.partialorder %v450, %v452
  %v454 = vsel %vm453, %v449, inf
  %455 = vmin.xlane.f32.xlu0 %v454
  %v456 = vpop.xlane.xlu0 %455
  %v457 = vcvt.f32.s32 %v456
  %v458 = vcvt.f32.s32 %v452
  %v459 = vshll.u32 %v458, 16
  %v460 = vadd.s32 %v459, %v457
  %v461 = vand.u32 %v432, 65535
  %v462 = vshra.s32 %v432, 16
  %v463 = vcvt.s32.f32 %v461
  %v464 = vcvt.s32.f32 %v462
  %465 = vmin.xlane.f32.xlu0 %v464
  %v466 = vpop.xlane.xlu0 %465
  %vm467 = vcmp.eq.f32.partialorder %v464, %v466
  %v468 = vsel %vm467, %v463, inf
  %469 = vmin.xlane.f32.xlu0 %v468
  %v470 = vpop.xlane.xlu0 %469
  %v471 = vcvt.f32.s32 %v470
  %v472 = vcvt.f32.s32 %v466
  %v473 = vshll.u32 %v472, 16
  %v474 = vadd.s32 %v473, %v471
  %v475 = vand.u32 %v433, 65535
  %v476 = vshra.s32 %v433, 16
  %v477 = vcvt.s32.f32 %v475
  %v478 = vcvt.s32.f32 %v476
  %479 = vmin.xlane.f32.xlu0 %v478
  %v480 = vpop.xlane.xlu0 %479
  %vm481 = vcmp.eq.f32.partialorder %v478, %v480
  %v482 = vsel %vm481, %v477, inf
  %483 = vmin.xlane.f32.xlu0 %v482
  %v484 = vpop.xlane.xlu0 %483
  %v485 = vcvt.f32.s32 %v484
  %v486 = vcvt.f32.s32 %v480
  %v487 = vshll.u32 %v486, 16
  %v488 = vadd.s32 %v487, %v485
  %v489 = vand.u32 %v434, 65535
  %v490 = vshra.s32 %v434, 16
  %v491 = vcvt.s32.f32 %v489
  %v492 = vcvt.s32.f32 %v490
  %493 = vmin.xlane.f32.xlu0 %v492
  %v494 = vpop.xlane.xlu0 %493
  %vm495 = vcmp.eq.f32.partialorder %v492, %v494
  %v496 = vsel %vm495, %v491, inf
  %497 = vmin.xlane.f32.xlu0 %v496
  %v498 = vpop.xlane.xlu0 %497
  %v499 = vcvt.f32.s32 %v498
  %v500 = vcvt.f32.s32 %v494
  %v501 = vshll.u32 %v500, 16
  %v502 = vadd.s32 %v501, %v499
  %v503 = vand.u32 %v435, 65535
  %v504 = vshra.s32 %v435, 16
  %v505 = vcvt.s32.f32 %v503
  %v506 = vcvt.s32.f32 %v504
  %507 = vmin.xlane.f32.xlu0 %v506
  %v508 = vpop.xlane.xlu0 %507
  %vm509 = vcmp.eq.f32.partialorder %v506, %v508
  %v510 = vsel %vm509, %v505, inf
  %511 = vmin.xlane.f32.xlu0 %v510
  %v512 = vpop.xlane.xlu0 %511
  %v513 = vcvt.f32.s32 %v512
  %v514 = vcvt.f32.s32 %v508
  %v515 = vshll.u32 %v514, 16
  %v516 = vadd.s32 %v515, %v513
  %v517 = vand.u32 %v436, 65535
  %v518 = vshra.s32 %v436, 16
  %v519 = vcvt.s32.f32 %v517
  %v520 = vcvt.s32.f32 %v518
  %521 = vmin.xlane.f32.xlu0 %v520
  %v522 = vpop.xlane.xlu0 %521
  %vm523 = vcmp.eq.f32.partialorder %v520, %v522
  %v524 = vsel %vm523, %v519, inf
  %525 = vmin.xlane.f32.xlu0 %v524
  %v526 = vpop.xlane.xlu0 %525
  %v527 = vcvt.f32.s32 %v526
  %v528 = vcvt.f32.s32 %v522
  %v529 = vshll.u32 %v528, 16
  %v530 = vadd.s32 %v529, %v527
  %v531 = vand.u32 %v437, 65535
  %v532 = vshra.s32 %v437, 16
  %v533 = vcvt.s32.f32 %v531
  %v534 = vcvt.s32.f32 %v532
  %535 = vmin.xlane.f32.xlu0 %v534
  %v536 = vpop.xlane.xlu0 %535
  %vm537 = vcmp.eq.f32.partialorder %v534, %v536
  %v538 = vsel %vm537, %v533, inf
  %539 = vmin.xlane.f32.xlu0 %v538
  %v540 = vpop.xlane.xlu0 %539
  %v541 = vcvt.f32.s32 %v540
  %v542 = vcvt.f32.s32 %v536
  %v543 = vshll.u32 %v542, 16
  %v544 = vadd.s32 %v543, %v541
  %v545 = vand.u32 %v438, 65535
  %v546 = vshra.s32 %v438, 16
  %v547 = vcvt.s32.f32 %v545
  %v548 = vcvt.s32.f32 %v546
  %549 = vmin.xlane.f32.xlu0 %v548
  %v550 = vpop.xlane.xlu0 %549
  %vm551 = vcmp.eq.f32.partialorder %v548, %v550
  %v552 = vsel %vm551, %v547, inf
  %553 = vmin.xlane.f32.xlu0 %v552
  %v554 = vpop.xlane.xlu0 %553
  %v555 = vcvt.f32.s32 %v554
  %v556 = vcvt.f32.s32 %v550
  %v557 = vshll.u32 %v556, 16
  %v558 = vadd.s32 %v557, %v555
  %v559 = vand.u32 %v439, 65535
  %v560 = vshra.s32 %v439, 16
  %v561 = vcvt.s32.f32 %v559
  %v562 = vcvt.s32.f32 %v560
  %563 = vmin.xlane.f32.xlu0 %v562
  %v564 = vpop.xlane.xlu0 %563
  %vm565 = vcmp.eq.f32.partialorder %v562, %v564
  %v566 = vsel %vm565, %v561, inf
  %567 = vmin.xlane.f32.xlu0 %v566
  %v568 = vpop.xlane.xlu0 %567
  %v569 = vcvt.f32.s32 %v568
  %v570 = vcvt.f32.s32 %v564
  %v571 = vshll.u32 %v570, 16
  %v572 = vadd.s32 %v571, %v569
  %v573 = vand.u32 %v440, 65535
  %v574 = vshra.s32 %v440, 16
  %v575 = vcvt.s32.f32 %v573
  %v576 = vcvt.s32.f32 %v574
  %577 = vmin.xlane.f32.xlu0 %v576
  %v578 = vpop.xlane.xlu0 %577
  %vm579 = vcmp.eq.f32.partialorder %v576, %v578
  %v580 = vsel %vm579, %v575, inf
  %581 = vmin.xlane.f32.xlu0 %v580
  %v582 = vpop.xlane.xlu0 %581
  %v583 = vcvt.f32.s32 %v582
  %v584 = vcvt.f32.s32 %v578
  %v585 = vshll.u32 %v584, 16
  %v586 = vadd.s32 %v585, %v583
  %v587 = vand.u32 %v441, 65535
  %v588 = vshra.s32 %v441, 16
  %v589 = vcvt.s32.f32 %v587
  %v590 = vcvt.s32.f32 %v588
  %591 = vmin.xlane.f32.xlu0 %v590
  %v592 = vpop.xlane.xlu0 %591
  %vm593 = vcmp.eq.f32.partialorder %v590, %v592
  %v594 = vsel %vm593, %v589, inf
  %595 = vmin.xlane.f32.xlu0 %v594
  %v596 = vpop.xlane.xlu0 %595
  %v597 = vcvt.f32.s32 %v596
  %v598 = vcvt.f32.s32 %v592
  %v599 = vshll.u32 %v598, 16
  %v600 = vadd.s32 %v599, %v597
  %v601 = vand.u32 %v442, 65535
  %v602 = vshra.s32 %v442, 16
  %v603 = vcvt.s32.f32 %v601
  %v604 = vcvt.s32.f32 %v602
  %605 = vmin.xlane.f32.xlu0 %v604
  %v606 = vpop.xlane.xlu0 %605
  %vm607 = vcmp.eq.f32.partialorder %v604, %v606
  %v608 = vsel %vm607, %v603, inf
  %609 = vmin.xlane.f32.xlu0 %v608
  %v610 = vpop.xlane.xlu0 %609
  %v611 = vcvt.f32.s32 %v610
  %v612 = vcvt.f32.s32 %v606
  %v613 = vshll.u32 %v612, 16
  %v614 = vadd.s32 %v613, %v611
  %v615 = vand.u32 %v443, 65535
  %v616 = vshra.s32 %v443, 16
  %v617 = vcvt.s32.f32 %v615
  %v618 = vcvt.s32.f32 %v616
  %619 = vmin.xlane.f32.xlu0 %v618
  %v620 = vpop.xlane.xlu0 %619
  %vm621 = vcmp.eq.f32.partialorder %v618, %v620
  %v622 = vsel %vm621, %v617, inf
  %623 = vmin.xlane.f32.xlu0 %v622
  %v624 = vpop.xlane.xlu0 %623
  %v625 = vcvt.f32.s32 %v624
  %v626 = vcvt.f32.s32 %v620
  %v627 = vshll.u32 %v626, 16
  %v628 = vadd.s32 %v627, %v625
  %v629 = vand.u32 %v444, 65535
  %v630 = vshra.s32 %v444, 16
  %v631 = vcvt.s32.f32 %v629
  %v632 = vcvt.s32.f32 %v630
  %633 = vmin.xlane.f32.xlu0 %v632
  %v634 = vpop.xlane.xlu0 %633
  %vm635 = vcmp.eq.f32.partialorder %v632, %v634
  %v636 = vsel %vm635, %v631, inf
  %637 = vmin.xlane.f32.xlu0 %v636
  %v638 = vpop.xlane.xlu0 %637
  %v639 = vcvt.f32.s32 %v638
  %v640 = vcvt.f32.s32 %v634
  %v641 = vshll.u32 %v640, 16
  %v642 = vadd.s32 %v641, %v639
  %v643 = vand.u32 %v445, 65535
  %v644 = vshra.s32 %v445, 16
  %v645 = vcvt.s32.f32 %v643
  %v646 = vcvt.s32.f32 %v644
  %647 = vmin.xlane.f32.xlu0 %v646
  %v648 = vpop.xlane.xlu0 %647
  %vm649 = vcmp.eq.f32.partialorder %v646, %v648
  %v650 = vsel %vm649, %v645, inf
  %651 = vmin.xlane.f32.xlu0 %v650
  %v652 = vpop.xlane.xlu0 %651
  %v653 = vcvt.f32.s32 %v652
  %v654 = vcvt.f32.s32 %v648
  %v655 = vshll.u32 %v654, 16
  %v656 = vadd.s32 %v655, %v653
  %v657 = vand.u32 %v446, 65535
  %v658 = vshra.s32 %v446, 16
  %v659 = vcvt.s32.f32 %v657
  %v660 = vcvt.s32.f32 %v658
  %661 = vmin.xlane.f32.xlu0 %v660
  %v662 = vpop.xlane.xlu0 %661
  %vm663 = vcmp.eq.f32.partialorder %v660, %v662
  %v664 = vsel %vm663, %v659, inf
  %665 = vmin.xlane.f32.xlu0 %v664
  %v666 = vpop.xlane.xlu0 %665
  %v667 = vcvt.f32.s32 %v666
  %v668 = vcvt.f32.s32 %v662
  %v669 = vshll.u32 %v668, 16
  %v670 = vadd.s32 %v669, %v667
  %v671 = vld [vmem:[%s4] sm:$0xff]
  %v672 = vld [vmem:[%s4 + $0x8] sm:$0xff]
  %v673 = vld [vmem:[%s4 + $0x10] sm:$0xff]
  %v674 = vld [vmem:[%s4 + $0x18] sm:$0xff]
  %v675 = vld [vmem:[%s4 + $0x20] sm:$0xff]
  %v676 = vld [vmem:[%s4 + $0x28] sm:$0xff]
  %v677 = vld [vmem:[%s4 + $0x30] sm:$0xff]
  %v678 = vld [vmem:[%s4 + $0x38] sm:$0xff]
  %v679 = vld [vmem:[%s4 + $0x40] sm:$0xff]
  %v680 = vld [vmem:[%s4 + $0x48] sm:$0xff]
  %v681 = vld [vmem:[%s4 + $0x50] sm:$0xff]
  %v682 = vld [vmem:[%s4 + $0x58] sm:$0xff]
  %v683 = vld [vmem:[%s4 + $0x60] sm:$0xff]
  %v684 = vld [vmem:[%s4 + $0x68] sm:$0xff]
  %v685 = vld [vmem:[%s4 + $0x70] sm:$0xff]
  %v686 = vld [vmem:[%s4 + $0x78] sm:$0xff]
  %v687 = vmul.u32 %v671, %v460
  %v688 = vmul.u32 %v672, %v474
  %v689 = vmul.u32 %v673, %v488
  %v690 = vmul.u32 %v674, %v502
  %v691 = vmul.u32 %v675, %v516
  %v692 = vmul.u32 %v676, %v530
  %v693 = vmul.u32 %v677, %v544
  %v694 = vmul.u32 %v678, %v558
  %v695 = vmul.u32 %v679, %v572
  %v696 = vmul.u32 %v680, %v586
  %v697 = vmul.u32 %v681, %v600
  %v698 = vmul.u32 %v682, %v614
  %v699 = vmul.u32 %v683, %v628
  %v700 = vmul.u32 %v684, %v642
  %v701 = vmul.u32 %v685, %v656
  %v702 = vmul.u32 %v686, %v670
  %vm703 = vcmask 7168
  %704 = vst.msk [vmem:[%s5] sm:$0xff] %vm703, %v687
  %705 = vst.msk [vmem:[%s5 + $0x8] sm:$0xff] %vm703, %v688
  %706 = vst.msk [vmem:[%s5 + $0x10] sm:$0xff] %vm703, %v689
  %707 = vst.msk [vmem:[%s5 + $0x18] sm:$0xff] %vm703, %v690
  %708 = vst.msk [vmem:[%s5 + $0x20] sm:$0xff] %vm703, %v691
  %709 = vst.msk [vmem:[%s5 + $0x28] sm:$0xff] %vm703, %v692
  %710 = vst.msk [vmem:[%s5 + $0x30] sm:$0xff] %vm703, %v693
  %711 = vst.msk [vmem:[%s5 + $0x38] sm:$0xff] %vm703, %v694
  %712 = vst.msk [vmem:[%s5 + $0x40] sm:$0xff] %vm703, %v695
  %713 = vst.msk [vmem:[%s5 + $0x48] sm:$0xff] %vm703, %v696
  %714 = vst.msk [vmem:[%s5 + $0x50] sm:$0xff] %vm703, %v697
  %715 = vst.msk [vmem:[%s5 + $0x58] sm:$0xff] %vm703, %v698
  %716 = vst.msk [vmem:[%s5 + $0x60] sm:$0xff] %vm703, %v699
  %717 = vst.msk [vmem:[%s5 + $0x68] sm:$0xff] %vm703, %v700
  %718 = vst.msk [vmem:[%s5 + $0x70] sm:$0xff] %vm703, %v701
  %719 = vst.msk [vmem:[%s5 + $0x78] sm:$0xff] %vm703, %v702
  // Predicated region
  $region22: #{bilstm_forward.5} parent=0 // pred_check
    _
  $region23: #{bilstm_forward.5} parent=0 // pred_check_branch
    %721 = sbr.rel (0) target = $region25
  $region24: #{bilstm_forward.5} parent=0 // pred_region
    _
  $region25: #{bilstm_forward.5} parent=0 // pred_fallthru
    _
  // Predicated region
  $region26: #{bilstm_forward.5} parent=0 // pred_check
    _
  $region27: #{bilstm_forward.5} parent=0 // pred_check_branch
    %723 = sbr.rel (0) target = $region29
  $region28: #{bilstm_forward.5} parent=0 // pred_region
    _
  $region29: #{bilstm_forward.5} parent=0 // pred_fallthru
    _

// kernel: bilstm_forward.4
$region0: #{bilstm_forward.4}
  #allocation0 [shape = 'u32[]', space=smem, size = 0x4, offset = 0x4, fixed_abs, tag = 'smem constant byte address 0x4 - core index']
  #allocation1 [shape = 'u32[144,128]{1,0:T(1,128)}', space=vmem, size = 0x12000, scoped, tag = 'internal scratch']
  #allocation2 [shape = 'f32[32,256]{1,0:T(8,128)}', space=vmem, size = 0x8000, scoped, tag = 'scratch operand']
  #allocation3 [shape = 'f32[32,128]{1,0:T(8,128)}', space=vmem, size = 0x4000, scoped, tag = 'scratch operand']
  %s0 = inlined_call_operand.vmem [shape: bf16[8,16,384], index: 0, kind: input, shape index: {}]
  %s1 = inlined_call_operand.vmem [shape: bf16[8,16,384], index: 1, kind: input, shape index: {}]
  %s2 = inlined_call_operand.vmem [shape: bf16[256,384], index: 2, kind: input, shape index: {}]
  %s3 = inlined_call_operand.vmem [shape: bf16[8,16,128], index: 3, kind: output, shape index: {0}]
  %s4 = inlined_call_operand.vmem [shape: bf16[8,16,128], index: 4, kind: output, shape index: {1}]
  %5 = xla_tuple %s3, %s4
  %s6 = sld [smem:[#allocation0]]
  $region34: #{bilstm_forward.4} parent=0
    _
  %s8 = ssub.s32 1, %s6
  %s9 = scalar_select 0, %s8, %s6
  // Predicated region
  $region2: #{bilstm_forward.4} parent=0 // pred_check
    _
  $region3: #{bilstm_forward.4} parent=0 // pred_check_branch
    %11 = sbr.rel (0) target = $region5
  $region4: #{bilstm_forward.4} parent=0 // pred_region
    _
  $region5: #{bilstm_forward.4} parent=0 // pred_fallthru
    _
  // Predicated region
  $region6: #{bilstm_forward.4} parent=0 // pred_check
    _
  $region7: #{bilstm_forward.4} parent=0 // pred_check_branch
    %13 = sbr.rel (0) target = $region9
  $region8: #{bilstm_forward.4} parent=0 // pred_region
    %s14 = ssub.s32 0, 0
    %s15 = smul.u32 8, %s14
    %p16 = scmp.lt.s32.totalorder %s15, 7
    %s17 = scalar_select %p16, %s15, 7
    %s18 = smul.addr %s17, 6
    %s19 = smul.addr %s18, 4
    %s20 = scalar_lea.vmem %s1, %s19
    %s21 = ssub.s32 0, 0
    %s22 = smul.u32 8, %s21
  $region9: #{bilstm_forward.4} parent=0 // pred_fallthru
    _
  // Predicated region
  $region10: #{bilstm_forward.4} parent=0 // pred_check
    _
  $region11: #{bilstm_forward.4} parent=0 // pred_check_branch
    %24 = sbr.rel (0) target = $region13
  $region12: #{bilstm_forward.4} parent=0 // pred_region
    _
  $region13: #{bilstm_forward.4} parent=0 // pred_fallthru
    _
  %s25 = ssub.s32 0, 0
  %s26 = smul.u32 8, %s25
  %p27 = scmp.lt.s32.totalorder %s26, 7
  %s28 = scalar_select %p27, %s26, 7
  %s29 = smul.addr %s28, 6
  %s30 = smul.addr %s29, 4
  %s31 = scalar_lea.vmem %s1, %s30
  %s32 = ssub.s32 0, 0
  %s33 = smul.u32 8, %s32
  %p34 = scmp.lt.s32.totalorder %s33, 7
  %s35 = scalar_select %p34, %s33, 7
  %s36 = smul.addr %s35, 2
  %s37 = smul.addr %s36, 4
  %s38 = scalar_lea.vmem %s4, %s37
  %s39 = ssub.s32 0, 0
  %s40 = smul.u32 8, %s39
  %p41 = scmp.lt.s32.totalorder %s40, 7
  %s42 = scalar_select %p41, %s40, 7
  %s43 = smul.addr %s42, 6
  %s44 = smul.addr %s43, 4
  %s45 = scalar_lea.vmem %s1, %s44
  %s46 = ssub.s32 0, 0
  %s47 = smul.u32 8, %s46
  %s48 = ssub.s32 0, 0
  %s49 = smul.u32 8, %s48
  %p50 = scmp.lt.s32.totalorder %s49, 7
  %s51 = scalar_select %p50, %s49, 7
  %s52 = smul.addr %s51, 2
  %s53 = smul.addr %s52, 4
  %s54 = scalar_lea.vmem %s4, %s53
  %s55 = ssub.s32 0, 0
  %s56 = smul.u32 8, %s55
  %p58 = scmp.eq.s32.totalorder 0, 0
  // Predicated region
  $region14: #{bilstm_forward.4} parent=0 // pred_check
    %p59 = pneg %p58
  $region15: #{bilstm_forward.4} parent=0 // pred_check_branch
    %61 = sbr.rel (%p59) target = $region17
  $region16: #{bilstm_forward.4} parent=0 // pred_region
    %62 = vst [vmem:[#allocation2] sm:$0xff] 0.0
    %63 = vst [vmem:[#allocation2 + $0x8] sm:$0xff] 0.0
    %64 = vst [vmem:[#allocation2 + $0x10] sm:$0xff] 0.0
    %65 = vst [vmem:[#allocation2 + $0x18] sm:$0xff] 0.0
    %66 = vst [vmem:[#allocation2 + $0x20] sm:$0xff] 0.0
    %67 = vst [vmem:[#allocation2 + $0x28] sm:$0xff] 0.0
    %68 = vst [vmem:[#allocation2 + $0x30] sm:$0xff] 0.0
    %69 = vst [vmem:[#allocation2 + $0x38] sm:$0xff] 0.0
    %70 = vst [vmem:[#allocation3] sm:$0xff] 0.0
    %71 = vst [vmem:[#allocation3 + $0x8] sm:$0xff] 0.0
    %72 = vst [vmem:[#allocation3 + $0x10] sm:$0xff] 0.0
    %73 = vst [vmem:[#allocation3 + $0x18] sm:$0xff] 0.0
  $region17: #{bilstm_forward.4} parent=0 // pred_fallthru
    _
  %v74 = vld [vmem:[%s0] sm:$0xff]
  %v75 = vld [vmem:[%s0 + $0x8] sm:$0xf]
  %v76 = vld [vmem:[%s0 + $0xc] sm:$0xff]
  %v77 = vld [vmem:[%s0 + $0x14] sm:$0xf]
  %v78 = vunpack.c.l.bf16 %v74
  %v79 = vunpack.c.h.bf16 %v74
  %v80 = vunpack.c.l.bf16 %v75
  %v81 = vunpack.c.l.bf16 %v76
  %v82 = vunpack.c.h.bf16 %v76
  %v83 = vunpack.c.l.bf16 %v77
  %s84 = scalar_lea.vmem %s45, 168
  %v85 = vld [vmem:[%s84] sm:$0xff]
  %v86 = vld [vmem:[%s84 + $0x8] sm:$0xf]
  %v87 = vld [vmem:[%s84 + $0xc] sm:$0xff]
  %v88 = vld [vmem:[%s84 + $0x14] sm:$0xf]
  %v89 = vunpack.c.l.bf16 %v85
  %v90 = vunpack.c.h.bf16 %v85
  %v91 = vunpack.c.l.bf16 %v86
  %v92 = vunpack.c.l.bf16 %v87
  %v93 = vunpack.c.h.bf16 %v87
  %v94 = vunpack.c.l.bf16 %v88
  %v95 = vld [vmem:[#allocation2] sm:$0xff]
  %v96 = vld [vmem:[#allocation2 + $0x8] sm:$0xff]
  %v97 = vld [vmem:[#allocation2 + $0x10] sm:$0xff]
  %v98 = vld [vmem:[#allocation2 + $0x18] sm:$0xff]
  %v99 = vld [vmem:[#allocation2 + $0x20] sm:$0xff]
  %v100 = vld [vmem:[#allocation2 + $0x28] sm:$0xff]
  %v101 = vld [vmem:[#allocation2 + $0x30] sm:$0xff]
  %v102 = vld [vmem:[#allocation2 + $0x38] sm:$0xff]
  %v103 = vpack.c.bf16 %v97, %v95
  %v104 = vpack.c.bf16 %v98, %v96
  %v105 = vpack.c.bf16 %v101, %v99
  %v106 = vpack.c.bf16 %v102, %v100
  %v107 = vld [vmem:[%s2] sm:$0xff]
  %v108 = vld [vmem:[%s2 + $0x8] sm:$0xf]
  %v109 = vld [vmem:[%s2 + $0xc] sm:$0xff]
  %v110 = vld [vmem:[%s2 + $0x14] sm:$0xf]
  %v111 = vld [vmem:[%s2 + $0x18] sm:$0xff]
  %v112 = vld [vmem:[%s2 + $0x20] sm:$0xf]
  %v113 = vld [vmem:[%s2 + $0x24] sm:$0xff]
  %v114 = vld [vmem:[%s2 + $0x2c] sm:$0xf]
  %v115 = vld [vmem:[%s2 + $0x30] sm:$0xff]
  %v116 = vld [vmem:[%s2 + $0x38] sm:$0xf]
  %v117 = vld [vmem:[%s2 + $0x3c] sm:$0xff]
  %v118 = vld [vmem:[%s2 + $0x44] sm:$0xf]
  %v119 = vld [vmem:[%s2 + $0x48] sm:$0xff]
  %v120 = vld [vmem:[%s2 + $0x50] sm:$0xf]
  %v121 = vld [vmem:[%s2 + $0x54] sm:$0xff]
  %v122 = vld [vmem:[%s2 + $0x5c] sm:$0xf]
  %v123 = vld [vmem:[%s2 + $0x60] sm:$0xff]
  %v124 = vld [vmem:[%s2 + $0x68] sm:$0xf]
  %v125 = vld [vmem:[%s2 + $0x6c] sm:$0xff]
  %v126 = vld [vmem:[%s2 + $0x74] sm:$0xf]
  %v127 = vld [vmem:[%s2 + $0x78] sm:$0xff]
  %v128 = vld [vmem:[%s2 + $0x80] sm:$0xf]
  %v129 = vld [vmem:[%s2 + $0x84] sm:$0xff]
  %v130 = vld [vmem:[%s2 + $0x8c] sm:$0xf]
  %v131 = vld [vmem:[%s2 + $0x90] sm:$0xff]
  %v132 = vld [vmem:[%s2 + $0x98] sm:$0xf]
  %v133 = vld [vmem:[%s2 + $0x9c] sm:$0xff]
  %v134 = vld [vmem:[%s2 + $0xa4] sm:$0xf]
  %v135 = vld [vmem:[%s2 + $0xa8] sm:$0xff]
  %v136 = vld [vmem:[%s2 + $0xb0] sm:$0xf]
  %v137 = vld [vmem:[%s2 + $0xb4] sm:$0xff]
  %v138 = vld [vmem:[%s2 + $0xbc] sm:$0xf]
  %v139 = vld [vmem:[%s2 + $0xc0] sm:$0xff]
  %v140 = vld [vmem:[%s2 + $0xc8] sm:$0xf]
  %v141 = vld [vmem:[%s2 + $0xcc] sm:$0xff]
  %v142 = vld [vmem:[%s2 + $0xd4] sm:$0xf]
  %v143 = vld [vmem:[%s2 + $0xd8] sm:$0xff]
  %v144 = vld [vmem:[%s2 + $0xe0] sm:$0xf]
  %v145 = vld [vmem:[%s2 + $0xe4] sm:$0xff]
  %v146 = vld [vmem:[%s2 + $0xec] sm:$0xf]
  %v147 = vld [vmem:[%s2 + $0xf0] sm:$0xff]
  %v148 = vld [vmem:[%s2 + $0xf8] sm:$0xf]
  %v149 = vld [vmem:[%s2 + $0xfc] sm:$0xff]
  %v150 = vld [vmem:[%s2 + $0x104] sm:$0xf]
  %v151 = vld [vmem:[%s2 + $0x108] sm:$0xff]
  %v152 = vld [vmem:[%s2 + $0x110] sm:$0xf]
  %v153 = vld [vmem:[%s2 + $0x114] sm:$0xff]
  %v154 = vld [vmem:[%s2 + $0x11c] sm:$0xf]
  %v155 = vld [vmem:[%s2 + $0x120] sm:$0xff]
  %v156 = vld [vmem:[%s2 + $0x128] sm:$0xf]
  %v157 = vld [vmem:[%s2 + $0x12c] sm:$0xff]
  %v158 = vld [vmem:[%s2 + $0x134] sm:$0xf]
  %v159 = vld [vmem:[%s2 + $0x138] sm:$0xff]
  %v160 = vld [vmem:[%s2 + $0x140] sm:$0xf]
  %v161 = vld [vmem:[%s2 + $0x144] sm:$0xff]
  %v162 = vld [vmem:[%s2 + $0x14c] sm:$0xf]
  %v163 = vld [vmem:[%s2 + $0x150] sm:$0xff]
  %v164 = vld [vmem:[%s2 + $0x158] sm:$0xf]
  %v165 = vld [vmem:[%s2 + $0x15c] sm:$0xff]
  %v166 = vld [vmem:[%s2 + $0x164] sm:$0xf]
  %v167 = vld [vmem:[%s2 + $0x168] sm:$0xff]
  %v168 = vld [vmem:[%s2 + $0x170] sm:$0xf]
  %v169 = vld [vmem:[%s2 + $0x174] sm:$0xff]
  %v170 = vld [vmem:[%s2 + $0x17c] sm:$0xf]
  %v235 = vunpack.c.l.b16 %v107
  %v236 = vunpack.c.h.b16 %v107
  %v237 = vunpack.c.l.b16 %v108
  %v238 = vunpack.c.l.b16 %v109
  %v239 = vunpack.c.h.b16 %v109
  %v240 = vunpack.c.l.b16 %v110
  %v241 = vunpack.c.l.b16 %v111
  %v242 = vunpack.c.h.b16 %v111
  %v243 = vunpack.c.l.b16 %v112
  %v244 = vunpack.c.l.b16 %v113
  %v245 = vunpack.c.h.b16 %v113
  %v246 = vunpack.c.l.b16 %v114
  %v247 = vunpack.c.l.b16 %v115
  %v248 = vunpack.c.h.b16 %v115
  %v249 = vunpack.c.l.b16 %v116
  %v250 = vunpack.c.l.b16 %v117
  %v251 = vunpack.c.h.b16 %v117
  %v252 = vunpack.c.l.b16 %v118
  %v253 = vunpack.c.l.b16 %v119
  %v254 = vunpack.c.h.b16 %v119
  %v255 = vunpack.c.l.b16 %v120
  %v256 = vunpack.c.l.b16 %v121
  %v257 = vunpack.c.h.b16 %v121
  %v258 = vunpack.c.l.b16 %v122
  %v259 = vunpack.c.l.b16 %v123
  %v260 = vunpack.c.h.b16 %v123
  %v261 = vunpack.c.l.b16 %v124
  %v262 = vunpack.c.l.b16 %v125
  %v263 = vunpack.c.h.b16 %v125
  %v264 = vunpack.c.l.b16 %v126
  %v265 = vunpack.c.l.b16 %v127
  %v266 = vunpack.c.h.b16 %v127
  %v267 = vunpack.c.l.b16 %v128
  %v268 = vunpack.c.l.b16 %v129
  %v269 = vunpack.c.h.b16 %v129
  %v270 = vunpack.c.l.b16 %v130
  %v271 = vunpack.c.l.b16 %v131
  %v272 = vunpack.c.h.b16 %v131
  %v273 = vunpack.c.l.b16 %v132
  %v274 = vunpack.c.l.b16 %v133
  %v275 = vunpack.c.h.b16 %v133
  %v276 = vunpack.c.l.b16 %v134
  %v277 = vunpack.c.l.b16 %v135
  %v278 = vunpack.c.h.b16 %v135
  %v279 = vunpack.c.l.b16 %v136
  %v280 = vunpack.c.l.b16 %v137
  %v281 = vunpack.c.h.b16 %v137
  %v282 = vunpack.c.l.b16 %v138
  %v283 = vunpack.c.l.b16 %v139
  %v284 = vunpack.c.h.b16 %v139
  %v285 = vunpack.c.l.b16 %v140
  %v286 = vunpack.c.l.b16 %v141
  %v287 = vunpack.c.h.b16 %v141
  %v288 = vunpack.c.l.b16 %v142
  %v289 = vunpack.c.l.b16 %v143
  %v290 = vunpack.c.h.b16 %v143
  %v291 = vunpack.c.l.b16 %v144
  %v292 = vunpack.c.l.b16 %v145
  %v293 = vunpack.c.h.b16 %v145
  %v294 = vunpack.c.l.b16 %v146
  %v295 = vunpack.c.l.b16 %v147
  %v296 = vunpack.c.h.b16 %v147
  %v297 = vunpack.c.l.b16 %v148
  %v298 = vunpack.c.l.b16 %v149
  %v299 = vunpack.c.h.b16 %v149
  %v300 = vunpack.c.l.b16 %v150
  %v301 = vunpack.c.l.b16 %v151
  %v302 = vunpack.c.h.b16 %v151
  %v303 = vunpack.c.l.b16 %v152
  %v304 = vunpack.c.l.b16 %v153
  %v305 = vunpack.c.h.b16 %v153
  %v306 = vunpack.c.l.b16 %v154
  %v307 = vunpack.c.l.b16 %v155
  %v308 = vunpack.c.h.b16 %v155
  %v309 = vunpack.c.l.b16 %v156
  %v310 = vunpack.c.l.b16 %v157
  %v311 = vunpack.c.h.b16 %v157
  %v312 = vunpack.c.l.b16 %v158
  %v313 = vunpack.c.l.b16 %v159
  %v314 = vunpack.c.h.b16 %v159
  %v315 = vunpack.c.l.b16 %v160
  %v316 = vunpack.c.l.b16 %v161
  %v317 = vunpack.c.h.b16 %v161
  %v318 = vunpack.c.l.b16 %v162
  %v319 = vunpack.c.l.b16 %v163
  %v320 = vunpack.c.h.b16 %v163
  %v321 = vunpack.c.l.b16 %v164
  %v322 = vunpack.c.l.b16 %v165
  %v323 = vunpack.c.h.b16 %v165
  %v324 = vunpack.c.l.b16 %v166
  %v325 = vunpack.c.l.b16 %v167
  %v326 = vunpack.c.h.b16 %v167
  %v327 = vunpack.c.l.b16 %v168
  %v328 = vunpack.c.l.b16 %v169
  %v329 = vunpack.c.h.b16 %v169
  %v330 = vunpack.c.l.b16 %v170
  %v331 = vpack.c.b16 %v238, %v235
  %v332 = vpack.c.b16 %v239, %v236
  %v333 = vpack.c.b16 %v240, %v237
  %v334 = vpack.c.b16 %v244, %v241
  %v335 = vpack.c.b16 %v245, %v242
  %v336 = vpack.c.b16 %v246, %v243
  %v337 = vpack.c.b16 %v250, %v247
  %v338 = vpack.c.b16 %v251, %v248
  %v339 = vpack.c.b16 %v252, %v249
  %v340 = vpack.c.b16 %v256, %v253
  %v341 = vpack.c.b16 %v257, %v254
  %v342 = vpack.c.b16 %v258, %v255
  %v343 = vpack.c.b16 %v262, %v259
  %v344 = vpack.c.b16 %v263, %v260
  %v345 = vpack.c.b16 %v264, %v261
  %v346 = vpack.c.b16 %v268, %v265
  %v347 = vpack.c.b16 %v269, %v266
  %v348 = vpack.c.b16 %v270, %v267
  %v349 = vpack.c.b16 %v274, %v271
  %v350 = vpack.c.b16 %v275, %v272
  %v351 = vpack.c.b16 %v276, %v273
  %v352 = vpack.c.b16 %v280, %v277
  %v353 = vpack.c.b16 %v281, %v278
  %v354 = vpack.c.b16 %v282, %v279
  %v355 = vpack.c.b16 %v286, %v283
  %v356 = vpack.c.b16 %v287, %v284
  %v357 = vpack.c.b16 %v288, %v285
  %v358 = vpack.c.b16 %v292, %v289
  %v359 = vpack.c.b16 %v293, %v290
  %v360 = vpack.c.b16 %v294, %v291
  %v361 = vpack.c.b16 %v298, %v295
  %v362 = vpack.c.b16 %v299, %v296
  %v363 = vpack.c.b16 %v300, %v297
  %v364 = vpack.c.b16 %v304, %v301
  %v365 = vpack.c.b16 %v305, %v302
  %v366 = vpack.c.b16 %v306, %v303
  %v367 = vpack.c.b16 %v310, %v307
  %v368 = vpack.c.b16 %v311, %v308
  %v369 = vpack.c.b16 %v312, %v309
  %v370 = vpack.c.b16 %v316, %v313
  %v371 = vpack.c.b16 %v317, %v314
  %v372 = vpack.c.b16 %v318, %v315
  %v373 = vpack.c.b16 %v322, %v319
  %v374 = vpack.c.b16 %v323, %v320
  %v375 = vpack.c.b16 %v324, %v321
  %v376 = vpack.c.b16 %v328, %v325
  %v377 = vpack.c.b16 %v329, %v326
  %v378 = vpack.c.b16 %v330, %v327
  %427 = vmatprep.subr.bf16.mxu0 %v332
  %428 = vmatpush1.bf16.msra.mxu0 %v331
  %429 = vmatprep.subr.bf16.mxu0 %v335
  %430 = vmatpush1.bf16.msra.mxu0 %v334
  %431 = vmatprep.subr.bf16.mxu0 %v338
  %432 = vmatpush1.bf16.msra.mxu0 %v337
  %433 = vmatprep.subr.bf16.mxu0 %v341
  %434 = vmatpush1.bf16.msra.mxu0 %v340
  %435 = vmatprep.subr.bf16.mxu0 %v344
  %436 = vmatpush1.bf16.msra.mxu0 %v343
  %437 = vmatprep.subr.bf16.mxu0 %v347
  %438 = vmatpush1.bf16.msra.mxu0 %v346
  %439 = vmatprep.subr.bf16.mxu0 %v350
  %440 = vmatpush1.bf16.msra.mxu0 %v349
  %441 = vmatprep.subr.bf16.mxu0 %v353
  %442 = vmatpush1.bf16.msra.mxu0 %v352
  %443 = vmatprep.subr.bf16.mxu0 %v356
  %444 = vmatpush1.bf16.msra.mxu0 %v355
  %445 = vmatprep.subr.bf16.mxu0 %v359
  %446 = vmatpush1.bf16.msra.mxu0 %v358
  %447 = vmatprep.subr.bf16.mxu0 %v362
  %448 = vmatpush1.bf16.msra.mxu0 %v361
  %449 = vmatprep.subr.bf16.mxu0 %v365
  %450 = vmatpush1.bf16.msra.mxu0 %v364
  %451 = vmatprep.subr.bf16.mxu0 %v368
  %452 = vmatpush1.bf16.msra.mxu0 %v367
  %453 = vmatprep.subr.bf16.mxu0 %v371
  %454 = vmatpush1.bf16.msra.mxu0 %v370
  %455 = vmatprep.subr.bf16.mxu0 %v374
  %456 = vmatpush1.bf16.msra.mxu0 %v373
  %457 = vmatprep.subr.bf16.mxu0 %v377
  %458 = vmatpush1.bf16.msra.mxu0 %v376
  %459 = vmatprep.mubr.bf16.mxu0 %v104
  %460 = vmatmul.mubr.bf16.gmra.mrb[0].mxu0 %v103
  %v461 = vpop.f32.mrb[0].mxu0
  %v462 = vadd.f32 0.0, %v461
  %v463 = vpop.f32.mrb[0].mxu0
  %v464 = vadd.f32 0.0, %v463
  %v465 = vpop.f32.mrb[0].mxu0
  %v466 = vadd.f32 0.0, %v465
  %v467 = vpop.f32.mrb[0].mxu0
  %v468 = vadd.f32 0.0, %v467
  %469 = vmatprep.mubr.bf16.mxu0 %v106
  %470 = vmatmul.mubr.bf16.gmra.mrb[0].mxu0 %v105
  %v471 = vpop.f32.mrb[0].mxu0
  %v472 = vadd.f32 0.0, %v471
  %v473 = vpop.f32.mrb[0].mxu0
  %v474 = vadd.f32 0.0, %v473
  %v475 = vpop.f32.mrb[0].mxu0
  %v476 = vadd.f32 0.0, %v475
  %v477 = vpop.f32.mrb[0].mxu0
  %v478 = vadd.f32 0.0, %v477
  %479 = vdwg.mxu0
  %480 = vmatprep.subr.bf16.mxu0 0
  %481 = vmatpush1.bf16.msra.mxu0 %v333
  %482 = vmatprep.subr.bf16.mxu0 0
  %483 = vmatpush1.bf16.msra.mxu0 %v336
  %484 = vmatprep.subr.bf16.mxu0 0
  %485 = vmatpush1.bf16.msra.mxu0 %v339
  %486 = vmatprep.subr.bf16.mxu0 0
  %487 = vmatpush1.bf16.msra.mxu0 %v342
  %488 = vmatprep.subr.bf16.mxu0 0
  %489 = vmatpush1.bf16.msra.mxu0 %v345
  %490 = vmatprep.subr.bf16.mxu0 0
  %491 = vmatpush1.bf16.msra.mxu0 %v348
  %492 = vmatprep.subr.bf16.mxu0 0
  %493 = vmatpush1.bf16.msra.mxu0 %v351
  %494 = vmatprep.subr.bf16.mxu0 0
  %495 = vmatpush1.bf16.msra.mxu0 %v354
  %496 = vmatprep.subr.bf16.mxu0 0
  %497 = vmatpush1.bf16.msra.mxu0 %v357
  %498 = vmatprep.subr.bf16.mxu0 0
  %499 = vmatpush1.bf16.msra.mxu0 %v360
  %500 = vmatprep.subr.bf16.mxu0 0
  %501 = vmatpush1.bf16.msra.mxu0 %v363
  %502 = vmatprep.subr.bf16.mxu0 0
  %503 = vmatpush1.bf16.msra.mxu0 %v366
  %504 = vmatprep.subr.bf16.mxu0 0
  %505 = vmatpush1.bf16.msra.mxu0 %v369
  %506 = vmatprep.subr.bf16.mxu0 0
  %507 = vmatpush1.bf16.msra.mxu0 %v372
  %508 = vmatprep.subr.bf16.mxu0 0
  %509 = vmatpush1.bf16.msra.mxu0 %v375
  %510 = vmatprep.subr.bf16.mxu0 0
  %511 = vmatpush1.bf16.msra.mxu0 %v378
  %512 = vmatprep.mubr.bf16.mxu0 %v104
  %513 = vmatmul.mubr.bf16.gmra.mrb[0].mxu0 %v103
  %v514 = vpop.f32.mrb[0].mxu0
  %v515 = vadd.f32 0.0, %v514
  %v516 = vpop.f32.mrb[0].mxu0
  %v517 = vpop.f32.mrb[0].mxu0
  %v518 = vadd.f32 0.0, %v517
  %v519 = vpop.f32.mrb[0].mxu0
  %520 = vmatprep.mubr.bf16.mxu0 %v106
  %521 = vmatmul.mubr.bf16.gmra.mrb[0].mxu0 %v105
  %v522 = vpop.f32.mrb[0].mxu0
  %v523 = vadd.f32 0.0, %v522
  %v524 = vpop.f32.mrb[0].mxu0
  %v525 = vpop.f32.mrb[0].mxu0
  %v526 = vadd.f32 0.0, %v525
  %v527 = vpop.f32.mrb[0].mxu0
  %528 = vdwg.mxu0
  %v529 = vadd.f32 %v78, %v462
  %v530 = vadd.f32 %v79, %v464
  %v531 = vadd.f32 %v80, %v515
  %v532 = vadd.f32 %v81, %v466
  %v533 = vadd.f32 %v82, %v468
  %v534 = vadd.f32 %v83, %v518
  %v535 = vadd.f32 %v89, %v472
  %v536 = vadd.f32 %v90, %v474
  %v537 = vadd.f32 %v91, %v523
  %v538 = vadd.f32 %v92, %v476
  %v539 = vadd.f32 %v93, %v478
  %v540 = vadd.f32 %v94, %v526
  %v541 = vxor.u32 %v529, 2147483648
  %v542 = vxor.u32 %v532, 2147483648
  %v543 = vxor.u32 %v535, 2147483648
  %v544 = vxor.u32 %v538, 2147483648
  %v545 = vmul.f32 %v541, 1.442695
  %v546 = vpow.pop %v545
  %v547 = vmul.f32 %v542, 1.442695
  %v548 = vpow.pop %v547
  %v549 = vmul.f32 %v543, 1.442695
  %v550 = vpow.pop %v549
  %v551 = vmul.f32 %v544, 1.442695
  %v552 = vpow.pop %v551
  %v553 = vadd.f32 %v546, 1.0
  %v554 = vadd.f32 %v548, 1.0
  %v555 = vadd.f32 %v550, 1.0
  %v556 = vadd.f32 %v552, 1.0
  %v557 = vrcp.pop %v553
  %v558 = vmul.f32 1.0, %v557
  %v559 = vrcp.pop %v554
  %v560 = vmul.f32 1.0, %v559
  %v561 = vrcp.pop %v555
  %v562 = vmul.f32 1.0, %v561
  %v563 = vrcp.pop %v556
  %v564 = vmul.f32 1.0, %v563
  %v565 = vxor.u32 %v530, 2147483648
  %v566 = vxor.u32 %v533, 2147483648
  %v567 = vxor.u32 %v536, 2147483648
  %v568 = vxor.u32 %v539, 2147483648
  %v569 = vmul.f32 %v565, 1.442695
  %v570 = vpow.pop %v569
  %v571 = vmul.f32 %v566, 1.442695
  %v572 = vpow.pop %v571
  %v573 = vmul.f32 %v567, 1.442695
  %v574 = vpow.pop %v573
  %v575 = vmul.f32 %v568, 1.442695
  %v576 = vpow.pop %v575
  %v577 = vadd.f32 %v570, 1.0
  %v578 = vadd.f32 %v572, 1.0
  %v579 = vadd.f32 %v574, 1.0
  %v580 = vadd.f32 %v576, 1.0
  %v581 = vrcp.pop %v577
  %v582 = vmul.f32 1.0, %v581
  %v583 = vrcp.pop %v578
  %v584 = vmul.f32 1.0, %v583
  %v585 = vrcp.pop %v579
  %v586 = vmul.f32 1.0, %v585
  %v587 = vrcp.pop %v580
  %v588 = vmul.f32 1.0, %v587
  %v589 = vtanh.pop %v531
  %v590 = vtanh.pop %v534
  %v591 = vtanh.pop %v537
  %v592 = vtanh.pop %v540
  %v593 = vsub.f32 1.0, %v558
  %v594 = vsub.f32 1.0, %v560
  %v595 = vsub.f32 1.0, %v562
  %v596 = vsub.f32 1.0, %v564
  %v597 = vld [vmem:[#allocation3] sm:$0xff]
  %v598 = vld [vmem:[#allocation3 + $0x8] sm:$0xff]
  %v599 = vld [vmem:[#allocation3 + $0x10] sm:$0xff]
  %v600 = vld [vmem:[#allocation3 + $0x18] sm:$0xff]
  %v601 = vmul.f32 %v593, %v597
  %v602 = vmul.f32 %v594, %v598
  %v603 = vmul.f32 %v595, %v599
  %v604 = vmul.f32 %v596, %v600
  %v605 = vmul.f32 %v558, %v589
  %v606 = vmul.f32 %v560, %v590
  %v607 = vmul.f32 %v562, %v591
  %v608 = vmul.f32 %v564, %v592
  %v609 = vadd.f32 %v601, %v605
  %v610 = vadd.f32 %v602, %v606
  %v611 = vadd.f32 %v603, %v607
  %v612 = vadd.f32 %v604, %v608
  %v613 = vtanh.pop %v609
  %v614 = vtanh.pop %v610
  %v615 = vtanh.pop %v611
  %v616 = vtanh.pop %v612
  %v617 = vmul.f32 %v582, %v613
  %v618 = vmul.f32 %v584, %v614
  %v619 = vmul.f32 %v586, %v615
  %v620 = vmul.f32 %v588, %v616
  %621 = vst [vmem:[#allocation3] sm:$0xff] %v609
  %622 = vst [vmem:[#allocation3 + $0x8] sm:$0xff] %v610
  %623 = vst [vmem:[#allocation3 + $0x10] sm:$0xff] %v611
  %624 = vst [vmem:[#allocation3 + $0x18] sm:$0xff] %v612
  %625 = vst [vmem:[#allocation2] sm:$0xff] %v617
  %626 = vst [vmem:[#allocation2 + $0x10] sm:$0xff] %v618
  %627 = vst [vmem:[#allocation2 + $0x28] sm:$0xff] %v619
  %628 = vst [vmem:[#allocation2 + $0x38] sm:$0xff] %v620
  %v629 = vpack.c.bf16 %v618, %v617
  %v630 = vpack.c.bf16 %v620, %v619
  %v632 = vunpack.c.l.b16 %v629
  %v633 = vunpack.c.h.b16 %v629
  %v634 = vpack.c.b16 %v632, %v632
  %v635 = vpack.c.b16 %v633, %v633
  %638 = vst [vmem:[%s3] sm:$0xf] %v634
  %639 = vst [vmem:[%s3 + $0x4] sm:$0xf] %v635
  %v641 = vunpack.c.l.b16 %v630
  %v642 = vunpack.c.h.b16 %v630
  %v643 = vpack.c.b16 %v641, %v641
  %v644 = vpack.c.b16 %v642, %v642
  %s647 = scalar_lea.vmem %s54, 56
  %648 = vst [vmem:[%s647] sm:$0xf] %v643
  %649 = vst [vmem:[%s647 + $0x4] sm:$0xf] %v644
  %s650 = scalar_lea.vmem %s0, 24
  %v651 = vld [vmem:[%s650] sm:$0xff]
  %v652 = vld [vmem:[%s650 + $0x8] sm:$0xf]
  %v653 = vld [vmem:[%s650 + $0xc] sm:$0xff]
  %v654 = vld [vmem:[%s650 + $0x14] sm:$0xf]
  %v655 = vunpack.c.l.bf16 %v651
  %v656 = vunpack.c.h.bf16 %v651
  %v657 = vunpack.c.l.bf16 %v652
  %v658 = vunpack.c.l.bf16 %v653
  %v659 = vunpack.c.h.bf16 %v653
  %v660 = vunpack.c.l.bf16 %v654
  %s661 = scalar_lea.vmem %s45, 144
  %v662 = vld [vmem:[%s661] sm:$0xff]
  %v663 = vld [vmem:[%s661 + $0x8] sm:$0xf]
  %v664 = vld [vmem:[%s661 + $0xc] sm:$0xff]
  %v665 = vld [vmem:[%s661 + $0x14] sm:$0xf]
  %v666 = vunpack.c.l.bf16 %v662
  %v667 = vunpack.c.h.bf16 %v662
  %v668 = vunpack.c.l.bf16 %v663
  %v669 = vunpack.c.l.bf16 %v664
  %v670 = vunpack.c.h.bf16 %v664
  %v671 = vunpack.c.l.bf16 %v665
  %v672 = vld [vmem:[#allocation2] sm:$0xff]
  %v673 = vld [vmem:[#allocation2 + $0x8] sm:$0xff]
  %v674 = vld [vmem:[#allocation2 + $0x10] sm:$0xff]
  %v675 = vld [vmem:[#allocation2 + $0x18] sm:$0xff]
  %v676 = vld [vmem:[#allocation2 + $0x20] sm:$0xff]
  %v677 = vld [vmem:[#allocation2 + $0x28] sm:$0xff]
  %v678 = vld [vmem:[#allocation2 + $0x30] sm:$0xff]
  %v679 = vld [vmem:[#allocation2 + $0x38] sm:$0xff]
  %v680 = vpack.c.bf16 %v674, %v672
  %v681 = vpack.c.bf16 %v675, %v673
  %v682 = vpack.c.bf16 %v678, %v676
  %v683 = vpack.c.bf16 %v679, %v677
  %v684 = vld [vmem:[%s2] sm:$0xff]
  %v685 = vld [vmem:[%s2 + $0x8] sm:$0xf]
  %v686 = vld [vmem:[%s2 + $0xc] sm:$0xff]
  %v687 = vld [vmem:[%s2 + $0x14] sm:$0xf]
  %v688 = vld [vmem:[%s2 + $0x18] sm:$0xff]
  %v689 = vld [vmem:[%s2 + $0x20] sm:$0xf]
  %v690 = vld [vmem:[%s2 + $0x24] sm:$0xff]
  %v691 = vld [vmem:[%s2 + $0x2c] sm:$0xf]
  %v692 = vld [vmem:[%s2 + $0x30] sm:$0xff]
  %v693 = vld [vmem:[%s2 + $0x38] sm:$0xf]
  %v694 = vld [vmem:[%s2 + $0x3c] sm:$0xff]
  %v695 = vld [vmem:[%s2 + $0x44] sm:$0xf]
  %v696 = vld [vmem:[%s2 + $0x48] sm:$0xff]
  %v697 = vld [vmem:[%s2 + $0x50] sm:$0xf]
  %v698 = vld [vmem:[%s2 + $0x54] sm:$0xff]
  %v699 = vld [vmem:[%s2 + $0x5c] sm:$0xf]
  %v700 = vld [vmem:[%s2 + $0x60] sm:$0xff]
  %v701 = vld [vmem:[%s2 + $0x68] sm:$0xf]
  %v702 = vld [vmem:[%s2 + $0x6c] sm:$0xff]
  %v703 = vld [vmem:[%s2 + $0x74] sm:$0xf]
  %v704 = vld [vmem:[%s2 + $0x78] sm:$0xff]
  %v705 = vld [vmem:[%s2 + $0x80] sm:$0xf]
  %v706 = vld [vmem:[%s2 + $0x84] sm:$0xff]
  %v707 = vld [vmem:[%s2 + $0x8c] sm:$0xf]
  %v708 = vld [vmem:[%s2 + $0x90] sm:$0xff]
  %v709 = vld [vmem:[%s2 + $0x98] sm:$0xf]
  %v710 = vld [vmem:[%s2 + $0x9c] sm:$0xff]
  %v711 = vld [vmem:[%s2 + $0xa4] sm:$0xf]
  %v712 = vld [vmem:[%s2 + $0xa8] sm:$0xff]
  %v713 = vld [vmem:[%s2 + $0xb0] sm:$0xf]
  %v714 = vld [vmem:[%s2 + $0xb4] sm:$0xff]
  %v715 = vld [vmem:[%s2 + $0xbc] sm:$0xf]
  %v716 = vld [vmem:[%s2 + $0xc0] sm:$0xff]
  %v717 = vld [vmem:[%s2 + $0xc8] sm:$0xf]
  %v718 = vld [vmem:[%s2 + $0xcc] sm:$0xff]
  %v719 = vld [vmem:[%s2 + $0xd4] sm:$0xf]
  %v720 = vld [vmem:[%s2 + $0xd8] sm:$0xff]
  %v721 = vld [vmem:[%s2 + $0xe0] sm:$0xf]
  %v722 = vld [vmem:[%s2 + $0xe4] sm:$0xff]
  %v723 = vld [vmem:[%s2 + $0xec] sm:$0xf]
  %v724 = vld [vmem:[%s2 + $0xf0] sm:$0xff]
  %v725 = vld [vmem:[%s2 + $0xf8] sm:$0xf]
  %v726 = vld [vmem:[%s2 + $0xfc] sm:$0xff]
  %v727 = vld [vmem:[%s2 + $0x104] sm:$0xf]
  %v728 = vld [vmem:[%s2 + $0x108] sm:$0xff]
  %v729 = vld [vmem:[%s2 + $0x110] sm:$0xf]
  %v730 = vld [vmem:[%s2 + $0x114] sm:$0xff]
  %v731 = vld [vmem:[%s2 + $0x11c] sm:$0xf]
  %v732 = vld [vmem:[%s2 + $0x120] sm:$0xff]
  %v733 = vld [vmem:[%s2 + $0x128] sm:$0xf]
  %v734 = vld [vmem:[%s2 + $0x12c] sm:$0xff]
  %v735 = vld [vmem:[%s2 + $0x134] sm:$0xf]
  %v736 = vld [vmem:[%s2 + $0x138] sm:$0xff]
  %v737 = vld [vmem:[%s2 + $0x140] sm:$0xf]
  %v738 = vld [vmem:[%s2 + $0x144] sm:$0xff]
  %v739 = vld [vmem:[%s2 + $0x14c] sm:$0xf]
  %v740 = vld [vmem:[%s2 + $0x150] sm:$0xff]
  %v741 = vld [vmem:[%s2 + $0x158] sm:$0xf]
  %v742 = vld [vmem:[%s2 + $0x15c] sm:$0xff]
  %v743 = vld [vmem:[%s2 + $0x164] sm:$0xf]
  %v744 = vld [vmem:[%s2 + $0x168] sm:$0xff]
  %v745 = vld [vmem:[%s2 + $0x170] sm:$0xf]
  %v746 = vld [vmem:[%s2 + $0x174] sm:$0xff]
  %v747 = vld [vmem:[%s2 + $0x17c] sm:$0xf]
  %v812 = vunpack.c.l.b16 %v684
  %v813 = vunpack.c.h.b16 %v684
  %v814 = vunpack.c.l.b16 %v685
  %v815 = vunpack.c.l.b16 %v686
  %v816 = vunpack.c.h.b16 %v686
  %v817 = vunpack.c.l.b16 %v687
  %v818 = vunpack.c.l.b16 %v688
  %v819 = vunpack.c.h.b16 %v688
  %v820 = vunpack.c.l.b16 %v689
  %v821 = vunpack.c.l.b16 %v690
  %v822 = vunpack.c.h.b16 %v690
  %v823 = vunpack.c.l.b16 %v691
  %v824 = vunpack.c.l.b16 %v692
  %v825 = vunpack.c.h.b16 %v692
  %v826 = vunpack.c.l.b16 %v693
  %v827 = vunpack.c.l.b16 %v694
  %v828 = vunpack.c.h.b16 %v694
  %v829 = vunpack.c.l.b16 %v695
  %v830 = vunpack.c.l.b16 %v696
  %v831 = vunpack.c.h.b16 %v696
  %v832 = vunpack.c.l.b16 %v697
  %v833 = vunpack.c.l.b16 %v698
  %v834 = vunpack.c.h.b16 %v698
  %v835 = vunpack.c.l.b16 %v699
  %v836 = vunpack.c.l.b16 %v700
  %v837 = vunpack.c.h.b16 %v700
  %v838 = vunpack.c.l.b16 %v701
  %v839 = vunpack.c.l.b16 %v702
  %v840 = vunpack.c.h.b16 %v702
  %v841 = vunpack.c.l.b16 %v703
  %v842 = vunpack.c.l.b16 %v704
  %v843 = vunpack.c.h.b16 %v704
  %v844 = vunpack.c.l.b16 %v705
  %v845 = vunpack.c.l.b16 %v706
  %v846 = vunpack.c.h.b16 %v706
  %v847 = vunpack.c.l.b16 %v707
  %v848 = vunpack.c.l.b16 %v708
  %v849 = vunpack.c.h.b16 %v708
  %v850 = vunpack.c.l.b16 %v709
  %v851 = vunpack.c.l.b16 %v710
  %v852 = vunpack.c.h.b16 %v710
  %v853 = vunpack.c.l.b16 %v711
  %v854 = vunpack.c.l.b16 %v712
  %v855 = vunpack.c.h.b16 %v712
  %v856 = vunpack.c.l.b16 %v713
  %v857 = vunpack.c.l.b16 %v714
  %v858 = vunpack.c.h.b16 %v714
  %v859 = vunpack.c.l.b16 %v715
  %v860 = vunpack.c.l.b16 %v716
  %v861 = vunpack.c.h.b16 %v716
  %v862 = vunpack.c.l.b16 %v717
  %v863 = vunpack.c.l.b16 %v718
  %v864 = vunpack.c.h.b16 %v718
  %v865 = vunpack.c.l.b16 %v719
  %v866 = vunpack.c.l.b16 %v720
  %v867 = vunpack.c.h.b16 %v720
  %v868 = vunpack.c.l.b16 %v721
  %v869 = vunpack.c.l.b16 %v722
  %v870 = vunpack.c.h.b16 %v722
  %v871 = vunpack.c.l.b16 %v723
  %v872 = vunpack.c.l.b16 %v724
  %v873 = vunpack.c.h.b16 %v724
  %v874 = vunpack.c.l.b16 %v725
  %v875 = vunpack.c.l.b16 %v726
  %v876 = vunpack.c.h.b16 %v726
  %v877 = vunpack.c.l.b16 %v727
  %v878 = vunpack.c.l.b16 %v728
  %v879 = vunpack.c.h.b16 %v728
  %v880 = vunpack.c.l.b16 %v729
  %v881 = vunpack.c.l.b16 %v730
  %v882 = vunpack.c.h.b16 %v730
  %v883 = vunpack.c.l.b16 %v731
  %v884 = vunpack.c.l.b16 %v732
  %v885 = vunpack.c.h.b16 %v732
  %v886 = vunpack.c.l.b16 %v733
  %v887 = vunpack.c.l.b16 %v734
  %v888 = vunpack.c.h.b16 %v734
  %v889 = vunpack.c.l.b16 %v735
  %v890 = vunpack.c.l.b16 %v736
  %v891 = vunpack.c.h.b16 %v736
  %v892 = vunpack.c.l.b16 %v737
  %v893 = vunpack.c.l.b16 %v738
  %v894 = vunpack.c.h.b16 %v738
  %v895 = vunpack.c.l.b16 %v739
  %v896 = vunpack.c.l.b16 %v740
  %v897 = vunpack.c.h.b16 %v740
  %v898 = vunpack.c.l.b16 %v741
  %v899 = vunpack.c.l.b16 %v742
  %v900 = vunpack.c.h.b16 %v742
  %v901 = vunpack.c.l.b16 %v743
  %v902 = vunpack.c.l.b16 %v744
  %v903 = vunpack.c.h.b16 %v744
  %v904 = vunpack.c.l.b16 %v745
  %v905 = vunpack.c.l.b16 %v746
  %v906 = vunpack.c.h.b16 %v746
  %v907 = vunpack.c.l.b16 %v747
  %v908 = vpack.c.b16 %v815, %v812
  %v909 = vpack.c.b16 %v816, %v813
  %v910 = vpack.c.b16 %v817, %v814
  %v911 = vpack.c.b16 %v821, %v818
  %v912 = vpack.c.b16 %v822, %v819
  %v913 = vpack.c.b16 %v823, %v820
  %v914 = vpack.c.b16 %v827, %v824
  %v915 = vpack.c.b16 %v828, %v825
  %v916 = vpack.c.b16 %v829, %v826
  %v917 = vpack.c.b16 %v833, %v830
  %v918 = vpack.c.b16 %v834, %v831
  %v919 = vpack.c.b16 %v835, %v832
  %v920 = vpack.c.b16 %v839, %v836
  %v921 = vpack.c.b16 %v840, %v837
  %v922 = vpack.c.b16 %v841, %v838
  %v923 = vpack.c.b16 %v845, %v842
  %v924 = vpack.c.b16 %v846, %v843
  %v925 = vpack.c.b16 %v847, %v844
  %v926 = vpack.c.b16 %v851, %v848
  %v927 = vpack.c.b16 %v852, %v849
  %v928 = vpack.c.b16 %v853, %v850
  %v929 = vpack.c.b16 %v857, %v854
  %v930 = vpack.c.b16 %v858, %v855
  %v931 = vpack.c.b16 %v859, %v856
  %v932 = vpack.c.b16 %v863, %v860
  %v933 = vpack.c.b16 %v864, %v861
  %v934 = vpack.c.b16 %v865, %v862
  %v935 = vpack.c.b16 %v869, %v866
  %v936 = vpack.c.b16 %v870, %v867
  %v937 = vpack.c.b16 %v871, %v868
  %v938 = vpack.c.b16 %v875, %v872
  %v939 = vpack.c.b16 %v876, %v873
  %v940 = vpack.c.b16 %v877, %v874
  %v941 = vpack.c.b16 %v881, %v878
  %v942 = vpack.c.b16 %v882, %v879
  %v943 = vpack.c.b16 %v883, %v880
  %v944 = vpack.c.b16 %v887, %v884
  %v945 = vpack.c.b16 %v888, %v885
  %v946 = vpack.c.b16 %v889, %v886
  %v947 = vpack.c.b16 %v893, %v890
  %v948 = vpack.c.b16 %v894, %v891
  %v949 = vpack.c.b16 %v895, %v892
  %v950 = vpack.c.b16 %v899, %v896
  %v951 = vpack.c.b16 %v900, %v897
  %v952 = vpack.c.b16 %v901, %v898
  %v953 = vpack.c.b16 %v905, %v902
  %v954 = vpack.c.b16 %v906, %v903
  %v955 = vpack.c.b16 %v907, %v904
  %1004 = vmatprep.subr.bf16.mxu0 %v909
  %1005 = vmatpush1.bf16.msra.mxu0 %v908
  %1006 = vmatprep.subr.bf16.mxu0 %v912
  %1007 = vmatpush1.bf16.msra.mxu0 %v911
  %1008 = vmatprep.subr.bf16.mxu0 %v915
  %1009 = vmatpush1.bf16.msra.mxu0 %v914
  %1010 = vmatprep.subr.bf16.mxu0 %v918
  %1011 = vmatpush1.bf16.msra.mxu0 %v917
  %1012 = vmatprep.subr.bf16.mxu0 %v921
  %1013 = vmatpush1.bf16.msra.mxu0 %v920
  %1014 = vmatprep.subr.bf16.mxu0 %v924
  %1015 = vmatpush1.bf16.msra.mxu0 %v923
  %1016 = vmatprep.subr.bf16.mxu0 %v927
  %1017 = vmatpush1.bf16.msra.mxu0 %v926
  %1018 = vmatprep.subr.bf16.mxu0 %v930
  %1019 = vmatpush1.bf16.msra.mxu0 %v929
  %1020 = vmatprep.subr.bf16.mxu0 %v933
  %1021 = vmatpush1.bf16.msra.mxu0 %v932
  %1022 = vmatprep.subr.bf16.mxu0 %v936
  %1023 = vmatpush1.bf16.msra.mxu0 %v935
  %1024 = vmatprep.subr.bf16.mxu0 %v939
  %1025 = vmatpush1.bf16.msra.mxu0 %v938
  %1026 = vmatprep.subr.bf16.mxu0 %v942
  %1027 = vmatpush1.bf16.msra.mxu0 %v941
  %1028 = vmatprep.subr.bf16.mxu0 %v945
  %1029 = vmatpush1.bf16.msra.mxu0 %v944
  %1030 = vmatprep.subr.bf16.mxu0 %v948
  %1031 = vmatpush1.bf16.msra.mxu0 %v947
  %1032 = vmatprep.subr.bf16.mxu0 %v951
  %1033 = vmatpush1.bf16.msra.mxu0 %v950
  %1034 = vmatprep.subr.bf16.mxu0 %v954
  %1035 = vmatpush1.bf16.msra.mxu0 %v953
  %1036 = vmatprep.mubr.bf16.mxu0 %v681
  %1037 = vmatmul.mubr.bf16.gmra.mrb[0].mxu0 %v680
  %v1038 = vpop.f32.mrb[0].mxu0
  %v1039 = vadd.f32 0.0, %v1038
  %v1040 = vpop.f32.mrb[0].mxu0
  %v1041 = vadd.f32 0.0, %v1040
  %v1042 = vpop.f32.mrb[0].mxu0
  %v1043 = vadd.f32 0.0, %v1042
  %v1044 = vpop.f32.mrb[0].mxu0
  %v1045 = vadd.f32 0.0, %v1044
  %1046 = vmatprep.mubr.bf16.mxu0 %v683
  %1047 = vmatmul.mubr.bf16.gmra.mrb[0].mxu0 %v682
  %v1048 = vpop.f32.mrb[0].mxu0
  %v1049 = vadd.f32 0.0, %v1048
  %v1050 = vpop.f32.mrb[0].mxu0
  %v1051 = vadd.f32 0.0, %v1050
  %v1052 = vpop.f32.mrb[0].mxu0
  %v1053 = vadd.f32 0.0, %v1052
  %v1054 = vpop.f32.mrb[0].mxu0
  %v1055 = vadd.f32 0.0, %v1054
  %1056 = vdwg.mxu0
  %1057 = vmatprep.subr.bf16.mxu0 0
  %1058 = vmatpush1.bf16.msra.mxu0 %v910
  %1059 = vmatprep.subr.bf16.mxu0 0
  %1060 = vmatpush1.bf16.msra.mxu0 %v913
  %1061 = vmatprep.subr.bf16.mxu0 0
  %1062 = vmatpush1.bf16.msra.mxu0 %v916
  %1063 = vmatprep.subr.bf16.mxu0 0
  %1064 = vmatpush1.bf16.msra.mxu0 %v919
  %1065 = vmatprep.subr.bf16.mxu0 0
  %1066 = vmatpush1.bf16.msra.mxu0 %v922
  %1067 = vmatprep.subr.bf16.mxu0 0
  %1068 = vmatpush1.bf16.msra.mxu0 %v925
  %1069 = vmatprep.subr.bf16.mxu0 0
  %1070 = vmatpush1.bf16.msra.mxu0 %v928
  %1071 = vmatprep.subr.bf16.mxu0 0
  %1072 = vmatpush1.bf16.msra.mxu0 %v931
  %1073 = vmatprep.subr.bf16.mxu0 0
  %1074 = vmatpush1.bf16.msra.mxu0 %v934
  %1075 = vmatprep.subr.bf16.mxu0 0
  %1076 = vmatpush1.bf16.msra.mxu0 %v937
  %1077 = vmatprep.subr.bf16.mxu0 0
  %1078 = vmatpush1.bf16.msra.mxu0 %v940
  %1079 = vmatprep.subr.bf16.mxu0 0
  %1080 = vmatpush1.bf16.msra.mxu0 %v943
  %1081 = vmatprep.subr.bf16.mxu0 0
  %1082 = vmatpush1.bf16.msra.mxu0 %v946
  %1083 = vmatprep.subr.bf16.mxu0 0
  %1084 = vmatpush1.bf16.msra.mxu0 %v949
  %1085 = vmatprep.subr.bf16.mxu0 0
  %1086 = vmatpush1.bf16.msra.mxu0 %v952
  %1087 = vmatprep.subr.bf16.mxu0 0
  %1088 = vmatpush1.bf16.msra.mxu0 %v955
  %1089 = vmatprep.mubr.bf16.mxu0 %v681
  %1090 = vmatmul.mubr.bf16.gmra.mrb[0].mxu0 %v680
  %v1091 = vpop.f32.mrb[0].mxu0
  %v1092 = vadd.f32 0.0, %v1091
  %v1093 = vpop.f32.mrb[0].mxu0
  %v1094 = vpop.f32.mrb[0].mxu0
  %v1095 = vadd.f32 0.0, %v1094
  %v1096 = vpop.f32.mrb[0].mxu0
  %1097 = vmatprep.mubr.bf16.mxu0 %v683
  %1098 = vmatmul.mubr.bf16.gmra.mrb[0].mxu0 %v682
  %v1099 = vpop.f32.mrb[0].mxu0
  %v1100 = vadd.f32 0.0, %v1099
  %v1101 = vpop.f32.mrb[0].mxu0
  %v1102 = vpop.f32.mrb[0].mxu0
  %v1103 = vadd.f32 0.0, %v1102
  %v1104 = vpop.f32.mrb[0].mxu0
  %1105 = vdwg.mxu0
  %v1106 = vadd.f32 %v655, %v1039
  %v1107 = vadd.f32 %v656, %v1041
  %v1108 = vadd.f32 %v657, %v1092
  %v1109 = vadd.f32 %v658, %v1043
  %v1110 = vadd.f32 %v659, %v1045
  %v1111 = vadd.f32 %v660, %v1095
  %v1112 = vadd.f32 %v666, %v1049
  %v1113 = vadd.f32 %v667, %v1051
  %v1114 = vadd.f32 %v668, %v1100
  %v1115 = vadd.f32 %v669, %v1053
  %v1116 = vadd.f32 %v670, %v1055
  %v1117 = vadd.f32 %v671, %v1103
  %v1118 = vxor.u32 %v1106, 2147483648
  %v1119 = vxor.u32 %v1109, 2147483648
  %v1120 = vxor.u32 %v1112, 2147483648
  %v1121 = vxor.u32 %v1115, 2147483648
  %v1122 = vmul.f32 %v1118, 1.442695
  %v1123 = vpow.pop %v1122
  %v1124 = vmul.f32 %v1119, 1.442695
  %v1125 = vpow.pop %v1124
  %v1126 = vmul.f32 %v1120, 1.442695
  %v1127 = vpow.pop %v1126
  %v1128 = vmul.f32 %v1121, 1.442695
  %v1129 = vpow.pop %v1128
  %v1130 = vadd.f32 %v1123, 1.0
  %v1131 = vadd.f32 %v1125, 1.0
  %v1132 = vadd.f32 %v1127, 1.0
  %v1133 = vadd.f32 %v1129, 1.0
  %v1134 = vrcp.pop %v1130
  %v1135 = vmul.f32 1.0, %v1134
  %v1136 = vrcp.pop %v1131
  %v1137 = vmul.f32 1.0, %v1136
  %v1138 = vrcp.pop %v1132
  %v1139 = vmul.f32 1.0, %v1138
  %v1140 = vrcp.pop %v1133
  %v1141 = vmul.f32 1.0, %v1140
  %v1142 = vxor.u32 %v1107, 2147483648
  %v1143 = vxor.u32 %v1110, 2147483648
  %v1144 = vxor.u32 %v1113, 2147483648
  %v1145 = vxor.u32 %v1116, 2147483648
  %v1146 = vmul.f32 %v1142, 1.442695
  %v1147 = vpow.pop %v1146
  %v1148 = vmul.f32 %v1143, 1.442695
  %v1149 = vpow.pop %v1148
  %v1150 = vmul.f32 %v1144, 1.442695
  %v1151 = vpow.pop %v1150
  %v1152 = vmul.f32 %v1145, 1.442695
  %v1153 = vpow.pop %v1152
  %v1154 = vadd.f32 %v1147, 1.0
  %v1155 = vadd.f32 %v1149, 1.0
  %v1156 = vadd.f32 %v1151, 1.0
  %v1157 = vadd.f32 %v1153, 1.0
  %v1158 = vrcp.pop %v1154
  %v1159 = vmul.f32 1.0, %v1158
  %v1160 = vrcp.pop %v1155
  %v1161 = vmul.f32 1.0, %v1160
  %v1162 = vrcp.pop %v1156
  %v1163 = vmul.f32 1.0, %v1162
  %v1164 = vrcp.pop %v1157
  %v1165 = vmul.f32 1.0, %v1164
  %v1166 = vtanh.pop %v1108
  %v1167 = vtanh.pop %v1111
  %v1168 = vtanh.pop %v1114
  %v1169 = vtanh.pop %v1117
  %v1170 = vsub.f32 1.0, %v1135
  %v1171 = vsub.f32 1.0, %v1137
  %v1172 = vsub.f32 1.0, %v1139
  %v1173 = vsub.f32 1.0, %v1141
  %v1174 = vld [vmem:[#allocation3] sm:$0xff]
  %v1175 = vld [vmem:[#allocation3 + $0x8] sm:$0xff]
  %v1176 = vld [vmem:[#allocation3 + $0x10] sm:$0xff]
  %v1177 = vld [vmem:[#allocation3 + $0x18] sm:$0xff]
  %v1178 = vmul.f32 %v1170, %v1174
  %v1179 = vmul.f32 %v1171, %v1175
  %v1180 = vmul.f32 %v1172, %v1176
  %v1181 = vmul.f32 %v1173, %v1177
  %v1182 = vmul.f32 %v1135, %v1166
  %v1183 = vmul.f32 %v1137, %v1167
  %v1184 = vmul.f32 %v1139, %v1168
  %v1185 = vmul.f32 %v1141, %v1169
  %v1186 = vadd.f32 %v1178, %v1182
  %v1187 = vadd.f32 %v1179, %v1183
  %v1188 = vadd.f32 %v1180, %v1184
  %v1189 = vadd.f32 %v1181, %v1185
  %v1190 = vtanh.pop %v1186
  %v1191 = vtanh.pop %v1187
  %v1192 = vtanh.pop %v1188
  %v1193 = vtanh.pop %v1189
  %v1194 = vmul.f32 %v1159, %v1190
  %v1195 = vmul.f32 %v1161, %v1191
  %v1196 = vmul.f32 %v1163, %v1192
  %v1197 = vmul.f32 %v1165, %v1193
  %1198 = vst [vmem:[#allocation3] sm:$0xff] %v1186
  %1199 = vst [vmem:[#allocation3 + $0x8] sm:$0xff] %v1187
  %1200 = vst [vmem:[#allocation3 + $0x10] sm:$0xff] %v1188
  %1201 = vst [vmem:[#allocation3 + $0x18] sm:$0xff] %v1189
  %1202 = vst [vmem:[#allocation2] sm:$0xff] %v1194
  %1203 = vst [vmem:[#allocation2 + $0x10] sm:$0xff] %v1195
  %1204 = vst [vmem:[#allocation2 + $0x28] sm:$0xff] %v1196
  %1205 = vst [vmem:[#allocation2 + $0x38] sm:$0xff] %v1197
  %v1206 = vpack.c.bf16 %v1195, %v1194
  %v1207 = vpack.c.bf16 %v1197, %v1196
  %v1209 = vunpack.c.l.b16 %v1206
  %v1210 = vunpack.c.h.b16 %v1206
  %v1211 = vpack.c.b16 %v1209, %v1209
  %v1212 = vpack.c.b16 %v1210, %v1210
  %s1215 = scalar_lea.vmem %s3, 8
  %1216 = vst [vmem:[%s1215] sm:$0xf] %v1211
  %1217 = vst [vmem:[%s1215 + $0x4] sm:$0xf] %v1212
  %v1219 = vunpack.c.l.b16 %v1207
  %v1220 = vunpack.c.h.b16 %v1207
  %v1221 = vpack.c.b16 %v1219, %v1219
  %v1222 = vpack.c.b16 %v1220, %v1220
  %s1225 = scalar_lea.vmem %s54, 48
  %1226 = vst [vmem:[%s1225] sm:$0xf] %v1221
  %1227 = vst [vmem:[%s1225 + $0x4] sm:$0xf] %v1222
  %s1228 = scalar_lea.vmem %s0, 48
  %v1229 = vld [vmem:[%s1228] sm:$0xff]
  %v1230 = vld [vmem:[%s1228 + $0x8] sm:$0xf]
  %v1231 = vld [vmem:[%s1228 + $0xc] sm:$0xff]
  %v1232 = vld [vmem:[%s1228 + $0x14] sm:$0xf]
  %v1233 = vunpack.c.l.bf16 %v1229
  %v1234 = vunpack.c.h.bf16 %v1229
  %v1235 = vunpack.c.l.bf16 %v1230
  %v1236 = vunpack.c.l.bf16 %v1231
  %v1237 = vunpack.c.h.bf16 %v1231
  %v1238 = vunpack.c.l.bf16 %v1232
  %s1239 = scalar_lea.vmem %s45, 120
  %v1240 = vld [vmem:[%s1239] sm:$0xff]
  %v1241 = vld [vmem:[%s1239 + $0x8] sm:$0xf]
  %v1242 = vld [vmem:[%s1239 + $0xc] sm:$0xff]
  %v1243 = vld [vmem:[%s1239 + $0x14] sm:$0xf]
  %v1244 = vunpack.c.l.bf16 %v1240
  %v1245 = vunpack.c.h.bf16 %v1240
  %v1246 = vunpack.c.l.bf16 %v1241
  %v1247 = vunpack.c.l.bf16 %v1242
  %v1248 = vunpack.c.h.bf16 %v1242
  %v1249 = vunpack.c.l.bf16 %v1243
  %v1250 = vld [vmem:[#allocation2] sm:$0xff]
  %v1251 = vld [vmem:[#allocation2 + $0x8] sm:$0xff]
  %v1252 = vld [vmem:[#allocation2 + $0x10] sm:$0xff]
  %v1253 = vld [vmem:[#allocation2 + $0x18] sm:$0xff]
  %v1254 = vld [vmem:[#allocation2 + $0x20] sm:$0xff]
  %v1255 = vld [vmem:[#allocation2 + $0x28] sm:$0xff]
  %v1256 = vld [vmem:[#allocation2 + $0x30] sm:$0xff]
  %v1257 = vld [vmem:[#allocation2 + $0x38] sm:$0xff]
  %v1258 = vpack.c.bf16 %v1252, %v1250
  %v1259 = vpack.c.bf16 %v1253, %v1251
  %v1260 = vpack.c.bf16 %v1256, %v1254
  %v1261 = vpack.c.bf16 %v1257, %v1255
  %v1262 = vld [vmem:[%s2] sm:$0xff]
  %v1263 = vld [vmem:[%s2 + $0x8] sm:$0xf]
  %v1264 = vld [vmem:[%s2 + $0xc] sm:$0xff]
  %v1265 = vld [vmem:[%s2 + $0x14] sm:$0xf]
  %v1266 = vld [vmem:[%s2 + $0x18] sm:$0xff]
  %v1267 = vld [vmem:[%s2 + $0x20] sm:$0xf]
  %v1268 = vld [vmem:[%s2 + $0x24] sm:$0xff]
  %v1269 = vld [vmem:[%s2 + $0x2c] sm:$0xf]
  %v1270 = vld [vmem:[%s2 + $0x30] sm:$0xff]
  %v1271 = vld [vmem:[%s2 + $0x38] sm:$0xf]
  %v1272 = vld [vmem:[%s2 + $0x3c] sm:$0xff]
  %v1273 = vld [vmem:[%s2 + $0x44] sm:$0xf]
  %v1274 = vld [vmem:[%s2 + $0x48] sm:$0xff]
  %v1275 = vld [vmem:[%s2 + $0x50] sm:$0xf]
  %v1276 = vld [vmem:[%s2 + $0x54] sm:$0xff]
  %v1277 = vld [vmem:[%s2 + $0x5c] sm:$0xf]
  %v1278 = vld [vmem:[%s2 + $0x60] sm:$0xff]
  %v1279 = vld [vmem:[%s2 + $0x68] sm:$0xf]
  %v1280 = vld [vmem:[%s2 + $0x6c] sm:$0xff]
  %v1281 = vld [vmem:[%s2 + $0x74] sm:$0xf]
  %v1282 = vld [vmem:[%s2 + $0x78] sm:$0xff]
  %v1283 = vld [vmem:[%s2 + $0x80] sm:$0xf]
  %v1284 = vld [vmem:[%s2 + $0x84] sm:$0xff]
  %v1285 = vld [vmem:[%s2 + $0x8c] sm:$0xf]
  %v1286 = vld [vmem:[%s2 + $0x90] sm:$0xff]
  %v1287 = vld [vmem:[%s2 + $0x98] sm:$0xf]
  %v1288 = vld [vmem:[%s2 + $0x9c] sm:$0xff]
  %v1289 = vld [vmem:[%s2 + $0xa4] sm:$0xf]
  %v1290 = vld [vmem:[%s2 + $0xa8] sm:$0xff]
  %v1291 = vld [vmem:[%s2 + $0xb0] sm:$0xf]
  %v1292 = vld [vmem:[%s2 + $0xb4] sm:$0xff]
  %v1293 = vld [vmem:[%s2 + $0xbc] sm:$0xf]
  %v1294 = vld [vmem:[%s2 + $0xc0] sm:$0xff]
  %v1295 = vld [vmem:[%s2 + $0xc8] sm:$0xf]
  %v1296 = vld [vmem:[%s2 + $0xcc] sm:$0xff]
  %v1297 = vld [vmem:[%s2 + $0xd4] sm:$0xf]
  %v1298 = vld [vmem:[%s2 + $0xd8] sm:$0xff]
  %v1299 = vld [vmem:[%s2 + $0xe0] sm:$0xf]
  %v1300 = vld [vmem:[%s2 + $0xe4] sm:$0xff]
  %v1301 = vld [vmem:[%s2 + $0xec] sm:$0xf]
  %v1302 = vld [vmem:[%s2 + $0xf0] sm:$0xff]
  %v1303 = vld [vmem:[%s2 + $0xf8] sm:$0xf]
  %v1304 = vld [vmem:[%s2 + $0xfc] sm:$0xff]
  %v1305 = vld [vmem:[%s2 + $0x104] sm:$0xf]
  %v1306 = vld [vmem:[%s2 + $0x108] sm:$0xff]
  %v1307 = vld [vmem:[%s2 + $0x110] sm:$0xf]
  %v1308 = vld [vmem:[%s2 + $0x114] sm:$0xff]
  %v1309 = vld [vmem:[%s2 + $0x11c] sm:$0xf]
  %v1310 = vld [vmem:[%s2 + $0x120] sm:$0xff]
  %v1311 = vld [vmem:[%s2 + $0x128] sm:$0xf]
  %v1312 = vld [vmem:[%s2 + $0x12c] sm:$0xff]
  %v1313 = vld [vmem:[%s2 + $0x134] sm:$0xf]
  %v1314 = vld [vmem:[%s2 + $0x138] sm:$0xff]
  %v1315 = vld [vmem:[%s2 + $0x140] sm:$0xf]
  %v1316 = vld [vmem:[%s2 + $0x144] sm:$0xff]
  %v1317 = vld [vmem:[%s2 + $0x14c] sm:$0xf]
  %v1318 = vld [vmem:[%s2 + $0x150] sm:$0xff]
  %v1319 = vld [vmem:[%s2 + $0x158] sm:$0xf]
  %v1320 = vld [vmem:[%s2 + $0x15c] sm:$0xff]
  %v1321 = vld [vmem:[%s2 + $0x164] sm:$0xf]
  %v1322 = vld [vmem:[%s2 + $0x168] sm:$0xff]
  %v1323 = vld [vmem:[%s2 + $0x170] sm:$0xf]
  %v1324 = vld [vmem:[%s2 + $0x174] sm:$0xff]
  %v1325 = vld [vmem:[%s2 + $0x17c] sm:$0xf]
  %v1390 = vunpack.c.l.b16 %v1262
  %v1391 = vunpack.c.h.b16 %v1262
  %v1392 = vunpack.c.l.b16 %v1263
  %v1393 = vunpack.c.l.b16 %v1264
  %v1394 = vunpack.c.h.b16 %v1264
  %v1395 = vunpack.c.l.b16 %v1265
  %v1396 = vunpack.c.l.b16 %v1266
  %v1397 = vunpack.c.h.b16 %v1266
  %v1398 = vunpack.c.l.b16 %v1267
  %v1399 = vunpack.c.l.b16 %v1268
  %v1400 = vunpack.c.h.b16 %v1268
  %v1401 = vunpack.c.l.b16 %v1269
  %v1402 = vunpack.c.l.b16 %v1270
  %v1403 = vunpack.c.h.b16 %v1270
  %v1404 = vunpack.c.l.b16 %v1271
  %v1405 = vunpack.c.l.b16 %v1272
  %v1406 = vunpack.c.h.b16 %v1272
  %v1407 = vunpack.c.l.b16 %v1273
  %v1408 = vunpack.c.l.b16 %v1274
  %v1409 = vunpack.c.h.b16 %v1274
  %v1410 = vunpack.c.l.b16 %v1275
  %v1411 = vunpack.c.l.b16 %v1276
  %v1412 = vunpack.c.h.b16 %v1276
  %v1413 = vunpack.c.l.b16 %v1277
  %v1414 = vunpack.c.l.b16 %v1278
  %v1415 = vunpack.c.h.b16 %v1278
  %v1416 = vunpack.c.l.b16 %v1279
  %v1417 = vunpack.c.l.b16 %v1280
  %v1418 = vunpack.c.h.b16 %v1280
  %v1419 = vunpack.c.l.b16 %v1281
  %v1420 = vunpack.c.l.b16 %v1282
  %v1421 = vunpack.c.h.b16 %v1282
  %v1422 = vunpack.c.l.b16 %v1283
  %v1423 = vunpack.c.l.b16 %v1284
  %v1424 = vunpack.c.h.b16 %v1284
  %v1425 = vunpack.c.l.b16 %v1285
  %v1426 = vunpack.c.l.b16 %v1286
  %v1427 = vunpack.c.h.b16 %v1286
  %v1428 = vunpack.c.l.b16 %v1287
  %v1429 = vunpack.c.l.b16 %v1288
  %v1430 = vunpack.c.h.b16 %v1288
  %v1431 = vunpack.c.l.b16 %v1289
  %v1432 = vunpack.c.l.b16 %v1290
  %v1433 = vunpack.c.h.b16 %v1290
  %v1434 = vunpack.c.l.b16 %v1291
  %v1435 = vunpack.c.l.b16 %v1292
  %v1436 = vunpack.c.h.b16 %v1292
  %v1437 = vunpack.c.l.b16 %v1293
  %v1438 = vunpack.c.l.b16 %v1294
  %v1439 = vunpack.c.h.b16 %v1294
  %v1440 = vunpack.c.l.b16 %v1295
  %v1441 = vunpack.c.l.b16 %v1296
  %v1442 = vunpack.c.h.b16 %v1296
  %v1443 = vunpack.c.l.b16 %v1297
  %v1444 = vunpack.c.l.b16 %v1298
  %v1445 = vunpack.c.h.b16 %v1298
  %v1446 = vunpack.c.l.b16 %v1299
  %v1447 = vunpack.c.l.b16 %v1300
  %v1448 = vunpack.c.h.b16 %v1300
  %v1449 = vunpack.c.l.b16 %v1301
  %v1450 = vunpack.c.l.b16 %v1302
  %v1451 = vunpack.c.h.b16 %v1302
  %v1452 = vunpack.c.l.b16 %v1303
  %v1453 = vunpack.c.l.b16 %v1304
  %v1454 = vunpack.c.h.b16 %v1304
  %v1455 = vunpack.c.l.b16 %v1305
  %v1456 = vunpack.c.l.b16 %v1306
  %v1457 = vunpack.c.h.b16 %v1306
  %v1458 = vunpack.c.l.b16 %v1307
  %v1459 = vunpack.c.l.b16 %v1308
  %v1460 = vunpack.c.h.b16 %v1308
  %v1461 = vunpack.c.l.b16 %v1309
  %v1462 = vunpack.c.l.b16 %v1310
  %v1463 = vunpack.c.h.b16 %v1310
  %v1464 = vunpack.c.l.b16 %v1311
  %v1465 = vunpack.c.l.b16 %v1312
  %v1466 = vunpack.c.h.b16 %v1312
  %v1467 = vunpack.c.l.b16 %v1313
  %v1468 = vunpack.c.l.b16 %v1314
  %v1469 = vunpack.c.h.b16 %v1314
  %v1470 = vunpack.c.l.b16 %v1315
  %v1471 = vunpack.c.l.b16 %v1316
  %v1472 = vunpack.c.h.b16 %v1316
  %v1473 = vunpack.c.l.b16 %v1317
  %v1474 = vunpack.c.l.b16 %v1318
  %v1475 = vunpack.c.h.b16 %v1318
  %v1476 = vunpack.c.l.b16 %v1319
  %v1477 = vunpack.c.l.b16 %v1320
  %v1478 = vunpack.c.h.b16 %v1320
  %v1479 = vunpack.c.l.b16 %v1321
  %v1480 = vunpack.c.l.b16 %v1322
  %v1481 = vunpack.c.h.b16 %v1322
  %v1482 = vunpack.c.l.b16 %v1323
  %v1483 = vunpack.c.l.b16 %v1324
  %v1484 = vunpack.c.h.b16 %v1324
  %v1485 = vunpack.c.l.b16 %v1325
  %v1486 = vpack.c.b16 %v1393, %v1390
  %v1487 = vpack.c.b16 %v1394, %v1391
  %v1488 = vpack.c.b16 %v1395, %v1392
  %v1489 = vpack.c.b16 %v1399, %v1396
  %v1490 = vpack.c.b16 %v1400, %v1397
  %v1491 = vpack.c.b16 %v1401, %v1398
  %v1492 = vpack.c.b16 %v1405, %v1402
  %v1493 = vpack.c.b16 %v1406, %v1403
  %v1494 = vpack.c.b16 %v1407, %v1404
  %v1495 = vpack.c.b16 %v1411, %v1408
  %v1496 = vpack.c.b16 %v1412, %v1409
  %v1497 = vpack.c.b16 %v1413, %v1410
  %v1498 = vpack.c.b16 %v1417, %v1414
  %v1499 = vpack.c.b16 %v1418, %v1415
  %v1500 = vpack.c.b16 %v1419, %v1416
  %v1501 = vpack.c.b16 %v1423, %v1420
  %v1502 = vpack.c.b16 %v1424, %v1421
  %v1503 = vpack.c.b16 %v1425, %v1422
  %v1504 = vpack.c.b16 %v1429, %v1426
  %v1505 = vpack.c.b16 %v1430, %v1427
  %v1506 = vpack.c.b16 %v1431, %v1428
  %v1507 = vpack.c.b16 %v1435, %v1432
  %v1508 = vpack.c.b16 %v1436, %v1433
  %v1509 = vpack.c.b16 %v1437, %v1434
  %v1510 = vpack.c.b16 %v1441, %v1438
  %v1511 = vpack.c.b16 %v1442, %v1439
  %v1512 = vpack.c.b16 %v1443, %v1440
  %v1513 = vpack.c.b16 %v1447, %v1444
  %v1514 = vpack.c.b16 %v1448, %v1445
  %v1515 = vpack.c.b16 %v1449, %v1446
  %v1516 = vpack.c.b16 %v1453, %v1450
  %v1517 = vpack.c.b16 %v1454, %v1451
  %v1518 = vpack.c.b16 %v1455, %v1452
  %v1519 = vpack.c.b16 %v1459, %v1456
  %v1520 = vpack.c.b16 %v1460, %v1457
  %v1521 = vpack.c.b16 %v1461, %v1458
  %v1522 = vpack.c.b16 %v1465, %v1462
  %v1523 = vpack.c.b16 %v1466, %v1463
  %v1524 = vpack.c.b16 %v1467, %v1464
  %v1525 = vpack.c.b16 %v1471, %v1468
  %v1526 = vpack.c.b16 %v1472, %v1469
  %v1527 = vpack.c.b16 %v1473, %v1470
  %v1528 = vpack.c.b16 %v1477, %v1474
  %v1529 = vpack.c.b16 %v1478, %v1475
  %v1530 = vpack.c.b16 %v1479, %v1476
  %v1531 = vpack.c.b16 %v1483, %v1480
  %v1532 = vpack.c.b16 %v1484, %v1481
  %v1533 = vpack.c.b16 %v1485, %v1482
  %1582 = vmatprep.subr.bf16.mxu0 %v1487
  %1583 = vmatpush1.bf16.msra.mxu0 %v1486
  %1584 = vmatprep.subr.bf16.mxu0 %v1490
  %1585 = vmatpush1.bf16.msra.mxu0 %v1489
  %1586 = vmatprep.subr.bf16.mxu0 %v1493
  %1587 = vmatpush1.bf16.msra.mxu0 %v1492
  %1588 = vmatprep.subr.bf16.mxu0 %v1496
  %1589 = vmatpush1.bf16.msra.mxu0 %v1495
  %1590 = vmatprep.subr.bf16.mxu0 %v1499
  %1591 = vmatpush1.bf16.msra.mxu0 %v1498
  %1592 = vmatprep.subr.bf16.mxu0 %v1502
  %1593 = vmatpush1.bf16.msra.mxu0 %v1501
  %1594 = vmatprep.subr.bf16.mxu0 %v1505
  %1595 = vmatpush1.bf16.msra.mxu0 %v1504
  %1596 = vmatprep.subr.bf16.mxu0 %v1508
  %1597 = vmatpush1.bf16.msra.mxu0 %v1507
  %1598 = vmatprep.subr.bf16.mxu0 %v1511
  %1599 = vmatpush1.bf16.msra.mxu0 %v1510
  %1600 = vmatprep.subr.bf16.mxu0 %v1514
  %1601 = vmatpush1.bf16.msra.mxu0 %v1513
  %1602 = vmatprep.subr.bf16.mxu0 %v1517
  %1603 = vmatpush1.bf16.msra.mxu0 %v1516
  %1604 = vmatprep.subr.bf16.mxu0 %v1520
  %1605 = vmatpush1.bf16.msra.mxu0 %v1519
  %1606 = vmatprep.subr.bf16.mxu0 %v1523
  %1607 = vmatpush1.bf16.msra.mxu0 %v1522
  %1608 = vmatprep.subr.bf16.mxu0 %v1526
  %1609 = vmatpush1.bf16.msra.mxu0 %v1525
  %1610 = vmatprep.subr.bf16.mxu0 %v1529
  %1611 = vmatpush1.bf16.msra.mxu0 %v1528
  %1612 = vmatprep.subr.bf16.mxu0 %v1532
  %1613 = vmatpush1.bf16.msra.mxu0 %v1531
  %1614 = vmatprep.mubr.bf16.mxu0 %v1259
  %1615 = vmatmul.mubr.bf16.gmra.mrb[0].mxu0 %v1258
  %v1616 = vpop.f32.mrb[0].mxu0
  %v1617 = vadd.f32 0.0, %v1616
  %v1618 = vpop.f32.mrb[0].mxu0
  %v1619 = vadd.f32 0.0, %v1618
  %v1620 = vpop.f32.mrb[0].mxu0
  %v1621 = vadd.f32 0.0, %v1620
  %v1622 = vpop.f32.mrb[0].mxu0
  %v1623 = vadd.f32 0.0, %v1622
  %1624 = vmatprep.mubr.bf16.mxu0 %v1261
  %1625 = vmatmul.mubr.bf16.gmra.mrb[0].mxu0 %v1260
  %v1626 = vpop.f32.mrb[0].mxu0
  %v1627 = vadd.f32 0.0, %v1626
  %v1628 = vpop.f32.mrb[0].mxu0
  %v1629 = vadd.f32 0.0, %v1628
  %v1630 = vpop.f32.mrb[0].mxu0
  %v1631 = vadd.f32 0.0, %v1630
  %v1632 = vpop.f32.mrb[0].mxu0
  %v1633 = vadd.f32 0.0, %v1632
  %1634 = vdwg.mxu0
  %1635 = vmatprep.subr.bf16.mxu0 0
  %1636 = vmatpush1.bf16.msra.mxu0 %v1488
  %1637 = vmatprep.subr.bf16.mxu0 0
  %1638 = vmatpush1.bf16.msra.mxu0 %v1491
  %1639 = vmatprep.subr.bf16.mxu0 0
  %1640 = vmatpush1.bf16.msra.mxu0 %v1494
  %1641 = vmatprep.subr.bf16.mxu0 0
  %1642 = vmatpush1.bf16.msra.mxu0 %v1497
  %1643 = vmatprep.subr.bf16.mxu0 0
  %1644 = vmatpush1.bf16.msra.mxu0 %v1500
  %1645 = vmatprep.subr.bf16.mxu0 0
  %1646 = vmatpush1.bf16.msra.mxu0 %v1503
  %1647 = vmatprep.subr.bf16.mxu0 0
  %1648 = vmatpush1.bf16.msra.mxu0 %v1506
  %1649 = vmatprep.subr.bf16.mxu0 0
  %1650 = vmatpush1.bf16.msra.mxu0 %v1509
  %1651 = vmatprep.subr.bf16.mxu0 0
  %1652 = vmatpush1.bf16.msra.mxu0 %v1512
  %1653 = vmatprep.subr.bf16.mxu0 0
  %1654 = vmatpush1.bf16.msra.mxu0 %v1515
  %1655 = vmatprep.subr.bf16.mxu0 0
  %1656 = vmatpush1.bf16.msra.mxu0 %v1518
  %1657 = vmatprep.subr.bf16.mxu0 0
  %1658 = vmatpush1.bf16.msra.mxu0 %v1521
  %1659 = vmatprep.subr.bf16.mxu0 0
  %1660 = vmatpush1.bf16.msra.mxu0 %v1524
  %1661 = vmatprep.subr.bf16.mxu0 0
  %1662 = vmatpush1.bf16.msra.mxu0 %v1527
  %1663 = vmatprep.subr.bf16.mxu0 0
  %1664 = vmatpush1.bf16.msra.mxu0 %v1530
  %1665 = vmatprep.subr.bf16.mxu0 0
  %1666 = vmatpush1.bf16.msra.mxu0 %v1533
  %1667 = vmatprep.mubr.bf16.mxu0 %v1259
  %1668 = vmatmul.mubr.bf16.gmra.mrb[0].mxu0 %v1258
  %v1669 = vpop.f32.mrb[0].mxu0
  %v1670 = vadd.f32 0.0, %v1669
  %v1671 = vpop.f32.mrb[0].mxu0
  %v1672 = vpop.f32.mrb[0].mxu0
  %v1673 = vadd.f32 0.0, %v1672
  %v1674 = vpop.f32.mrb[0].mxu0
  %1675 = vmatprep.mubr.bf16.mxu0 %v1261
  %1676 = vmatmul.mubr.bf16.gmra.mrb[0].mxu0 %v1260
  %v1677 = vpop.f32.mrb[0].mxu0
  %v1678 = vadd.f32 0.0, %v1677
  %v1679 = vpop.f32.mrb[0].mxu0
  %v1680 = vpop.f32.mrb[0].mxu0
  %v1681 = vadd.f32 0.0, %v1680
  %v1682 = vpop.f32.mrb[0].mxu0
  %1683 = vdwg.mxu0
  %v1684 = vadd.f32 %v1233, %v1617
  %v1685 = vadd.f32 %v1234, %v1619
  %v1686 = vadd.f32 %v1235, %v1670
  %v1687 = vadd.f32 %v1236, %v1621
  %v1688 = vadd.f32 %v1237, %v1623
  %v1689 = vadd.f32 %v1238, %v1673
  %v1690 = vadd.f32 %v1244, %v1627
  %v1691 = vadd.f32 %v1245, %v1629
  %v1692 = vadd.f32 %v1246, %v1678
  %v1693 = vadd.f32 %v1247, %v1631
  %v1694 = vadd.f32 %v1248, %v1633
  %v1695 = vadd.f32 %v1249, %v1681
  %v1696 = vxor.u32 %v1684, 2147483648
  %v1697 = vxor.u32 %v1687, 2147483648
  %v1698 = vxor.u32 %v1690, 2147483648
  %v1699 = vxor.u32 %v1693, 2147483648
  %v1700 = vmul.f32 %v1696, 1.442695
  %v1701 = vpow.pop %v1700
  %v1702 = vmul.f32 %v1697, 1.442695
  %v1703 = vpow.pop %v1702
  %v1704 = vmul.f32 %v1698, 1.442695
  %v1705 = vpow.pop %v1704
  %v1706 = vmul.f32 %v1699, 1.442695
  %v1707 = vpow.pop %v1706
  %v1708 = vadd.f32 %v1701, 1.0
  %v1709 = vadd.f32 %v1703, 1.0
  %v1710 = vadd.f32 %v1705, 1.0
  %v1711 = vadd.f32 %v1707, 1.0
  %v1712 = vrcp.pop %v1708
  %v1713 = vmul.f32 1.0, %v1712
  %v1714 = vrcp.pop %v1709
  %v1715 = vmul.f32 1.0, %v1714
  %v1716 = vrcp.pop %v1710
  %v1717 = vmul.f32 1.0, %v1716
  %v1718 = vrcp.pop %v1711
  %v1719 = vmul.f32 1.0, %v1718
  %v1720 = vxor.u32 %v1685, 2147483648
  %v1721 = vxor.u32 %v1688, 2147483648
  %v1722 = vxor.u32 %v1691, 2147483648
  %v1723 = vxor.u32 %v1694, 2147483648
  %v1724 = vmul.f32 %v1720, 1.442695
  %v1725 = vpow.pop %v1724
  %v1726 = vmul.f32 %v1721, 1.442695
  %v1727 = vpow.pop %v1726
  %v1728 = vmul.f32 %v1722, 1.442695
  %v1729 = vpow.pop %v1728
  %v1730 = vmul.f32 %v1723, 1.442695
  %v1731 = vpow.pop %v1730
  %v1732 = vadd.f32 %v1725, 1.0
  %v1733 = vadd.f32 %v1727, 1.0
  %v1734 = vadd.f32 %v1729, 1.0
  %v1735 = vadd.f32 %v1731, 1.0
  %v1736 = vrcp.pop %v1732
  %v1737 = vmul.f32 1.0, %v1736
  %v1738 = vrcp.pop %v1733
  %v1739 = vmul.f32 1.0, %v1738
  %v1740 = vrcp.pop %v1734
  %v1741 = vmul.f32 1.0, %v1740
  %v1742 = vrcp.pop %v1735
  %v1743 = vmul.f32 1.0, %v1742
  %v1744 = vtanh.pop %v1686
  %v1745 = vtanh.pop %v1689
  %v1746 = vtanh.pop %v1692
  %v1747 = vtanh.pop %v1695
  %v1748 = vsub.f32 1.0, %v1713
  %v1749 = vsub.f32 1.0, %v1715
  %v1750 = vsub.f32 1.0, %v1717
  %v1751 = vsub.f32 1.0, %v1719
  %v1752 = vld [vmem:[#allocation3] sm:$0xff]
  %v1753 = vld [vmem:[#allocation3 + $0x8] sm:$0xff]
  %v1754 = vld [vmem:[#allocation3 + $0x10] sm:$0xff]
  %v1755 = vld [vmem:[#allocation3 + $0x18] sm:$0xff]
  %v1756 = vmul.f32 %v1748, %v1752
  %v1757 = vmul.f32 %v1749, %v1753
  %v1758 = vmul.f32 %v1750, %v1754
  %v1759 = vmul.f32 %v1751, %v1755
  %v1760 = vmul.f32 %v1713, %v1744
  %v1761 = vmul.f32 %v1715, %v1745
  %v1762 = vmul.f32 %v1717, %v1746
  %v1763 = vmul.f32 %v1719, %v1747
  %v1764 = vadd.f32 %v1756, %v1760
  %v1765 = vadd.f32 %v1757, %v1761
  %v1766 = vadd.f32 %v1758, %v1762
  %v1767 = vadd.f32 %v1759, %v1763
  %v1768 = vtanh.pop %v1764
  %v1769 = vtanh.pop %v1765
  %v1770 = vtanh.pop %v1766
  %v1771 = vtanh.pop %v1767
  %v1772 = vmul.f32 %v1737, %v1768
  %v1773 = vmul.f32 %v1739, %v1769
  %v1774 = vmul.f32 %v1741, %v1770
  %v1775 = vmul.f32 %v1743, %v1771
  %1776 = vst [vmem:[#allocation3] sm:$0xff] %v1764
  %1777 = vst [vmem:[#allocation3 + $0x8] sm:$0xff] %v1765
  %1778 = vst [vmem:[#allocation3 + $0x10] sm:$0xff] %v1766
  %1779 = vst [vmem:[#allocation3 + $0x18] sm:$0xff] %v1767
  %1780 = vst [vmem:[#allocation2] sm:$0xff] %v1772
  %1781 = vst [vmem:[#allocation2 + $0x10] sm:$0xff] %v1773
  %1782 = vst [vmem:[#allocation2 + $0x28] sm:$0xff] %v1774
  %1783 = vst [vmem:[#allocation2 + $0x38] sm:$0xff] %v1775
  %v1784 = vpack.c.bf16 %v1773, %v1772
  %v1785 = vpack.c.bf16 %v1775, %v1774
  %v1787 = vunpack.c.l.b16 %v1784
  %v1788 = vunpack.c.h.b16 %v1784
  %v1789 = vpack.c.b16 %v1787, %v1787
  %v1790 = vpack.c.b16 %v1788, %v1788
  %s1793 = scalar_lea.vmem %s3, 16
  %1794 = vst [vmem:[%s1793] sm:$0xf] %v1789
  %1795 = vst [vmem:[%s1793 + $0x4] sm:$0xf] %v1790
  %v1797 = vunpack.c.l.b16 %v1785
  %v1798 = vunpack.c.h.b16 %v1785
  %v1799 = vpack.c.b16 %v1797, %v1797
  %v1800 = vpack.c.b16 %v1798, %v1798
  %s1803 = scalar_lea.vmem %s54, 40
  %1804 = vst [vmem:[%s1803] sm:$0xf] %v1799
  %1805 = vst [vmem:[%s1803 + $0x4] sm:$0xf] %v1800
  %s1806 = scalar_lea.vmem %s0, 72
  %v1807 = vld [vmem:[%s1806] sm:$0xff]
  %v1808 = vld [vmem:[%s1806 + $0x8] sm:$0xf]
  %v1809 = vld [vmem:[%s1806 + $0xc] sm:$0xff]
  %v1810 = vld [vmem:[%s1806 + $0x14] sm:$0xf]
  %v1811 = vunpack.c.l.bf16 %v1807
  %v1812 = vunpack.c.h.bf16 %v1807
  %v1813 = vunpack.c.l.bf16 %v1808
  %v1814 = vunpack.c.l.bf16 %v1809
  %v1815 = vunpack.c.h.bf16 %v1809
  %v1816 = vunpack.c.l.bf16 %v1810
  %s1817 = scalar_lea.vmem %s45, 96
  %v1818 = vld [vmem:[%s1817] sm:$0xff]
  %v1819 = vld [vmem:[%s1817 + $0x8] sm:$0xf]
  %v1820 = vld [vmem:[%s1817 + $0xc] sm:$0xff]
  %v1821 = vld [vmem:[%s1817 + $0x14] sm:$0xf]
  %v1822 = vunpack.c.l.bf16 %v1818
  %v1823 = vunpack.c.h.bf16 %v1818
  %v1824 = vunpack.c.l.bf16 %v1819
  %v1825 = vunpack.c.l.bf16 %v1820
  %v1826 = vunpack.c.h.bf16 %v1820
  %v1827 = vunpack.c.l.bf16 %v1821
  %v1828 = vld [vmem:[#allocation2] sm:$0xff]
  %v1829 = vld [vmem:[#allocation2 + $0x8] sm:$0xff]
  %v1830 = vld [vmem:[#allocation2 + $0x10] sm:$0xff]
  %v1831 = vld [vmem:[#allocation2 + $0x18] sm:$0xff]
  %v1832 = vld [vmem:[#allocation2 + $0x20] sm:$0xff]
  %v1833 = vld [vmem:[#allocation2 + $0x28] sm:$0xff]
  %v1834 = vld [vmem:[#allocation2 + $0x30] sm:$0xff]
  %v1835 = vld [vmem:[#allocation2 + $0x38] sm:$0xff]
  %v1836 = vpack.c.bf16 %v1830, %v1828
  %v1837 = vpack.c.bf16 %v1831, %v1829
  %v1838 = vpack.c.bf16 %v1834, %v1832
  %v1839 = vpack.c.bf16 %v1835, %v1833
  %v1840 = vld [vmem:[%s2] sm:$0xff]
  %v1841 = vld [vmem:[%s2 + $0x8] sm:$0xf]
  %v1842 = vld [vmem:[%s2 + $0xc] sm:$0xff]
  %v1843 = vld [vmem:[%s2 + $0x14] sm:$0xf]
  %v1844 = vld [vmem:[%s2 + $0x18] sm:$0xff]
  %v1845 = vld [vmem:[%s2 + $0x20] sm:$0xf]
  %v1846 = vld [vmem:[%s2 + $0x24] sm:$0xff]
  %v1847 = vld [vmem:[%s2 + $0x2c] sm:$0xf]
  %v1848 = vld [vmem:[%s2 + $0x30] sm:$0xff]
  %v1849 = vld [vmem:[%s2 + $0x38] sm:$0xf]
  %v1850 = vld [vmem:[%s2 + $0x3c] sm:$0xff]
  %v1851 = vld [vmem:[%s2 + $0x44] sm:$0xf]
  %v1852 = vld [vmem:[%s2 + $0x48] sm:$0xff]
  %v1853 = vld [vmem:[%s2 + $0x50] sm:$0xf]
  %v1854 = vld [vmem:[%s2 + $0x54] sm:$0xff]
  %v1855 = vld [vmem:[%s2 + $0x5c] sm:$0xf]
  %v1856 = vld [vmem:[%s2 + $0x60] sm:$0xff]
  %v1857 = vld [vmem:[%s2 + $0x68] sm:$0xf]
  %v1858 = vld [vmem:[%s2 + $0x6c] sm:$0xff]
  %v1859 = vld [vmem:[%s2 + $0x74] sm:$0xf]
  %v1860 = vld [vmem:[%s2 + $0x78] sm:$0xff]
  %v1861 = vld [vmem:[%s2 + $0x80] sm:$0xf]
  %v1862 = vld [vmem:[%s2 + $0x84] sm:$0xff]
  %v1863 = vld [vmem:[%s2 + $0x8c] sm:$0xf]
  %v1864 = vld [vmem:[%s2 + $0x90] sm:$0xff]
  %v1865 = vld [vmem:[%s2 + $0x98] sm:$0xf]
  %v1866 = vld [vmem:[%s2 + $0x9c] sm:$0xff]
  %v1867 = vld [vmem:[%s2 + $0xa4] sm:$0xf]
  %v1868 = vld [vmem:[%s2 + $0xa8] sm:$0xff]
  %v1869 = vld [vmem:[%s2 + $0xb0] sm:$0xf]
  %v1870 = vld [vmem:[%s2 + $0xb4] sm:$0xff]
  %v1871 = vld [vmem:[%s2 + $0xbc] sm:$0xf]
  %v1872 = vld [vmem:[%s2 + $0xc0] sm:$0xff]
  %v1873 = vld [vmem:[%s2 + $0xc8] sm:$0xf]
  %v1874 = vld [vmem:[%s2 + $0xcc] sm:$0xff]
  %v1875 = vld [vmem:[%s2 + $0xd4] sm:$0xf]
  %v1876 = vld [vmem:[%s2 + $0xd8] sm:$0xff]
  %v1877 = vld [vmem:[%s2 + $0xe0] sm:$0xf]
  %v1878 = vld [vmem:[%s2 + $0xe4] sm:$0xff]
  %v1879 = vld [vmem:[%s2 + $0xec] sm:$0xf]
  %v1880 = vld [vmem:[%s2 + $0xf0] sm:$0xff]
  %v1881 = vld [vmem:[%s2 + $0xf8] sm:$0xf]
  %v1882 = vld [vmem:[%s2 + $0xfc] sm:$0xff]
  %v1883 = vld [vmem:[%s2 + $0x104] sm:$0xf]
  %v1884 = vld [vmem:[%s2 + $0x108] sm:$0xff]
  %v1885 = vld [vmem:[%s2 + $0x110] sm:$0xf]
  %v1886 = vld [vmem:[%s2 + $0x114] sm:$0xff]
  %v1887 = vld [vmem:[%s2 + $0x11c] sm:$0xf]
  %v1888 = vld [vmem:[%s2 + $0x120] sm:$0xff]
  %v1889 = vld [vmem:[%s2 + $0x128] sm:$0xf]
  %v1890 = vld [vmem:[%s2 + $0x12c] sm:$0xff]
  %v1891 = vld [vmem:[%s2 + $0x134] sm:$0xf]
  %v1892 = vld [vmem:[%s2 + $0x138] sm:$0xff]
  %v1893 = vld [vmem:[%s2 + $0x140] sm:$0xf]
  %v1894 = vld [vmem:[%s2 + $0x144] sm:$0xff]
  %v1895 = vld [vmem:[%s2 + $0x14c] sm:$0xf]
  %v1896 = vld [vmem:[%s2 + $0x150] sm:$0xff]
  %v1897 = vld [vmem:[%s2 + $0x158] sm:$0xf]
  %v1898 = vld [vmem:[%s2 + $0x15c] sm:$0xff]
  %v1899 = vld [vmem:[%s2 + $0x164] sm:$0xf]
  %v1900 = vld [vmem:[%s2 + $0x168] sm:$0xff]
  %v1901 = vld [vmem:[%s2 + $0x170] sm:$0xf]
  %v1902 = vld [vmem:[%s2 + $0x174] sm:$0xff]
  %v1903 = vld [vmem:[%s2 + $0x17c] sm:$0xf]
  %v1968 = vunpack.c.l.b16 %v1840
  %v1969 = vunpack.c.h.b16 %v1840
  %v1970 = vunpack.c.l.b16 %v1841
  %v1971 = vunpack.c.l.b16 %v1842
  %v1972 = vunpack.c.h.b16 %v1842
  %v1973 = vunpack.c.l.b16 %v1843
  %v1974 = vunpack.c.l.b16 %v1844
  %v1975 = vunpack.c.h.b16 %v1844
  %v1976 = vunpack.c.l.b16 %v1845
  %v1977 = vunpack.c.l.b16 %v1846
  %v1978 = vunpack.c.h.b16 %v1846
  %v1979 = vunpack.c.l.b16 %v1847
  %v1980 = vunpack.c.l.b16 %v1848
  %v1981 = vunpack.c.h.b16 %v1848
  %v1982 = vunpack.c.l.b16 %v1849
  %v1983 = vunpack.c.l.b16 %v1850
  %v1984 = vunpack.c.h.b16 %v1850
  %v1985 = vunpack.c.l.b16 %v1851
  %v1986 = vunpack.c.l.b16 %v1852
  %v1987 = vunpack.c.h.b16 %v1852
  %v1988 = vunpack.c.l.b16 %v1853
  %v1989 = vunpack.c.l.b16 %v1854
  %v1990 = vunpack.c.h.b16 %v1854
  %v1991 = vunpack.c.l.b16 %v1855
  %v1992 = vunpack.c.l.b16 %v1856
  %v1993 = vunpack.c.h.b16 %v1856
  %v1994 = vunpack.c.l.b16 %v1857
  %v1995 = vunpack.c.l.b16 %v1858
  %v1996 = vunpack.c.h.b16 %v1858
  %v1997 = vunpack.c.l.b16 %v1859
  %v1998 = vunpack.c.l.b16 %v1860
  %v1999 = vunpack.c.h.b16 %v1860
  %v2000 = vunpack.c.l.b16 %v1861
  %v2001 = vunpack.c.l.b16 %v1862
  %v2002 = vunpack.c.h.b16 %v1862
  %v2003 = vunpack.c.l.b16 %v1863
  %v2004 = vunpack.c.l.b16 %v1864
  %v2005 = vunpack.c.h.b16 %v1864
  %v2006 = vunpack.c.l.b16 %v1865
  %v2007 = vunpack.c.l.b16 %v1866
  %v2008 = vunpack.c.h.b16 %v1866
  %v2009 = vunpack.c.l.b16 %v1867
  %v2010 = vunpack.c.l.b16 %v1868
  %v2011 = vunpack.c.h.b16 %v1868
  %v2012 = vunpack.c.l.b16 %v1869
  %v2013 = vunpack.c.l.b16 %v1870
  %v2014 = vunpack.c.h.b16 %v1870
  %v2015 = vunpack.c.l.b16 %v1871
  %v2016 = vunpack.c.l.b16 %v1872
  %v2017 = vunpack.c.h.b16 %v1872
  %v2018 = vunpack.c.l.b16 %v1873
  %v2019 = vunpack.c.l.b16 %v1874
  %v2020 = vunpack.c.h.b16 %v1874
  %v2021 = vunpack.c.l.b16 %v1875
  %v2022 = vunpack.c.l.b16 %v1876
  %v2023 = vunpack.c.h.b16 %v1876
  %v2024 = vunpack.c.l.b16 %v1877
  %v2025 = vunpack.c.l.b16 %v1878
  %v2026 = vunpack.c.h.b16 %v1878
  %v2027 = vunpack.c.l.b16 %v1879
  %v2028 = vunpack.c.l.b16 %v1880
  %v2029 = vunpack.c.h.b16 %v1880
  %v2030 = vunpack.c.l.b16 %v1881
  %v2031 = vunpack.c.l.b16 %v1882
  %v2032 = vunpack.c.h.b16 %v1882
  %v2033 = vunpack.c.l.b16 %v1883
  %v2034 = vunpack.c.l.b16 %v1884
  %v2035 = vunpack.c.h.b16 %v1884
  %v2036 = vunpack.c.l.b16 %v1885
  %v2037 = vunpack.c.l.b16 %v1886
  %v2038 = vunpack.c.h.b16 %v1886
  %v2039 = vunpack.c.l.b16 %v1887
  %v2040 = vunpack.c.l.b16 %v1888
  %v2041 = vunpack.c.h.b16 %v1888
  %v2042 = vunpack.c.l.b16 %v1889
  %v2043 = vunpack.c.l.b16 %v1890
  %v2044 = vunpack.c.h.b16 %v1890
  %v2045 = vunpack.c.l.b16 %v1891
  %v2046 = vunpack.c.l.b16 %v1892
  %v2047 = vunpack.c.h.b16 %v1892
  %v2048 = vunpack.c.l.b16 %v1893
  %v2049 = vunpack.c.l.b16 %v1894
  %v2050 = vunpack.c.h.b16 %v1894
  %v2051 = vunpack.c.l.b16 %v1895
  %v2052 = vunpack.c.l.b16 %v1896
  %v2053 = vunpack.c.h.b16 %v1896
  %v2054 = vunpack.c.l.b16 %v1897
  %v2055 = vunpack.c.l.b16 %v1898
  %v2056 = vunpack.c.h.b16 %v1898
  %v2057 = vunpack.c.l.b16 %v1899
  %v2058 = vunpack.c.l.b16 %v1900
  %v2059 = vunpack.c.h.b16 %v1900
  %v2060 = vunpack.c.l.b16 %v1901
  %v2061 = vunpack.c.l.b16 %v1902
  %v2062 = vunpack.c.h.b16 %v1902
  %v2063 = vunpack.c.l.b16 %v1903
  %v2064 = vpack.c.b16 %v1971, %v1968
  %v2065 = vpack.c.b16 %v1972, %v1969
  %v2066 = vpack.c.b16 %v1973, %v1970
  %v2067 = vpack.c.b16 %v1977, %v1974
  %v2068 = vpack.c.b16 %v1978, %v1975
  %v2069 = vpack.c.b16 %v1979, %v1976
  %v2070 = vpack.c.b16 %v1983, %v1980
  %v2071 = vpack.c.b16 %v1984, %v1981
  %v2072 = vpack.c.b16 %v1985, %v1982
  %v2073 = vpack.c.b16 %v1989, %v1986
  %v2074 = vpack.c.b16 %v1990, %v1987
  %v2075 = vpack.c.b16 %v1991, %v1988
  %v2076 = vpack.c.b16 %v1995, %v1992
  %v2077 = vpack.c.b16 %v1996, %v1993
  %v2078 = vpack.c.b16 %v1997, %v1994
  %v2079 = vpack.c.b16 %v2001, %v1998
  %v2080 = vpack.c.b16 %v2002, %v1999
  %v2081 = vpack.c.b16 %v2003, %v2000
  %v2082 = vpack.c.b16 %v2007, %v2004
  %v2083 = vpack.c.b16 %v2008, %v2005
  %v2084 = vpack.c.b16 %v2009, %v2006
  %v2085 = vpack.c.b16 %v2013, %v2010
  %v2086 = vpack.c.b16 %v2014, %v2011
  %v2087 = vpack.c.b16 %v2015, %v2012
  %v2088 = vpack.c.b16 %v2019, %v2016
  %v2089 = vpack.c.b16 %v2020, %v2017
  %v2090 = vpack.c.b16 %v2021, %v2018
  %v2091 = vpack.c.b16 %v2025, %v2022
  %v2092 = vpack.c.b16 %v2026, %v2023
  %v2093 = vpack.c.b16 %v2027, %v2024
  %v2094 = vpack.c.b16 %v2031, %v2028
  %v2095 = vpack.c.b16 %v2032, %v2029
  %v2096 = vpack.c.b16 %v2033, %v2030
  %v2097 = vpack.c.b16 %v2037, %v2034
  %v2098 = vpack.c.b16 %v2038, %v2035
  %v2099 = vpack.c.b16 %v2039, %v2036
  %v2100 = vpack.c.b16 %v2043, %v2040
  %v2101 = vpack.c.b16 %v2044, %v2041
  %v2102 = vpack.c.b16 %v2045, %v2042
  %v2103 = vpack.c.b16 %v2049, %v2046
  %v2104 = vpack.c.b16 %v2050, %v2047
  %v2105 = vpack.c.b16 %v2051, %v2048
  %v2106 = vpack.c.b16 %v2055, %v2052
  %v2107 = vpack.c.b16 %v2056, %v2053
  %v2108 = vpack.c.b16 %v2057, %v2054
  %v2109 = vpack.c.b16 %v2061, %v2058
  %v2110 = vpack.c.b16 %v2062, %v2059
  %v2111 = vpack.c.b16 %v2063, %v2060
  %2160 = vmatprep.subr.bf16.mxu0 %v2065
  %2161 = vmatpush1.bf16.msra.mxu0 %v2064
  %2162 = vmatprep.subr.bf16.mxu0 %v2068
  %2163 = vmatpush1.bf16.msra.mxu0 %v2067
  %2164 = vmatprep.subr.bf16.mxu0 %v2071
  %2165 = vmatpush1.bf16.msra.mxu0 %v2070
  %2166 = vmatprep.subr.bf16.mxu0 %v2074
  %2167 = vmatpush1.bf16.msra.mxu0 %v2073
  %2168 = vmatprep.subr.bf16.mxu0 %v2077
  %2169 = vmatpush1.bf16.msra.mxu0 %v2076
  %2170 = vmatprep.subr.bf16.mxu0 %v2080
  %2171 = vmatpush1.bf16.msra.mxu0 %v2079
  %2172 = vmatprep.subr.bf16.mxu0 %v2083
  %2173 = vmatpush1.bf16.msra.mxu0 %v2082
  %2174 = vmatprep.subr.bf16.mxu0 %v2086
  %2175 = vmatpush1.bf16.msra.mxu0 %v2085
  %2176 = vmatprep.subr.bf16.mxu0 %v2089
  %2177 = vmatpush1.bf16.msra.mxu0 %v2088
  %2178 = vmatprep.subr.bf16.mxu0 %v2092
  %2179 = vmatpush1.bf16.msra.mxu0 %v2091
  %2180 = vmatprep.subr.bf16.mxu0 %v2095
  %2181 = vmatpush1.bf16.msra.mxu0 %v2094
  %2182 = vmatprep.subr.bf16.mxu0 %v2098
  %2183 = vmatpush1.bf16.msra.mxu0 %v2097
  %2184 = vmatprep.subr.bf16.mxu0 %v2101
  %2185 = vmatpush1.bf16.msra.mxu0 %v2100
  %2186 = vmatprep.subr.bf16.mxu0 %v2104
  %2187 = vmatpush1.bf16.msra.mxu0 %v2103
  %2188 = vmatprep.subr.bf16.mxu0 %v2107
  %2189 = vmatpush1.bf16.msra.mxu0 %v2106
  %2190 = vmatprep.subr.bf16.mxu0 %v2110
  %2191 = vmatpush1.bf16.msra.mxu0 %v2109
  %2192 = vmatprep.mubr.bf16.mxu0 %v1837
  %2193 = vmatmul.mubr.bf16.gmra.mrb[0].mxu0 %v1836
  %v2194 = vpop.f32.mrb[0].mxu0
  %v2195 = vadd.f32 0.0, %v2194
  %v2196 = vpop.f32.mrb[0].mxu0
  %v2197 = vadd.f32 0.0, %v2196
  %v2198 = vpop.f32.mrb[0].mxu0
  %v2199 = vadd.f32 0.0, %v2198
  %v2200 = vpop.f32.mrb[0].mxu0
  %v2201 = vadd.f32 0.0, %v2200
  %2202 = vmatprep.mubr.bf16.mxu0 %v1839
  %2203 = vmatmul.mubr.bf16.gmra.mrb[0].mxu0 %v1838
  %v2204 = vpop.f32.mrb[0].mxu0
  %v2205 = vadd.f32 0.0, %v2204
  %v2206 = vpop.f32.mrb[0].mxu0
  %v2207 = vadd.f32 0.0, %v2206
  %v2208 = vpop.f32.mrb[0].mxu0
  %v2209 = vadd.f32 0.0, %v2208
  %v2210 = vpop.f32.mrb[0].mxu0
  %v2211 = vadd.f32 0.0, %v2210
  %2212 = vdwg.mxu0
  %2213 = vmatprep.subr.bf16.mxu0 0
  %2214 = vmatpush1.bf16.msra.mxu0 %v2066
  %2215 = vmatprep.subr.bf16.mxu0 0
  %2216 = vmatpush1.bf16.msra.mxu0 %v2069
  %2217 = vmatprep.subr.bf16.mxu0 0
  %2218 = vmatpush1.bf16.msra.mxu0 %v2072
  %2219 = vmatprep.subr.bf16.mxu0 0
  %2220 = vmatpush1.bf16.msra.mxu0 %v2075
  %2221 = vmatprep.subr.bf16.mxu0 0
  %2222 = vmatpush1.bf16.msra.mxu0 %v2078
  %2223 = vmatprep.subr.bf16.mxu0 0
  %2224 = vmatpush1.bf16.msra.mxu0 %v2081
  %2225 = vmatprep.subr.bf16.mxu0 0
  %2226 = vmatpush1.bf16.msra.mxu0 %v2084
  %2227 = vmatprep.subr.bf16.mxu0 0
  %2228 = vmatpush1.bf16.msra.mxu0 %v2087
  %2229 = vmatprep.subr.bf16.mxu0 0
  %2230 = vmatpush1.bf16.msra.mxu0 %v2090
  %2231 = vmatprep.subr.bf16.mxu0 0
  %2232 = vmatpush1.bf16.msra.mxu0 %v2093
  %2233 = vmatprep.subr.bf16.mxu0 0
  %2234 = vmatpush1.bf16.msra.mxu0 %v2096
  %2235 = vmatprep.subr.bf16.mxu0 0
  %2236 = vmatpush1.bf16.msra.mxu0 %v2099
  %2237 = vmatprep.subr.bf16.mxu0 0
  %2238 = vmatpush1.bf16.msra.mxu0 %v2102
  %2239 = vmatprep.subr.bf16.mxu0 0
  %2240 = vmatpush1.bf16.msra.mxu0 %v2105
  %2241 = vmatprep.subr.bf16.mxu0 0
  %2242 = vmatpush1.bf16.msra.mxu0 %v2108
  %2243 = vmatprep.subr.bf16.mxu0 0
  %2244 = vmatpush1.bf16.msra.mxu0 %v2111
  %2245 = vmatprep.mubr.bf16.mxu0 %v1837
  %2246 = vmatmul.mubr.bf16.gmra.mrb[0].mxu0 %v1836
  %v2247 = vpop.f32.mrb[0].mxu0
  %v2248 = vadd.f32 0.0, %v2247
  %v2249 = vpop.f32.mrb[0].mxu0
  %v2250 = vpop.f32.mrb[0].mxu0
  %v2251 = vadd.f32 0.0, %v2250
  %v2252 = vpop.f32.mrb[0].mxu0
  %2253 = vmatprep.mubr.bf16.mxu0 %v1839
  %2254 = vmatmul.mubr.bf16.gmra.mrb[0].mxu0 %v1838
  %v2255 = vpop.f32.mrb[0].mxu0
  %v2256 = vadd.f32 0.0, %v2255
  %v2257 = vpop.f32.mrb[0].mxu0
  %v2258 = vpop.f32.mrb[0].mxu0
  %v2259 = vadd.f32 0.0, %v2258
  %v2260 = vpop.f32.mrb[0].mxu0
  %2261 = vdwg.mxu0
  %v2262 = vadd.f32 %v1811, %v2195
  %v2263 = vadd.f32 %v1812, %v2197
  %v2264 = vadd.f32 %v1813, %v2248
  %v2265 = vadd.f32 %v1814, %v2199
  %v2266 = vadd.f32 %v1815, %v2201
  %v2267 = vadd.f32 %v1816, %v2251
  %v2268 = vadd.f32 %v1822, %v2205
  %v2269 = vadd.f32 %v1823, %v2207
  %v2270 = vadd.f32 %v1824, %v2256
  %v2271 = vadd.f32 %v1825, %v2209
  %v2272 = vadd.f32 %v1826, %v2211
  %v2273 = vadd.f32 %v1827, %v2259
  %v2274 = vxor.u32 %v2262, 2147483648
  %v2275 = vxor.u32 %v2265, 2147483648
  %v2276 = vxor.u32 %v2268, 2147483648
  %v2277 = vxor.u32 %v2271, 2147483648
  %v2278 = vmul.f32 %v2274, 1.442695
  %v2279 = vpow.pop %v2278
  %v2280 = vmul.f32 %v2275, 1.442695
  %v2281 = vpow.pop %v2280
  %v2282 = vmul.f32 %v2276, 1.442695
  %v2283 = vpow.pop %v2282
  %v2284 = vmul.f32 %v2277, 1.442695
  %v2285 = vpow.pop %v2284
  %v2286 = vadd.f32 %v2279, 1.0
  %v2287 = vadd.f32 %v2281, 1.0
  %v2288 = vadd.f32 %v2283, 1.0
  %v2289 = vadd.f32 %v2285, 1.0
  %v2290 = vrcp.pop %v2286
  %v2291 = vmul.f32 1.0, %v2290
  %v2292 = vrcp.pop %v2287
  %v2293 = vmul.f32 1.0, %v2292
  %v2294 = vrcp.pop %v2288
  %v2295 = vmul.f32 1.0, %v2294
  %v2296 = vrcp.pop %v2289
  %v2297 = vmul.f32 1.0, %v2296
  %v2298 = vxor.u32 %v2263, 2147483648
  %v2299 = vxor.u32 %v2266, 2147483648
  %v2300 = vxor.u32 %v2269, 2147483648
  %v2301 = vxor.u32 %v2272, 2147483648
  %v2302 = vmul.f32 %v2298, 1.442695
  %v2303 = vpow.pop %v2302
  %v2304 = vmul.f32 %v2299, 1.442695
  %v2305 = vpow.pop %v2304
  %v2306 = vmul.f32 %v2300, 1.442695
  %v2307 = vpow.pop %v2306
  %v2308 = vmul.f32 %v2301, 1.442695
  %v2309 = vpow.pop %v2308
  %v2310 = vadd.f32 %v2303, 1.0
  %v2311 = vadd.f32 %v2305, 1.0
  %v2312 = vadd.f32 %v2307, 1.0
  %v2313 = vadd.f32 %v2309, 1.0
  %v2314 = vrcp.pop %v2310
  %v2315 = vmul.f32 1.0, %v2314
  %v2316 = vrcp.pop %v2311
  %v2317 = vmul.f32 1.0, %v2316
  %v2318 = vrcp.pop %v2312
  %v2319 = vmul.f32 1.0, %v2318
  %v2320 = vrcp.pop %v2313
  %v2321 = vmul.f32 1.0, %v2320
  %v2322 = vtanh.pop %v2264
  %v2323 = vtanh.pop %v2267
  %v2324 = vtanh.pop %v2270
  %v2325 = vtanh.pop %v2273
  %v2326 = vsub.f32 1.0, %v2291
  %v2327 = vsub.f32 1.0, %v2293
  %v2328 = vsub.f32 1.0, %v2295
  %v2329 = vsub.f32 1.0, %v2297
  %v2330 = vld [vmem:[#allocation3] sm:$0xff]
  %v2331 = vld [vmem:[#allocation3 + $0x8] sm:$0xff]
  %v2332 = vld [vmem:[#allocation3 + $0x10] sm:$0xff]
  %v2333 = vld [vmem:[#allocation3 + $0x18] sm:$0xff]
  %v2334 = vmul.f32 %v2326, %v2330
  %v2335 = vmul.f32 %v2327, %v2331
  %v2336 = vmul.f32 %v2328, %v2332
  %v2337 = vmul.f32 %v2329, %v2333
  %v2338 = vmul.f32 %v2291, %v2322
  %v2339 = vmul.f32 %v2293, %v2323
  %v2340 = vmul.f32 %v2295, %v2324
  %v2341 = vmul.f32 %v2297, %v2325
  %v2342 = vadd.f32 %v2334, %v2338
  %v2343 = vadd.f32 %v2335, %v2339
  %v2344 = vadd.f32 %v2336, %v2340
  %v2345 = vadd.f32 %v2337, %v2341
  %v2346 = vtanh.pop %v2342
  %v2347 = vtanh.pop %v2343
  %v2348 = vtanh.pop %v2344
  %v2349 = vtanh.pop %v2345
  %v2350 = vmul.f32 %v2315, %v2346
  %v2351 = vmul.f32 %v2317, %v2347
  %v2352 = vmul.f32 %v2319, %v2348
  %v2353 = vmul.f32 %v2321, %v2349
  %2354 = vst [vmem:[#allocation3] sm:$0xff] %v2342
  %2355 = vst [vmem:[#allocation3 + $0x8] sm:$0xff] %v2343
  %2356 = vst [vmem:[#allocation3 + $0x10] sm:$0xff] %v2344
  %2357 = vst [vmem:[#allocation3 + $0x18] sm:$0xff] %v2345
  %2358 = vst [vmem:[#allocation2] sm:$0xff] %v2350
  %2359 = vst [vmem:[#allocation2 + $0x10] sm:$0xff] %v2351
  %2360 = vst [vmem:[#allocation2 + $0x28] sm:$0xff] %v2352
  %2361 = vst [vmem:[#allocation2 + $0x38] sm:$0xff] %v2353
  %v2362 = vpack.c.bf16 %v2351, %v2350
  %v2363 = vpack.c.bf16 %v2353, %v2352
  %v2365 = vunpack.c.l.b16 %v2362
  %v2366 = vunpack.c.h.b16 %v2362
  %v2367 = vpack.c.b16 %v2365, %v2365
  %v2368 = vpack.c.b16 %v2366, %v2366
  %s2371 = scalar_lea.vmem %s3, 24
  %2372 = vst [vmem:[%s2371] sm:$0xf] %v2367
  %2373 = vst [vmem:[%s2371 + $0x4] sm:$0xf] %v2368
  %v2375 = vunpack.c.l.b16 %v2363
  %v2376 = vunpack.c.h.b16 %v2363
  %v2377 = vpack.c.b16 %v2375, %v2375
  %v2378 = vpack.c.b16 %v2376, %v2376
  %s2381 = scalar_lea.vmem %s54, 32
  %2382 = vst [vmem:[%s2381] sm:$0xf] %v2377
  %2383 = vst [vmem:[%s2381 + $0x4] sm:$0xf] %v2378
  %s2384 = scalar_lea.vmem %s0, 96
  %v2385 = vld [vmem:[%s2384] sm:$0xff]
  %v2386 = vld [vmem:[%s2384 + $0x8] sm:$0xf]
  %v2387 = vld [vmem:[%s2384 + $0xc] sm:$0xff]
  %v2388 = vld [vmem:[%s2384 + $0x14] sm:$0xf]
  %v2389 = vunpack.c.l.bf16 %v2385
  %v2390 = vunpack.c.h.bf16 %v2385
  %v2391 = vunpack.c.l.bf16 %v2386
  %v2392 = vunpack.c.l.bf16 %v2387
  %v2393 = vunpack.c.h.bf16 %v2387
  %v2394 = vunpack.c.l.bf16 %v2388
  %s2395 = scalar_lea.vmem %s45, 72
  %v2396 = vld [vmem:[%s2395] sm:$0xff]
  %v2397 = vld [vmem:[%s2395 + $0x8] sm:$0xf]
  %v2398 = vld [vmem:[%s2395 + $0xc] sm:$0xff]
  %v2399 = vld [vmem:[%s2395 + $0x14] sm:$0xf]
  %v2400 = vunpack.c.l.bf16 %v2396
  %v2401 = vunpack.c.h.bf16 %v2396
  %v2402 = vunpack.c.l.bf16 %v2397
  %v2403 = vunpack.c.l.bf16 %v2398
  %v2404 = vunpack.c.h.bf16 %v2398
  %v2405 = vunpack.c.l.bf16 %v2399
  %v2406 = vld [vmem:[#allocation2] sm:$0xff]
  %v2407 = vld [vmem:[#allocation2 + $0x8] sm:$0xff]
  %v2408 = vld [vmem:[#allocation2 + $0x10] sm:$0xff]
  %v2409 = vld [vmem:[#allocation2 + $0x18] sm:$0xff]
  %v2410 = vld [vmem:[#allocation2 + $0x20] sm:$0xff]
  %v2411 = vld [vmem:[#allocation2 + $0x28] sm:$0xff]
  %v2412 = vld [vmem:[#allocation2 + $0x30] sm:$0xff]
  %v2413 = vld [vmem:[#allocation2 + $0x38] sm:$0xff]
  %v2414 = vpack.c.bf16 %v2408, %v2406
  %v2415 = vpack.c.bf16 %v2409, %v2407
  %v2416 = vpack.c.bf16 %v2412, %v2410
  %v2417 = vpack.c.bf16 %v2413, %v2411
  %v2418 = vld [vmem:[%s2] sm:$0xff]
  %v2419 = vld [vmem:[%s2 + $0x8] sm:$0xf]
  %v2420 = vld [vmem:[%s2 + $0xc] sm:$0xff]
  %v2421 = vld [vmem:[%s2 + $0x14] sm:$0xf]
  %v2422 = vld [vmem:[%s2 + $0x18] sm:$0xff]
  %v2423 = vld [vmem:[%s2 + $0x20] sm:$0xf]
  %v2424 = vld [vmem:[%s2 + $0x24] sm:$0xff]
  %v2425 = vld [vmem:[%s2 + $0x2c] sm:$0xf]
  %v2426 = vld [vmem:[%s2 + $0x30] sm:$0xff]
  %v2427 = vld [vmem:[%s2 + $0x38] sm:$0xf]
  %v2428 = vld [vmem:[%s2 + $0x3c] sm:$0xff]
  %v2429 = vld [vmem:[%s2 + $0x44] sm:$0xf]
  %v2430 = vld [vmem:[%s2 + $0x48] sm:$0xff]
  %v2431 = vld [vmem:[%s2 + $0x50] sm:$0xf]
  %v2432 = vld [vmem:[%s2 + $0x54] sm:$0xff]
  %v2433 = vld [vmem:[%s2 + $0x5c] sm:$0xf]
  %v2434 = vld [vmem:[%s2 + $0x60] sm:$0xff]
  %v2435 = vld [vmem:[%s2 + $0x68] sm:$0xf]
  %v2436 = vld [vmem:[%s2 + $0x6c] sm:$0xff]
  %v2437 = vld [vmem:[%s2 + $0x74] sm:$0xf]
  %v2438 = vld [vmem:[%s2 + $0x78] sm:$0xff]
  %v2439 = vld [vmem:[%s2 + $0x80] sm:$0xf]
  %v2440 = vld [vmem:[%s2 + $0x84] sm:$0xff]
  %v2441 = vld [vmem:[%s2 + $0x8c] sm:$0xf]
  %v2442 = vld [vmem:[%s2 + $0x90] sm:$0xff]
  %v2443 = vld [vmem:[%s2 + $0x98] sm:$0xf]
  %v2444 = vld [vmem:[%s2 + $0x9c] sm:$0xff]
  %v2445 = vld [vmem:[%s2 + $0xa4] sm:$0xf]
  %v2446 = vld [vmem:[%s2 + $0xa8] sm:$0xff]
  %v2447 = vld [vmem:[%s2 + $0xb0] sm:$0xf]
  %v2448 = vld [vmem:[%s2 + $0xb4] sm:$0xff]
  %v2449 = vld [vmem:[%s2 + $0xbc] sm:$0xf]
  %v2450 = vld [vmem:[%s2 + $0xc0] sm:$0xff]
  %v2451 = vld [vmem:[%s2 + $0xc8] sm:$0xf]
  %v2452 = vld [vmem:[%s2 + $0xcc] sm:$0xff]
  %v2453 = vld [vmem:[%s2 + $0xd4] sm:$0xf]
  %v2454 = vld [vmem:[%s2 + $0xd8] sm:$0xff]
  %v2455 = vld [vmem:[%s2 + $0xe0] sm:$0xf]
  %v2456 = vld [vmem:[%s2 + $0xe4] sm:$0xff]
  %v2457 = vld [vmem:[%s2 + $0xec] sm:$0xf]
  %v2458 = vld [vmem:[%s2 + $0xf0] sm:$0xff]
  %v2459 = vld [vmem:[%s2 + $0xf8] sm:$0xf]
  %v2460 = vld [vmem:[%s2 + $0xfc] sm:$0xff]
  %v2461 = vld [vmem:[%s2 + $0x104] sm:$0xf]
  %v2462 = vld [vmem:[%s2 + $0x108] sm:$0xff]
  %v2463 = vld [vmem:[%s2 + $0x110] sm:$0xf]
  %v2464 = vld [vmem:[%s2 + $0x114] sm:$0xff]
  %v2465 = vld [vmem:[%s2 + $0x11c] sm:$0xf]
  %v2466 = vld [vmem:[%s2 + $0x120] sm:$0xff]
  %v2467 = vld [vmem:[%s2 + $0x128] sm:$0xf]
  %v2468 = vld [vmem:[%s2 + $0x12c] sm:$0xff]
  %v2469 = vld [vmem:[%s2 + $0x134] sm:$0xf]
  %v2470 = vld [vmem:[%s2 + $0x138] sm:$0xff]
  %v2471 = vld [vmem:[%s2 + $0x140] sm:$0xf]
  %v2472 = vld [vmem:[%s2 + $0x144] sm:$0xff]
  %v2473 = vld [vmem:[%s2 + $0x14c] sm:$0xf]
  %v2474 = vld [vmem:[%s2 + $0x150] sm:$0xff]
  %v2475 = vld [vmem:[%s2 + $0x158] sm:$0xf]
  %v2476 = vld [vmem:[%s2 + $0x15c] sm:$0xff]
  %v2477 = vld [vmem:[%s2 + $0x164] sm:$0xf]
  %v2478 = vld [vmem:[%s2 + $0x168] sm:$0xff]
  %v2479 = vld [vmem:[%s2 + $0x170] sm:$0xf]
  %v2480 = vld [vmem:[%s2 + $0x174] sm:$0xff]
  %v2481 = vld [vmem:[%s2 + $0x17c] sm:$0xf]
  %v2546 = vunpack.c.l.b16 %v2418
  %v2547 = vunpack.c.h.b16 %v2418
  %v2548 = vunpack.c.l.b16 %v2419
  %v2549 = vunpack.c.l.b16 %v2420
  %v2550 = vunpack.c.h.b16 %v2420
  %v2551 = vunpack.c.l.b16 %v2421
  %v2552 = vunpack.c.l.b16 %v2422
  %v2553 = vunpack.c.h.b16 %v2422
  %v2554 = vunpack.c.l.b16 %v2423
  %v2555 = vunpack.c.l.b16 %v2424
  %v2556 = vunpack.c.h.b16 %v2424
  %v2557 = vunpack.c.l.b16 %v2425
  %v2558 = vunpack.c.l.b16 %v2426
  %v2559 = vunpack.c.h.b16 %v2426
  %v2560 = vunpack.c.l.b16 %v2427
  %v2561 = vunpack.c.l.b16 %v2428
  %v2562 = vunpack.c.h.b16 %v2428
  %v2563 = vunpack.c.l.b16 %v2429
  %v2564 = vunpack.c.l.b16 %v2430
  %v2565 = vunpack.c.h.b16 %v2430
  %v2566 = vunpack.c.l.b16 %v2431
  %v2567 = vunpack.c.l.b16 %v2432
  %v2568 = vunpack.c.h.b16 %v2432
  %v2569 = vunpack.c.l.b16 %v2433
  %v2570 = vunpack.c.l.b16 %v2434
  %v2571 = vunpack.c.h.b16 %v2434
  %v2572 = vunpack.c.l.b16 %v2435
  %v2573 = vunpack.c.l.b16 %v2436
  %v2574 = vunpack.c.h.b16 %v2436
  %v2575 = vunpack.c.l.b16 %v2437
  %v2576 = vunpack.c.l.b16 %v2438
  %v2577 = vunpack.c.h.b16 %v2438
  %v2578 = vunpack.c.l.b16 %v2439
  %v2579 = vunpack.c.l.b16 %v2440
  %v2580 = vunpack.c.h.b16 %v2440
  %v2581 = vunpack.c.l.b16 %v2441
  %v2582 = vunpack.c.l.b16 %v2442
  %v2583 = vunpack.c.h.b16 %v2442
  %v2584 = vunpack.c.l.b16 %v2443
  %v2585 = vunpack.c.l.b16 %v2444
  %v2586 = vunpack.c.h.b16 %v2444
  %v2587 = vunpack.c.l.b16 %v2445
  %v2588 = vunpack.c.l.b16 %v2446
  %v2589 = vunpack.c.h.b16 %v2446
  %v2590 = vunpack.c.l.b16 %v2447
  %v2591 = vunpack.c.l.b16 %v2448
  %v2592 = vunpack.c.h.b16 %v2448
  %v2593 = vunpack.c.l.b16 %v2449
  %v2594 = vunpack.c.l.b16 %v2450
  %v2595 = vunpack.c.h.b16 %v2450
  %v2596 = vunpack.c.l.b16 %v2451
  %v2597 = vunpack.c.l.b16 %v2452
  %v2598 = vunpack.c.h.b16 %v2452
  %v2599 = vunpack.c.l.b16 %v2453
  %v2600 = vunpack.c.l.b16 %v2454
  %v2601 = vunpack.c.h.b16 %v2454
  %v2602 = vunpack.c.l.b16 %v2455
  %v2603 = vunpack.c.l.b16 %v2456
  %v2604 = vunpack.c.h.b16 %v2456
  %v2605 = vunpack.c.l.b16 %v2457
  %v2606 = vunpack.c.l.b16 %v2458
  %v2607 = vunpack.c.h.b16 %v2458
  %v2608 = vunpack.c.l.b16 %v2459
  %v2609 = vunpack.c.l.b16 %v2460
  %v2610 = vunpack.c.h.b16 %v2460
  %v2611 = vunpack.c.l.b16 %v2461
  %v2612 = vunpack.c.l.b16 %v2462
  %v2613 = vunpack.c.h.b16 %v2462
  %v2614 = vunpack.c.l.b16 %v2463
  %v2615 = vunpack.c.l.b16 %v2464
  %v2616 = vunpack.c.h.b16 %v2464
  %v2617 = vunpack.c.l.b16 %v2465
  %v2618 = vunpack.c.l.b16 %v2466
  %v2619 = vunpack.c.h.b16 %v2466
  %v2620 = vunpack.c.l.b16 %v2467
  %v2621 = vunpack.c.l.b16 %v2468
  %v2622 = vunpack.c.h.b16 %v2468
  %v2623 = vunpack.c.l.b16 %v2469
  %v2624 = vunpack.c.l.b16 %v2470
  %v2625 = vunpack.c.h.b16 %v2470
  %v2626 = vunpack.c.l.b16 %v2471
  %v2627 = vunpack.c.l.b16 %v2472
  %v2628 = vunpack.c.h.b16 %v2472
  %v2629 = vunpack.c.l.b16 %v2473
  %v2630 = vunpack.c.l.b16 %v2474
  %v2631 = vunpack.c.h.b16 %v2474
  %v2632 = vunpack.c.l.b16 %v2475
  %v2633 = vunpack.c.l.b16 %v2476
  %v2634 = vunpack.c.h.b16 %v2476
  %v2635 = vunpack.c.l.b16 %v2477
  %v2636 = vunpack.c.l.b16 %v2478
  %v2637 = vunpack.c.h.b16 %v2478
  %v2638 = vunpack.c.l.b16 %v2479
  %v2639 = vunpack.c.l.b16 %v2480
  %v2640 = vunpack.c.h.b16 %v2480
  %v2641 = vunpack.c.l.b16 %v2481
  %v2642 = vpack.c.b16 %v2549, %v2546
  %v2643 = vpack.c.b16 %v2550, %v2547
  %v2644 = vpack.c.b16 %v2551, %v2548
  %v2645 = vpack.c.b16 %v2555, %v2552
  %v2646 = vpack.c.b16 %v2556, %v2553
  %v2647 = vpack.c.b16 %v2557, %v2554
  %v2648 = vpack.c.b16 %v2561, %v2558
  %v2649 = vpack.c.b16 %v2562, %v2559
  %v2650 = vpack.c.b16 %v2563, %v2560
  %v2651 = vpack.c.b16 %v2567, %v2564
  %v2652 = vpack.c.b16 %v2568, %v2565
  %v2653 = vpack.c.b16 %v2569, %v2566
  %v2654 = vpack.c.b16 %v2573, %v2570
  %v2655 = vpack.c.b16 %v2574, %v2571
  %v2656 = vpack.c.b16 %v2575, %v2572
  %v2657 = vpack.c.b16 %v2579, %v2576
  %v2658 = vpack.c.b16 %v2580, %v2577
  %v2659 = vpack.c.b16 %v2581, %v2578
  %v2660 = vpack.c.b16 %v2585, %v2582
  %v2661 = vpack.c.b16 %v2586, %v2583
  %v2662 = vpack.c.b16 %v2587, %v2584
  %v2663 = vpack.c.b16 %v2591, %v2588
  %v2664 = vpack.c.b16 %v2592, %v2589
  %v2665 = vpack.c.b16 %v2593, %v2590
  %v2666 = vpack.c.b16 %v2597, %v2594
  %v2667 = vpack.c.b16 %v2598, %v2595
  %v2668 = vpack.c.b16 %v2599, %v2596
  %v2669 = vpack.c.b16 %v2603, %v2600
  %v2670 = vpack.c.b16 %v2604, %v2601
  %v2671 = vpack.c.b16 %v2605, %v2602
  %v2672 = vpack.c.b16 %v2609, %v2606
  %v2673 = vpack.c.b16 %v2610, %v2607
  %v2674 = vpack.c.b16 %v2611, %v2608
  %v2675 = vpack.c.b16 %v2615, %v2612
  %v2676 = vpack.c.b16 %v2616, %v2613
  %v2677 = vpack.c.b16 %v2617, %v2614
  %v2678 = vpack.c.b16 %v2621, %v2618
  %v2679 = vpack.c.b16 %v2622, %v2619
  %v2680 = vpack.c.b16 %v2623, %v2620
  %v2681 = vpack.c.b16 %v2627, %v2624
  %v2682 = vpack.c.b16 %v2628, %v2625
  %v2683 = vpack.c.b16 %v2629, %v2626
  %v2684 = vpack.c.b16 %v2633, %v2630
  %v2685 = vpack.c.b16 %v2634, %v2631
  %v2686 = vpack.c.b16 %v2635, %v2632
  %v2687 = vpack.c.b16 %v2639, %v2636
  %v2688 = vpack.c.b16 %v2640, %v2637
  %v2689 = vpack.c.b16 %v2641, %v2638
  %2738 = vmatprep.subr.bf16.mxu0 %v2643
  %2739 = vmatpush1.bf16.msra.mxu0 %v2642
  %2740 = vmatprep.subr.bf16.mxu0 %v2646
  %2741 = vmatpush1.bf16.msra.mxu0 %v2645
  %2742 = vmatprep.subr.bf16.mxu0 %v2649
  %2743 = vmatpush1.bf16.msra.mxu0 %v2648
  %2744 = vmatprep.subr.bf16.mxu0 %v2652
  %2745 = vmatpush1.bf16.msra.mxu0 %v2651
  %2746 = vmatprep.subr.bf16.mxu0 %v2655
  %2747 = vmatpush1.bf16.msra.mxu0 %v2654
  %2748 = vmatprep.subr.bf16.mxu0 %v2658
  %2749 = vmatpush1.bf16.msra.mxu0 %v2657
  %2750 = vmatprep.subr.bf16.mxu0 %v2661
  %2751 = vmatpush1.bf16.msra.mxu0 %v2660
  %2752 = vmatprep.subr.bf16.mxu0 %v2664
  %2753 = vmatpush1.bf16.msra.mxu0 %v2663
  %2754 = vmatprep.subr.bf16.mxu0 %v2667
  %2755 = vmatpush1.bf16.msra.mxu0 %v2666
  %2756 = vmatprep.subr.bf16.mxu0 %v2670
  %2757 = vmatpush1.bf16.msra.mxu0 %v2669
  %2758 = vmatprep.subr.bf16.mxu0 %v2673
  %2759 = vmatpush1.bf16.msra.mxu0 %v2672
  %2760 = vmatprep.subr.bf16.mxu0 %v2676
  %2761 = vmatpush1.bf16.msra.mxu0 %v2675
  %2762 = vmatprep.subr.bf16.mxu0 %v2679
  %2763 = vmatpush1.bf16.msra.mxu0 %v2678
  %2764 = vmatprep.subr.bf16.mxu0 %v2682
  %2765 = vmatpush1.bf16.msra.mxu0 %v2681
  %2766 = vmatprep.subr.bf16.mxu0 %v2685
  %2767 = vmatpush1.bf16.msra.mxu0 %v2684
  %2768 = vmatprep.subr.bf16.mxu0 %v2688
  %2769 = vmatpush1.bf16.msra.mxu0 %v2687
  %2770 = vmatprep.mubr.bf16.mxu0 %v2415
  %2771 = vmatmul.mubr.bf16.gmra.mrb[0].mxu0 %v2414
  %v2772 = vpop.f32.mrb[0].mxu0
  %v2773 = vadd.f32 0.0, %v2772
  %v2774 = vpop.f32.mrb[0].mxu0
  %v2775 = vadd.f32 0.0, %v2774
  %v2776 = vpop.f32.mrb[0].mxu0
  %v2777 = vadd.f32 0.0, %v2776
  %v2778 = vpop.f32.mrb[0].mxu0
  %v2779 = vadd.f32 0.0, %v2778
  %2780 = vmatprep.mubr.bf16.mxu0 %v2417
  %2781 = vmatmul.mubr.bf16.gmra.mrb[0].mxu0 %v2416
  %v2782 = vpop.f32.mrb[0].mxu0
  %v2783 = vadd.f32 0.0, %v2782
  %v2784 = vpop.f32.mrb[0].mxu0
  %v2785 = vadd.f32 0.0, %v2784
  %v2786 = vpop.f32.mrb[0].mxu0
  %v2787 = vadd.f32 0.0, %v2786
  %v2788 = vpop.f32.mrb[0].mxu0
  %v2789 = vadd.f32 0.0, %v2788
  %2790 = vdwg.mxu0
  %2791 = vmatprep.subr.bf16.mxu0 0
  %2792 = vmatpush1.bf16.msra.mxu0 %v2644
  %2793 = vmatprep.subr.bf16.mxu0 0
  %2794 = vmatpush1.bf16.msra.mxu0 %v2647
  %2795 = vmatprep.subr.bf16.mxu0 0
  %2796 = vmatpush1.bf16.msra.mxu0 %v2650
  %2797 = vmatprep.subr.bf16.mxu0 0
  %2798 = vmatpush1.bf16.msra.mxu0 %v2653
  %2799 = vmatprep.subr.bf16.mxu0 0
  %2800 = vmatpush1.bf16.msra.mxu0 %v2656
  %2801 = vmatprep.subr.bf16.mxu0 0
  %2802 = vmatpush1.bf16.msra.mxu0 %v2659
  %2803 = vmatprep.subr.bf16.mxu0 0
  %2804 = vmatpush1.bf16.msra.mxu0 %v2662
  %2805 = vmatprep.subr.bf16.mxu0 0
  %2806 = vmatpush1.bf16.msra.mxu0 %v2665
  %2807 = vmatprep.subr.bf16.mxu0 0
  %2808 = vmatpush1.bf16.msra.mxu0 %v2668
  %2809 = vmatprep.subr.bf16.mxu0 0
  %2810 = vmatpush1.bf16.msra.mxu0 %v2671
  %2811 = vmatprep.subr.bf16.mxu0 0
  %2812 = vmatpush1.bf16.msra.mxu0 %v2674
  %2813 = vmatprep.subr.bf16.mxu0 0
  %2814 = vmatpush1.bf16.msra.mxu0 %v2677
  %2815 = vmatprep.subr.bf16.mxu0 0
  %2816 = vmatpush1.bf16.msra.mxu0 %v2680
  %2817 = vmatprep.subr.bf16.mxu0 0
  %2818 = vmatpush1.bf16.msra.mxu0 %v2683
  %2819 = vmatprep.subr.bf16.mxu0 0
  %2820 = vmatpush1.bf16.msra.mxu0 %v2686
  %2821 = vmatprep.subr.bf16.mxu0 0
  %2822 = vmatpush1.bf16.msra.mxu0 %v2689
  %2823 = vmatprep.mubr.bf16.mxu0 %v2415
  %2824 = vmatmul.mubr.bf16.gmra.mrb[0].mxu0 %v2414
  %v2825 = vpop.f32.mrb[0].mxu0
  %v2826 = vadd.f32 0.0, %v2825
  %v2827 = vpop.f32.mrb[0].mxu0
  %v2828 = vpop.f32.mrb[0].mxu0
  %v2829 = vadd.f32 0.0, %v2828
  %v2830 = vpop.f32.mrb[0].mxu0
  %2831 = vmatprep.mubr.bf16.mxu0 %v2417
  %2832 = vmatmul.mubr.bf16.gmra.mrb[0].mxu0 %v2416
  %v2833 = vpop.f32.mrb[0].mxu0
  %v2834 = vadd.f32 0.0, %v2833
  %v2835 = vpop.f32.mrb[0].mxu0
  %v2836 = vpop.f32.mrb[0].mxu0
  %v2837 = vadd.f32 0.0, %v2836
  %v2838 = vpop.f32.mrb[0].mxu0
  %2839 = vdwg.mxu0
  %v2840 = vadd.f32 %v2389, %v2773
  %v2841 = vadd.f32 %v2390, %v2775
  %v2842 = vadd.f32 %v2391, %v2826
  %v2843 = vadd.f32 %v2392, %v2777
  %v2844 = vadd.f32 %v2393, %v2779
  %v2845 = vadd.f32 %v2394, %v2829
  %v2846 = vadd.f32 %v2400, %v2783
  %v2847 = vadd.f32 %v2401, %v2785
  %v2848 = vadd.f32 %v2402, %v2834
  %v2849 = vadd.f32 %v2403, %v2787
  %v2850 = vadd.f32 %v2404, %v2789
  %v2851 = vadd.f32 %v2405, %v2837
  %v2852 = vxor.u32 %v2840, 2147483648
  %v2853 = vxor.u32 %v2843, 2147483648
  %v2854 = vxor.u32 %v2846, 2147483648
  %v2855 = vxor.u32 %v2849, 2147483648
  %v2856 = vmul.f32 %v2852, 1.442695
  %v2857 = vpow.pop %v2856
  %v2858 = vmul.f32 %v2853, 1.442695
  %v2859 = vpow.pop %v2858
  %v2860 = vmul.f32 %v2854, 1.442695
  %v2861 = vpow.pop %v2860
  %v2862 = vmul.f32 %v2855, 1.442695
  %v2863 = vpow.pop %v2862
  %v2864 = vadd.f32 %v2857, 1.0
  %v2865 = vadd.f32 %v2859, 1.0
  %v2866 = vadd.f32 %v2861, 1.0
  %v2867 = vadd.f32 %v2863, 1.0
  %v2868 = vrcp.pop %v2864
  %v2869 = vmul.f32 1.0, %v2868
  %v2870 = vrcp.pop %v2865
  %v2871 = vmul.f32 1.0, %v2870
  %v2872 = vrcp.pop %v2866
  %v2873 = vmul.f32 1.0, %v2872
  %v2874 = vrcp.pop %v2867
  %v2875 = vmul.f32 1.0, %v2874
  %v2876 = vxor.u32 %v2841, 2147483648
  %v2877 = vxor.u32 %v2844, 2147483648
  %v2878 = vxor.u32 %v2847, 2147483648
  %v2879 = vxor.u32 %v2850, 2147483648
  %v2880 = vmul.f32 %v2876, 1.442695
  %v2881 = vpow.pop %v2880
  %v2882 = vmul.f32 %v2877, 1.442695
  %v2883 = vpow.pop %v2882
  %v2884 = vmul.f32 %v2878, 1.442695
  %v2885 = vpow.pop %v2884
  %v2886 = vmul.f32 %v2879, 1.442695
  %v2887 = vpow.pop %v2886
  %v2888 = vadd.f32 %v2881, 1.0
  %v2889 = vadd.f32 %v2883, 1.0
  %v2890 = vadd.f32 %v2885, 1.0
  %v2891 = vadd.f32 %v2887, 1.0
  %v2892 = vrcp.pop %v2888
  %v2893 = vmul.f32 1.0, %v2892
  %v2894 = vrcp.pop %v2889
  %v2895 = vmul.f32 1.0, %v2894
  %v2896 = vrcp.pop %v2890
  %v2897 = vmul.f32 1.0, %v2896
  %v2898 = vrcp.pop %v2891
  %v2899 = vmul.f32 1.0, %v2898
  %v2900 = vtanh.pop %v2842
  %v2901 = vtanh.pop %v2845
  %v2902 = vtanh.pop %v2848
  %v2903 = vtanh.pop %v2851
  %v2904 = vsub.f32 1.0, %v2869
  %v2905 = vsub.f32 1.0, %v2871
  %v2906 = vsub.f32 1.0, %v2873
  %v2907 = vsub.f32 1.0, %v2875
  %v2908 = vld [vmem:[#allocation3] sm:$0xff]
  %v2909 = vld [vmem:[#allocation3 + $0x8] sm:$0xff]
  %v2910 = vld [vmem:[#allocation3 + $0x10] sm:$0xff]
  %v2911 = vld [vmem:[#allocation3 + $0x18] sm:$0xff]
  %v2912 = vmul.f32 %v2904, %v2908
  %v2913 = vmul.f32 %v2905, %v2909
  %v2914 = vmul.f32 %v2906, %v2910
  %v2915 = vmul.f32 %v2907, %v2911
  %v2916 = vmul.f32 %v2869, %v2900
  %v2917 = vmul.f32 %v2871, %v2901
  %v2918 = vmul.f32 %v2873, %v2902
  %v2919 = vmul.f32 %v2875, %v2903
  %v2920 = vadd.f32 %v2912, %v2916
  %v2921 = vadd.f32 %v2913, %v2917
  %v2922 = vadd.f32 %v2914, %v2918
  %v2923 = vadd.f32 %v2915, %v2919
  %v2924 = vtanh.pop %v2920
  %v2925 = vtanh.pop %v2921
  %v2926 = vtanh.pop %v2922
  %v2927 = vtanh.pop %v2923
  %v2928 = vmul.f32 %v2893, %v2924
  %v2929 = vmul.f32 %v2895, %v2925
  %v2930 = vmul.f32 %v2897, %v2926
  %v2931 = vmul.f32 %v2899, %v2927
  %2932 = vst [vmem:[#allocation3] sm:$0xff] %v2920
  %2933 = vst [vmem:[#allocation3 + $0x8] sm:$0xff] %v2921
  %2934 = vst [vmem:[#allocation3 + $0x10] sm:$0xff] %v2922
  %2935 = vst [vmem:[#allocation3 + $0x18] sm:$0xff] %v2923
  %2936 = vst [vmem:[#allocation2] sm:$0xff] %v2928
  %2937 = vst [vmem:[#allocation2 + $0x10] sm:$0xff] %v2929
  %2938 = vst [vmem:[#allocation2 + $0x28] sm:$0xff] %v2930
  %2939 = vst [vmem:[#allocation2 + $0x38] sm:$0xff] %v2931
  %v2940 = vpack.c.bf16 %v2929, %v2928
  %v2941 = vpack.c.bf16 %v2931, %v2930
  %v2943 = vunpack.c.l.b16 %v2940
  %v2944 = vunpack.c.h.b16 %v2940
  %v2945 = vpack.c.b16 %v2943, %v2943
  %v2946 = vpack.c.b16 %v2944, %v2944
  %s2949 = scalar_lea.vmem %s3, 32
  %2950 = vst [vmem:[%s2949] sm:$0xf] %v2945
  %2951 = vst [vmem:[%s2949 + $0x4] sm:$0xf] %v2946
  %v2953 = vunpack.c.l.b16 %v2941
  %v2954 = vunpack.c.h.b16 %v2941
  %v2955 = vpack.c.b16 %v2953, %v2953
  %v2956 = vpack.c.b16 %v2954, %v2954
  %s2959 = scalar_lea.vmem %s54, 24
  %2960 = vst [vmem:[%s2959] sm:$0xf] %v2955
  %2961 = vst [vmem:[%s2959 + $0x4] sm:$0xf] %v2956
  %s2962 = scalar_lea.vmem %s0, 120
  %v2963 = vld [vmem:[%s2962] sm:$0xff]
  %v2964 = vld [vmem:[%s2962 + $0x8] sm:$0xf]
  %v2965 = vld [vmem:[%s2962 + $0xc] sm:$0xff]
  %v2966 = vld [vmem:[%s2962 + $0x14] sm:$0xf]
  %v2967 = vunpack.c.l.bf16 %v2963
  %v2968 = vunpack.c.h.bf16 %v2963
  %v2969 = vunpack.c.l.bf16 %v2964
  %v2970 = vunpack.c.l.bf16 %v2965
  %v2971 = vunpack.c.h.bf16 %v2965
  %v2972 = vunpack.c.l.bf16 %v2966
  %s2973 = scalar_lea.vmem %s45, 48
  %v2974 = vld [vmem:[%s2973] sm:$0xff]
  %v2975 = vld [vmem:[%s2973 + $0x8] sm:$0xf]
  %v2976 = vld [vmem:[%s2973 + $0xc] sm:$0xff]
  %v2977 = vld [vmem:[%s2973 + $0x14] sm:$0xf]
  %v2978 = vunpack.c.l.bf16 %v2974
  %v2979 = vunpack.c.h.bf16 %v2974
  %v2980 = vunpack.c.l.bf16 %v2975
  %v2981 = vunpack.c.l.bf16 %v2976
  %v2982 = vunpack.c.h.bf16 %v2976
  %v2983 = vunpack.c.l.bf16 %v2977
  %v2984 = vld [vmem:[#allocation2] sm:$0xff]
  %v2985 = vld [vmem:[#allocation2 + $0x8] sm:$0xff]
  %v2986 = vld [vmem:[#allocation2 + $0x10] sm:$0xff]
  %v2987 = vld [vmem:[#allocation2 + $0x18] sm:$0xff]
  %v2988 = vld [vmem:[#allocation2 + $0x20] sm:$0xff]
  %v2989 = vld [vmem:[#allocation2 + $0x28] sm:$0xff]
  %v2990 = vld [vmem:[#allocation2 + $0x30] sm:$0xff]
  %v2991 = vld [vmem:[#allocation2 + $0x38] sm:$0xff]
  %v2992 = vpack.c.bf16 %v2986, %v2984
  %v2993 = vpack.c.bf16 %v2987, %v2985
  %v2994 = vpack.c.bf16 %v2990, %v2988
  %v2995 = vpack.c.bf16 %v2991, %v2989
  %v2996 = vld [vmem:[%s2] sm:$0xff]
  %v2997 = vld [vmem:[%s2 + $0x8] sm:$0xf]
  %v2998 = vld [vmem:[%s2 + $0xc] sm:$0xff]
  %v2999 = vld [vmem:[%s2 + $0x14] sm:$0xf]
  %v3000 = vld [vmem:[%s2 + $0x18] sm:$0xff]
  %v3001 = vld [vmem:[%s2 + $0x20] sm:$0xf]
  %v3002 = vld [vmem:[%s2 + $0x24] sm:$0xff]
  %v3003 = vld [vmem:[%s2 + $0x2c] sm:$0xf]
  %v3004 = vld [vmem:[%s2 + $0x30] sm:$0xff]
  %v3005 = vld [vmem:[%s2 + $0x38] sm:$0xf]
  %v3006 = vld [vmem:[%s2 + $0x3c] sm:$0xff]
  %v3007 = vld [vmem:[%s2 + $0x44] sm:$0xf]
  %v3008 = vld [vmem:[%s2 + $0x48] sm:$0xff]
  %v3009 = vld [vmem:[%s2 + $0x50] sm:$0xf]
  %v3010 = vld [vmem:[%s2 + $0x54] sm:$0xff]
  %v3011 = vld [vmem:[%s2 + $0x5c] sm:$0xf]
  %v3012 = vld [vmem:[%s2 + $0x60] sm:$0xff]
  %v3013 = vld [vmem:[%s2 + $0x68] sm:$0xf]
  %v3014 = vld [vmem:[%s2 + $0x6c] sm:$0xff]
  %v3015 = vld [vmem:[%s2 + $0x74] sm:$0xf]
  %v3016 = vld [vmem:[%s2 + $0x78] sm:$0xff]
  %v3017 = vld [vmem:[%s2 + $0x80] sm:$0xf]
  %v3018 = vld [vmem:[%s2 + $0x84] sm:$0xff]
  %v3019 = vld [vmem:[%s2 + $0x8c] sm:$0xf]
  %v3020 = vld [vmem:[%s2 + $0x90] sm:$0xff]
  %v3021 = vld [vmem:[%s2 + $0x98] sm:$0xf]
  %v3022 = vld [vmem:[%s2 + $0x9c] sm:$0xff]
  %v3023 = vld [vmem:[%s2 + $0xa4] sm:$0xf]
  %v3024 = vld [vmem:[%s2 + $0xa8] sm:$0xff]
  %v3025 = vld [vmem:[%s2 + $0xb0] sm:$0xf]
  %v3026 = vld [vmem:[%s2 + $0xb4] sm:$0xff]
  %v3027 = vld [vmem:[%s2 + $0xbc] sm:$0xf]
  %v3028 = vld [vmem:[%s2 + $0xc0] sm:$0xff]
  %v3029 = vld [vmem:[%s2 + $0xc8] sm:$0xf]
  %v3030 = vld [vmem:[%s2 + $0xcc] sm:$0xff]
  %v3031 = vld [vmem:[%s2 + $0xd4] sm:$0xf]
  %v3032 = vld [vmem:[%s2 + $0xd8] sm:$0xff]
  %v3033 = vld [vmem:[%s2 + $0xe0] sm:$0xf]
  %v3034 = vld [vmem:[%s2 + $0xe4] sm:$0xff]
  %v3035 = vld [vmem:[%s2 + $0xec] sm:$0xf]
  %v3036 = vld [vmem:[%s2 + $0xf0] sm:$0xff]
  %v3037 = vld [vmem:[%s2 + $0xf8] sm:$0xf]
  %v3038 = vld [vmem:[%s2 + $0xfc] sm:$0xff]
  %v3039 = vld [vmem:[%s2 + $0x104] sm:$0xf]
  %v3040 = vld [vmem:[%s2 + $0x108] sm:$0xff]
  %v3041 = vld [vmem:[%s2 + $0x110] sm:$0xf]
  %v3042 = vld [vmem:[%s2 + $0x114] sm:$0xff]
  %v3043 = vld [vmem:[%s2 + $0x11c] sm:$0xf]
  %v3044 = vld [vmem:[%s2 + $0x120] sm:$0xff]
  %v3045 = vld [vmem:[%s2 + $0x128] sm:$0xf]
  %v3046 = vld [vmem:[%s2 + $0x12c] sm:$0xff]
  %v3047 = vld [vmem:[%s2 + $0x134] sm:$0xf]
  %v3048 = vld [vmem:[%s2 + $0x138] sm:$0xff]
  %v3049 = vld [vmem:[%s2 + $0x140] sm:$0xf]
  %v3050 = vld [vmem:[%s2 + $0x144] sm:$0xff]
  %v3051 = vld [vmem:[%s2 + $0x14c] sm:$0xf]
  %v3052 = vld [vmem:[%s2 + $0x150] sm:$0xff]
  %v3053 = vld [vmem:[%s2 + $0x158] sm:$0xf]
  %v3054 = vld [vmem:[%s2 + $0x15c] sm:$0xff]
  %v3055 = vld [vmem:[%s2 + $0x164] sm:$0xf]
  %v3056 = vld [vmem:[%s2 + $0x168] sm:$0xff]
  %v3057 = vld [vmem:[%s2 + $0x170] sm:$0xf]
  %v3058 = vld [vmem:[%s2 + $0x174] sm:$0xff]
  %v3059 = vld [vmem:[%s2 + $0x17c] sm:$0xf]
  %v3124 = vunpack.c.l.b16 %v2996
  %v3125 = vunpack.c.h.b16 %v2996
  %v3126 = vunpack.c.l.b16 %v2997
  %v3127 = vunpack.c.l.b16 %v2998
  %v3128 = vunpack.c.h.b16 %v2998
  %v3129 = vunpack.c.l.b16 %v2999
  %v3130 = vunpack.c.l.b16 %v3000
  %v3131 = vunpack.c.h.b16 %v3000
  %v3132 = vunpack.c.l.b16 %v3001
  %v3133 = vunpack.c.l.b16 %v3002
  %v3134 = vunpack.c.h.b16 %v3002
  %v3135 = vunpack.c.l.b16 %v3003
  %v3136 = vunpack.c.l.b16 %v3004
  %v3137 = vunpack.c.h.b16 %v3004
  %v3138 = vunpack.c.l.b16 %v3005
  %v3139 = vunpack.c.l.b16 %v3006
  %v3140 = vunpack.c.h.b16 %v3006
  %v3141 = vunpack.c.l.b16 %v3007
  %v3142 = vunpack.c.l.b16 %v3008
  %v3143 = vunpack.c.h.b16 %v3008
  %v3144 = vunpack.c.l.b16 %v3009
  %v3145 = vunpack.c.l.b16 %v3010
  %v3146 = vunpack.c.h.b16 %v3010
  %v3147 = vunpack.c.l.b16 %v3011
  %v3148 = vunpack.c.l.b16 %v3012
  %v3149 = vunpack.c.h.b16 %v3012
  %v3150 = vunpack.c.l.b16 %v3013
  %v3151 = vunpack.c.l.b16 %v3014
  %v3152 = vunpack.c.h.b16 %v3014
  %v3153 = vunpack.c.l.b16 %v3015
  %v3154 = vunpack.c.l.b16 %v3016
  %v3155 = vunpack.c.h.b16 %v3016
  %v3156 = vunpack.c.l.b16 %v3017
  %v3157 = vunpack.c.l.b16 %v3018
  %v3158 = vunpack.c.h.b16 %v3018
  %v3159 = vunpack.c.l.b16 %v3019
  %v3160 = vunpack.c.l.b16 %v3020
  %v3161 = vunpack.c.h.b16 %v3020
  %v3162 = vunpack.c.l.b16 %v3021
  %v3163 = vunpack.c.l.b16 %v3022
  %v3164 = vunpack.c.h.b16 %v3022
  %v3165 = vunpack.c.l.b16 %v3023
  %v3166 = vunpack.c.l.b16 %v3024
  %v3167 = vunpack.c.h.b16 %v3024
  %v3168 = vunpack.c.l.b16 %v3025
  %v3169 = vunpack.c.l.b16 %v3026
  %v3170 = vunpack.c.h.b16 %v3026
  %v3171 = vunpack.c.l.b16 %v3027
  %v3172 = vunpack.c.l.b16 %v3028
  %v3173 = vunpack.c.h.b16 %v3028
  %v3174 = vunpack.c.l.b16 %v3029
  %v3175 = vunpack.c.l.b16 %v3030
  %v3176 = vunpack.c.h.b16 %v3030
  %v3177 = vunpack.c.l.b16 %v3031
  %v3178 = vunpack.c.l.b16 %v3032
  %v3179 = vunpack.c.h.b16 %v3032
  %v3180 = vunpack.c.l.b16 %v3033
  %v3181 = vunpack.c.l.b16 %v3034
  %v3182 = vunpack.c.h.b16 %v3034
  %v3183 = vunpack.c.l.b16 %v3035
  %v3184 = vunpack.c.l.b16 %v3036
  %v3185 = vunpack.c.h.b16 %v3036
  %v3186 = vunpack.c.l.b16 %v3037
  %v3187 = vunpack.c.l.b16 %v3038
  %v3188 = vunpack.c.h.b16 %v3038
  %v3189 = vunpack.c.l.b16 %v3039
  %v3190 = vunpack.c.l.b16 %v3040
  %v3191 = vunpack.c.h.b16 %v3040
  %v3192 = vunpack.c.l.b16 %v3041
  %v3193 = vunpack.c.l.b16 %v3042
  %v3194 = vunpack.c.h.b16 %v3042
  %v3195 = vunpack.c.l.b16 %v3043
  %v3196 = vunpack.c.l.b16 %v3044
  %v3197 = vunpack.c.h.b16 %v3044
  %v3198 = vunpack.c.l.b16 %v3045
  %v3199 = vunpack.c.l.b16 %v3046
  %v3200 = vunpack.c.h.b16 %v3046
  %v3201 = vunpack.c.l.b16 %v3047
  %v3202 = vunpack.c.l.b16 %v3048
  %v3203 = vunpack.c.h.b16 %v3048
  %v3204 = vunpack.c.l.b16 %v3049
  %v3205 = vunpack.c.l.b16 %v3050
  %v3206 = vunpack.c.h.b16 %v3050
  %v3207 = vunpack.c.l.b16 %v3051
  %v3208 = vunpack.c.l.b16 %v3052
  %v3209 = vunpack.c.h.b16 %v3052
  %v3210 = vunpack.c.l.b16 %v3053
  %v3211 = vunpack.c.l.b16 %v3054
  %v3212 = vunpack.c.h.b16 %v3054
  %v3213 = vunpack.c.l.b16 %v3055
  %v3214 = vunpack.c.l.b16 %v3056
  %v3215 = vunpack.c.h.b16 %v3056
  %v3216 = vunpack.c.l.b16 %v3057
  %v3217 = vunpack.c.l.b16 %v3058
  %v3218 = vunpack.c.h.b16 %v3058
  %v3219 = vunpack.c.l.b16 %v3059
  %v3220 = vpack.c.b16 %v3127, %v3124
  %v3221 = vpack.c.b16 %v3128, %v3125
  %v3222 = vpack.c.b16 %v3129, %v3126
  %v3223 = vpack.c.b16 %v3133, %v3130
  %v3224 = vpack.c.b16 %v3134, %v3131
  %v3225 = vpack.c.b16 %v3135, %v3132
  %v3226 = vpack.c.b16 %v3139, %v3136
  %v3227 = vpack.c.b16 %v3140, %v3137
  %v3228 = vpack.c.b16 %v3141, %v3138
  %v3229 = vpack.c.b16 %v3145, %v3142
  %v3230 = vpack.c.b16 %v3146, %v3143
  %v3231 = vpack.c.b16 %v3147, %v3144
  %v3232 = vpack.c.b16 %v3151, %v3148
  %v3233 = vpack.c.b16 %v3152, %v3149
  %v3234 = vpack.c.b16 %v3153, %v3150
  %v3235 = vpack.c.b16 %v3157, %v3154
  %v3236 = vpack.c.b16 %v3158, %v3155
  %v3237 = vpack.c.b16 %v3159, %v3156
  %v3238 = vpack.c.b16 %v3163, %v3160
  %v3239 = vpack.c.b16 %v3164, %v3161
  %v3240 = vpack.c.b16 %v3165, %v3162
  %v3241 = vpack.c.b16 %v3169, %v3166
  %v3242 = vpack.c.b16 %v3170, %v3167
  %v3243 = vpack.c.b16 %v3171, %v3168
  %v3244 = vpack.c.b16 %v3175, %v3172
  %v3245 = vpack.c.b16 %v3176, %v3173
  %v3246 = vpack.c.b16 %v3177, %v3174
  %v3247 = vpack.c.b16 %v3181, %v3178
  %v3248 = vpack.c.b16 %v3182, %v3179
  %v3249 = vpack.c.b16 %v3183, %v3180
  %v3250 = vpack.c.b16 %v3187, %v3184
  %v3251 = vpack.c.b16 %v3188, %v3185
  %v3252 = vpack.c.b16 %v3189, %v3186
  %v3253 = vpack.c.b16 %v3193, %v3190
  %v3254 = vpack.c.b16 %v3194, %v3191
  %v3255 = vpack.c.b16 %v3195, %v3192
  %v3256 = vpack.c.b16 %v3199, %v3196
  %v3257 = vpack.c.b16 %v3200, %v3197
  %v3258 = vpack.c.b16 %v3201, %v3198
  %v3259 = vpack.c.b16 %v3205, %v3202
  %v3260 = vpack.c.b16 %v3206, %v3203
  %v3261 = vpack.c.b16 %v3207, %v3204
  %v3262 = vpack.c.b16 %v3211, %v3208
  %v3263 = vpack.c.b16 %v3212, %v3209
  %v3264 = vpack.c.b16 %v3213, %v3210
  %v3265 = vpack.c.b16 %v3217, %v3214
  %v3266 = vpack.c.b16 %v3218, %v3215
  %v3267 = vpack.c.b16 %v3219, %v3216
  %3316 = vmatprep.subr.bf16.mxu0 %v3221
  %3317 = vmatpush1.bf16.msra.mxu0 %v3220
  %3318 = vmatprep.subr.bf16.mxu0 %v3224
  %3319 = vmatpush1.bf16.msra.mxu0 %v3223
  %3320 = vmatprep.subr.bf16.mxu0 %v3227
  %3321 = vmatpush1.bf16.msra.mxu0 %v3226
  %3322 = vmatprep.subr.bf16.mxu0 %v3230
  %3323 = vmatpush1.bf16.msra.mxu0 %v3229
  %3324 = vmatprep.subr.bf16.mxu0 %v3233
  %3325 = vmatpush1.bf16.msra.mxu0 %v3232
  %3326 = vmatprep.subr.bf16.mxu0 %v3236
  %3327 = vmatpush1.bf16.msra.mxu0 %v3235
  %3328 = vmatprep.subr.bf16.mxu0 %v3239
  %3329 = vmatpush1.bf16.msra.mxu0 %v3238
  %3330 = vmatprep.subr.bf16.mxu0 %v3242
  %3331 = vmatpush1.bf16.msra.mxu0 %v3241
  %3332 = vmatprep.subr.bf16.mxu0 %v3245
  %3333 = vmatpush1.bf16.msra.mxu0 %v3244
  %3334 = vmatprep.subr.bf16.mxu0 %v3248
  %3335 = vmatpush1.bf16.msra.mxu0 %v3247
  %3336 = vmatprep.subr.bf16.mxu0 %v3251
  %3337 = vmatpush1.bf16.msra.mxu0 %v3250
  %3338 = vmatprep.subr.bf16.mxu0 %v3254
  %3339 = vmatpush1.bf16.msra.mxu0 %v3253
  %3340 = vmatprep.subr.bf16.mxu0 %v3257
  %3341 = vmatpush1.bf16.msra.mxu0 %v3256
  %3342 = vmatprep.subr.bf16.mxu0 %v3260
  %3343 = vmatpush1.bf16.msra.mxu0 %v3259
  %3344 = vmatprep.subr.bf16.mxu0 %v3263
  %3345 = vmatpush1.bf16.msra.mxu0 %v3262
  %3346 = vmatprep.subr.bf16.mxu0 %v3266
  %3347 = vmatpush1.bf16.msra.mxu0 %v3265
  %3348 = vmatprep.mubr.bf16.mxu0 %v2993
  %3349 = vmatmul.mubr.bf16.gmra.mrb[0].mxu0 %v2992
  %v3350 = vpop.f32.mrb[0].mxu0
  %v3351 = vadd.f32 0.0, %v3350
  %v3352 = vpop.f32.mrb[0].mxu0
  %v3353 = vadd.f32 0.0, %v3352
  %v3354 = vpop.f32.mrb[0].mxu0
  %v3355 = vadd.f32 0.0, %v3354
  %v3356 = vpop.f32.mrb[0].mxu0
  %v3357 = vadd.f32 0.0, %v3356
  %3358 = vmatprep.mubr.bf16.mxu0 %v2995
  %3359 = vmatmul.mubr.bf16.gmra.mrb[0].mxu0 %v2994
  %v3360 = vpop.f32.mrb[0].mxu0
  %v3361 = vadd.f32 0.0, %v3360
  %v3362 = vpop.f32.mrb[0].mxu0
  %v3363 = vadd.f32 0.0, %v3362
  %v3364 = vpop.f32.mrb[0].mxu0
  %v3365 = vadd.f32 0.0, %v3364
  %v3366 = vpop.f32.mrb[0].mxu0
  %v3367 = vadd.f32 0.0, %v3366
  %3368 = vdwg.mxu0
  %3369 = vmatprep.subr.bf16.mxu0 0
  %3370 = vmatpush1.bf16.msra.mxu0 %v3222
  %3371 = vmatprep.subr.bf16.mxu0 0
  %3372 = vmatpush1.bf16.msra.mxu0 %v3225
  %3373 = vmatprep.subr.bf16.mxu0 0
  %3374 = vmatpush1.bf16.msra.mxu0 %v3228
  %3375 = vmatprep.subr.bf16.mxu0 0
  %3376 = vmatpush1.bf16.msra.mxu0 %v3231
  %3377 = vmatprep.subr.bf16.mxu0 0
  %3378 = vmatpush1.bf16.msra.mxu0 %v3234
  %3379 = vmatprep.subr.bf16.mxu0 0
  %3380 = vmatpush1.bf16.msra.mxu0 %v3237
  %3381 = vmatprep.subr.bf16.mxu0 0
  %3382 = vmatpush1.bf16.msra.mxu0 %v3240
  %3383 = vmatprep.subr.bf16.mxu0 0
  %3384 = vmatpush1.bf16.msra.mxu0 %v3243
  %3385 = vmatprep.subr.bf16.mxu0 0
  %3386 = vmatpush1.bf16.msra.mxu0 %v3246
  %3387 = vmatprep.subr.bf16.mxu0 0
  %3388 = vmatpush1.bf16.msra.mxu0 %v3249
  %3389 = vmatprep.subr.bf16.mxu0 0
  %3390 = vmatpush1.bf16.msra.mxu0 %v3252
  %3391 = vmatprep.subr.bf16.mxu0 0
  %3392 = vmatpush1.bf16.msra.mxu0 %v3255
  %3393 = vmatprep.subr.bf16.mxu0 0
  %3394 = vmatpush1.bf16.msra.mxu0 %v3258
  %3395 = vmatprep.subr.bf16.mxu0 0
  %3396 = vmatpush1.bf16.msra.mxu0 %v3261
  %3397 = vmatprep.subr.bf16.mxu0 0
  %3398 = vmatpush1.bf16.msra.mxu0 %v3264
  %3399 = vmatprep.subr.bf16.mxu0 0
  %3400 = vmatpush1.bf16.msra.mxu0 %v3267
  %3401 = vmatprep.mubr.bf16.mxu0 %v2993
  %3402 = vmatmul.mubr.bf16.gmra.mrb[0].mxu0 %v2992
  %v3403 = vpop.f32.mrb[0].mxu0
  %v3404 = vadd.f32 0.0, %v3403
  %v3405 = vpop.f32.mrb[0].mxu0
  %v3406 = vpop.f32.mrb[0].mxu0
  %v3407 = vadd.f32 0.0, %v3406
  %v3408 = vpop.f32.mrb[0].mxu0
  %3409 = vmatprep.mubr.bf16.mxu0 %v2995
  %3410 = vmatmul.mubr.bf16.gmra.mrb[0].mxu0 %v2994
  %v3411 = vpop.f32.mrb[0].mxu0
  %v3412 = vadd.f32 0.0, %v3411
  %v3413 = vpop.f32.mrb[0].mxu0
  %v3414 = vpop.f32.mrb[0].mxu0
  %v3415 = vadd.f32 0.0, %v3414
  %v3416 = vpop.f32.mrb[0].mxu0
  %3417 = vdwg.mxu0
  %v3418 = vadd.f32 %v2967, %v3351
  %v3419 = vadd.f32 %v2968, %v3353
  %v3420 = vadd.f32 %v2969, %v3404
  %v3421 = vadd.f32 %v2970, %v3355
  %v3422 = vadd.f32 %v2971, %v3357
  %v3423 = vadd.f32 %v2972, %v3407
  %v3424 = vadd.f32 %v2978, %v3361
  %v3425 = vadd.f32 %v2979, %v3363
  %v3426 = vadd.f32 %v2980, %v3412
  %v3427 = vadd.f32 %v2981, %v3365
  %v3428 = vadd.f32 %v2982, %v3367
  %v3429 = vadd.f32 %v2983, %v3415
  %v3430 = vxor.u32 %v3418, 2147483648
  %v3431 = vxor.u32 %v3421, 2147483648
  %v3432 = vxor.u32 %v3424, 2147483648
  %v3433 = vxor.u32 %v3427, 2147483648
  %v3434 = vmul.f32 %v3430, 1.442695
  %v3435 = vpow.pop %v3434
  %v3436 = vmul.f32 %v3431, 1.442695
  %v3437 = vpow.pop %v3436
  %v3438 = vmul.f32 %v3432, 1.442695
  %v3439 = vpow.pop %v3438
  %v3440 = vmul.f32 %v3433, 1.442695
  %v3441 = vpow.pop %v3440
  %v3442 = vadd.f32 %v3435, 1.0
  %v3443 = vadd.f32 %v3437, 1.0
  %v3444 = vadd.f32 %v3439, 1.0
  %v3445 = vadd.f32 %v3441, 1.0
  %v3446 = vrcp.pop %v3442
  %v3447 = vmul.f32 1.0, %v3446
  %v3448 = vrcp.pop %v3443
  %v3449 = vmul.f32 1.0, %v3448
  %v3450 = vrcp.pop %v3444
  %v3451 = vmul.f32 1.0, %v3450
  %v3452 = vrcp.pop %v3445
  %v3453 = vmul.f32 1.0, %v3452
  %v3454 = vxor.u32 %v3419, 2147483648
  %v3455 = vxor.u32 %v3422, 2147483648
  %v3456 = vxor.u32 %v3425, 2147483648
  %v3457 = vxor.u32 %v3428, 2147483648
  %v3458 = vmul.f32 %v3454, 1.442695
  %v3459 = vpow.pop %v3458
  %v3460 = vmul.f32 %v3455, 1.442695
  %v3461 = vpow.pop %v3460
  %v3462 = vmul.f32 %v3456, 1.442695
  %v3463 = vpow.pop %v3462
  %v3464 = vmul.f32 %v3457, 1.442695
  %v3465 = vpow.pop %v3464
  %v3466 = vadd.f32 %v3459, 1.0
  %v3467 = vadd.f32 %v3461, 1.0
  %v3468 = vadd.f32 %v3463, 1.0
  %v3469 = vadd.f32 %v3465, 1.0
  %v3470 = vrcp.pop %v3466
  %v3471 = vmul.f32 1.0, %v3470
  %v3472 = vrcp.pop %v3467
  %v3473 = vmul.f32 1.0, %v3472
  %v3474 = vrcp.pop %v3468
  %v3475 = vmul.f32 1.0, %v3474
  %v3476 = vrcp.pop %v3469
  %v3477 = vmul.f32 1.0, %v3476
  %v3478 = vtanh.pop %v3420
  %v3479 = vtanh.pop %v3423
  %v3480 = vtanh.pop %v3426
  %v3481 = vtanh.pop %v3429
  %v3482 = vsub.f32 1.0, %v3447
  %v3483 = vsub.f32 1.0, %v3449
  %v3484 = vsub.f32 1.0, %v3451
  %v3485 = vsub.f32 1.0, %v3453
  %v3486 = vld [vmem:[#allocation3] sm:$0xff]
  %v3487 = vld [vmem:[#allocation3 + $0x8] sm:$0xff]
  %v3488 = vld [vmem:[#allocation3 + $0x10] sm:$0xff]
  %v3489 = vld [vmem:[#allocation3 + $0x18] sm:$0xff]
  %v3490 = vmul.f32 %v3482, %v3486
  %v3491 = vmul.f32 %v3483, %v3487
  %v3492 = vmul.f32 %v3484, %v3488
  %v3493 = vmul.f32 %v3485, %v3489
  %v3494 = vmul.f32 %v3447, %v3478
  %v3495 = vmul.f32 %v3449, %v3479
  %v3496 = vmul.f32 %v3451, %v3480
  %v3497 = vmul.f32 %v3453, %v3481
  %v3498 = vadd.f32 %v3490, %v3494
  %v3499 = vadd.f32 %v3491, %v3495
  %v3500 = vadd.f32 %v3492, %v3496
  %v3501 = vadd.f32 %v3493, %v3497
  %v3502 = vtanh.pop %v3498
  %v3503 = vtanh.pop %v3499
  %v3504 = vtanh.pop %v3500
  %v3505 = vtanh.pop %v3501
  %v3506 = vmul.f32 %v3471, %v3502
  %v3507 = vmul.f32 %v3473, %v3503
  %v3508 = vmul.f32 %v3475, %v3504
  %v3509 = vmul.f32 %v3477, %v3505
  %3510 = vst [vmem:[#allocation3] sm:$0xff] %v3498
  %3511 = vst [vmem:[#allocation3 + $0x8] sm:$0xff] %v3499
  %3512 = vst [vmem:[#allocation3 + $0x10] sm:$0xff] %v3500
  %3513 = vst [vmem:[#allocation3 + $0x18] sm:$0xff] %v3501
  %3514 = vst [vmem:[#allocation2] sm:$0xff] %v3506
  %3515 = vst [vmem:[#allocation2 + $0x10] sm:$0xff] %v3507
  %3516 = vst [vmem:[#allocation2 + $0x28] sm:$0xff] %v3508
  %3517 = vst [vmem:[#allocation2 + $0x38] sm:$0xff] %v3509
  %v3518 = vpack.c.bf16 %v3507, %v3506
  %v3519 = vpack.c.bf16 %v3509, %v3508
  %v3521 = vunpack.c.l.b16 %v3518
  %v3522 = vunpack.c.h.b16 %v3518
  %v3523 = vpack.c.b16 %v3521, %v3521
  %v3524 = vpack.c.b16 %v3522, %v3522
  %s3527 = scalar_lea.vmem %s3, 40
  %3528 = vst [vmem:[%s3527] sm:$0xf] %v3523
  %3529 = vst [vmem:[%s3527 + $0x4] sm:$0xf] %v3524
  %v3531 = vunpack.c.l.b16 %v3519
  %v3532 = vunpack.c.h.b16 %v3519
  %v3533 = vpack.c.b16 %v3531, %v3531
  %v3534 = vpack.c.b16 %v3532, %v3532
  %s3537 = scalar_lea.vmem %s54, 16
  %3538 = vst [vmem:[%s3537] sm:$0xf] %v3533
  %3539 = vst [vmem:[%s3537 + $0x4] sm:$0xf] %v3534
  %s3540 = scalar_lea.vmem %s0, 144
  %v3541 = vld [vmem:[%s3540] sm:$0xff]
  %v3542 = vld [vmem:[%s3540 + $0x8] sm:$0xf]
  %v3543 = vld [vmem:[%s3540 + $0xc] sm:$0xff]
  %v3544 = vld [vmem:[%s3540 + $0x14] sm:$0xf]
  %v3545 = vunpack.c.l.bf16 %v3541
  %v3546 = vunpack.c.h.bf16 %v3541
  %v3547 = vunpack.c.l.bf16 %v3542
  %v3548 = vunpack.c.l.bf16 %v3543
  %v3549 = vunpack.c.h.bf16 %v3543
  %v3550 = vunpack.c.l.bf16 %v3544
  %s3551 = scalar_lea.vmem %s45, 24
  %v3552 = vld [vmem:[%s3551] sm:$0xff]
  %v3553 = vld [vmem:[%s3551 + $0x8] sm:$0xf]
  %v3554 = vld [vmem:[%s3551 + $0xc] sm:$0xff]
  %v3555 = vld [vmem:[%s3551 + $0x14] sm:$0xf]
  %v3556 = vunpack.c.l.bf16 %v3552
  %v3557 = vunpack.c.h.bf16 %v3552
  %v3558 = vunpack.c.l.bf16 %v3553
  %v3559 = vunpack.c.l.bf16 %v3554
  %v3560 = vunpack.c.h.bf16 %v3554
  %v3561 = vunpack.c.l.bf16 %v3555
  %v3562 = vld [vmem:[#allocation2] sm:$0xff]
  %v3563 = vld [vmem:[#allocation2 + $0x8] sm:$0xff]
  %v3564 = vld [vmem:[#allocation2 + $0x10] sm:$0xff]
  %v3565 = vld [vmem:[#allocation2 + $0x18] sm:$0xff]
  %v3566 = vld [vmem:[#allocation2 + $0x20] sm:$0xff]
  %v3567 = vld [vmem:[#allocation2 + $0x28] sm:$0xff]
  %v3568 = vld [vmem:[#allocation2 + $0x30] sm:$0xff]
  %v3569 = vld [vmem:[#allocation2 + $0x38] sm:$0xff]
  %v3570 = vpack.c.bf16 %v3564, %v3562
  %v3571 = vpack.c.bf16 %v3565, %v3563
  %v3572 = vpack.c.bf16 %v3568, %v3566
  %v3573 = vpack.c.bf16 %v3569, %v3567
  %v3574 = vld [vmem:[%s2] sm:$0xff]
  %v3575 = vld [vmem:[%s2 + $0x8] sm:$0xf]
  %v3576 = vld [vmem:[%s2 + $0xc] sm:$0xff]
  %v3577 = vld [vmem:[%s2 + $0x14] sm:$0xf]
  %v3578 = vld [vmem:[%s2 + $0x18] sm:$0xff]
  %v3579 = vld [vmem:[%s2 + $0x20] sm:$0xf]
  %v3580 = vld [vmem:[%s2 + $0x24] sm:$0xff]
  %v3581 = vld [vmem:[%s2 + $0x2c] sm:$0xf]
  %v3582 = vld [vmem:[%s2 + $0x30] sm:$0xff]
  %v3583 = vld [vmem:[%s2 + $0x38] sm:$0xf]
  %v3584 = vld [vmem:[%s2 + $0x3c] sm:$0xff]
  %v3585 = vld [vmem:[%s2 + $0x44] sm:$0xf]
  %v3586 = vld [vmem:[%s2 + $0x48] sm:$0xff]
  %v3587 = vld [vmem:[%s2 + $0x50] sm:$0xf]
  %v3588 = vld [vmem:[%s2 + $0x54] sm:$0xff]
  %v3589 = vld [vmem:[%s2 + $0x5c] sm:$0xf]
  %v3590 = vld [vmem:[%s2 + $0x60] sm:$0xff]
  %v3591 = vld [vmem:[%s2 + $0x68] sm:$0xf]
  %v3592 = vld [vmem:[%s2 + $0x6c] sm:$0xff]
  %v3593 = vld [vmem:[%s2 + $0x74] sm:$0xf]
  %v3594 = vld [vmem:[%s2 + $0x78] sm:$0xff]
  %v3595 = vld [vmem:[%s2 + $0x80] sm:$0xf]
  %v3596 = vld [vmem:[%s2 + $0x84] sm:$0xff]
  %v3597 = vld [vmem:[%s2 + $0x8c] sm:$0xf]
  %v3598 = vld [vmem:[%s2 + $0x90] sm:$0xff]
  %v3599 = vld [vmem:[%s2 + $0x98] sm:$0xf]
  %v3600 = vld [vmem:[%s2 + $0x9c] sm:$0xff]
  %v3601 = vld [vmem:[%s2 + $0xa4] sm:$0xf]
  %v3602 = vld [vmem:[%s2 + $0xa8] sm:$0xff]
  %v3603 = vld [vmem:[%s2 + $0xb0] sm:$0xf]
  %v3604 = vld [vmem:[%s2 + $0xb4] sm:$0xff]
  %v3605 = vld [vmem:[%s2 + $0xbc] sm:$0xf]
  %v3606 = vld [vmem:[%s2 + $0xc0] sm:$0xff]
  %v3607 = vld [vmem:[%s2 + $0xc8] sm:$0xf]
  %v3608 = vld [vmem:[%s2 + $0xcc] sm:$0xff]
  %v3609 = vld [vmem:[%s2 + $0xd4] sm:$0xf]
  %v3610 = vld [vmem:[%s2 + $0xd8] sm:$0xff]
  %v3611 = vld [vmem:[%s2 + $0xe0] sm:$0xf]
  %v3612 = vld [vmem:[%s2 + $0xe4] sm:$0xff]
  %v3613 = vld [vmem:[%s2 + $0xec] sm:$0xf]
  %v3614 = vld [vmem:[%s2 + $0xf0] sm:$0xff]
  %v3615 = vld [vmem:[%s2 + $0xf8] sm:$0xf]
  %v3616 = vld [vmem:[%s2 + $0xfc] sm:$0xff]
  %v3617 = vld [vmem:[%s2 + $0x104] sm:$0xf]
  %v3618 = vld [vmem:[%s2 + $0x108] sm:$0xff]
  %v3619 = vld [vmem:[%s2 + $0x110] sm:$0xf]
  %v3620 = vld [vmem:[%s2 + $0x114] sm:$0xff]
  %v3621 = vld [vmem:[%s2 + $0x11c] sm:$0xf]
  %v3622 = vld [vmem:[%s2 + $0x120] sm:$0xff]
  %v3623 = vld [vmem:[%s2 + $0x128] sm:$0xf]
  %v3624 = vld [vmem:[%s2 + $0x12c] sm:$0xff]
  %v3625 = vld [vmem:[%s2 + $0x134] sm:$0xf]
  %v3626 = vld [vmem:[%s2 + $0x138] sm:$0xff]
  %v3627 = vld [vmem:[%s2 + $0x140] sm:$0xf]
  %v3628 = vld [vmem:[%s2 + $0x144] sm:$0xff]
  %v3629 = vld [vmem:[%s2 + $0x14c] sm:$0xf]
  %v3630 = vld [vmem:[%s2 + $0x150] sm:$0xff]
  %v3631 = vld [vmem:[%s2 + $0x158] sm:$0xf]
  %v3632 = vld [vmem:[%s2 + $0x15c] sm:$0xff]
  %v3633 = vld [vmem:[%s2 + $0x164] sm:$0xf]
  %v3634 = vld [vmem:[%s2 + $0x168] sm:$0xff]
  %v3635 = vld [vmem:[%s2 + $0x170] sm:$0xf]
  %v3636 = vld [vmem:[%s2 + $0x174] sm:$0xff]
  %v3637 = vld [vmem:[%s2 + $0x17c] sm:$0xf]
  %v3702 = vunpack.c.l.b16 %v3574
  %v3703 = vunpack.c.h.b16 %v3574
  %v3704 = vunpack.c.l.b16 %v3575
  %v3705 = vunpack.c.l.b16 %v3576
  %v3706 = vunpack.c.h.b16 %v3576
  %v3707 = vunpack.c.l.b16 %v3577
  %v3708 = vunpack.c.l.b16 %v3578
  %v3709 = vunpack.c.h.b16 %v3578
  %v3710 = vunpack.c.l.b16 %v3579
  %v3711 = vunpack.c.l.b16 %v3580
  %v3712 = vunpack.c.h.b16 %v3580
  %v3713 = vunpack.c.l.b16 %v3581
  %v3714 = vunpack.c.l.b16 %v3582
  %v3715 = vunpack.c.h.b16 %v3582
  %v3716 = vunpack.c.l.b16 %v3583
  %v3717 = vunpack.c.l.b16 %v3584
  %v3718 = vunpack.c.h.b16 %v3584
  %v3719 = vunpack.c.l.b16 %v3585
  %v3720 = vunpack.c.l.b16 %v3586
  %v3721 = vunpack.c.h.b16 %v3586
  %v3722 = vunpack.c.l.b16 %v3587
  %v3723 = vunpack.c.l.b16 %v3588
  %v3724 = vunpack.c.h.b16 %v3588
  %v3725 = vunpack.c.l.b16 %v3589
  %v3726 = vunpack.c.l.b16 %v3590
  %v3727 = vunpack.c.h.b16 %v3590
  %v3728 = vunpack.c.l.b16 %v3591
  %v3729 = vunpack.c.l.b16 %v3592
  %v3730 = vunpack.c.h.b16 %v3592
  %v3731 = vunpack.c.l.b16 %v3593
  %v3732 = vunpack.c.l.b16 %v3594
  %v3733 = vunpack.c.h.b16 %v3594
  %v3734 = vunpack.c.l.b16 %v3595
  %v3735 = vunpack.c.l.b16 %v3596
  %v3736 = vunpack.c.h.b16 %v3596
  %v3737 = vunpack.c.l.b16 %v3597
  %v3738 = vunpack.c.l.b16 %v3598
  %v3739 = vunpack.c.h.b16 %v3598
  %v3740 = vunpack.c.l.b16 %v3599
  %v3741 = vunpack.c.l.b16 %v3600
  %v3742 = vunpack.c.h.b16 %v3600
  %v3743 = vunpack.c.l.b16 %v3601
  %v3744 = vunpack.c.l.b16 %v3602
  %v3745 = vunpack.c.h.b16 %v3602
  %v3746 = vunpack.c.l.b16 %v3603
  %v3747 = vunpack.c.l.b16 %v3604
  %v3748 = vunpack.c.h.b16 %v3604
  %v3749 = vunpack.c.l.b16 %v3605
  %v3750 = vunpack.c.l.b16 %v3606
  %v3751 = vunpack.c.h.b16 %v3606
  %v3752 = vunpack.c.l.b16 %v3607
  %v3753 = vunpack.c.l.b16 %v3608
  %v3754 = vunpack.c.h.b16 %v3608
  %v3755 = vunpack.c.l.b16 %v3609
  %v3756 = vunpack.c.l.b16 %v3610
  %v3757 = vunpack.c.h.b16 %v3610
  %v3758 = vunpack.c.l.b16 %v3611
  %v3759 = vunpack.c.l.b16 %v3612
  %v3760 = vunpack.c.h.b16 %v3612
  %v3761 = vunpack.c.l.b16 %v3613
  %v3762 = vunpack.c.l.b16 %v3614
  %v3763 = vunpack.c.h.b16 %v3614
  %v3764 = vunpack.c.l.b16 %v3615
  %v3765 = vunpack.c.l.b16 %v3616
  %v3766 = vunpack.c.h.b16 %v3616
  %v3767 = vunpack.c.l.b16 %v3617
  %v3768 = vunpack.c.l.b16 %v3618
  %v3769 = vunpack.c.h.b16 %v3618
  %v3770 = vunpack.c.l.b16 %v3619
  %v3771 = vunpack.c.l.b16 %v3620
  %v3772 = vunpack.c.h.b16 %v3620
  %v3773 = vunpack.c.l.b16 %v3621
  %v3774 = vunpack.c.l.b16 %v3622
  %v3775 = vunpack.c.h.b16 %v3622
  %v3776 = vunpack.c.l.b16 %v3623
  %v3777 = vunpack.c.l.b16 %v3624
  %v3778 = vunpack.c.h.b16 %v3624
  %v3779 = vunpack.c.l.b16 %v3625
  %v3780 = vunpack.c.l.b16 %v3626
  %v3781 = vunpack.c.h.b16 %v3626
  %v3782 = vunpack.c.l.b16 %v3627
  %v3783 = vunpack.c.l.b16 %v3628
  %v3784 = vunpack.c.h.b16 %v3628
  %v3785 = vunpack.c.l.b16 %v3629
  %v3786 = vunpack.c.l.b16 %v3630
  %v3787 = vunpack.c.h.b16 %v3630
  %v3788 = vunpack.c.l.b16 %v3631
  %v3789 = vunpack.c.l.b16 %v3632
  %v3790 = vunpack.c.h.b16 %v3632
  %v3791 = vunpack.c.l.b16 %v3633
  %v3792 = vunpack.c.l.b16 %v3634
  %v3793 = vunpack.c.h.b16 %v3634
  %v3794 = vunpack.c.l.b16 %v3635
  %v3795 = vunpack.c.l.b16 %v3636
  %v3796 = vunpack.c.h.b16 %v3636
  %v3797 = vunpack.c.l.b16 %v3637
  %v3798 = vpack.c.b16 %v3705, %v3702
  %v3799 = vpack.c.b16 %v3706, %v3703
  %v3800 = vpack.c.b16 %v3707, %v3704
  %v3801 = vpack.c.b16 %v3711, %v3708
  %v3802 = vpack.c.b16 %v3712, %v3709
  %v3803 = vpack.c.b16 %v3713, %v3710
  %v3804 = vpack.c.b16 %v3717, %v3714
  %v3805 = vpack.c.b16 %v3718, %v3715
  %v3806 = vpack.c.b16 %v3719, %v3716
  %v3807 = vpack.c.b16 %v3723, %v3720
  %v3808 = vpack.c.b16 %v3724, %v3721
  %v3809 = vpack.c.b16 %v3725, %v3722
  %v3810 = vpack.c.b16 %v3729, %v3726
  %v3811 = vpack.c.b16 %v3730, %v3727
  %v3812 = vpack.c.b16 %v3731, %v3728
  %v3813 = vpack.c.b16 %v3735, %v3732
  %v3814 = vpack.c.b16 %v3736, %v3733
  %v3815 = vpack.c.b16 %v3737, %v3734
  %v3816 = vpack.c.b16 %v3741, %v3738
  %v3817 = vpack.c.b16 %v3742, %v3739
  %v3818 = vpack.c.b16 %v3743, %v3740
  %v3819 = vpack.c.b16 %v3747, %v3744
  %v3820 = vpack.c.b16 %v3748, %v3745
  %v3821 = vpack.c.b16 %v3749, %v3746
  %v3822 = vpack.c.b16 %v3753, %v3750
  %v3823 = vpack.c.b16 %v3754, %v3751
  %v3824 = vpack.c.b16 %v3755, %v3752
  %v3825 = vpack.c.b16 %v3759, %v3756
  %v3826 = vpack.c.b16 %v3760, %v3757
  %v3827 = vpack.c.b16 %v3761, %v3758
  %v3828 = vpack.c.b16 %v3765, %v3762
  %v3829 = vpack.c.b16 %v3766, %v3763
  %v3830 = vpack.c.b16 %v3767, %v3764
  %v3831 = vpack.c.b16 %v3771, %v3768
  %v3832 = vpack.c.b16 %v3772, %v3769
  %v3833 = vpack.c.b16 %v3773, %v3770
  %v3834 = vpack.c.b16 %v3777, %v3774
  %v3835 = vpack.c.b16 %v3778, %v3775
  %v3836 = vpack.c.b16 %v3779, %v3776
  %v3837 = vpack.c.b16 %v3783, %v3780
  %v3838 = vpack.c.b16 %v3784, %v3781
  %v3839 = vpack.c.b16 %v3785, %v3782
  %v3840 = vpack.c.b16 %v3789, %v3786
  %v3841 = vpack.c.b16 %v3790, %v3787
  %v3842 = vpack.c.b16 %v3791, %v3788
  %v3843 = vpack.c.b16 %v3795, %v3792
  %v3844 = vpack.c.b16 %v3796, %v3793
  %v3845 = vpack.c.b16 %v3797, %v3794
  %3894 = vmatprep.subr.bf16.mxu0 %v3799
  %3895 = vmatpush1.bf16.msra.mxu0 %v3798
  %3896 = vmatprep.subr.bf16.mxu0 %v3802
  %3897 = vmatpush1.bf16.msra.mxu0 %v3801
  %3898 = vmatprep.subr.bf16.mxu0 %v3805
  %3899 = vmatpush1.bf16.msra.mxu0 %v3804
  %3900 = vmatprep.subr.bf16.mxu0 %v3808
  %3901 = vmatpush1.bf16.msra.mxu0 %v3807
  %3902 = vmatprep.subr.bf16.mxu0 %v3811
  %3903 = vmatpush1.bf16.msra.mxu0 %v3810
  %3904 = vmatprep.subr.bf16.mxu0 %v3814
  %3905 = vmatpush1.bf16.msra.mxu0 %v3813
  %3906 = vmatprep.subr.bf16.mxu0 %v3817
  %3907 = vmatpush1.bf16.msra.mxu0 %v3816
  %3908 = vmatprep.subr.bf16.mxu0 %v3820
  %3909 = vmatpush1.bf16.msra.mxu0 %v3819
  %3910 = vmatprep.subr.bf16.mxu0 %v3823
  %3911 = vmatpush1.bf16.msra.mxu0 %v3822
  %3912 = vmatprep.subr.bf16.mxu0 %v3826
  %3913 = vmatpush1.bf16.msra.mxu0 %v3825
  %3914 = vmatprep.subr.bf16.mxu0 %v3829
  %3915 = vmatpush1.bf16.msra.mxu0 %v3828
  %3916 = vmatprep.subr.bf16.mxu0 %v3832
  %3917 = vmatpush1.bf16.msra.mxu0 %v3831
  %3918 = vmatprep.subr.bf16.mxu0 %v3835
  %3919 = vmatpush1.bf16.msra.mxu0 %v3834
  %3920 = vmatprep.subr.bf16.mxu0 %v3838
  %3921 = vmatpush1.bf16.msra.mxu0 %v3837
  %3922 = vmatprep.subr.bf16.mxu0 %v3841
  %3923 = vmatpush1.bf16.msra.mxu0 %v3840
  %3924 = vmatprep.subr.bf16.mxu0 %v3844
  %3925 = vmatpush1.bf16.msra.mxu0 %v3843
  %3926 = vmatprep.mubr.bf16.mxu0 %v3571
  %3927 = vmatmul.mubr.bf16.gmra.mrb[0].mxu0 %v3570
  %v3928 = vpop.f32.mrb[0].mxu0
  %v3929 = vadd.f32 0.0, %v3928
  %v3930 = vpop.f32.mrb[0].mxu0
  %v3931 = vadd.f32 0.0, %v3930
  %v3932 = vpop.f32.mrb[0].mxu0
  %v3933 = vadd.f32 0.0, %v3932
  %v3934 = vpop.f32.mrb[0].mxu0
  %v3935 = vadd.f32 0.0, %v3934
  %3936 = vmatprep.mubr.bf16.mxu0 %v3573
  %3937 = vmatmul.mubr.bf16.gmra.mrb[0].mxu0 %v3572
  %v3938 = vpop.f32.mrb[0].mxu0
  %v3939 = vadd.f32 0.0, %v3938
  %v3940 = vpop.f32.mrb[0].mxu0
  %v3941 = vadd.f32 0.0, %v3940
  %v3942 = vpop.f32.mrb[0].mxu0
  %v3943 = vadd.f32 0.0, %v3942
  %v3944 = vpop.f32.mrb[0].mxu0
  %v3945 = vadd.f32 0.0, %v3944
  %3946 = vdwg.mxu0
  %3947 = vmatprep.subr.bf16.mxu0 0
  %3948 = vmatpush1.bf16.msra.mxu0 %v3800
  %3949 = vmatprep.subr.bf16.mxu0 0
  %3950 = vmatpush1.bf16.msra.mxu0 %v3803
  %3951 = vmatprep.subr.bf16.mxu0 0
  %3952 = vmatpush1.bf16.msra.mxu0 %v3806
  %3953 = vmatprep.subr.bf16.mxu0 0
  %3954 = vmatpush1.bf16.msra.mxu0 %v3809
  %3955 = vmatprep.subr.bf16.mxu0 0
  %3956 = vmatpush1.bf16.msra.mxu0 %v3812
  %3957 = vmatprep.subr.bf16.mxu0 0
  %3958 = vmatpush1.bf16.msra.mxu0 %v3815
  %3959 = vmatprep.subr.bf16.mxu0 0
  %3960 = vmatpush1.bf16.msra.mxu0 %v3818
  %3961 = vmatprep.subr.bf16.mxu0 0
  %3962 = vmatpush1.bf16.msra.mxu0 %v3821
  %3963 = vmatprep.subr.bf16.mxu0 0
  %3964 = vmatpush1.bf16.msra.mxu0 %v3824
  %3965 = vmatprep.subr.bf16.mxu0 0
  %3966 = vmatpush1.bf16.msra.mxu0 %v3827
  %3967 = vmatprep.subr.bf16.mxu0 0
  %3968 = vmatpush1.bf16.msra.mxu0 %v3830
  %3969 = vmatprep.subr.bf16.mxu0 0
  %3970 = vmatpush1.bf16.msra.mxu0 %v3833
  %3971 = vmatprep.subr.bf16.mxu0 0
  %3972 = vmatpush1.bf16.msra.mxu0 %v3836
  %3973 = vmatprep.subr.bf16.mxu0 0
  %3974 = vmatpush1.bf16.msra.mxu0 %v3839
  %3975 = vmatprep.subr.bf16.mxu0 0
  %3976 = vmatpush1.bf16.msra.mxu0 %v3842
  %3977 = vmatprep.subr.bf16.mxu0 0
  %3978 = vmatpush1.bf16.msra.mxu0 %v3845
  %3979 = vmatprep.mubr.bf16.mxu0 %v3571
  %3980 = vmatmul.mubr.bf16.gmra.mrb[0].mxu0 %v3570
  %v3981 = vpop.f32.mrb[0].mxu0
  %v3982 = vadd.f32 0.0, %v3981
  %v3983 = vpop.f32.mrb[0].mxu0
  %v3984 = vpop.f32.mrb[0].mxu0
  %v3985 = vadd.f32 0.0, %v3984
  %v3986 = vpop.f32.mrb[0].mxu0
  %3987 = vmatprep.mubr.bf16.mxu0 %v3573
  %3988 = vmatmul.mubr.bf16.gmra.mrb[0].mxu0 %v3572
  %v3989 = vpop.f32.mrb[0].mxu0
  %v3990 = vadd.f32 0.0, %v3989
  %v3991 = vpop.f32.mrb[0].mxu0
  %v3992 = vpop.f32.mrb[0].mxu0
  %v3993 = vadd.f32 0.0, %v3992
  %v3994 = vpop.f32.mrb[0].mxu0
  %3995 = vdwg.mxu0
  %v3996 = vadd.f32 %v3545, %v3929
  %v3997 = vadd.f32 %v3546, %v3931
  %v3998 = vadd.f32 %v3547, %v3982
  %v3999 = vadd.f32 %v3548, %v3933
  %v4000 = vadd.f32 %v3549, %v3935
  %v4001 = vadd.f32 %v3550, %v3985
  %v4002 = vadd.f32 %v3556, %v3939
  %v4003 = vadd.f32 %v3557, %v3941
  %v4004 = vadd.f32 %v3558, %v3990
  %v4005 = vadd.f32 %v3559, %v3943
  %v4006 = vadd.f32 %v3560, %v3945
  %v4007 = vadd.f32 %v3561, %v3993
  %v4008 = vxor.u32 %v3996, 2147483648
  %v4009 = vxor.u32 %v3999, 2147483648
  %v4010 = vxor.u32 %v4002, 2147483648
  %v4011 = vxor.u32 %v4005, 2147483648
  %v4012 = vmul.f32 %v4008, 1.442695
  %v4013 = vpow.pop %v4012
  %v4014 = vmul.f32 %v4009, 1.442695
  %v4015 = vpow.pop %v4014
  %v4016 = vmul.f32 %v4010, 1.442695
  %v4017 = vpow.pop %v4016
  %v4018 = vmul.f32 %v4011, 1.442695
  %v4019 = vpow.pop %v4018
  %v4020 = vadd.f32 %v4013, 1.0
  %v4021 = vadd.f32 %v4015, 1.0
  %v4022 = vadd.f32 %v4017, 1.0
  %v4023 = vadd.f32 %v4019, 1.0
  %v4024 = vrcp.pop %v4020
  %v4025 = vmul.f32 1.0, %v4024
  %v4026 = vrcp.pop %v4021
  %v4027 = vmul.f32 1.0, %v4026
  %v4028 = vrcp.pop %v4022
  %v4029 = vmul.f32 1.0, %v4028
  %v4030 = vrcp.pop %v4023
  %v4031 = vmul.f32 1.0, %v4030
  %v4032 = vxor.u32 %v3997, 2147483648
  %v4033 = vxor.u32 %v4000, 2147483648
  %v4034 = vxor.u32 %v4003, 2147483648
  %v4035 = vxor.u32 %v4006, 2147483648
  %v4036 = vmul.f32 %v4032, 1.442695
  %v4037 = vpow.pop %v4036
  %v4038 = vmul.f32 %v4033, 1.442695
  %v4039 = vpow.pop %v4038
  %v4040 = vmul.f32 %v4034, 1.442695
  %v4041 = vpow.pop %v4040
  %v4042 = vmul.f32 %v4035, 1.442695
  %v4043 = vpow.pop %v4042
  %v4044 = vadd.f32 %v4037, 1.0
  %v4045 = vadd.f32 %v4039, 1.0
  %v4046 = vadd.f32 %v4041, 1.0
  %v4047 = vadd.f32 %v4043, 1.0
  %v4048 = vrcp.pop %v4044
  %v4049 = vmul.f32 1.0, %v4048
  %v4050 = vrcp.pop %v4045
  %v4051 = vmul.f32 1.0, %v4050
  %v4052 = vrcp.pop %v4046
  %v4053 = vmul.f32 1.0, %v4052
  %v4054 = vrcp.pop %v4047
  %v4055 = vmul.f32 1.0, %v4054
  %v4056 = vtanh.pop %v3998
  %v4057 = vtanh.pop %v4001
  %v4058 = vtanh.pop %v4004
  %v4059 = vtanh.pop %v4007
  %v4060 = vsub.f32 1.0, %v4025
  %v4061 = vsub.f32 1.0, %v4027
  %v4062 = vsub.f32 1.0, %v4029
  %v4063 = vsub.f32 1.0, %v4031
  %v4064 = vld [vmem:[#allocation3] sm:$0xff]
  %v4065 = vld [vmem:[#allocation3 + $0x8] sm:$0xff]
  %v4066 = vld [vmem:[#allocation3 + $0x10] sm:$0xff]
  %v4067 = vld [vmem:[#allocation3 + $0x18] sm:$0xff]
  %v4068 = vmul.f32 %v4060, %v4064
  %v4069 = vmul.f32 %v4061, %v4065
  %v4070 = vmul.f32 %v4062, %v4066
  %v4071 = vmul.f32 %v4063, %v4067
  %v4072 = vmul.f32 %v4025, %v4056
  %v4073 = vmul.f32 %v4027, %v4057
  %v4074 = vmul.f32 %v4029, %v4058
  %v4075 = vmul.f32 %v4031, %v4059
  %v4076 = vadd.f32 %v4068, %v4072
  %v4077 = vadd.f32 %v4069, %v4073
  %v4078 = vadd.f32 %v4070, %v4074
  %v4079 = vadd.f32 %v4071, %v4075
  %v4080 = vtanh.pop %v4076
  %v4081 = vtanh.pop %v4077
  %v4082 = vtanh.pop %v4078
  %v4083 = vtanh.pop %v4079
  %v4084 = vmul.f32 %v4049, %v4080
  %v4085 = vmul.f32 %v4051, %v4081
  %v4086 = vmul.f32 %v4053, %v4082
  %v4087 = vmul.f32 %v4055, %v4083
  %4088 = vst [vmem:[#allocation3] sm:$0xff] %v4076
  %4089 = vst [vmem:[#allocation3 + $0x8] sm:$0xff] %v4077
  %4090 = vst [vmem:[#allocation3 + $0x10] sm:$0xff] %v4078
  %4091 = vst [vmem:[#allocation3 + $0x18] sm:$0xff] %v4079
  %4092 = vst [vmem:[#allocation2] sm:$0xff] %v4084
  %4093 = vst [vmem:[#allocation2 + $0x10] sm:$0xff] %v4085
  %4094 = vst [vmem:[#allocation2 + $0x28] sm:$0xff] %v4086
  %4095 = vst [vmem:[#allocation2 + $0x38] sm:$0xff] %v4087
  %v4096 = vpack.c.bf16 %v4085, %v4084
  %v4097 = vpack.c.bf16 %v4087, %v4086
  %v4099 = vunpack.c.l.b16 %v4096
  %v4100 = vunpack.c.h.b16 %v4096
  %v4101 = vpack.c.b16 %v4099, %v4099
  %v4102 = vpack.c.b16 %v4100, %v4100
  %s4105 = scalar_lea.vmem %s3, 48
  %4106 = vst [vmem:[%s4105] sm:$0xf] %v4101
  %4107 = vst [vmem:[%s4105 + $0x4] sm:$0xf] %v4102
  %v4109 = vunpack.c.l.b16 %v4097
  %v4110 = vunpack.c.h.b16 %v4097
  %v4111 = vpack.c.b16 %v4109, %v4109
  %v4112 = vpack.c.b16 %v4110, %v4110
  %s4115 = scalar_lea.vmem %s54, 8
  %4116 = vst [vmem:[%s4115] sm:$0xf] %v4111
  %4117 = vst [vmem:[%s4115 + $0x4] sm:$0xf] %v4112
  %s4118 = scalar_lea.vmem %s0, 168
  %v4119 = vld [vmem:[%s4118] sm:$0xff]
  %v4120 = vld [vmem:[%s4118 + $0x8] sm:$0xf]
  %v4121 = vld [vmem:[%s4118 + $0xc] sm:$0xff]
  %v4122 = vld [vmem:[%s4118 + $0x14] sm:$0xf]
  %v4123 = vunpack.c.l.bf16 %v4119
  %v4124 = vunpack.c.h.bf16 %v4119
  %v4125 = vunpack.c.l.bf16 %v4120
  %v4126 = vunpack.c.l.bf16 %v4121
  %v4127 = vunpack.c.h.bf16 %v4121
  %v4128 = vunpack.c.l.bf16 %v4122
  %v4129 = vld [vmem:[%s45] sm:$0xff]
  %v4130 = vld [vmem:[%s45 + $0x8] sm:$0xf]
  %v4131 = vld [vmem:[%s45 + $0xc] sm:$0xff]
  %v4132 = vld [vmem:[%s45 + $0x14] sm:$0xf]
  %v4133 = vunpack.c.l.bf16 %v4129
  %v4134 = vunpack.c.h.bf16 %v4129
  %v4135 = vunpack.c.l.bf16 %v4130
  %v4136 = vunpack.c.l.bf16 %v4131
  %v4137 = vunpack.c.h.bf16 %v4131
  %v4138 = vunpack.c.l.bf16 %v4132
  %v4139 = vld [vmem:[#allocation2] sm:$0xff]
  %v4140 = vld [vmem:[#allocation2 + $0x8] sm:$0xff]
  %v4141 = vld [vmem:[#allocation2 + $0x10] sm:$0xff]
  %v4142 = vld [vmem:[#allocation2 + $0x18] sm:$0xff]
  %v4143 = vld [vmem:[#allocation2 + $0x20] sm:$0xff]
  %v4144 = vld [vmem:[#allocation2 + $0x28] sm:$0xff]
  %v4145 = vld [vmem:[#allocation2 + $0x30] sm:$0xff]
  %v4146 = vld [vmem:[#allocation2 + $0x38] sm:$0xff]
  %v4147 = vpack.c.bf16 %v4141, %v4139
  %v4148 = vpack.c.bf16 %v4142, %v4140
  %v4149 = vpack.c.bf16 %v4145, %v4143
  %v4150 = vpack.c.bf16 %v4146, %v4144
  %v4151 = vld [vmem:[%s2] sm:$0xff]
  %v4152 = vld [vmem:[%s2 + $0x8] sm:$0xf]
  %v4153 = vld [vmem:[%s2 + $0xc] sm:$0xff]
  %v4154 = vld [vmem:[%s2 + $0x14] sm:$0xf]
  %v4155 = vld [vmem:[%s2 + $0x18] sm:$0xff]
  %v4156 = vld [vmem:[%s2 + $0x20] sm:$0xf]
  %v4157 = vld [vmem:[%s2 + $0x24] sm:$0xff]
  %v4158 = vld [vmem:[%s2 + $0x2c] sm:$0xf]
  %v4159 = vld [vmem:[%s2 + $0x30] sm:$0xff]
  %v4160 = vld [vmem:[%s2 + $0x38] sm:$0xf]
  %v4161 = vld [vmem:[%s2 + $0x3c] sm:$0xff]
  %v4162 = vld [vmem:[%s2 + $0x44] sm:$0xf]
  %v4163 = vld [vmem:[%s2 + $0x48] sm:$0xff]
  %v4164 = vld [vmem:[%s2 + $0x50] sm:$0xf]
  %v4165 = vld [vmem:[%s2 + $0x54] sm:$0xff]
  %v4166 = vld [vmem:[%s2 + $0x5c] sm:$0xf]
  %v4167 = vld [vmem:[%s2 + $0x60] sm:$0xff]
  %v4168 = vld [vmem:[%s2 + $0x68] sm:$0xf]
  %v4169 = vld [vmem:[%s2 + $0x6c] sm:$0xff]
  %v4170 = vld [vmem:[%s2 + $0x74] sm:$0xf]
  %v4171 = vld [vmem:[%s2 + $0x78] sm:$0xff]
  %v4172 = vld [vmem:[%s2 + $0x80] sm:$0xf]
  %v4173 = vld [vmem:[%s2 + $0x84] sm:$0xff]
  %v4174 = vld [vmem:[%s2 + $0x8c] sm:$0xf]
  %v4175 = vld [vmem:[%s2 + $0x90] sm:$0xff]
  %v4176 = vld [vmem:[%s2 + $0x98] sm:$0xf]
  %v4177 = vld [vmem:[%s2 + $0x9c] sm:$0xff]
  %v4178 = vld [vmem:[%s2 + $0xa4] sm:$0xf]
  %v4179 = vld [vmem:[%s2 + $0xa8] sm:$0xff]
  %v4180 = vld [vmem:[%s2 + $0xb0] sm:$0xf]
  %v4181 = vld [vmem:[%s2 + $0xb4] sm:$0xff]
  %v4182 = vld [vmem:[%s2 + $0xbc] sm:$0xf]
  %v4183 = vld [vmem:[%s2 + $0xc0] sm:$0xff]
  %v4184 = vld [vmem:[%s2 + $0xc8] sm:$0xf]
  %v4185 = vld [vmem:[%s2 + $0xcc] sm:$0xff]
  %v4186 = vld [vmem:[%s2 + $0xd4] sm:$0xf]
  %v4187 = vld [vmem:[%s2 + $0xd8] sm:$0xff]
  %v4188 = vld [vmem:[%s2 + $0xe0] sm:$0xf]
  %v4189 = vld [vmem:[%s2 + $0xe4] sm:$0xff]
  %v4190 = vld [vmem:[%s2 + $0xec] sm:$0xf]
  %v4191 = vld [vmem:[%s2 + $0xf0] sm:$0xff]
  %v4192 = vld [vmem:[%s2 + $0xf8] sm:$0xf]
  %v4193 = vld [vmem:[%s2 + $0xfc] sm:$0xff]
  %v4194 = vld [vmem:[%s2 + $0x104] sm:$0xf]
  %v4195 = vld [vmem:[%s2 + $0x108] sm:$0xff]
  %v4196 = vld [vmem:[%s2 + $0x110] sm:$0xf]
  %v4197 = vld [vmem:[%s2 + $0x114] sm:$0xff]
  %v4198 = vld [vmem:[%s2 + $0x11c] sm:$0xf]
  %v4199 = vld [vmem:[%s2 + $0x120] sm:$0xff]
  %v4200 = vld [vmem:[%s2 + $0x128] sm:$0xf]
  %v4201 = vld [vmem:[%s2 + $0x12c] sm:$0xff]
  %v4202 = vld [vmem:[%s2 + $0x134] sm:$0xf]
  %v4203 = vld [vmem:[%s2 + $0x138] sm:$0xff]
  %v4204 = vld [vmem:[%s2 + $0x140] sm:$0xf]
  %v4205 = vld [vmem:[%s2 + $0x144] sm:$0xff]
  %v4206 = vld [vmem:[%s2 + $0x14c] sm:$0xf]
  %v4207 = vld [vmem:[%s2 + $0x150] sm:$0xff]
  %v4208 = vld [vmem:[%s2 + $0x158] sm:$0xf]
  %v4209 = vld [vmem:[%s2 + $0x15c] sm:$0xff]
  %v4210 = vld [vmem:[%s2 + $0x164] sm:$0xf]
  %v4211 = vld [vmem:[%s2 + $0x168] sm:$0xff]
  %v4212 = vld [vmem:[%s2 + $0x170] sm:$0xf]
  %v4213 = vld [vmem:[%s2 + $0x174] sm:$0xff]
  %v4214 = vld [vmem:[%s2 + $0x17c] sm:$0xf]
  %v4279 = vunpack.c.l.b16 %v4151
  %v4280 = vunpack.c.h.b16 %v4151
  %v4281 = vunpack.c.l.b16 %v4152
  %v4282 = vunpack.c.l.b16 %v4153
  %v4283 = vunpack.c.h.b16 %v4153
  %v4284 = vunpack.c.l.b16 %v4154
  %v4285 = vunpack.c.l.b16 %v4155
  %v4286 = vunpack.c.h.b16 %v4155
  %v4287 = vunpack.c.l.b16 %v4156
  %v4288 = vunpack.c.l.b16 %v4157
  %v4289 = vunpack.c.h.b16 %v4157
  %v4290 = vunpack.c.l.b16 %v4158
  %v4291 = vunpack.c.l.b16 %v4159
  %v4292 = vunpack.c.h.b16 %v4159
  %v4293 = vunpack.c.l.b16 %v4160
  %v4294 = vunpack.c.l.b16 %v4161
  %v4295 = vunpack.c.h.b16 %v4161
  %v4296 = vunpack.c.l.b16 %v4162
  %v4297 = vunpack.c.l.b16 %v4163
  %v4298 = vunpack.c.h.b16 %v4163
  %v4299 = vunpack.c.l.b16 %v4164
  %v4300 = vunpack.c.l.b16 %v4165
  %v4301 = vunpack.c.h.b16 %v4165
  %v4302 = vunpack.c.l.b16 %v4166
  %v4303 = vunpack.c.l.b16 %v4167
  %v4304 = vunpack.c.h.b16 %v4167
  %v4305 = vunpack.c.l.b16 %v4168
  %v4306 = vunpack.c.l.b16 %v4169
  %v4307 = vunpack.c.h.b16 %v4169
  %v4308 = vunpack.c.l.b16 %v4170
  %v4309 = vunpack.c.l.b16 %v4171
  %v4310 = vunpack.c.h.b16 %v4171
  %v4311 = vunpack.c.l.b16 %v4172
  %v4312 = vunpack.c.l.b16 %v4173
  %v4313 = vunpack.c.h.b16 %v4173
  %v4314 = vunpack.c.l.b16 %v4174
  %v4315 = vunpack.c.l.b16 %v4175
  %v4316 = vunpack.c.h.b16 %v4175
  %v4317 = vunpack.c.l.b16 %v4176
  %v4318 = vunpack.c.l.b16 %v4177
  %v4319 = vunpack.c.h.b16 %v4177
  %v4320 = vunpack.c.l.b16 %v4178
  %v4321 = vunpack.c.l.b16 %v4179
  %v4322 = vunpack.c.h.b16 %v4179
  %v4323 = vunpack.c.l.b16 %v4180
  %v4324 = vunpack.c.l.b16 %v4181
  %v4325 = vunpack.c.h.b16 %v4181
  %v4326 = vunpack.c.l.b16 %v4182
  %v4327 = vunpack.c.l.b16 %v4183
  %v4328 = vunpack.c.h.b16 %v4183
  %v4329 = vunpack.c.l.b16 %v4184
  %v4330 = vunpack.c.l.b16 %v4185
  %v4331 = vunpack.c.h.b16 %v4185
  %v4332 = vunpack.c.l.b16 %v4186
  %v4333 = vunpack.c.l.b16 %v4187
  %v4334 = vunpack.c.h.b16 %v4187
  %v4335 = vunpack.c.l.b16 %v4188
  %v4336 = vunpack.c.l.b16 %v4189
  %v4337 = vunpack.c.h.b16 %v4189
  %v4338 = vunpack.c.l.b16 %v4190
  %v4339 = vunpack.c.l.b16 %v4191
  %v4340 = vunpack.c.h.b16 %v4191
  %v4341 = vunpack.c.l.b16 %v4192
  %v4342 = vunpack.c.l.b16 %v4193
  %v4343 = vunpack.c.h.b16 %v4193
  %v4344 = vunpack.c.l.b16 %v4194
  %v4345 = vunpack.c.l.b16 %v4195
  %v4346 = vunpack.c.h.b16 %v4195
  %v4347 = vunpack.c.l.b16 %v4196
  %v4348 = vunpack.c.l.b16 %v4197
  %v4349 = vunpack.c.h.b16 %v4197
  %v4350 = vunpack.c.l.b16 %v4198
  %v4351 = vunpack.c.l.b16 %v4199
  %v4352 = vunpack.c.h.b16 %v4199
  %v4353 = vunpack.c.l.b16 %v4200
  %v4354 = vunpack.c.l.b16 %v4201
  %v4355 = vunpack.c.h.b16 %v4201
  %v4356 = vunpack.c.l.b16 %v4202
  %v4357 = vunpack.c.l.b16 %v4203
  %v4358 = vunpack.c.h.b16 %v4203
  %v4359 = vunpack.c.l.b16 %v4204
  %v4360 = vunpack.c.l.b16 %v4205
  %v4361 = vunpack.c.h.b16 %v4205
  %v4362 = vunpack.c.l.b16 %v4206
  %v4363 = vunpack.c.l.b16 %v4207
  %v4364 = vunpack.c.h.b16 %v4207
  %v4365 = vunpack.c.l.b16 %v4208
  %v4366 = vunpack.c.l.b16 %v4209
  %v4367 = vunpack.c.h.b16 %v4209
  %v4368 = vunpack.c.l.b16 %v4210
  %v4369 = vunpack.c.l.b16 %v4211
  %v4370 = vunpack.c.h.b16 %v4211
  %v4371 = vunpack.c.l.b16 %v4212
  %v4372 = vunpack.c.l.b16 %v4213
  %v4373 = vunpack.c.h.b16 %v4213
  %v4374 = vunpack.c.l.b16 %v4214
  %v4375 = vpack.c.b16 %v4282, %v4279
  %v4376 = vpack.c.b16 %v4283, %v4280
  %v4377 = vpack.c.b16 %v4284, %v4281
  %v4378 = vpack.c.b16 %v4288, %v4285
  %v4379 = vpack.c.b16 %v4289, %v4286
  %v4380 = vpack.c.b16 %v4290, %v4287
  %v4381 = vpack.c.b16 %v4294, %v4291
  %v4382 = vpack.c.b16 %v4295, %v4292
  %v4383 = vpack.c.b16 %v4296, %v4293
  %v4384 = vpack.c.b16 %v4300, %v4297
  %v4385 = vpack.c.b16 %v4301, %v4298
  %v4386 = vpack.c.b16 %v4302, %v4299
  %v4387 = vpack.c.b16 %v4306, %v4303
  %v4388 = vpack.c.b16 %v4307, %v4304
  %v4389 = vpack.c.b16 %v4308, %v4305
  %v4390 = vpack.c.b16 %v4312, %v4309
  %v4391 = vpack.c.b16 %v4313, %v4310
  %v4392 = vpack.c.b16 %v4314, %v4311
  %v4393 = vpack.c.b16 %v4318, %v4315
  %v4394 = vpack.c.b16 %v4319, %v4316
  %v4395 = vpack.c.b16 %v4320, %v4317
  %v4396 = vpack.c.b16 %v4324, %v4321
  %v4397 = vpack.c.b16 %v4325, %v4322
  %v4398 = vpack.c.b16 %v4326, %v4323
  %v4399 = vpack.c.b16 %v4330, %v4327
  %v4400 = vpack.c.b16 %v4331, %v4328
  %v4401 = vpack.c.b16 %v4332, %v4329
  %v4402 = vpack.c.b16 %v4336, %v4333
  %v4403 = vpack.c.b16 %v4337, %v4334
  %v4404 = vpack.c.b16 %v4338, %v4335
  %v4405 = vpack.c.b16 %v4342, %v4339
  %v4406 = vpack.c.b16 %v4343, %v4340
  %v4407 = vpack.c.b16 %v4344, %v4341
  %v4408 = vpack.c.b16 %v4348, %v4345
  %v4409 = vpack.c.b16 %v4349, %v4346
  %v4410 = vpack.c.b16 %v4350, %v4347
  %v4411 = vpack.c.b16 %v4354, %v4351
  %v4412 = vpack.c.b16 %v4355, %v4352
  %v4413 = vpack.c.b16 %v4356, %v4353
  %v4414 = vpack.c.b16 %v4360, %v4357
  %v4415 = vpack.c.b16 %v4361, %v4358
  %v4416 = vpack.c.b16 %v4362, %v4359
  %v4417 = vpack.c.b16 %v4366, %v4363
  %v4418 = vpack.c.b16 %v4367, %v4364
  %v4419 = vpack.c.b16 %v4368, %v4365
  %v4420 = vpack.c.b16 %v4372, %v4369
  %v4421 = vpack.c.b16 %v4373, %v4370
  %v4422 = vpack.c.b16 %v4374, %v4371
  %4471 = vmatprep.subr.bf16.mxu0 %v4376
  %4472 = vmatpush1.bf16.msra.mxu0 %v4375
  %4473 = vmatprep.subr.bf16.mxu0 %v4379
  %4474 = vmatpush1.bf16.msra.mxu0 %v4378
  %4475 = vmatprep.subr.bf16.mxu0 %v4382
  %4476 = vmatpush1.bf16.msra.mxu0 %v4381
  %4477 = vmatprep.subr.bf16.mxu0 %v4385
  %4478 = vmatpush1.bf16.msra.mxu0 %v4384
  %4479 = vmatprep.subr.bf16.mxu0 %v4388
  %4480 = vmatpush1.bf16.msra.mxu0 %v4387
  %4481 = vmatprep.subr.bf16.mxu0 %v4391
  %4482 = vmatpush1.bf16.msra.mxu0 %v4390
  %4483 = vmatprep.subr.bf16.mxu0 %v4394
  %4484 = vmatpush1.bf16.msra.mxu0 %v4393
  %4485 = vmatprep.subr.bf16.mxu0 %v4397
  %4486 = vmatpush1.bf16.msra.mxu0 %v4396
  %4487 = vmatprep.subr.bf16.mxu0 %v4400
  %4488 = vmatpush1.bf16.msra.mxu0 %v4399
  %4489 = vmatprep.subr.bf16.mxu0 %v4403
  %4490 = vmatpush1.bf16.msra.mxu0 %v4402
  %4491 = vmatprep.subr.bf16.mxu0 %v4406
  %4492 = vmatpush1.bf16.msra.mxu0 %v4405
  %4493 = vmatprep.subr.bf16.mxu0 %v4409
  %4494 = vmatpush1.bf16.msra.mxu0 %v4408
  %4495 = vmatprep.subr.bf16.mxu0 %v4412
  %4496 = vmatpush1.bf16.msra.mxu0 %v4411
  %4497 = vmatprep.subr.bf16.mxu0 %v4415
  %4498 = vmatpush1.bf16.msra.mxu0 %v4414
  %4499 = vmatprep.subr.bf16.mxu0 %v4418
  %4500 = vmatpush1.bf16.msra.mxu0 %v4417
  %4501 = vmatprep.subr.bf16.mxu0 %v4421
  %4502 = vmatpush1.bf16.msra.mxu0 %v4420
  %4503 = vmatprep.mubr.bf16.mxu0 %v4148
  %4504 = vmatmul.mubr.bf16.gmra.mrb[0].mxu0 %v4147
  %v4505 = vpop.f32.mrb[0].mxu0
  %v4506 = vadd.f32 0.0, %v4505
  %v4507 = vpop.f32.mrb[0].mxu0
  %v4508 = vadd.f32 0.0, %v4507
  %v4509 = vpop.f32.mrb[0].mxu0
  %v4510 = vadd.f32 0.0, %v4509
  %v4511 = vpop.f32.mrb[0].mxu0
  %v4512 = vadd.f32 0.0, %v4511
  %4513 = vmatprep.mubr.bf16.mxu0 %v4150
  %4514 = vmatmul.mubr.bf16.gmra.mrb[0].mxu0 %v4149
  %v4515 = vpop.f32.mrb[0].mxu0
  %v4516 = vadd.f32 0.0, %v4515
  %v4517 = vpop.f32.mrb[0].mxu0
  %v4518 = vadd.f32 0.0, %v4517
  %v4519 = vpop.f32.mrb[0].mxu0
  %v4520 = vadd.f32 0.0, %v4519
  %v4521 = vpop.f32.mrb[0].mxu0
  %v4522 = vadd.f32 0.0, %v4521
  %4523 = vdwg.mxu0
  %4524 = vmatprep.subr.bf16.mxu0 0
  %4525 = vmatpush1.bf16.msra.mxu0 %v4377
  %4526 = vmatprep.subr.bf16.mxu0 0
  %4527 = vmatpush1.bf16.msra.mxu0 %v4380
  %4528 = vmatprep.subr.bf16.mxu0 0
  %4529 = vmatpush1.bf16.msra.mxu0 %v4383
  %4530 = vmatprep.subr.bf16.mxu0 0
  %4531 = vmatpush1.bf16.msra.mxu0 %v4386
  %4532 = vmatprep.subr.bf16.mxu0 0
  %4533 = vmatpush1.bf16.msra.mxu0 %v4389
  %4534 = vmatprep.subr.bf16.mxu0 0
  %4535 = vmatpush1.bf16.msra.mxu0 %v4392
  %4536 = vmatprep.subr.bf16.mxu0 0
  %4537 = vmatpush1.bf16.msra.mxu0 %v4395
  %4538 = vmatprep.subr.bf16.mxu0 0
  %4539 = vmatpush1.bf16.msra.mxu0 %v4398
  %4540 = vmatprep.subr.bf16.mxu0 0
  %4541 = vmatpush1.bf16.msra.mxu0 %v4401
  %4542 = vmatprep.subr.bf16.mxu0 0
  %4543 = vmatpush1.bf16.msra.mxu0 %v4404
  %4544 = vmatprep.subr.bf16.mxu0 0
  %4545 = vmatpush1.bf16.msra.mxu0 %v4407
  %4546 = vmatprep.subr.bf16.mxu0 0
  %4547 = vmatpush1.bf16.msra.mxu0 %v4410
  %4548 = vmatprep.subr.bf16.mxu0 0
  %4549 = vmatpush1.bf16.msra.mxu0 %v4413
  %4550 = vmatprep.subr.bf16.mxu0 0
  %4551 = vmatpush1.bf16.msra.mxu0 %v4416
  %4552 = vmatprep.subr.bf16.mxu0 0
  %4553 = vmatpush1.bf16.msra.mxu0 %v4419
  %4554 = vmatprep.subr.bf16.mxu0 0
  %4555 = vmatpush1.bf16.msra.mxu0 %v4422
  %4556 = vmatprep.mubr.bf16.mxu0 %v4148
  %4557 = vmatmul.mubr.bf16.gmra.mrb[0].mxu0 %v4147
  %v4558 = vpop.f32.mrb[0].mxu0
  %v4559 = vadd.f32 0.0, %v4558
  %v4560 = vpop.f32.mrb[0].mxu0
  %v4561 = vpop.f32.mrb[0].mxu0
  %v4562 = vadd.f32 0.0, %v4561
  %v4563 = vpop.f32.mrb[0].mxu0
  %4564 = vmatprep.mubr.bf16.mxu0 %v4150
  %4565 = vmatmul.mubr.bf16.gmra.mrb[0].mxu0 %v4149
  %v4566 = vpop.f32.mrb[0].mxu0
  %v4567 = vadd.f32 0.0, %v4566
  %v4568 = vpop.f32.mrb[0].mxu0
  %v4569 = vpop.f32.mrb[0].mxu0
  %v4570 = vadd.f32 0.0, %v4569
  %v4571 = vpop.f32.mrb[0].mxu0
  %4572 = vdwg.mxu0
  %v4573 = vadd.f32 %v4123, %v4506
  %v4574 = vadd.f32 %v4124, %v4508
  %v4575 = vadd.f32 %v4125, %v4559
  %v4576 = vadd.f32 %v4126, %v4510
  %v4577 = vadd.f32 %v4127, %v4512
  %v4578 = vadd.f32 %v4128, %v4562
  %v4579 = vadd.f32 %v4133, %v4516
  %v4580 = vadd.f32 %v4134, %v4518
  %v4581 = vadd.f32 %v4135, %v4567
  %v4582 = vadd.f32 %v4136, %v4520
  %v4583 = vadd.f32 %v4137, %v4522
  %v4584 = vadd.f32 %v4138, %v4570
  %v4585 = vxor.u32 %v4573, 2147483648
  %v4586 = vxor.u32 %v4576, 2147483648
  %v4587 = vxor.u32 %v4579, 2147483648
  %v4588 = vxor.u32 %v4582, 2147483648
  %v4589 = vmul.f32 %v4585, 1.442695
  %v4590 = vpow.pop %v4589
  %v4591 = vmul.f32 %v4586, 1.442695
  %v4592 = vpow.pop %v4591
  %v4593 = vmul.f32 %v4587, 1.442695
  %v4594 = vpow.pop %v4593
  %v4595 = vmul.f32 %v4588, 1.442695
  %v4596 = vpow.pop %v4595
  %v4597 = vadd.f32 %v4590, 1.0
  %v4598 = vadd.f32 %v4592, 1.0
  %v4599 = vadd.f32 %v4594, 1.0
  %v4600 = vadd.f32 %v4596, 1.0
  %v4601 = vrcp.pop %v4597
  %v4602 = vmul.f32 1.0, %v4601
  %v4603 = vrcp.pop %v4598
  %v4604 = vmul.f32 1.0, %v4603
  %v4605 = vrcp.pop %v4599
  %v4606 = vmul.f32 1.0, %v4605
  %v4607 = vrcp.pop %v4600
  %v4608 = vmul.f32 1.0, %v4607
  %v4609 = vxor.u32 %v4574, 2147483648
  %v4610 = vxor.u32 %v4577, 2147483648
  %v4611 = vxor.u32 %v4580, 2147483648
  %v4612 = vxor.u32 %v4583, 2147483648
  %v4613 = vmul.f32 %v4609, 1.442695
  %v4614 = vpow.pop %v4613
  %v4615 = vmul.f32 %v4610, 1.442695
  %v4616 = vpow.pop %v4615
  %v4617 = vmul.f32 %v4611, 1.442695
  %v4618 = vpow.pop %v4617
  %v4619 = vmul.f32 %v4612, 1.442695
  %v4620 = vpow.pop %v4619
  %v4621 = vadd.f32 %v4614, 1.0
  %v4622 = vadd.f32 %v4616, 1.0
  %v4623 = vadd.f32 %v4618, 1.0
  %v4624 = vadd.f32 %v4620, 1.0
  %v4625 = vrcp.pop %v4621
  %v4626 = vmul.f32 1.0, %v4625
  %v4627 = vrcp.pop %v4622
  %v4628 = vmul.f32 1.0, %v4627
  %v4629 = vrcp.pop %v4623
  %v4630 = vmul.f32 1.0, %v4629
  %v4631 = vrcp.pop %v4624
  %v4632 = vmul.f32 1.0, %v4631
  %v4633 = vtanh.pop %v4575
  %v4634 = vtanh.pop %v4578
  %v4635 = vtanh.pop %v4581
  %v4636 = vtanh.pop %v4584
  %v4637 = vsub.f32 1.0, %v4602
  %v4638 = vsub.f32 1.0, %v4604
  %v4639 = vsub.f32 1.0, %v4606
  %v4640 = vsub.f32 1.0, %v4608
  %v4641 = vld [vmem:[#allocation3] sm:$0xff]
  %v4642 = vld [vmem:[#allocation3 + $0x8] sm:$0xff]
  %v4643 = vld [vmem:[#allocation3 + $0x10] sm:$0xff]
  %v4644 = vld [vmem:[#allocation3 + $0x18] sm:$0xff]
  %v4645 = vmul.f32 %v4637, %v4641
  %v4646 = vmul.f32 %v4638, %v4642
  %v4647 = vmul.f32 %v4639, %v4643
  %v4648 = vmul.f32 %v4640, %v4644
  %v4649 = vmul.f32 %v4602, %v4633
  %v4650 = vmul.f32 %v4604, %v4634
  %v4651 = vmul.f32 %v4606, %v4635
  %v4652 = vmul.f32 %v4608, %v4636
  %v4653 = vadd.f32 %v4645, %v4649
  %v4654 = vadd.f32 %v4646, %v4650
  %v4655 = vadd.f32 %v4647, %v4651
  %v4656 = vadd.f32 %v4648, %v4652
  %v4657 = vtanh.pop %v4653
  %v4658 = vtanh.pop %v4654
  %v4659 = vtanh.pop %v4655
  %v4660 = vtanh.pop %v4656
  %v4661 = vmul.f32 %v4626, %v4657
  %v4662 = vmul.f32 %v4628, %v4658
  %v4663 = vmul.f32 %v4630, %v4659
  %v4664 = vmul.f32 %v4632, %v4660
  %4665 = vst [vmem:[#allocation3] sm:$0xff] %v4653
  %4666 = vst [vmem:[#allocation3 + $0x8] sm:$0xff] %v4654
  %4667 = vst [vmem:[#allocation3 + $0x10] sm:$0xff] %v4655
  %4668 = vst [vmem:[#allocation3 + $0x18] sm:$0xff] %v4656
  %4669 = vst [vmem:[#allocation2] sm:$0xff] %v4661
  %4670 = vst [vmem:[#allocation2 + $0x10] sm:$0xff] %v4662
  %4671 = vst [vmem:[#allocation2 + $0x28] sm:$0xff] %v4663
  %4672 = vst [vmem:[#allocation2 + $0x38] sm:$0xff] %v4664
  %v4673 = vpack.c.bf16 %v4662, %v4661
  %v4674 = vpack.c.bf16 %v4664, %v4663
  %v4676 = vunpack.c.l.b16 %v4673
  %v4677 = vunpack.c.h.b16 %v4673
  %v4678 = vpack.c.b16 %v4676, %v4676
  %v4679 = vpack.c.b16 %v4677, %v4677
  %s4682 = scalar_lea.vmem %s3, 56
  %4683 = vst [vmem:[%s4682] sm:$0xf] %v4678
  %4684 = vst [vmem:[%s4682 + $0x4] sm:$0xf] %v4679
  %v4686 = vunpack.c.l.b16 %v4674
  %v4687 = vunpack.c.h.b16 %v4674
  %v4688 = vpack.c.b16 %v4686, %v4686
  %v4689 = vpack.c.b16 %v4687, %v4687
  %4692 = vst [vmem:[%s54] sm:$0xf] %v4688
  %4693 = vst [vmem:[%s54 + $0x4] sm:$0xf] %v4689
  %s4694 = ssub.s32 0, 0
  %s4695 = smul.u32 8, %s4694
  %p4696 = scmp.lt.s32.totalorder %s4695, 7
  %s4697 = scalar_select %p4696, %s4695, 7
  %s4698 = smul.addr %s4697, 2
  %s4699 = smul.addr %s4698, 4
  %s4700 = scalar_lea.vmem %s4, %s4699
  // Predicated region
  $region18: #{bilstm_forward.4} parent=0 // pred_check
    _
  $region19: #{bilstm_forward.4} parent=0 // pred_check_branch
    %4702 = sbr.rel (0) target = $region21
  $region20: #{bilstm_forward.4} parent=0 // pred_region
    _
  $region21: #{bilstm_forward.4} parent=0 // pred_fallthru
    _
  // Predicated region
  $region22: #{bilstm_forward.4} parent=0 // pred_check
    _
  $region23: #{bilstm_forward.4} parent=0 // pred_check_branch
    %4704 = sbr.rel (0) target = $region25
  $region24: #{bilstm_forward.4} parent=0 // pred_region
    %s4705 = ssub.s32 0, 0
    %s4706 = smul.u32 8, %s4705
  $region25: #{bilstm_forward.4} parent=0 // pred_fallthru
    _
  // Predicated region
  $region26: #{bilstm_forward.4} parent=0 // pred_check
    _
  $region27: #{bilstm_forward.4} parent=0 // pred_check_branch
    %4708 = sbr.rel (0) target = $region29
  $region28: #{bilstm_forward.4} parent=0 // pred_region
    _
  $region29: #{bilstm_forward.4} parent=0 // pred_fallthru
    _
  // Predicated region
  $region30: #{bilstm_forward.4} parent=0 // pred_check
    _
  $region31: #{bilstm_forward.4} parent=0 // pred_check_branch
    %4710 = sbr.rel (0) target = $region33
  $region32: #{bilstm_forward.4} parent=0 // pred_region
    %s4711 = ssub.s32 0, 0
    %s4712 = smul.u32 8, %s4711
    %p4713 = scmp.lt.s32.totalorder %s4712, 7
    %s4714 = scalar_select %p4713, %s4712, 7
    %s4715 = smul.addr %s4714, 2
    %s4716 = smul.addr %s4715, 4
    %s4717 = scalar_lea.vmem %s4, %s4716
  $region33: #{bilstm_forward.4} parent=0 // pred_fallthru
    _

</llo_original>
